<compile_context>
chip_gen: v6e
topology: v6e:2x2x1
jax: 0.10.0
libtpu: 0.0.40
codegen_flags: <defaults>
</compile_context>

<pallas_src>
import math

import jax
import jax.numpy as jnp
from jax.experimental import pallas as pl
from jax.experimental.pallas import tpu as pltpu

# ----------------------------- model config (small) --------------------------
B = 2                      # batch
H = 32                     # hidden size (768 analog)
NH = 4                     # attention heads
DH = H // NH               # head dim
MLP = 64                   # MLP / intermediate size
LAYERS = 2                 # transformer layers per encoder
FEAT = 32                  # image_encoder.head output dim (768 analog)

IMG_C, IMG_S, PATCH = 3, 16, 8
N_PATCH = (IMG_S // PATCH) ** 2          # 4
PATCH_DIM = IMG_C * PATCH * PATCH        # 192
VIT_TOKENS = N_PATCH + 1                 # CLS + patches
AUG_DIM = PATCH_DIM + 2 + VIT_TOKENS     # + CLS col + conv-bias col + pos one-hot

VOCAB, MAX_POS, SEQ = 100, 16, 8

ATTN_SCALE = 1.0 / math.sqrt(DH)
VEC_LANES = 128                          # lane width of packed parameter slabs
MASK_VALUE = -1e30                       # additive mask for disallowed keys


# --------------------------- in-kernel math helpers ---------------------------
def _row(vp, i, width):
    """Row i of a packed (n, 128) parameter slab, as a (1, width) value."""
    return vp[i:i + 1, 0:width]


def _layernorm(x, g, b, eps):
    m = jnp.mean(x, axis=-1, keepdims=True)
    xc = x - m
    v = jnp.mean(xc * xc, axis=-1, keepdims=True)
    return xc * jax.lax.rsqrt(v + eps) * g + b


_ERF_P = 0.3275911
_ERF_A1, _ERF_A2, _ERF_A3, _ERF_A4, _ERF_A5 = (
    0.254829592, -0.284496736, 1.421413741, -1.453152027, 1.061405429)


def _erf(x):
    # Abramowitz & Stegun 7.1.26 rational approximation, built only from
    # exp / mul / add / select / EUP-reciprocal so it lowers cleanly in Mosaic.
    sgn = jnp.where(x < 0.0, -1.0, 1.0)
    a = jnp.abs(x)
    t = pl.reciprocal(1.0 + _ERF_P * a, approx=True)
    poly = t * (_ERF_A1 + t * (_ERF_A2 + t * (_ERF_A3 + t * (_ERF_A4 + t * _ERF_A5))))
    return sgn * (1.0 - poly * jnp.exp(-a * a))


def _gelu(x):
    # exact (erf-based) GELU, matching HF BertIntermediate / timm ViT defaults
    return 0.5 * x * (1.0 + _erf(x * (1.0 / math.sqrt(2.0))))


def _l2norm_row(v):
    # F.normalize(dim=-1, eps=1e-12) semantics; rsqrt lives on the EUP slot.
    ss = jnp.sum(v * v, axis=-1, keepdims=True)
    return v * jax.lax.rsqrt(jnp.maximum(ss, 1e-24))


def _attention(x, qkv_w, proj_w, qkv_b, proj_b, mask2d):
    """Multi-head self-attention on the VMEM-resident (rows, H) activation tile.

    qkv_w is the fused (H, 3H) projection (Q | K | V blocks of H lanes each);
    proj_w is the fused (H, H) output projection applied to the lane-concatenated
    head outputs.  mask2d is a (rows, rows) additive block-diagonal (+ padding)
    mask so every batch element shares one 2-D score matmul per head.
    """
    qkv = jnp.dot(x, qkv_w, preferred_element_type=jnp.float32) + qkv_b  # (R, 3H)
    heads = []
    for h in range(NH):
        q = qkv[:, 0 * H + h * DH:0 * H + (h + 1) * DH]
        k = qkv[:, 1 * H + h * DH:1 * H + (h + 1) * DH]
        v = qkv[:, 2 * H + h * DH:2 * H + (h + 1) * DH]
        s = jax.lax.dot_general(q, k, (((1,), (1,)), ((), ())),
                                preferred_element_type=jnp.float32) * ATTN_SCALE
        s = s + mask2d
        s = s - jnp.max(s, axis=-1, keepdims=True)
        p = jnp.exp(s)
        p = p * pl.reciprocal(jnp.sum(p, axis=-1, keepdims=True), approx=True)
        heads.append(jnp.dot(p, v, preferred_element_type=jnp.float32))   # (R, DH)
    ctx = jnp.concatenate(heads, axis=-1)                                 # (R, H)
    return jnp.dot(ctx, proj_w, preferred_element_type=jnp.float32) + proj_b


# ------------------------------- fused kernel ---------------------------------
def _clip_kernel(v_tok_ref, v_embed_w_ref, v_mask_ref,
                 v_qkv_w_ref, v_proj_w_ref, v_fc1_w_ref, v_fc2_w_ref,
                 v_lvec_ref, v_fvec_ref, v_head_w_ref,
                 t_emb_ref, t_mask_ref,
                 t_qkv_w_ref, t_proj_w_ref, t_inter_w_ref, t_out_w_ref,
                 t_lvec_ref, t_fvec_ref,
                 img_ref, txt_ref):
    """Both encoders in one kernel invocation, fully VMEM-resident."""
    # ===================== ViT image encoder (pre-LN) =====================
    v_mask = v_mask_ref[...]
    # patch embed + CLS token + conv bias + positional embedding, all via the
    # augmented columns of the token matrix -> a single matmul.
    x = jnp.dot(v_tok_ref[...], v_embed_w_ref[...],
                preferred_element_type=jnp.float32)                      # (B*T, H)

    for l in range(LAYERS):
        vp = v_lvec_ref[l]                               # packed per-layer vectors
        h1 = _layernorm(x, _row(vp, 0, H), _row(vp, 1, H), 1e-6)
        x = x + _attention(h1, v_qkv_w_ref[l], v_proj_w_ref[l],
                           _row(vp, 2, 3 * H), _row(vp, 3, H), v_mask)
        h2 = _layernorm(x, _row(vp, 4, H), _row(vp, 5, H), 1e-6)
        h2 = _gelu(jnp.dot(h2, v_fc1_w_ref[l],
                           preferred_element_type=jnp.float32) + _row(vp, 6, MLP))
        x = x + jnp.dot(h2, v_fc2_w_ref[l],
                        preferred_element_type=jnp.float32) + _row(vp, 7, H)

    fv = v_fvec_ref[...]
    x = _layernorm(x, _row(fv, 0, H), _row(fv, 1, H), 1e-6)              # final norm
    head_w = v_head_w_ref[...]
    head_b = _row(fv, 2, FEAT)
    for i in range(B):   # CLS pooling via static row slices (no selector matmul)
        cls = x[i * VIT_TOKENS:i * VIT_TOKENS + 1, :]
        feat = jnp.dot(cls, head_w, preferred_element_type=jnp.float32) + head_b
        img_ref[i:i + 1, :] = _l2norm_row(feat)

    # ===================== SciBERT text encoder (post-LN) =====================
    t_mask = t_mask_ref[...]
    tf = t_fvec_ref[...]
    y = _layernorm(t_emb_ref[...], _row(tf, 0, H), _row(tf, 1, H), 1e-12)  # (B*S, H)

    for l in range(LAYERS):
        vp = t_lvec_ref[l]
        a = _attention(y, t_qkv_w_ref[l], t_proj_w_ref[l],
                       _row(vp, 0, 3 * H), _row(vp, 1, H), t_mask)
        y = _layernorm(y + a, _row(vp, 2, H), _row(vp, 3, H), 1e-12)
        hh = _gelu(jnp.dot(y, t_inter_w_ref[l],
                           preferred_element_type=jnp.float32) + _row(vp, 4, MLP))
        hh = jnp.dot(hh, t_out_w_ref[l],
                     preferred_element_type=jnp.float32) + _row(vp, 5, H)
        y = _layernorm(y + hh, _row(vp, 6, H), _row(vp, 7, H), 1e-12)

    for i in range(B):   # CLS pooling + L2 normalize
        cls = y[i * SEQ:i * SEQ + 1, :]
        txt_ref[i:i + 1, :] = _l2norm_row(cls)


# ------------------------------ parameter init --------------------------------
def _pack_rows(vecs):
    """Pack 1-D vectors (len <= 128) into a zero-padded lane-dense (n,128) slab."""
    rows = []
    for v in vecs:
        v = jnp.asarray(v, jnp.float32).reshape(-1)
        rows.append(jnp.pad(v, (0, VEC_LANES - v.shape[0])))
    return jnp.stack(rows, axis=0)


def init_params(key):
    keys = iter(jax.random.split(key, 64))
    nk = lambda: next(keys)
    rnd = lambda *shape: jax.random.normal(nk(), shape, jnp.float32) * 0.02
    ones = lambda n: jnp.ones((n,), jnp.float32)
    zeros = lambda n: jnp.zeros((n,), jnp.float32)

    def fused_qkv():
        wq, wk, wv = rnd(H, H), rnd(H, H), rnd(H, H)
        return jnp.concatenate([wq, wk, wv], axis=1)     # (H, 3H)

    # ---------------- ViT image encoder ----------------
    patch_w, patch_b = rnd(PATCH_DIM, H), zeros(H)
    cls_tok = rnd(H)
    pos = rnd(VIT_TOKENS, H)
    qkv, proj, f1, f2, lv = [], [], [], [], []
    for _ in range(LAYERS):
        qkv.append(fused_qkv()); proj.append(rnd(H, H))
        f1.append(rnd(H, MLP)); f2.append(rnd(MLP, H))
        lv.append(_pack_rows([ones(H), zeros(H),      # 0,1: ln1 gamma/beta
                              zeros(3 * H),           # 2:   fused qkv bias
                              zeros(H),               # 3:   attn out-proj bias
                              ones(H), zeros(H),      # 4,5: ln2 gamma/beta
                              zeros(MLP),             # 6:   fc1 bias
                              zeros(H)]))             # 7:   fc2 bias
    vit = {
        # augmented embed weight rows = [conv weight | CLS token | conv bias | pos emb]
        "embed_w": jnp.concatenate([patch_w, cls_tok.reshape(1, H),
                                    patch_b.reshape(1, H), pos], axis=0),
        "qkv_w": jnp.stack(qkv), "proj_w": jnp.stack(proj),
        "fc1_w": jnp.stack(f1), "fc2_w": jnp.stack(f2),
        "lvec": jnp.stack(lv),
        "fvec": _pack_rows([ones(H), zeros(H), zeros(FEAT)]),  # final LN g/b, head bias
        "head_w": rnd(H, FEAT),
    }

    # ---------------- SciBERT-style text encoder ----------------
    qkv, proj, f1, f2, lv = [], [], [], [], []
    for _ in range(LAYERS):
        qkv.append(fused_qkv()); proj.append(rnd(H, H))
        f1.append(rnd(H, MLP)); f2.append(rnd(MLP, H))
        lv.append(_pack_rows([zeros(3 * H),           # 0:   fused qkv bias
                              zeros(H),               # 1:   attn out-proj bias
                              ones(H), zeros(H),      # 2,3: attention LayerNorm
                              zeros(MLP),             # 4:   intermediate bias
                              zeros(H),               # 5:   output dense bias
                              ones(H), zeros(H)]))    # 6,7: output LayerNorm
    bert = {
        "word_emb": rnd(VOCAB, H),
        "pos_emb": rnd(MAX_POS, H),
        "type_emb": rnd(2, H),
        "qkv_w": jnp.stack(qkv), "proj_w": jnp.stack(proj),
        "inter_w": jnp.stack(f1), "out_w": jnp.stack(f2),
        "lvec": jnp.stack(lv),
        "fvec": _pack_rows([ones(H), zeros(H)]),      # embedding LayerNorm gamma/beta
    }
    return {"vit": vit, "bert": bert}


# ---------------------------------- forward -----------------------------------
def clip_forward(params, image, input_ids, attention_mask):
    vit, bert = params["vit"], params["bert"]

    # ---- host-side glue (pure data prep; all hot compute is in the kernel) ----
    # Patchify NCHW image into flattened conv patches, then augment each row with
    # CLS-indicator, conv-bias-indicator and position one-hot columns so the
    # in-kernel patch-embed matmul also produces the CLS token, the conv bias and
    # the positional embedding (no concatenation / add needed inside the kernel).
    g = IMG_S // PATCH
    patches = image.reshape(B, IMG_C, g, PATCH, g, PATCH)
    patches = patches.transpose(0, 2, 4, 1, 3, 5).reshape(B, N_PATCH, PATCH_DIM)
    patch_block = jnp.concatenate(
        [jnp.zeros((B, 1, PATCH_DIM), jnp.float32), patches], axis=1)    # (B, T, 192)
    cls_col = jnp.concatenate([jnp.ones((B, 1, 1), jnp.float32),
                               jnp.zeros((B, N_PATCH, 1), jnp.float32)], axis=1)
    bias_col = 1.0 - cls_col
    pos_oh = jnp.broadcast_to(jnp.eye(VIT_TOKENS, dtype=jnp.float32)[None],
                              (B, VIT_TOKENS, VIT_TOKENS))
    v_tok = jnp.concatenate([patch_block, cls_col, bias_col, pos_oh],
                            axis=-1).reshape(B * VIT_TOKENS, AUG_DIM)

    # Block-diagonal additive mask (batch isolation) for the ViT.
    bid_v = jnp.repeat(jnp.arange(B), VIT_TOKENS)
    v_mask = jnp.where(bid_v[:, None] == bid_v[None, :], 0.0,
                       MASK_VALUE).astype(jnp.float32)

    # BERT embeddings: word + position + token-type(=0) table gather in plain JAX.
    we = jnp.take(bert["word_emb"], input_ids, axis=0)                   # (B, S, H)
    pe = bert["pos_emb"][:SEQ][None, :, :]
    te = bert["type_emb"][0][None, None, :]
    t_emb = (we + pe + te).reshape(B * SEQ, H)

    # Block-diagonal mask combined with the key-padding mask.
    bid_t = jnp.repeat(jnp.arange(B), SEQ)
    key_ok = attention_mask.reshape(-1) > 0
    t_mask = jnp.where((bid_t[:, None] == bid_t[None, :]) & key_ok[None, :],
                       0.0, MASK_VALUE).astype(jnp.float32)

    vspec = pl.BlockSpec(memory_space=pltpu.MemorySpace.VMEM)
    img_f, txt_f = pl.pallas_call(
        _clip_kernel,
        out_shape=(jax.ShapeDtypeStruct((B, FEAT), jnp.float32),
                   jax.ShapeDtypeStruct((B, H), jnp.float32)),
        in_specs=[vspec] * 18,
        out_specs=(vspec, vspec),
    )(v_tok, vit["embed_w"], v_mask,
      vit["qkv_w"], vit["proj_w"], vit["fc1_w"], vit["fc2_w"],
      vit["lvec"], vit["fvec"], vit["head_w"],
      t_emb, t_mask,
      bert["qkv_w"], bert["proj_w"], bert["inter_w"], bert["out_w"],
      bert["lvec"], bert["fvec"])
    return img_f, txt_f


# ------------------------------------ main -------------------------------------
if __name__ == "__main__":
    key = jax.random.PRNGKey(0)
    kp, ki, kt = jax.random.split(key, 3)

    params = init_params(kp)
    image = jax.random.normal(ki, (B, IMG_C, IMG_S, IMG_S), jnp.float32)   # NCHW
    input_ids = jax.random.randint(kt, (B, SEQ), 0, VOCAB, dtype=jnp.int32)
    attention_mask = jnp.ones((B, SEQ), jnp.int32).at[:, SEQ - 2:].set(0)  # padded tail

    fwd = jax.jit(clip_forward)
    img_f, txt_f = fwd(params, image, input_ids, attention_mask)
    jax.block_until_ready((img_f, txt_f))

    assert img_f.shape == (B, FEAT) and txt_f.shape == (B, H)
    assert bool(jnp.all(jnp.isfinite(img_f))) and bool(jnp.all(jnp.isfinite(txt_f)))
    print("KERNEL_OK")
</pallas_src>

<mosaic_0001>
module attributes {stable_mosaic.version = 11 : i64} {
  func.func @_clip_kernel(%arg0: memref<10x199xf32, #tpu.memory_space<vmem>>, %arg1: memref<199x32xf32, #tpu.memory_space<vmem>>, %arg2: memref<10x10xf32, #tpu.memory_space<vmem>>, %arg3: memref<2x32x96xf32, #tpu.memory_space<vmem>>, %arg4: memref<2x32x32xf32, #tpu.memory_space<vmem>>, %arg5: memref<2x32x64xf32, #tpu.memory_space<vmem>>, %arg6: memref<2x64x32xf32, #tpu.memory_space<vmem>>, %arg7: memref<2x8x128xf32, #tpu.memory_space<vmem>>, %arg8: memref<3x128xf32, #tpu.memory_space<vmem>>, %arg9: memref<32x32xf32, #tpu.memory_space<vmem>>, %arg10: memref<16x32xf32, #tpu.memory_space<vmem>>, %arg11: memref<16x16xf32, #tpu.memory_space<vmem>>, %arg12: memref<2x32x96xf32, #tpu.memory_space<vmem>>, %arg13: memref<2x32x32xf32, #tpu.memory_space<vmem>>, %arg14: memref<2x32x64xf32, #tpu.memory_space<vmem>>, %arg15: memref<2x64x32xf32, #tpu.memory_space<vmem>>, %arg16: memref<2x8x128xf32, #tpu.memory_space<vmem>>, %arg17: memref<2x128xf32, #tpu.memory_space<vmem>>, %arg18: memref<2x32xf32, #tpu.memory_space<vmem>>, %arg19: memref<2x32xf32, #tpu.memory_space<vmem>>) attributes {dimension_semantics = [], scalar_prefetch = 0 : i64, scratch_operands = 0 : i64, tpu.core_type = #tpu.core_type<tc>} {
    %c0 = arith.constant 0 : index
    %c0_0 = arith.constant 0 : index
    %0 = vector.load %arg2[%c0, %c0_0] : memref<10x10xf32, #tpu.memory_space<vmem>>, vector<10x10xf32>
    %c0_1 = arith.constant 0 : index
    %c0_2 = arith.constant 0 : index
    %1 = vector.load %arg0[%c0_1, %c0_2] : memref<10x199xf32, #tpu.memory_space<vmem>>, vector<10x199xf32>
    %c0_3 = arith.constant 0 : index
    %c0_4 = arith.constant 0 : index
    %2 = vector.load %arg1[%c0_3, %c0_4] : memref<199x32xf32, #tpu.memory_space<vmem>>, vector<199x32xf32>
    %cst = arith.constant dense<0.000000e+00> : vector<10x32xf32>
    %3 = tpu.matmul %1, %2, %cst {dimension_numbers = #tpu.dot_dimension_numbers<[1], [0], [0], [1], [0, 0, 1, 1], [], []>} : vector<10x199xf32>, vector<199x32xf32>, vector<10x32xf32> -> vector<10x32xf32>
    %c0_5 = arith.constant 0 : index
    %c0_6 = arith.constant 0 : index
    %c0_7 = arith.constant 0 : index
    %4 = vector.load %arg7[%c0_5, %c0_6, %c0_7] : memref<2x8x128xf32, #tpu.memory_space<vmem>>, vector<1x8x128xf32>
    %5 = vector.shape_cast %4 : vector<1x8x128xf32> to vector<8x128xf32>
    %6 = vector.extract_strided_slice %5 {offsets = [0, 0], sizes = [1, 32], strides = [1, 1]} : vector<8x128xf32> to vector<1x32xf32>
    %7 = vector.extract_strided_slice %5 {offsets = [1, 0], sizes = [1, 32], strides = [1, 1]} : vector<8x128xf32> to vector<1x32xf32>
    %cst_8 = arith.constant dense<0.000000e+00> : vector<10xf32>
    %8 = vector.multi_reduction <add>, %3, %cst_8 [1] : vector<10x32xf32> to vector<10xf32>
    %9 = vector.shape_cast %8 : vector<10xf32> to vector<10x1xf32>
    %cst_9 = arith.constant 3.200000e+01 : f32
    %10 = vector.broadcast %cst_9 : f32 to vector<10x1xf32>
    %11 = arith.divf %9, %10 : vector<10x1xf32>
    %12 = vector.broadcast %11 : vector<10x1xf32> to vector<10x32xf32>
    %13 = arith.subf %3, %12 : vector<10x32xf32>
    %14 = arith.mulf %13, %13 : vector<10x32xf32>
    %cst_10 = arith.constant dense<0.000000e+00> : vector<10xf32>
    %15 = vector.multi_reduction <add>, %14, %cst_10 [1] : vector<10x32xf32> to vector<10xf32>
    %16 = vector.shape_cast %15 : vector<10xf32> to vector<10x1xf32>
    %cst_11 = arith.constant 3.200000e+01 : f32
    %17 = vector.broadcast %cst_11 : f32 to vector<10x1xf32>
    %18 = arith.divf %16, %17 : vector<10x1xf32>
    %cst_12 = arith.constant 9.99999997E-7 : f32
    %19 = vector.broadcast %cst_12 : f32 to vector<10x1xf32>
    %20 = arith.addf %18, %19 : vector<10x1xf32>
    %21 = math.rsqrt %20 : vector<10x1xf32>
    %22 = vector.broadcast %21 : vector<10x1xf32> to vector<10x32xf32>
    %23 = arith.mulf %13, %22 : vector<10x32xf32>
    %24 = vector.broadcast %6 : vector<1x32xf32> to vector<10x32xf32>
    %25 = arith.mulf %23, %24 : vector<10x32xf32>
    %26 = vector.broadcast %7 : vector<1x32xf32> to vector<10x32xf32>
    %27 = arith.addf %25, %26 : vector<10x32xf32>
    %c0_13 = arith.constant 0 : index
    %c0_14 = arith.constant 0 : index
    %c0_15 = arith.constant 0 : index
    %28 = vector.load %arg3[%c0_13, %c0_14, %c0_15] : memref<2x32x96xf32, #tpu.memory_space<vmem>>, vector<1x32x96xf32>
    %29 = vector.shape_cast %28 : vector<1x32x96xf32> to vector<32x96xf32>
    %c0_16 = arith.constant 0 : index
    %c0_17 = arith.constant 0 : index
    %c0_18 = arith.constant 0 : index
    %30 = vector.load %arg4[%c0_16, %c0_17, %c0_18] : memref<2x32x32xf32, #tpu.memory_space<vmem>>, vector<1x32x32xf32>
    %31 = vector.shape_cast %30 : vector<1x32x32xf32> to vector<32x32xf32>
    %32 = vector.extract_strided_slice %5 {offsets = [2, 0], sizes = [1, 96], strides = [1, 1]} : vector<8x128xf32> to vector<1x96xf32>
    %33 = vector.extract_strided_slice %5 {offsets = [3, 0], sizes = [1, 32], strides = [1, 1]} : vector<8x128xf32> to vector<1x32xf32>
    %cst_19 = arith.constant dense<0.000000e+00> : vector<10x96xf32>
    %34 = tpu.matmul %27, %29, %cst_19 {dimension_numbers = #tpu.dot_dimension_numbers<[1], [0], [0], [1], [0, 0, 1, 1], [], []>} : vector<10x32xf32>, vector<32x96xf32>, vector<10x96xf32> -> vector<10x96xf32>
    %35 = vector.broadcast %32 : vector<1x96xf32> to vector<10x96xf32>
    %36 = arith.addf %34, %35 : vector<10x96xf32>
    %37 = vector.extract_strided_slice %36 {offsets = [0, 0], sizes = [10, 8], strides = [1, 1]} : vector<10x96xf32> to vector<10x8xf32>
    %38 = vector.extract_strided_slice %36 {offsets = [0, 32], sizes = [10, 8], strides = [1, 1]} : vector<10x96xf32> to vector<10x8xf32>
    %39 = vector.extract_strided_slice %36 {offsets = [0, 64], sizes = [10, 8], strides = [1, 1]} : vector<10x96xf32> to vector<10x8xf32>
    %cst_20 = arith.constant dense<0.000000e+00> : vector<10x10xf32>
    %40 = tpu.matmul %37, %38, %cst_20 {dimension_numbers = #tpu.dot_dimension_numbers<[1], [1], [0], [0], [0, 0, 1, 0], [], []>} : vector<10x8xf32>, vector<10x8xf32>, vector<10x10xf32> -> vector<10x10xf32>
    %cst_21 = arith.constant 0.353553385 : f32
    %41 = vector.broadcast %cst_21 : f32 to vector<10x10xf32>
    %42 = arith.mulf %40, %41 : vector<10x10xf32>
    %43 = arith.addf %42, %0 : vector<10x10xf32>
    %cst_22 = arith.constant dense<0xFF800000> : vector<10xf32>
    %44 = vector.multi_reduction <maximumf>, %43, %cst_22 [1] : vector<10x10xf32> to vector<10xf32>
    %45 = vector.shape_cast %44 : vector<10xf32> to vector<10x1xf32>
    %46 = vector.broadcast %45 : vector<10x1xf32> to vector<10x10xf32>
    %47 = arith.subf %43, %46 : vector<10x10xf32>
    %48 = math.exp %47 : vector<10x10xf32>
    %cst_23 = arith.constant dense<0.000000e+00> : vector<10xf32>
    %49 = vector.multi_reduction <add>, %48, %cst_23 [1] : vector<10x10xf32> to vector<10xf32>
    %50 = vector.shape_cast %49 : vector<10xf32> to vector<10x1xf32>
    %51 = tpu.reciprocal %50 {approx = true} : vector<10x1xf32> -> vector<10x1xf32>
    %52 = vector.broadcast %51 : vector<10x1xf32> to vector<10x10xf32>
    %53 = arith.mulf %48, %52 : vector<10x10xf32>
    %cst_24 = arith.constant dense<0.000000e+00> : vector<10x8xf32>
    %54 = tpu.matmul %53, %39, %cst_24 {dimension_numbers = #tpu.dot_dimension_numbers<[1], [0], [0], [1], [0, 0, 1, 1], [], []>} : vector<10x10xf32>, vector<10x8xf32>, vector<10x8xf32> -> vector<10x8xf32>
    %55 = vector.extract_strided_slice %36 {offsets = [0, 8], sizes = [10, 8], strides = [1, 1]} : vector<10x96xf32> to vector<10x8xf32>
    %56 = vector.extract_strided_slice %36 {offsets = [0, 40], sizes = [10, 8], strides = [1, 1]} : vector<10x96xf32> to vector<10x8xf32>
    %57 = vector.extract_strided_slice %36 {offsets = [0, 72], sizes = [10, 8], strides = [1, 1]} : vector<10x96xf32> to vector<10x8xf32>
    %cst_25 = arith.constant dense<0.000000e+00> : vector<10x10xf32>
    %58 = tpu.matmul %55, %56, %cst_25 {dimension_numbers = #tpu.dot_dimension_numbers<[1], [1], [0], [0], [0, 0, 1, 0], [], []>} : vector<10x8xf32>, vector<10x8xf32>, vector<10x10xf32> -> vector<10x10xf32>
    %cst_26 = arith.constant 0.353553385 : f32
    %59 = vector.broadcast %cst_26 : f32 to vector<10x10xf32>
    %60 = arith.mulf %58, %59 : vector<10x10xf32>
    %61 = arith.addf %60, %0 : vector<10x10xf32>
    %cst_27 = arith.constant dense<0xFF800000> : vector<10xf32>
    %62 = vector.multi_reduction <maximumf>, %61, %cst_27 [1] : vector<10x10xf32> to vector<10xf32>
    %63 = vector.shape_cast %62 : vector<10xf32> to vector<10x1xf32>
    %64 = vector.broadcast %63 : vector<10x1xf32> to vector<10x10xf32>
    %65 = arith.subf %61, %64 : vector<10x10xf32>
    %66 = math.exp %65 : vector<10x10xf32>
    %cst_28 = arith.constant dense<0.000000e+00> : vector<10xf32>
    %67 = vector.multi_reduction <add>, %66, %cst_28 [1] : vector<10x10xf32> to vector<10xf32>
    %68 = vector.shape_cast %67 : vector<10xf32> to vector<10x1xf32>
    %69 = tpu.reciprocal %68 {approx = true} : vector<10x1xf32> -> vector<10x1xf32>
    %70 = vector.broadcast %69 : vector<10x1xf32> to vector<10x10xf32>
    %71 = arith.mulf %66, %70 : vector<10x10xf32>
    %cst_29 = arith.constant dense<0.000000e+00> : vector<10x8xf32>
    %72 = tpu.matmul %71, %57, %cst_29 {dimension_numbers = #tpu.dot_dimension_numbers<[1], [0], [0], [1], [0, 0, 1, 1], [], []>} : vector<10x10xf32>, vector<10x8xf32>, vector<10x8xf32> -> vector<10x8xf32>
    %73 = vector.extract_strided_slice %36 {offsets = [0, 16], sizes = [10, 8], strides = [1, 1]} : vector<10x96xf32> to vector<10x8xf32>
    %74 = vector.extract_strided_slice %36 {offsets = [0, 48], sizes = [10, 8], strides = [1, 1]} : vector<10x96xf32> to vector<10x8xf32>
    %75 = vector.extract_strided_slice %36 {offsets = [0, 80], sizes = [10, 8], strides = [1, 1]} : vector<10x96xf32> to vector<10x8xf32>
    %cst_30 = arith.constant dense<0.000000e+00> : vector<10x10xf32>
    %76 = tpu.matmul %73, %74, %cst_30 {dimension_numbers = #tpu.dot_dimension_numbers<[1], [1], [0], [0], [0, 0, 1, 0], [], []>} : vector<10x8xf32>, vector<10x8xf32>, vector<10x10xf32> -> vector<10x10xf32>
    %cst_31 = arith.constant 0.353553385 : f32
    %77 = vector.broadcast %cst_31 : f32 to vector<10x10xf32>
    %78 = arith.mulf %76, %77 : vector<10x10xf32>
    %79 = arith.addf %78, %0 : vector<10x10xf32>
    %cst_32 = arith.constant dense<0xFF800000> : vector<10xf32>
    %80 = vector.multi_reduction <maximumf>, %79, %cst_32 [1] : vector<10x10xf32> to vector<10xf32>
    %81 = vector.shape_cast %80 : vector<10xf32> to vector<10x1xf32>
    %82 = vector.broadcast %81 : vector<10x1xf32> to vector<10x10xf32>
    %83 = arith.subf %79, %82 : vector<10x10xf32>
    %84 = math.exp %83 : vector<10x10xf32>
    %cst_33 = arith.constant dense<0.000000e+00> : vector<10xf32>
    %85 = vector.multi_reduction <add>, %84, %cst_33 [1] : vector<10x10xf32> to vector<10xf32>
    %86 = vector.shape_cast %85 : vector<10xf32> to vector<10x1xf32>
    %87 = tpu.reciprocal %86 {approx = true} : vector<10x1xf32> -> vector<10x1xf32>
    %88 = vector.broadcast %87 : vector<10x1xf32> to vector<10x10xf32>
    %89 = arith.mulf %84, %88 : vector<10x10xf32>
    %cst_34 = arith.constant dense<0.000000e+00> : vector<10x8xf32>
    %90 = tpu.matmul %89, %75, %cst_34 {dimension_numbers = #tpu.dot_dimension_numbers<[1], [0], [0], [1], [0, 0, 1, 1], [], []>} : vector<10x10xf32>, vector<10x8xf32>, vector<10x8xf32> -> vector<10x8xf32>
    %91 = vector.extract_strided_slice %36 {offsets = [0, 24], sizes = [10, 8], strides = [1, 1]} : vector<10x96xf32> to vector<10x8xf32>
    %92 = vector.extract_strided_slice %36 {offsets = [0, 56], sizes = [10, 8], strides = [1, 1]} : vector<10x96xf32> to vector<10x8xf32>
    %93 = vector.extract_strided_slice %36 {offsets = [0, 88], sizes = [10, 8], strides = [1, 1]} : vector<10x96xf32> to vector<10x8xf32>
    %cst_35 = arith.constant dense<0.000000e+00> : vector<10x10xf32>
    %94 = tpu.matmul %91, %92, %cst_35 {dimension_numbers = #tpu.dot_dimension_numbers<[1], [1], [0], [0], [0, 0, 1, 0], [], []>} : vector<10x8xf32>, vector<10x8xf32>, vector<10x10xf32> -> vector<10x10xf32>
    %cst_36 = arith.constant 0.353553385 : f32
    %95 = vector.broadcast %cst_36 : f32 to vector<10x10xf32>
    %96 = arith.mulf %94, %95 : vector<10x10xf32>
    %97 = arith.addf %96, %0 : vector<10x10xf32>
    %cst_37 = arith.constant dense<0xFF800000> : vector<10xf32>
    %98 = vector.multi_reduction <maximumf>, %97, %cst_37 [1] : vector<10x10xf32> to vector<10xf32>
    %99 = vector.shape_cast %98 : vector<10xf32> to vector<10x1xf32>
    %100 = vector.broadcast %99 : vector<10x1xf32> to vector<10x10xf32>
    %101 = arith.subf %97, %100 : vector<10x10xf32>
    %102 = math.exp %101 : vector<10x10xf32>
    %cst_38 = arith.constant dense<0.000000e+00> : vector<10xf32>
    %103 = vector.multi_reduction <add>, %102, %cst_38 [1] : vector<10x10xf32> to vector<10xf32>
    %104 = vector.shape_cast %103 : vector<10xf32> to vector<10x1xf32>
    %105 = tpu.reciprocal %104 {approx = true} : vector<10x1xf32> -> vector<10x1xf32>
    %106 = vector.broadcast %105 : vector<10x1xf32> to vector<10x10xf32>
    %107 = arith.mulf %102, %106 : vector<10x10xf32>
    %cst_39 = arith.constant dense<0.000000e+00> : vector<10x8xf32>
    %108 = tpu.matmul %107, %93, %cst_39 {dimension_numbers = #tpu.dot_dimension_numbers<[1], [0], [0], [1], [0, 0, 1, 1], [], []>} : vector<10x10xf32>, vector<10x8xf32>, vector<10x8xf32> -> vector<10x8xf32>
    %109 = tpu.concatenate %54, %72, %90, %108 in 1 : vector<10x8xf32>, vector<10x8xf32>, vector<10x8xf32>, vector<10x8xf32> -> vector<10x32xf32>
    %cst_40 = arith.constant dense<0.000000e+00> : vector<10x32xf32>
    %110 = tpu.matmul %109, %31, %cst_40 {dimension_numbers = #tpu.dot_dimension_numbers<[1], [0], [0], [1], [0, 0, 1, 1], [], []>} : vector<10x32xf32>, vector<32x32xf32>, vector<10x32xf32> -> vector<10x32xf32>
    %111 = vector.broadcast %33 : vector<1x32xf32> to vector<10x32xf32>
    %112 = arith.addf %110, %111 : vector<10x32xf32>
    %113 = arith.addf %3, %112 : vector<10x32xf32>
    %114 = vector.extract_strided_slice %5 {offsets = [4, 0], sizes = [1, 32], strides = [1, 1]} : vector<8x128xf32> to vector<1x32xf32>
    %115 = vector.extract_strided_slice %5 {offsets = [5, 0], sizes = [1, 32], strides = [1, 1]} : vector<8x128xf32> to vector<1x32xf32>
    %cst_41 = arith.constant dense<0.000000e+00> : vector<10xf32>
    %116 = vector.multi_reduction <add>, %113, %cst_41 [1] : vector<10x32xf32> to vector<10xf32>
    %117 = vector.shape_cast %116 : vector<10xf32> to vector<10x1xf32>
    %cst_42 = arith.constant 3.200000e+01 : f32
    %118 = vector.broadcast %cst_42 : f32 to vector<10x1xf32>
    %119 = arith.divf %117, %118 : vector<10x1xf32>
    %120 = vector.broadcast %119 : vector<10x1xf32> to vector<10x32xf32>
    %121 = arith.subf %113, %120 : vector<10x32xf32>
    %122 = arith.mulf %121, %121 : vector<10x32xf32>
    %cst_43 = arith.constant dense<0.000000e+00> : vector<10xf32>
    %123 = vector.multi_reduction <add>, %122, %cst_43 [1] : vector<10x32xf32> to vector<10xf32>
    %124 = vector.shape_cast %123 : vector<10xf32> to vector<10x1xf32>
    %cst_44 = arith.constant 3.200000e+01 : f32
    %125 = vector.broadcast %cst_44 : f32 to vector<10x1xf32>
    %126 = arith.divf %124, %125 : vector<10x1xf32>
    %cst_45 = arith.constant 9.99999997E-7 : f32
    %127 = vector.broadcast %cst_45 : f32 to vector<10x1xf32>
    %128 = arith.addf %126, %127 : vector<10x1xf32>
    %129 = math.rsqrt %128 : vector<10x1xf32>
    %130 = vector.broadcast %129 : vector<10x1xf32> to vector<10x32xf32>
    %131 = arith.mulf %121, %130 : vector<10x32xf32>
    %132 = vector.broadcast %114 : vector<1x32xf32> to vector<10x32xf32>
    %133 = arith.mulf %131, %132 : vector<10x32xf32>
    %134 = vector.broadcast %115 : vector<1x32xf32> to vector<10x32xf32>
    %135 = arith.addf %133, %134 : vector<10x32xf32>
    %c0_46 = arith.constant 0 : index
    %c0_47 = arith.constant 0 : index
    %c0_48 = arith.constant 0 : index
    %136 = vector.load %arg5[%c0_46, %c0_47, %c0_48] : memref<2x32x64xf32, #tpu.memory_space<vmem>>, vector<1x32x64xf32>
    %137 = vector.shape_cast %136 : vector<1x32x64xf32> to vector<32x64xf32>
    %cst_49 = arith.constant dense<0.000000e+00> : vector<10x64xf32>
    %138 = tpu.matmul %135, %137, %cst_49 {dimension_numbers = #tpu.dot_dimension_numbers<[1], [0], [0], [1], [0, 0, 1, 1], [], []>} : vector<10x32xf32>, vector<32x64xf32>, vector<10x64xf32> -> vector<10x64xf32>
    %139 = vector.extract_strided_slice %5 {offsets = [6, 0], sizes = [1, 64], strides = [1, 1]} : vector<8x128xf32> to vector<1x64xf32>
    %140 = vector.broadcast %139 : vector<1x64xf32> to vector<10x64xf32>
    %141 = arith.addf %138, %140 : vector<10x64xf32>
    %cst_50 = arith.constant 5.000000e-01 : f32
    %142 = vector.broadcast %cst_50 : f32 to vector<10x64xf32>
    %143 = arith.mulf %142, %141 : vector<10x64xf32>
    %cst_51 = arith.constant 0.707106769 : f32
    %144 = vector.broadcast %cst_51 : f32 to vector<10x64xf32>
    %145 = arith.mulf %141, %144 : vector<10x64xf32>
    %cst_52 = arith.constant 0.000000e+00 : f32
    %146 = vector.broadcast %cst_52 : f32 to vector<10x64xf32>
    %147 = arith.cmpf olt, %145, %146 : vector<10x64xf32>
    %cst_53 = arith.constant -1.000000e+00 : f32
    %cst_54 = arith.constant 1.000000e+00 : f32
    %148 = vector.broadcast %cst_53 : f32 to vector<10x64xf32>
    %149 = vector.broadcast %cst_54 : f32 to vector<10x64xf32>
    %150 = arith.select %147, %148, %149 : vector<10x64xi1>, vector<10x64xf32>
    %151 = math.absf %145 : vector<10x64xf32>
    %cst_55 = arith.constant 0.327591091 : f32
    %152 = vector.broadcast %cst_55 : f32 to vector<10x64xf32>
    %153 = arith.mulf %152, %151 : vector<10x64xf32>
    %cst_56 = arith.constant 1.000000e+00 : f32
    %154 = vector.broadcast %cst_56 : f32 to vector<10x64xf32>
    %155 = arith.addf %154, %153 : vector<10x64xf32>
    %156 = tpu.reciprocal %155 {approx = true} : vector<10x64xf32> -> vector<10x64xf32>
    %cst_57 = arith.constant 1.06140542 : f32
    %157 = vector.broadcast %cst_57 : f32 to vector<10x64xf32>
    %158 = arith.mulf %156, %157 : vector<10x64xf32>
    %cst_58 = arith.constant -1.45315206 : f32
    %159 = vector.broadcast %cst_58 : f32 to vector<10x64xf32>
    %160 = arith.addf %159, %158 : vector<10x64xf32>
    %161 = arith.mulf %156, %160 : vector<10x64xf32>
    %cst_59 = arith.constant 1.42141378 : f32
    %162 = vector.broadcast %cst_59 : f32 to vector<10x64xf32>
    %163 = arith.addf %162, %161 : vector<10x64xf32>
    %164 = arith.mulf %156, %163 : vector<10x64xf32>
    %cst_60 = arith.constant -0.284496725 : f32
    %165 = vector.broadcast %cst_60 : f32 to vector<10x64xf32>
    %166 = arith.addf %165, %164 : vector<10x64xf32>
    %167 = arith.mulf %156, %166 : vector<10x64xf32>
    %cst_61 = arith.constant 0.254829586 : f32
    %168 = vector.broadcast %cst_61 : f32 to vector<10x64xf32>
    %169 = arith.addf %168, %167 : vector<10x64xf32>
    %170 = arith.mulf %156, %169 : vector<10x64xf32>
    %cst_62 = arith.constant 0.000000e+00 : f32
    %171 = vector.broadcast %cst_62 : f32 to vector<10x64xf32>
    %172 = arith.subf %171, %151 : vector<10x64xf32>
    %173 = arith.mulf %172, %151 : vector<10x64xf32>
    %174 = math.exp %173 : vector<10x64xf32>
    %175 = arith.mulf %170, %174 : vector<10x64xf32>
    %cst_63 = arith.constant 1.000000e+00 : f32
    %176 = vector.broadcast %cst_63 : f32 to vector<10x64xf32>
    %177 = arith.subf %176, %175 : vector<10x64xf32>
    %178 = arith.mulf %150, %177 : vector<10x64xf32>
    %cst_64 = arith.constant 1.000000e+00 : f32
    %179 = vector.broadcast %cst_64 : f32 to vector<10x64xf32>
    %180 = arith.addf %179, %178 : vector<10x64xf32>
    %181 = arith.mulf %143, %180 : vector<10x64xf32>
    %c0_65 = arith.constant 0 : index
    %c0_66 = arith.constant 0 : index
    %c0_67 = arith.constant 0 : index
    %182 = vector.load %arg6[%c0_65, %c0_66, %c0_67] : memref<2x64x32xf32, #tpu.memory_space<vmem>>, vector<1x64x32xf32>
    %183 = vector.shape_cast %182 : vector<1x64x32xf32> to vector<64x32xf32>
    %cst_68 = arith.constant dense<0.000000e+00> : vector<10x32xf32>
    %184 = tpu.matmul %181, %183, %cst_68 {dimension_numbers = #tpu.dot_dimension_numbers<[1], [0], [0], [1], [0, 0, 1, 1], [], []>} : vector<10x64xf32>, vector<64x32xf32>, vector<10x32xf32> -> vector<10x32xf32>
    %185 = arith.addf %113, %184 : vector<10x32xf32>
    %186 = vector.extract_strided_slice %5 {offsets = [7, 0], sizes = [1, 32], strides = [1, 1]} : vector<8x128xf32> to vector<1x32xf32>
    %187 = vector.broadcast %186 : vector<1x32xf32> to vector<10x32xf32>
    %188 = arith.addf %185, %187 : vector<10x32xf32>
    %c1 = arith.constant 1 : index
    %c0_69 = arith.constant 0 : index
    %c0_70 = arith.constant 0 : index
    %189 = vector.load %arg7[%c1, %c0_69, %c0_70] : memref<2x8x128xf32, #tpu.memory_space<vmem>>, vector<1x8x128xf32>
    %190 = vector.shape_cast %189 : vector<1x8x128xf32> to vector<8x128xf32>
    %191 = vector.extract_strided_slice %190 {offsets = [0, 0], sizes = [1, 32], strides = [1, 1]} : vector<8x128xf32> to vector<1x32xf32>
    %192 = vector.extract_strided_slice %190 {offsets = [1, 0], sizes = [1, 32], strides = [1, 1]} : vector<8x128xf32> to vector<1x32xf32>
    %cst_71 = arith.constant dense<0.000000e+00> : vector<10xf32>
    %193 = vector.multi_reduction <add>, %188, %cst_71 [1] : vector<10x32xf32> to vector<10xf32>
    %194 = vector.shape_cast %193 : vector<10xf32> to vector<10x1xf32>
    %cst_72 = arith.constant 3.200000e+01 : f32
    %195 = vector.broadcast %cst_72 : f32 to vector<10x1xf32>
    %196 = arith.divf %194, %195 : vector<10x1xf32>
    %197 = vector.broadcast %196 : vector<10x1xf32> to vector<10x32xf32>
    %198 = arith.subf %188, %197 : vector<10x32xf32>
    %199 = arith.mulf %198, %198 : vector<10x32xf32>
    %cst_73 = arith.constant dense<0.000000e+00> : vector<10xf32>
    %200 = vector.multi_reduction <add>, %199, %cst_73 [1] : vector<10x32xf32> to vector<10xf32>
    %201 = vector.shape_cast %200 : vector<10xf32> to vector<10x1xf32>
    %cst_74 = arith.constant 3.200000e+01 : f32
    %202 = vector.broadcast %cst_74 : f32 to vector<10x1xf32>
    %203 = arith.divf %201, %202 : vector<10x1xf32>
    %cst_75 = arith.constant 9.99999997E-7 : f32
    %204 = vector.broadcast %cst_75 : f32 to vector<10x1xf32>
    %205 = arith.addf %203, %204 : vector<10x1xf32>
    %206 = math.rsqrt %205 : vector<10x1xf32>
    %207 = vector.broadcast %206 : vector<10x1xf32> to vector<10x32xf32>
    %208 = arith.mulf %198, %207 : vector<10x32xf32>
    %209 = vector.broadcast %191 : vector<1x32xf32> to vector<10x32xf32>
    %210 = arith.mulf %208, %209 : vector<10x32xf32>
    %211 = vector.broadcast %192 : vector<1x32xf32> to vector<10x32xf32>
    %212 = arith.addf %210, %211 : vector<10x32xf32>
    %c1_76 = arith.constant 1 : index
    %c0_77 = arith.constant 0 : index
    %c0_78 = arith.constant 0 : index
    %213 = vector.load %arg3[%c1_76, %c0_77, %c0_78] : memref<2x32x96xf32, #tpu.memory_space<vmem>>, vector<1x32x96xf32>
    %214 = vector.shape_cast %213 : vector<1x32x96xf32> to vector<32x96xf32>
    %c1_79 = arith.constant 1 : index
    %c0_80 = arith.constant 0 : index
    %c0_81 = arith.constant 0 : index
    %215 = vector.load %arg4[%c1_79, %c0_80, %c0_81] : memref<2x32x32xf32, #tpu.memory_space<vmem>>, vector<1x32x32xf32>
    %216 = vector.shape_cast %215 : vector<1x32x32xf32> to vector<32x32xf32>
    %217 = vector.extract_strided_slice %190 {offsets = [2, 0], sizes = [1, 96], strides = [1, 1]} : vector<8x128xf32> to vector<1x96xf32>
    %218 = vector.extract_strided_slice %190 {offsets = [3, 0], sizes = [1, 32], strides = [1, 1]} : vector<8x128xf32> to vector<1x32xf32>
    %cst_82 = arith.constant dense<0.000000e+00> : vector<10x96xf32>
    %219 = tpu.matmul %212, %214, %cst_82 {dimension_numbers = #tpu.dot_dimension_numbers<[1], [0], [0], [1], [0, 0, 1, 1], [], []>} : vector<10x32xf32>, vector<32x96xf32>, vector<10x96xf32> -> vector<10x96xf32>
    %220 = vector.broadcast %217 : vector<1x96xf32> to vector<10x96xf32>
    %221 = arith.addf %219, %220 : vector<10x96xf32>
    %222 = vector.extract_strided_slice %221 {offsets = [0, 0], sizes = [10, 8], strides = [1, 1]} : vector<10x96xf32> to vector<10x8xf32>
    %223 = vector.extract_strided_slice %221 {offsets = [0, 32], sizes = [10, 8], strides = [1, 1]} : vector<10x96xf32> to vector<10x8xf32>
    %224 = vector.extract_strided_slice %221 {offsets = [0, 64], sizes = [10, 8], strides = [1, 1]} : vector<10x96xf32> to vector<10x8xf32>
    %cst_83 = arith.constant dense<0.000000e+00> : vector<10x10xf32>
    %225 = tpu.matmul %222, %223, %cst_83 {dimension_numbers = #tpu.dot_dimension_numbers<[1], [1], [0], [0], [0, 0, 1, 0], [], []>} : vector<10x8xf32>, vector<10x8xf32>, vector<10x10xf32> -> vector<10x10xf32>
    %cst_84 = arith.constant 0.353553385 : f32
    %226 = vector.broadcast %cst_84 : f32 to vector<10x10xf32>
    %227 = arith.mulf %225, %226 : vector<10x10xf32>
    %228 = arith.addf %227, %0 : vector<10x10xf32>
    %cst_85 = arith.constant dense<0xFF800000> : vector<10xf32>
    %229 = vector.multi_reduction <maximumf>, %228, %cst_85 [1] : vector<10x10xf32> to vector<10xf32>
    %230 = vector.shape_cast %229 : vector<10xf32> to vector<10x1xf32>
    %231 = vector.broadcast %230 : vector<10x1xf32> to vector<10x10xf32>
    %232 = arith.subf %228, %231 : vector<10x10xf32>
    %233 = math.exp %232 : vector<10x10xf32>
    %cst_86 = arith.constant dense<0.000000e+00> : vector<10xf32>
    %234 = vector.multi_reduction <add>, %233, %cst_86 [1] : vector<10x10xf32> to vector<10xf32>
    %235 = vector.shape_cast %234 : vector<10xf32> to vector<10x1xf32>
    %236 = tpu.reciprocal %235 {approx = true} : vector<10x1xf32> -> vector<10x1xf32>
    %237 = vector.broadcast %236 : vector<10x1xf32> to vector<10x10xf32>
    %238 = arith.mulf %233, %237 : vector<10x10xf32>
    %cst_87 = arith.constant dense<0.000000e+00> : vector<10x8xf32>
    %239 = tpu.matmul %238, %224, %cst_87 {dimension_numbers = #tpu.dot_dimension_numbers<[1], [0], [0], [1], [0, 0, 1, 1], [], []>} : vector<10x10xf32>, vector<10x8xf32>, vector<10x8xf32> -> vector<10x8xf32>
    %240 = vector.extract_strided_slice %221 {offsets = [0, 8], sizes = [10, 8], strides = [1, 1]} : vector<10x96xf32> to vector<10x8xf32>
    %241 = vector.extract_strided_slice %221 {offsets = [0, 40], sizes = [10, 8], strides = [1, 1]} : vector<10x96xf32> to vector<10x8xf32>
    %242 = vector.extract_strided_slice %221 {offsets = [0, 72], sizes = [10, 8], strides = [1, 1]} : vector<10x96xf32> to vector<10x8xf32>
    %cst_88 = arith.constant dense<0.000000e+00> : vector<10x10xf32>
    %243 = tpu.matmul %240, %241, %cst_88 {dimension_numbers = #tpu.dot_dimension_numbers<[1], [1], [0], [0], [0, 0, 1, 0], [], []>} : vector<10x8xf32>, vector<10x8xf32>, vector<10x10xf32> -> vector<10x10xf32>
    %cst_89 = arith.constant 0.353553385 : f32
    %244 = vector.broadcast %cst_89 : f32 to vector<10x10xf32>
    %245 = arith.mulf %243, %244 : vector<10x10xf32>
    %246 = arith.addf %245, %0 : vector<10x10xf32>
    %cst_90 = arith.constant dense<0xFF800000> : vector<10xf32>
    %247 = vector.multi_reduction <maximumf>, %246, %cst_90 [1] : vector<10x10xf32> to vector<10xf32>
    %248 = vector.shape_cast %247 : vector<10xf32> to vector<10x1xf32>
    %249 = vector.broadcast %248 : vector<10x1xf32> to vector<10x10xf32>
    %250 = arith.subf %246, %249 : vector<10x10xf32>
    %251 = math.exp %250 : vector<10x10xf32>
    %cst_91 = arith.constant dense<0.000000e+00> : vector<10xf32>
    %252 = vector.multi_reduction <add>, %251, %cst_91 [1] : vector<10x10xf32> to vector<10xf32>
    %253 = vector.shape_cast %252 : vector<10xf32> to vector<10x1xf32>
    %254 = tpu.reciprocal %253 {approx = true} : vector<10x1xf32> -> vector<10x1xf32>
    %255 = vector.broadcast %254 : vector<10x1xf32> to vector<10x10xf32>
    %256 = arith.mulf %251, %255 : vector<10x10xf32>
    %cst_92 = arith.constant dense<0.000000e+00> : vector<10x8xf32>
    %257 = tpu.matmul %256, %242, %cst_92 {dimension_numbers = #tpu.dot_dimension_numbers<[1], [0], [0], [1], [0, 0, 1, 1], [], []>} : vector<10x10xf32>, vector<10x8xf32>, vector<10x8xf32> -> vector<10x8xf32>
    %258 = vector.extract_strided_slice %221 {offsets = [0, 16], sizes = [10, 8], strides = [1, 1]} : vector<10x96xf32> to vector<10x8xf32>
    %259 = vector.extract_strided_slice %221 {offsets = [0, 48], sizes = [10, 8], strides = [1, 1]} : vector<10x96xf32> to vector<10x8xf32>
    %260 = vector.extract_strided_slice %221 {offsets = [0, 80], sizes = [10, 8], strides = [1, 1]} : vector<10x96xf32> to vector<10x8xf32>
    %cst_93 = arith.constant dense<0.000000e+00> : vector<10x10xf32>
    %261 = tpu.matmul %258, %259, %cst_93 {dimension_numbers = #tpu.dot_dimension_numbers<[1], [1], [0], [0], [0, 0, 1, 0], [], []>} : vector<10x8xf32>, vector<10x8xf32>, vector<10x10xf32> -> vector<10x10xf32>
    %cst_94 = arith.constant 0.353553385 : f32
    %262 = vector.broadcast %cst_94 : f32 to vector<10x10xf32>
    %263 = arith.mulf %261, %262 : vector<10x10xf32>
    %264 = arith.addf %263, %0 : vector<10x10xf32>
    %cst_95 = arith.constant dense<0xFF800000> : vector<10xf32>
    %265 = vector.multi_reduction <maximumf>, %264, %cst_95 [1] : vector<10x10xf32> to vector<10xf32>
    %266 = vector.shape_cast %265 : vector<10xf32> to vector<10x1xf32>
    %267 = vector.broadcast %266 : vector<10x1xf32> to vector<10x10xf32>
    %268 = arith.subf %264, %267 : vector<10x10xf32>
    %269 = math.exp %268 : vector<10x10xf32>
    %cst_96 = arith.constant dense<0.000000e+00> : vector<10xf32>
    %270 = vector.multi_reduction <add>, %269, %cst_96 [1] : vector<10x10xf32> to vector<10xf32>
    %271 = vector.shape_cast %270 : vector<10xf32> to vector<10x1xf32>
    %272 = tpu.reciprocal %271 {approx = true} : vector<10x1xf32> -> vector<10x1xf32>
    %273 = vector.broadcast %272 : vector<10x1xf32> to vector<10x10xf32>
    %274 = arith.mulf %269, %273 : vector<10x10xf32>
    %cst_97 = arith.constant dense<0.000000e+00> : vector<10x8xf32>
    %275 = tpu.matmul %274, %260, %cst_97 {dimension_numbers = #tpu.dot_dimension_numbers<[1], [0], [0], [1], [0, 0, 1, 1], [], []>} : vector<10x10xf32>, vector<10x8xf32>, vector<10x8xf32> -> vector<10x8xf32>
    %276 = vector.extract_strided_slice %221 {offsets = [0, 24], sizes = [10, 8], strides = [1, 1]} : vector<10x96xf32> to vector<10x8xf32>
    %277 = vector.extract_strided_slice %221 {offsets = [0, 56], sizes = [10, 8], strides = [1, 1]} : vector<10x96xf32> to vector<10x8xf32>
    %278 = vector.extract_strided_slice %221 {offsets = [0, 88], sizes = [10, 8], strides = [1, 1]} : vector<10x96xf32> to vector<10x8xf32>
    %cst_98 = arith.constant dense<0.000000e+00> : vector<10x10xf32>
    %279 = tpu.matmul %276, %277, %cst_98 {dimension_numbers = #tpu.dot_dimension_numbers<[1], [1], [0], [0], [0, 0, 1, 0], [], []>} : vector<10x8xf32>, vector<10x8xf32>, vector<10x10xf32> -> vector<10x10xf32>
    %cst_99 = arith.constant 0.353553385 : f32
    %280 = vector.broadcast %cst_99 : f32 to vector<10x10xf32>
    %281 = arith.mulf %279, %280 : vector<10x10xf32>
    %282 = arith.addf %281, %0 : vector<10x10xf32>
    %cst_100 = arith.constant dense<0xFF800000> : vector<10xf32>
    %283 = vector.multi_reduction <maximumf>, %282, %cst_100 [1] : vector<10x10xf32> to vector<10xf32>
    %284 = vector.shape_cast %283 : vector<10xf32> to vector<10x1xf32>
    %285 = vector.broadcast %284 : vector<10x1xf32> to vector<10x10xf32>
    %286 = arith.subf %282, %285 : vector<10x10xf32>
    %287 = math.exp %286 : vector<10x10xf32>
    %cst_101 = arith.constant dense<0.000000e+00> : vector<10xf32>
    %288 = vector.multi_reduction <add>, %287, %cst_101 [1] : vector<10x10xf32> to vector<10xf32>
    %289 = vector.shape_cast %288 : vector<10xf32> to vector<10x1xf32>
    %290 = tpu.reciprocal %289 {approx = true} : vector<10x1xf32> -> vector<10x1xf32>
    %291 = vector.broadcast %290 : vector<10x1xf32> to vector<10x10xf32>
    %292 = arith.mulf %287, %291 : vector<10x10xf32>
    %cst_102 = arith.constant dense<0.000000e+00> : vector<10x8xf32>
    %293 = tpu.matmul %292, %278, %cst_102 {dimension_numbers = #tpu.dot_dimension_numbers<[1], [0], [0], [1], [0, 0, 1, 1], [], []>} : vector<10x10xf32>, vector<10x8xf32>, vector<10x8xf32> -> vector<10x8xf32>
    %294 = tpu.concatenate %239, %257, %275, %293 in 1 : vector<10x8xf32>, vector<10x8xf32>, vector<10x8xf32>, vector<10x8xf32> -> vector<10x32xf32>
    %cst_103 = arith.constant dense<0.000000e+00> : vector<10x32xf32>
    %295 = tpu.matmul %294, %216, %cst_103 {dimension_numbers = #tpu.dot_dimension_numbers<[1], [0], [0], [1], [0, 0, 1, 1], [], []>} : vector<10x32xf32>, vector<32x32xf32>, vector<10x32xf32> -> vector<10x32xf32>
    %296 = vector.broadcast %218 : vector<1x32xf32> to vector<10x32xf32>
    %297 = arith.addf %295, %296 : vector<10x32xf32>
    %298 = arith.addf %188, %297 : vector<10x32xf32>
    %299 = vector.extract_strided_slice %190 {offsets = [4, 0], sizes = [1, 32], strides = [1, 1]} : vector<8x128xf32> to vector<1x32xf32>
    %300 = vector.extract_strided_slice %190 {offsets = [5, 0], sizes = [1, 32], strides = [1, 1]} : vector<8x128xf32> to vector<1x32xf32>
    %cst_104 = arith.constant dense<0.000000e+00> : vector<10xf32>
    %301 = vector.multi_reduction <add>, %298, %cst_104 [1] : vector<10x32xf32> to vector<10xf32>
    %302 = vector.shape_cast %301 : vector<10xf32> to vector<10x1xf32>
    %cst_105 = arith.constant 3.200000e+01 : f32
    %303 = vector.broadcast %cst_105 : f32 to vector<10x1xf32>
    %304 = arith.divf %302, %303 : vector<10x1xf32>
    %305 = vector.broadcast %304 : vector<10x1xf32> to vector<10x32xf32>
    %306 = arith.subf %298, %305 : vector<10x32xf32>
    %307 = arith.mulf %306, %306 : vector<10x32xf32>
    %cst_106 = arith.constant dense<0.000000e+00> : vector<10xf32>
    %308 = vector.multi_reduction <add>, %307, %cst_106 [1] : vector<10x32xf32> to vector<10xf32>
    %309 = vector.shape_cast %308 : vector<10xf32> to vector<10x1xf32>
    %cst_107 = arith.constant 3.200000e+01 : f32
    %310 = vector.broadcast %cst_107 : f32 to vector<10x1xf32>
    %311 = arith.divf %309, %310 : vector<10x1xf32>
    %cst_108 = arith.constant 9.99999997E-7 : f32
    %312 = vector.broadcast %cst_108 : f32 to vector<10x1xf32>
    %313 = arith.addf %311, %312 : vector<10x1xf32>
    %314 = math.rsqrt %313 : vector<10x1xf32>
    %315 = vector.broadcast %314 : vector<10x1xf32> to vector<10x32xf32>
    %316 = arith.mulf %306, %315 : vector<10x32xf32>
    %317 = vector.broadcast %299 : vector<1x32xf32> to vector<10x32xf32>
    %318 = arith.mulf %316, %317 : vector<10x32xf32>
    %319 = vector.broadcast %300 : vector<1x32xf32> to vector<10x32xf32>
    %320 = arith.addf %318, %319 : vector<10x32xf32>
    %c1_109 = arith.constant 1 : index
    %c0_110 = arith.constant 0 : index
    %c0_111 = arith.constant 0 : index
    %321 = vector.load %arg5[%c1_109, %c0_110, %c0_111] : memref<2x32x64xf32, #tpu.memory_space<vmem>>, vector<1x32x64xf32>
    %322 = vector.shape_cast %321 : vector<1x32x64xf32> to vector<32x64xf32>
    %cst_112 = arith.constant dense<0.000000e+00> : vector<10x64xf32>
    %323 = tpu.matmul %320, %322, %cst_112 {dimension_numbers = #tpu.dot_dimension_numbers<[1], [0], [0], [1], [0, 0, 1, 1], [], []>} : vector<10x32xf32>, vector<32x64xf32>, vector<10x64xf32> -> vector<10x64xf32>
    %324 = vector.extract_strided_slice %190 {offsets = [6, 0], sizes = [1, 64], strides = [1, 1]} : vector<8x128xf32> to vector<1x64xf32>
    %325 = vector.broadcast %324 : vector<1x64xf32> to vector<10x64xf32>
    %326 = arith.addf %323, %325 : vector<10x64xf32>
    %cst_113 = arith.constant 5.000000e-01 : f32
    %327 = vector.broadcast %cst_113 : f32 to vector<10x64xf32>
    %328 = arith.mulf %327, %326 : vector<10x64xf32>
    %cst_114 = arith.constant 0.707106769 : f32
    %329 = vector.broadcast %cst_114 : f32 to vector<10x64xf32>
    %330 = arith.mulf %326, %329 : vector<10x64xf32>
    %cst_115 = arith.constant 0.000000e+00 : f32
    %331 = vector.broadcast %cst_115 : f32 to vector<10x64xf32>
    %332 = arith.cmpf olt, %330, %331 : vector<10x64xf32>
    %cst_116 = arith.constant -1.000000e+00 : f32
    %cst_117 = arith.constant 1.000000e+00 : f32
    %333 = vector.broadcast %cst_116 : f32 to vector<10x64xf32>
    %334 = vector.broadcast %cst_117 : f32 to vector<10x64xf32>
    %335 = arith.select %332, %333, %334 : vector<10x64xi1>, vector<10x64xf32>
    %336 = math.absf %330 : vector<10x64xf32>
    %cst_118 = arith.constant 0.327591091 : f32
    %337 = vector.broadcast %cst_118 : f32 to vector<10x64xf32>
    %338 = arith.mulf %337, %336 : vector<10x64xf32>
    %cst_119 = arith.constant 1.000000e+00 : f32
    %339 = vector.broadcast %cst_119 : f32 to vector<10x64xf32>
    %340 = arith.addf %339, %338 : vector<10x64xf32>
    %341 = tpu.reciprocal %340 {approx = true} : vector<10x64xf32> -> vector<10x64xf32>
    %cst_120 = arith.constant 1.06140542 : f32
    %342 = vector.broadcast %cst_120 : f32 to vector<10x64xf32>
    %343 = arith.mulf %341, %342 : vector<10x64xf32>
    %cst_121 = arith.constant -1.45315206 : f32
    %344 = vector.broadcast %cst_121 : f32 to vector<10x64xf32>
    %345 = arith.addf %344, %343 : vector<10x64xf32>
    %346 = arith.mulf %341, %345 : vector<10x64xf32>
    %cst_122 = arith.constant 1.42141378 : f32
    %347 = vector.broadcast %cst_122 : f32 to vector<10x64xf32>
    %348 = arith.addf %347, %346 : vector<10x64xf32>
    %349 = arith.mulf %341, %348 : vector<10x64xf32>
    %cst_123 = arith.constant -0.284496725 : f32
    %350 = vector.broadcast %cst_123 : f32 to vector<10x64xf32>
    %351 = arith.addf %350, %349 : vector<10x64xf32>
    %352 = arith.mulf %341, %351 : vector<10x64xf32>
    %cst_124 = arith.constant 0.254829586 : f32
    %353 = vector.broadcast %cst_124 : f32 to vector<10x64xf32>
    %354 = arith.addf %353, %352 : vector<10x64xf32>
    %355 = arith.mulf %341, %354 : vector<10x64xf32>
    %cst_125 = arith.constant 0.000000e+00 : f32
    %356 = vector.broadcast %cst_125 : f32 to vector<10x64xf32>
    %357 = arith.subf %356, %336 : vector<10x64xf32>
    %358 = arith.mulf %357, %336 : vector<10x64xf32>
    %359 = math.exp %358 : vector<10x64xf32>
    %360 = arith.mulf %355, %359 : vector<10x64xf32>
    %cst_126 = arith.constant 1.000000e+00 : f32
    %361 = vector.broadcast %cst_126 : f32 to vector<10x64xf32>
    %362 = arith.subf %361, %360 : vector<10x64xf32>
    %363 = arith.mulf %335, %362 : vector<10x64xf32>
    %cst_127 = arith.constant 1.000000e+00 : f32
    %364 = vector.broadcast %cst_127 : f32 to vector<10x64xf32>
    %365 = arith.addf %364, %363 : vector<10x64xf32>
    %366 = arith.mulf %328, %365 : vector<10x64xf32>
    %c1_128 = arith.constant 1 : index
    %c0_129 = arith.constant 0 : index
    %c0_130 = arith.constant 0 : index
    %367 = vector.load %arg6[%c1_128, %c0_129, %c0_130] : memref<2x64x32xf32, #tpu.memory_space<vmem>>, vector<1x64x32xf32>
    %368 = vector.shape_cast %367 : vector<1x64x32xf32> to vector<64x32xf32>
    %cst_131 = arith.constant dense<0.000000e+00> : vector<10x32xf32>
    %369 = tpu.matmul %366, %368, %cst_131 {dimension_numbers = #tpu.dot_dimension_numbers<[1], [0], [0], [1], [0, 0, 1, 1], [], []>} : vector<10x64xf32>, vector<64x32xf32>, vector<10x32xf32> -> vector<10x32xf32>
    %370 = arith.addf %298, %369 : vector<10x32xf32>
    %371 = vector.extract_strided_slice %190 {offsets = [7, 0], sizes = [1, 32], strides = [1, 1]} : vector<8x128xf32> to vector<1x32xf32>
    %372 = vector.broadcast %371 : vector<1x32xf32> to vector<10x32xf32>
    %373 = arith.addf %370, %372 : vector<10x32xf32>
    %c0_132 = arith.constant 0 : index
    %c0_133 = arith.constant 0 : index
    %374 = vector.load %arg8[%c0_132, %c0_133] : memref<3x128xf32, #tpu.memory_space<vmem>>, vector<3x128xf32>
    %375 = vector.extract_strided_slice %374 {offsets = [0, 0], sizes = [1, 32], strides = [1, 1]} : vector<3x128xf32> to vector<1x32xf32>
    %376 = vector.extract_strided_slice %374 {offsets = [1, 0], sizes = [1, 32], strides = [1, 1]} : vector<3x128xf32> to vector<1x32xf32>
    %cst_134 = arith.constant dense<0.000000e+00> : vector<10xf32>
    %377 = vector.multi_reduction <add>, %373, %cst_134 [1] : vector<10x32xf32> to vector<10xf32>
    %378 = vector.shape_cast %377 : vector<10xf32> to vector<10x1xf32>
    %cst_135 = arith.constant 3.200000e+01 : f32
    %379 = vector.broadcast %cst_135 : f32 to vector<10x1xf32>
    %380 = arith.divf %378, %379 : vector<10x1xf32>
    %381 = vector.broadcast %380 : vector<10x1xf32> to vector<10x32xf32>
    %382 = arith.subf %373, %381 : vector<10x32xf32>
    %383 = arith.mulf %382, %382 : vector<10x32xf32>
    %cst_136 = arith.constant dense<0.000000e+00> : vector<10xf32>
    %384 = vector.multi_reduction <add>, %383, %cst_136 [1] : vector<10x32xf32> to vector<10xf32>
    %385 = vector.shape_cast %384 : vector<10xf32> to vector<10x1xf32>
    %cst_137 = arith.constant 3.200000e+01 : f32
    %386 = vector.broadcast %cst_137 : f32 to vector<10x1xf32>
    %387 = arith.divf %385, %386 : vector<10x1xf32>
    %cst_138 = arith.constant 9.99999997E-7 : f32
    %388 = vector.broadcast %cst_138 : f32 to vector<10x1xf32>
    %389 = arith.addf %387, %388 : vector<10x1xf32>
    %390 = math.rsqrt %389 : vector<10x1xf32>
    %391 = vector.broadcast %390 : vector<10x1xf32> to vector<10x32xf32>
    %392 = arith.mulf %382, %391 : vector<10x32xf32>
    %393 = vector.broadcast %375 : vector<1x32xf32> to vector<10x32xf32>
    %394 = arith.mulf %392, %393 : vector<10x32xf32>
    %395 = vector.broadcast %376 : vector<1x32xf32> to vector<10x32xf32>
    %396 = arith.addf %394, %395 : vector<10x32xf32>
    %c0_139 = arith.constant 0 : index
    %c0_140 = arith.constant 0 : index
    %397 = vector.load %arg9[%c0_139, %c0_140] : memref<32x32xf32, #tpu.memory_space<vmem>>, vector<32x32xf32>
    %398 = vector.extract_strided_slice %374 {offsets = [2, 0], sizes = [1, 32], strides = [1, 1]} : vector<3x128xf32> to vector<1x32xf32>
    %399 = vector.extract_strided_slice %396 {offsets = [0, 0], sizes = [1, 32], strides = [1, 1]} : vector<10x32xf32> to vector<1x32xf32>
    %cst_141 = arith.constant dense<0.000000e+00> : vector<1x32xf32>
    %400 = tpu.matmul %399, %397, %cst_141 {dimension_numbers = #tpu.dot_dimension_numbers<[1], [0], [0], [1], [0, 0, 1, 1], [], []>} : vector<1x32xf32>, vector<32x32xf32>, vector<1x32xf32> -> vector<1x32xf32>
    %401 = arith.addf %400, %398 : vector<1x32xf32>
    %402 = arith.mulf %401, %401 : vector<1x32xf32>
    %cst_142 = arith.constant dense<0.000000e+00> : vector<1xf32>
    %403 = vector.multi_reduction <add>, %402, %cst_142 [1] : vector<1x32xf32> to vector<1xf32>
    %404 = vector.shape_cast %403 : vector<1xf32> to vector<1x1xf32>
    %cst_143 = arith.constant 1.000000e-24 : f32
    %405 = vector.broadcast %cst_143 : f32 to vector<1x1xf32>
    %406 = arith.maximumf %404, %405 : vector<1x1xf32>
    %407 = math.rsqrt %406 : vector<1x1xf32>
    %408 = vector.broadcast %407 : vector<1x1xf32> to vector<1x32xf32>
    %409 = arith.mulf %401, %408 : vector<1x32xf32>
    %c0_144 = arith.constant 0 : index
    %c0_145 = arith.constant 0 : index
    %410 = vector.load %arg18[%c0_144, %c0_145] : memref<2x32xf32, #tpu.memory_space<vmem>>, vector<1x32xf32>
    tpu.vector_store %arg18[%c0_144, %c0_145], %409 {strides = array<i32>} : memref<2x32xf32, #tpu.memory_space<vmem>>, vector<1x32xf32>,
    %411 = vector.extract_strided_slice %396 {offsets = [5, 0], sizes = [1, 32], strides = [1, 1]} : vector<10x32xf32> to vector<1x32xf32>
    %cst_146 = arith.constant dense<0.000000e+00> : vector<1x32xf32>
    %412 = tpu.matmul %411, %397, %cst_146 {dimension_numbers = #tpu.dot_dimension_numbers<[1], [0], [0], [1], [0, 0, 1, 1], [], []>} : vector<1x32xf32>, vector<32x32xf32>, vector<1x32xf32> -> vector<1x32xf32>
    %413 = arith.addf %412, %398 : vector<1x32xf32>
    %414 = arith.mulf %413, %413 : vector<1x32xf32>
    %cst_147 = arith.constant dense<0.000000e+00> : vector<1xf32>
    %415 = vector.multi_reduction <add>, %414, %cst_147 [1] : vector<1x32xf32> to vector<1xf32>
    %416 = vector.shape_cast %415 : vector<1xf32> to vector<1x1xf32>
    %cst_148 = arith.constant 1.000000e-24 : f32
    %417 = vector.broadcast %cst_148 : f32 to vector<1x1xf32>
    %418 = arith.maximumf %416, %417 : vector<1x1xf32>
    %419 = math.rsqrt %418 : vector<1x1xf32>
    %420 = vector.broadcast %419 : vector<1x1xf32> to vector<1x32xf32>
    %421 = arith.mulf %413, %420 : vector<1x32xf32>
    %c1_149 = arith.constant 1 : index
    %c0_150 = arith.constant 0 : index
    %422 = vector.load %arg18[%c1_149, %c0_150] : memref<2x32xf32, #tpu.memory_space<vmem>>, vector<1x32xf32>
    tpu.vector_store %arg18[%c1_149, %c0_150], %421 {strides = array<i32>} : memref<2x32xf32, #tpu.memory_space<vmem>>, vector<1x32xf32>,
    %c0_151 = arith.constant 0 : index
    %c0_152 = arith.constant 0 : index
    %423 = vector.load %arg11[%c0_151, %c0_152] : memref<16x16xf32, #tpu.memory_space<vmem>>, vector<16x16xf32>
    %c0_153 = arith.constant 0 : index
    %c0_154 = arith.constant 0 : index
    %424 = vector.load %arg17[%c0_153, %c0_154] : memref<2x128xf32, #tpu.memory_space<vmem>>, vector<2x128xf32>
    %c0_155 = arith.constant 0 : index
    %c0_156 = arith.constant 0 : index
    %425 = vector.load %arg10[%c0_155, %c0_156] : memref<16x32xf32, #tpu.memory_space<vmem>>, vector<16x32xf32>
    %426 = vector.extract_strided_slice %424 {offsets = [0, 0], sizes = [1, 32], strides = [1, 1]} : vector<2x128xf32> to vector<1x32xf32>
    %427 = vector.extract_strided_slice %424 {offsets = [1, 0], sizes = [1, 32], strides = [1, 1]} : vector<2x128xf32> to vector<1x32xf32>
    %cst_157 = arith.constant dense<0.000000e+00> : vector<16xf32>
    %428 = vector.multi_reduction <add>, %425, %cst_157 [1] : vector<16x32xf32> to vector<16xf32>
    %429 = vector.shape_cast %428 : vector<16xf32> to vector<16x1xf32>
    %cst_158 = arith.constant 3.200000e+01 : f32
    %430 = vector.broadcast %cst_158 : f32 to vector<16x1xf32>
    %431 = arith.divf %429, %430 : vector<16x1xf32>
    %432 = vector.broadcast %431 : vector<16x1xf32> to vector<16x32xf32>
    %433 = arith.subf %425, %432 : vector<16x32xf32>
    %434 = arith.mulf %433, %433 : vector<16x32xf32>
    %cst_159 = arith.constant dense<0.000000e+00> : vector<16xf32>
    %435 = vector.multi_reduction <add>, %434, %cst_159 [1] : vector<16x32xf32> to vector<16xf32>
    %436 = vector.shape_cast %435 : vector<16xf32> to vector<16x1xf32>
    %cst_160 = arith.constant 3.200000e+01 : f32
    %437 = vector.broadcast %cst_160 : f32 to vector<16x1xf32>
    %438 = arith.divf %436, %437 : vector<16x1xf32>
    %cst_161 = arith.constant 9.99999996E-13 : f32
    %439 = vector.broadcast %cst_161 : f32 to vector<16x1xf32>
    %440 = arith.addf %438, %439 : vector<16x1xf32>
    %441 = math.rsqrt %440 : vector<16x1xf32>
    %442 = vector.broadcast %441 : vector<16x1xf32> to vector<16x32xf32>
    %443 = arith.mulf %433, %442 : vector<16x32xf32>
    %444 = vector.broadcast %426 : vector<1x32xf32> to vector<16x32xf32>
    %445 = arith.mulf %443, %444 : vector<16x32xf32>
    %446 = vector.broadcast %427 : vector<1x32xf32> to vector<16x32xf32>
    %447 = arith.addf %445, %446 : vector<16x32xf32>
    %c0_162 = arith.constant 0 : index
    %c0_163 = arith.constant 0 : index
    %c0_164 = arith.constant 0 : index
    %448 = vector.load %arg16[%c0_162, %c0_163, %c0_164] : memref<2x8x128xf32, #tpu.memory_space<vmem>>, vector<1x8x128xf32>
    %449 = vector.shape_cast %448 : vector<1x8x128xf32> to vector<8x128xf32>
    %c0_165 = arith.constant 0 : index
    %c0_166 = arith.constant 0 : index
    %c0_167 = arith.constant 0 : index
    %450 = vector.load %arg12[%c0_165, %c0_166, %c0_167] : memref<2x32x96xf32, #tpu.memory_space<vmem>>, vector<1x32x96xf32>
    %451 = vector.shape_cast %450 : vector<1x32x96xf32> to vector<32x96xf32>
    %c0_168 = arith.constant 0 : index
    %c0_169 = arith.constant 0 : index
    %c0_170 = arith.constant 0 : index
    %452 = vector.load %arg13[%c0_168, %c0_169, %c0_170] : memref<2x32x32xf32, #tpu.memory_space<vmem>>, vector<1x32x32xf32>
    %453 = vector.shape_cast %452 : vector<1x32x32xf32> to vector<32x32xf32>
    %454 = vector.extract_strided_slice %449 {offsets = [0, 0], sizes = [1, 96], strides = [1, 1]} : vector<8x128xf32> to vector<1x96xf32>
    %455 = vector.extract_strided_slice %449 {offsets = [1, 0], sizes = [1, 32], strides = [1, 1]} : vector<8x128xf32> to vector<1x32xf32>
    %cst_171 = arith.constant dense<0.000000e+00> : vector<16x96xf32>
    %456 = tpu.matmul %447, %451, %cst_171 {dimension_numbers = #tpu.dot_dimension_numbers<[1], [0], [0], [1], [0, 0, 1, 1], [], []>} : vector<16x32xf32>, vector<32x96xf32>, vector<16x96xf32> -> vector<16x96xf32>
    %457 = vector.broadcast %454 : vector<1x96xf32> to vector<16x96xf32>
    %458 = arith.addf %456, %457 : vector<16x96xf32>
    %459 = vector.extract_strided_slice %458 {offsets = [0, 0], sizes = [16, 8], strides = [1, 1]} : vector<16x96xf32> to vector<16x8xf32>
    %460 = vector.extract_strided_slice %458 {offsets = [0, 32], sizes = [16, 8], strides = [1, 1]} : vector<16x96xf32> to vector<16x8xf32>
    %461 = vector.extract_strided_slice %458 {offsets = [0, 64], sizes = [16, 8], strides = [1, 1]} : vector<16x96xf32> to vector<16x8xf32>
    %cst_172 = arith.constant dense<0.000000e+00> : vector<16x16xf32>
    %462 = tpu.matmul %459, %460, %cst_172 {dimension_numbers = #tpu.dot_dimension_numbers<[1], [1], [0], [0], [0, 0, 1, 0], [], []>} : vector<16x8xf32>, vector<16x8xf32>, vector<16x16xf32> -> vector<16x16xf32>
    %cst_173 = arith.constant 0.353553385 : f32
    %463 = vector.broadcast %cst_173 : f32 to vector<16x16xf32>
    %464 = arith.mulf %462, %463 : vector<16x16xf32>
    %465 = arith.addf %464, %423 : vector<16x16xf32>
    %cst_174 = arith.constant dense<0xFF800000> : vector<16xf32>
    %466 = vector.multi_reduction <maximumf>, %465, %cst_174 [1] : vector<16x16xf32> to vector<16xf32>
    %467 = vector.shape_cast %466 : vector<16xf32> to vector<16x1xf32>
    %468 = vector.broadcast %467 : vector<16x1xf32> to vector<16x16xf32>
    %469 = arith.subf %465, %468 : vector<16x16xf32>
    %470 = math.exp %469 : vector<16x16xf32>
    %cst_175 = arith.constant dense<0.000000e+00> : vector<16xf32>
    %471 = vector.multi_reduction <add>, %470, %cst_175 [1] : vector<16x16xf32> to vector<16xf32>
    %472 = vector.shape_cast %471 : vector<16xf32> to vector<16x1xf32>
    %473 = tpu.reciprocal %472 {approx = true} : vector<16x1xf32> -> vector<16x1xf32>
    %474 = vector.broadcast %473 : vector<16x1xf32> to vector<16x16xf32>
    %475 = arith.mulf %470, %474 : vector<16x16xf32>
    %cst_176 = arith.constant dense<0.000000e+00> : vector<16x8xf32>
    %476 = tpu.matmul %475, %461, %cst_176 {dimension_numbers = #tpu.dot_dimension_numbers<[1], [0], [0], [1], [0, 0, 1, 1], [], []>} : vector<16x16xf32>, vector<16x8xf32>, vector<16x8xf32> -> vector<16x8xf32>
    %477 = vector.extract_strided_slice %458 {offsets = [0, 8], sizes = [16, 8], strides = [1, 1]} : vector<16x96xf32> to vector<16x8xf32>
    %478 = vector.extract_strided_slice %458 {offsets = [0, 40], sizes = [16, 8], strides = [1, 1]} : vector<16x96xf32> to vector<16x8xf32>
    %479 = vector.extract_strided_slice %458 {offsets = [0, 72], sizes = [16, 8], strides = [1, 1]} : vector<16x96xf32> to vector<16x8xf32>
    %cst_177 = arith.constant dense<0.000000e+00> : vector<16x16xf32>
    %480 = tpu.matmul %477, %478, %cst_177 {dimension_numbers = #tpu.dot_dimension_numbers<[1], [1], [0], [0], [0, 0, 1, 0], [], []>} : vector<16x8xf32>, vector<16x8xf32>, vector<16x16xf32> -> vector<16x16xf32>
    %cst_178 = arith.constant 0.353553385 : f32
    %481 = vector.broadcast %cst_178 : f32 to vector<16x16xf32>
    %482 = arith.mulf %480, %481 : vector<16x16xf32>
    %483 = arith.addf %482, %423 : vector<16x16xf32>
    %cst_179 = arith.constant dense<0xFF800000> : vector<16xf32>
    %484 = vector.multi_reduction <maximumf>, %483, %cst_179 [1] : vector<16x16xf32> to vector<16xf32>
    %485 = vector.shape_cast %484 : vector<16xf32> to vector<16x1xf32>
    %486 = vector.broadcast %485 : vector<16x1xf32> to vector<16x16xf32>
    %487 = arith.subf %483, %486 : vector<16x16xf32>
    %488 = math.exp %487 : vector<16x16xf32>
    %cst_180 = arith.constant dense<0.000000e+00> : vector<16xf32>
    %489 = vector.multi_reduction <add>, %488, %cst_180 [1] : vector<16x16xf32> to vector<16xf32>
    %490 = vector.shape_cast %489 : vector<16xf32> to vector<16x1xf32>
    %491 = tpu.reciprocal %490 {approx = true} : vector<16x1xf32> -> vector<16x1xf32>
    %492 = vector.broadcast %491 : vector<16x1xf32> to vector<16x16xf32>
    %493 = arith.mulf %488, %492 : vector<16x16xf32>
    %cst_181 = arith.constant dense<0.000000e+00> : vector<16x8xf32>
    %494 = tpu.matmul %493, %479, %cst_181 {dimension_numbers = #tpu.dot_dimension_numbers<[1], [0], [0], [1], [0, 0, 1, 1], [], []>} : vector<16x16xf32>, vector<16x8xf32>, vector<16x8xf32> -> vector<16x8xf32>
    %495 = vector.extract_strided_slice %458 {offsets = [0, 16], sizes = [16, 8], strides = [1, 1]} : vector<16x96xf32> to vector<16x8xf32>
    %496 = vector.extract_strided_slice %458 {offsets = [0, 48], sizes = [16, 8], strides = [1, 1]} : vector<16x96xf32> to vector<16x8xf32>
    %497 = vector.extract_strided_slice %458 {offsets = [0, 80], sizes = [16, 8], strides = [1, 1]} : vector<16x96xf32> to vector<16x8xf32>
    %cst_182 = arith.constant dense<0.000000e+00> : vector<16x16xf32>
    %498 = tpu.matmul %495, %496, %cst_182 {dimension_numbers = #tpu.dot_dimension_numbers<[1], [1], [0], [0], [0, 0, 1, 0], [], []>} : vector<16x8xf32>, vector<16x8xf32>, vector<16x16xf32> -> vector<16x16xf32>
    %cst_183 = arith.constant 0.353553385 : f32
    %499 = vector.broadcast %cst_183 : f32 to vector<16x16xf32>
    %500 = arith.mulf %498, %499 : vector<16x16xf32>
    %501 = arith.addf %500, %423 : vector<16x16xf32>
    %cst_184 = arith.constant dense<0xFF800000> : vector<16xf32>
    %502 = vector.multi_reduction <maximumf>, %501, %cst_184 [1] : vector<16x16xf32> to vector<16xf32>
    %503 = vector.shape_cast %502 : vector<16xf32> to vector<16x1xf32>
    %504 = vector.broadcast %503 : vector<16x1xf32> to vector<16x16xf32>
    %505 = arith.subf %501, %504 : vector<16x16xf32>
    %506 = math.exp %505 : vector<16x16xf32>
    %cst_185 = arith.constant dense<0.000000e+00> : vector<16xf32>
    %507 = vector.multi_reduction <add>, %506, %cst_185 [1] : vector<16x16xf32> to vector<16xf32>
    %508 = vector.shape_cast %507 : vector<16xf32> to vector<16x1xf32>
    %509 = tpu.reciprocal %508 {approx = true} : vector<16x1xf32> -> vector<16x1xf32>
    %510 = vector.broadcast %509 : vector<16x1xf32> to vector<16x16xf32>
    %511 = arith.mulf %506, %510 : vector<16x16xf32>
    %cst_186 = arith.constant dense<0.000000e+00> : vector<16x8xf32>
    %512 = tpu.matmul %511, %497, %cst_186 {dimension_numbers = #tpu.dot_dimension_numbers<[1], [0], [0], [1], [0, 0, 1, 1], [], []>} : vector<16x16xf32>, vector<16x8xf32>, vector<16x8xf32> -> vector<16x8xf32>
    %513 = vector.extract_strided_slice %458 {offsets = [0, 24], sizes = [16, 8], strides = [1, 1]} : vector<16x96xf32> to vector<16x8xf32>
    %514 = vector.extract_strided_slice %458 {offsets = [0, 56], sizes = [16, 8], strides = [1, 1]} : vector<16x96xf32> to vector<16x8xf32>
    %515 = vector.extract_strided_slice %458 {offsets = [0, 88], sizes = [16, 8], strides = [1, 1]} : vector<16x96xf32> to vector<16x8xf32>
    %cst_187 = arith.constant dense<0.000000e+00> : vector<16x16xf32>
    %516 = tpu.matmul %513, %514, %cst_187 {dimension_numbers = #tpu.dot_dimension_numbers<[1], [1], [0], [0], [0, 0, 1, 0], [], []>} : vector<16x8xf32>, vector<16x8xf32>, vector<16x16xf32> -> vector<16x16xf32>
    %cst_188 = arith.constant 0.353553385 : f32
    %517 = vector.broadcast %cst_188 : f32 to vector<16x16xf32>
    %518 = arith.mulf %516, %517 : vector<16x16xf32>
    %519 = arith.addf %518, %423 : vector<16x16xf32>
    %cst_189 = arith.constant dense<0xFF800000> : vector<16xf32>
    %520 = vector.multi_reduction <maximumf>, %519, %cst_189 [1] : vector<16x16xf32> to vector<16xf32>
    %521 = vector.shape_cast %520 : vector<16xf32> to vector<16x1xf32>
    %522 = vector.broadcast %521 : vector<16x1xf32> to vector<16x16xf32>
    %523 = arith.subf %519, %522 : vector<16x16xf32>
    %524 = math.exp %523 : vector<16x16xf32>
    %cst_190 = arith.constant dense<0.000000e+00> : vector<16xf32>
    %525 = vector.multi_reduction <add>, %524, %cst_190 [1] : vector<16x16xf32> to vector<16xf32>
    %526 = vector.shape_cast %525 : vector<16xf32> to vector<16x1xf32>
    %527 = tpu.reciprocal %526 {approx = true} : vector<16x1xf32> -> vector<16x1xf32>
    %528 = vector.broadcast %527 : vector<16x1xf32> to vector<16x16xf32>
    %529 = arith.mulf %524, %528 : vector<16x16xf32>
    %cst_191 = arith.constant dense<0.000000e+00> : vector<16x8xf32>
    %530 = tpu.matmul %529, %515, %cst_191 {dimension_numbers = #tpu.dot_dimension_numbers<[1], [0], [0], [1], [0, 0, 1, 1], [], []>} : vector<16x16xf32>, vector<16x8xf32>, vector<16x8xf32> -> vector<16x8xf32>
    %531 = tpu.concatenate %476, %494, %512, %530 in 1 : vector<16x8xf32>, vector<16x8xf32>, vector<16x8xf32>, vector<16x8xf32> -> vector<16x32xf32>
    %cst_192 = arith.constant dense<0.000000e+00> : vector<16x32xf32>
    %532 = tpu.matmul %531, %453, %cst_192 {dimension_numbers = #tpu.dot_dimension_numbers<[1], [0], [0], [1], [0, 0, 1, 1], [], []>} : vector<16x32xf32>, vector<32x32xf32>, vector<16x32xf32> -> vector<16x32xf32>
    %533 = vector.broadcast %455 : vector<1x32xf32> to vector<16x32xf32>
    %534 = arith.addf %532, %533 : vector<16x32xf32>
    %535 = arith.addf %447, %534 : vector<16x32xf32>
    %536 = vector.extract_strided_slice %449 {offsets = [2, 0], sizes = [1, 32], strides = [1, 1]} : vector<8x128xf32> to vector<1x32xf32>
    %537 = vector.extract_strided_slice %449 {offsets = [3, 0], sizes = [1, 32], strides = [1, 1]} : vector<8x128xf32> to vector<1x32xf32>
    %cst_193 = arith.constant dense<0.000000e+00> : vector<16xf32>
    %538 = vector.multi_reduction <add>, %535, %cst_193 [1] : vector<16x32xf32> to vector<16xf32>
    %539 = vector.shape_cast %538 : vector<16xf32> to vector<16x1xf32>
    %cst_194 = arith.constant 3.200000e+01 : f32
    %540 = vector.broadcast %cst_194 : f32 to vector<16x1xf32>
    %541 = arith.divf %539, %540 : vector<16x1xf32>
    %542 = vector.broadcast %541 : vector<16x1xf32> to vector<16x32xf32>
    %543 = arith.subf %535, %542 : vector<16x32xf32>
    %544 = arith.mulf %543, %543 : vector<16x32xf32>
    %cst_195 = arith.constant dense<0.000000e+00> : vector<16xf32>
    %545 = vector.multi_reduction <add>, %544, %cst_195 [1] : vector<16x32xf32> to vector<16xf32>
    %546 = vector.shape_cast %545 : vector<16xf32> to vector<16x1xf32>
    %cst_196 = arith.constant 3.200000e+01 : f32
    %547 = vector.broadcast %cst_196 : f32 to vector<16x1xf32>
    %548 = arith.divf %546, %547 : vector<16x1xf32>
    %cst_197 = arith.constant 9.99999996E-13 : f32
    %549 = vector.broadcast %cst_197 : f32 to vector<16x1xf32>
    %550 = arith.addf %548, %549 : vector<16x1xf32>
    %551 = math.rsqrt %550 : vector<16x1xf32>
    %552 = vector.broadcast %551 : vector<16x1xf32> to vector<16x32xf32>
    %553 = arith.mulf %543, %552 : vector<16x32xf32>
    %554 = vector.broadcast %536 : vector<1x32xf32> to vector<16x32xf32>
    %555 = arith.mulf %553, %554 : vector<16x32xf32>
    %556 = vector.broadcast %537 : vector<1x32xf32> to vector<16x32xf32>
    %557 = arith.addf %555, %556 : vector<16x32xf32>
    %c0_198 = arith.constant 0 : index
    %c0_199 = arith.constant 0 : index
    %c0_200 = arith.constant 0 : index
    %558 = vector.load %arg14[%c0_198, %c0_199, %c0_200] : memref<2x32x64xf32, #tpu.memory_space<vmem>>, vector<1x32x64xf32>
    %559 = vector.shape_cast %558 : vector<1x32x64xf32> to vector<32x64xf32>
    %cst_201 = arith.constant dense<0.000000e+00> : vector<16x64xf32>
    %560 = tpu.matmul %557, %559, %cst_201 {dimension_numbers = #tpu.dot_dimension_numbers<[1], [0], [0], [1], [0, 0, 1, 1], [], []>} : vector<16x32xf32>, vector<32x64xf32>, vector<16x64xf32> -> vector<16x64xf32>
    %561 = vector.extract_strided_slice %449 {offsets = [4, 0], sizes = [1, 64], strides = [1, 1]} : vector<8x128xf32> to vector<1x64xf32>
    %562 = vector.broadcast %561 : vector<1x64xf32> to vector<16x64xf32>
    %563 = arith.addf %560, %562 : vector<16x64xf32>
    %cst_202 = arith.constant 5.000000e-01 : f32
    %564 = vector.broadcast %cst_202 : f32 to vector<16x64xf32>
    %565 = arith.mulf %564, %563 : vector<16x64xf32>
    %cst_203 = arith.constant 0.707106769 : f32
    %566 = vector.broadcast %cst_203 : f32 to vector<16x64xf32>
    %567 = arith.mulf %563, %566 : vector<16x64xf32>
    %cst_204 = arith.constant 0.000000e+00 : f32
    %568 = vector.broadcast %cst_204 : f32 to vector<16x64xf32>
    %569 = arith.cmpf olt, %567, %568 : vector<16x64xf32>
    %cst_205 = arith.constant -1.000000e+00 : f32
    %cst_206 = arith.constant 1.000000e+00 : f32
    %570 = vector.broadcast %cst_205 : f32 to vector<16x64xf32>
    %571 = vector.broadcast %cst_206 : f32 to vector<16x64xf32>
    %572 = arith.select %569, %570, %571 : vector<16x64xi1>, vector<16x64xf32>
    %573 = math.absf %567 : vector<16x64xf32>
    %cst_207 = arith.constant 0.327591091 : f32
    %574 = vector.broadcast %cst_207 : f32 to vector<16x64xf32>
    %575 = arith.mulf %574, %573 : vector<16x64xf32>
    %cst_208 = arith.constant 1.000000e+00 : f32
    %576 = vector.broadcast %cst_208 : f32 to vector<16x64xf32>
    %577 = arith.addf %576, %575 : vector<16x64xf32>
    %578 = tpu.reciprocal %577 {approx = true} : vector<16x64xf32> -> vector<16x64xf32>
    %cst_209 = arith.constant 1.06140542 : f32
    %579 = vector.broadcast %cst_209 : f32 to vector<16x64xf32>
    %580 = arith.mulf %578, %579 : vector<16x64xf32>
    %cst_210 = arith.constant -1.45315206 : f32
    %581 = vector.broadcast %cst_210 : f32 to vector<16x64xf32>
    %582 = arith.addf %581, %580 : vector<16x64xf32>
    %583 = arith.mulf %578, %582 : vector<16x64xf32>
    %cst_211 = arith.constant 1.42141378 : f32
    %584 = vector.broadcast %cst_211 : f32 to vector<16x64xf32>
    %585 = arith.addf %584, %583 : vector<16x64xf32>
    %586 = arith.mulf %578, %585 : vector<16x64xf32>
    %cst_212 = arith.constant -0.284496725 : f32
    %587 = vector.broadcast %cst_212 : f32 to vector<16x64xf32>
    %588 = arith.addf %587, %586 : vector<16x64xf32>
    %589 = arith.mulf %578, %588 : vector<16x64xf32>
    %cst_213 = arith.constant 0.254829586 : f32
    %590 = vector.broadcast %cst_213 : f32 to vector<16x64xf32>
    %591 = arith.addf %590, %589 : vector<16x64xf32>
    %592 = arith.mulf %578, %591 : vector<16x64xf32>
    %cst_214 = arith.constant 0.000000e+00 : f32
    %593 = vector.broadcast %cst_214 : f32 to vector<16x64xf32>
    %594 = arith.subf %593, %573 : vector<16x64xf32>
    %595 = arith.mulf %594, %573 : vector<16x64xf32>
    %596 = math.exp %595 : vector<16x64xf32>
    %597 = arith.mulf %592, %596 : vector<16x64xf32>
    %cst_215 = arith.constant 1.000000e+00 : f32
    %598 = vector.broadcast %cst_215 : f32 to vector<16x64xf32>
    %599 = arith.subf %598, %597 : vector<16x64xf32>
    %600 = arith.mulf %572, %599 : vector<16x64xf32>
    %cst_216 = arith.constant 1.000000e+00 : f32
    %601 = vector.broadcast %cst_216 : f32 to vector<16x64xf32>
    %602 = arith.addf %601, %600 : vector<16x64xf32>
    %603 = arith.mulf %565, %602 : vector<16x64xf32>
    %c0_217 = arith.constant 0 : index
    %c0_218 = arith.constant 0 : index
    %c0_219 = arith.constant 0 : index
    %604 = vector.load %arg15[%c0_217, %c0_218, %c0_219] : memref<2x64x32xf32, #tpu.memory_space<vmem>>, vector<1x64x32xf32>
    %605 = vector.shape_cast %604 : vector<1x64x32xf32> to vector<64x32xf32>
    %cst_220 = arith.constant dense<0.000000e+00> : vector<16x32xf32>
    %606 = tpu.matmul %603, %605, %cst_220 {dimension_numbers = #tpu.dot_dimension_numbers<[1], [0], [0], [1], [0, 0, 1, 1], [], []>} : vector<16x64xf32>, vector<64x32xf32>, vector<16x32xf32> -> vector<16x32xf32>
    %607 = vector.extract_strided_slice %449 {offsets = [5, 0], sizes = [1, 32], strides = [1, 1]} : vector<8x128xf32> to vector<1x32xf32>
    %608 = vector.broadcast %607 : vector<1x32xf32> to vector<16x32xf32>
    %609 = arith.addf %606, %608 : vector<16x32xf32>
    %610 = arith.addf %557, %609 : vector<16x32xf32>
    %611 = vector.extract_strided_slice %449 {offsets = [6, 0], sizes = [1, 32], strides = [1, 1]} : vector<8x128xf32> to vector<1x32xf32>
    %612 = vector.extract_strided_slice %449 {offsets = [7, 0], sizes = [1, 32], strides = [1, 1]} : vector<8x128xf32> to vector<1x32xf32>
    %cst_221 = arith.constant dense<0.000000e+00> : vector<16xf32>
    %613 = vector.multi_reduction <add>, %610, %cst_221 [1] : vector<16x32xf32> to vector<16xf32>
    %614 = vector.shape_cast %613 : vector<16xf32> to vector<16x1xf32>
    %cst_222 = arith.constant 3.200000e+01 : f32
    %615 = vector.broadcast %cst_222 : f32 to vector<16x1xf32>
    %616 = arith.divf %614, %615 : vector<16x1xf32>
    %617 = vector.broadcast %616 : vector<16x1xf32> to vector<16x32xf32>
    %618 = arith.subf %610, %617 : vector<16x32xf32>
    %619 = arith.mulf %618, %618 : vector<16x32xf32>
    %cst_223 = arith.constant dense<0.000000e+00> : vector<16xf32>
    %620 = vector.multi_reduction <add>, %619, %cst_223 [1] : vector<16x32xf32> to vector<16xf32>
    %621 = vector.shape_cast %620 : vector<16xf32> to vector<16x1xf32>
    %cst_224 = arith.constant 3.200000e+01 : f32
    %622 = vector.broadcast %cst_224 : f32 to vector<16x1xf32>
    %623 = arith.divf %621, %622 : vector<16x1xf32>
    %cst_225 = arith.constant 9.99999996E-13 : f32
    %624 = vector.broadcast %cst_225 : f32 to vector<16x1xf32>
    %625 = arith.addf %623, %624 : vector<16x1xf32>
    %626 = math.rsqrt %625 : vector<16x1xf32>
    %627 = vector.broadcast %626 : vector<16x1xf32> to vector<16x32xf32>
    %628 = arith.mulf %618, %627 : vector<16x32xf32>
    %629 = vector.broadcast %611 : vector<1x32xf32> to vector<16x32xf32>
    %630 = arith.mulf %628, %629 : vector<16x32xf32>
    %631 = vector.broadcast %612 : vector<1x32xf32> to vector<16x32xf32>
    %632 = arith.addf %630, %631 : vector<16x32xf32>
    %c1_226 = arith.constant 1 : index
    %c0_227 = arith.constant 0 : index
    %c0_228 = arith.constant 0 : index
    %633 = vector.load %arg16[%c1_226, %c0_227, %c0_228] : memref<2x8x128xf32, #tpu.memory_space<vmem>>, vector<1x8x128xf32>
    %634 = vector.shape_cast %633 : vector<1x8x128xf32> to vector<8x128xf32>
    %c1_229 = arith.constant 1 : index
    %c0_230 = arith.constant 0 : index
    %c0_231 = arith.constant 0 : index
    %635 = vector.load %arg12[%c1_229, %c0_230, %c0_231] : memref<2x32x96xf32, #tpu.memory_space<vmem>>, vector<1x32x96xf32>
    %636 = vector.shape_cast %635 : vector<1x32x96xf32> to vector<32x96xf32>
    %c1_232 = arith.constant 1 : index
    %c0_233 = arith.constant 0 : index
    %c0_234 = arith.constant 0 : index
    %637 = vector.load %arg13[%c1_232, %c0_233, %c0_234] : memref<2x32x32xf32, #tpu.memory_space<vmem>>, vector<1x32x32xf32>
    %638 = vector.shape_cast %637 : vector<1x32x32xf32> to vector<32x32xf32>
    %639 = vector.extract_strided_slice %634 {offsets = [0, 0], sizes = [1, 96], strides = [1, 1]} : vector<8x128xf32> to vector<1x96xf32>
    %640 = vector.extract_strided_slice %634 {offsets = [1, 0], sizes = [1, 32], strides = [1, 1]} : vector<8x128xf32> to vector<1x32xf32>
    %cst_235 = arith.constant dense<0.000000e+00> : vector<16x96xf32>
    %641 = tpu.matmul %632, %636, %cst_235 {dimension_numbers = #tpu.dot_dimension_numbers<[1], [0], [0], [1], [0, 0, 1, 1], [], []>} : vector<16x32xf32>, vector<32x96xf32>, vector<16x96xf32> -> vector<16x96xf32>
    %642 = vector.broadcast %639 : vector<1x96xf32> to vector<16x96xf32>
    %643 = arith.addf %641, %642 : vector<16x96xf32>
    %644 = vector.extract_strided_slice %643 {offsets = [0, 0], sizes = [16, 8], strides = [1, 1]} : vector<16x96xf32> to vector<16x8xf32>
    %645 = vector.extract_strided_slice %643 {offsets = [0, 32], sizes = [16, 8], strides = [1, 1]} : vector<16x96xf32> to vector<16x8xf32>
    %646 = vector.extract_strided_slice %643 {offsets = [0, 64], sizes = [16, 8], strides = [1, 1]} : vector<16x96xf32> to vector<16x8xf32>
    %cst_236 = arith.constant dense<0.000000e+00> : vector<16x16xf32>
    %647 = tpu.matmul %644, %645, %cst_236 {dimension_numbers = #tpu.dot_dimension_numbers<[1], [1], [0], [0], [0, 0, 1, 0], [], []>} : vector<16x8xf32>, vector<16x8xf32>, vector<16x16xf32> -> vector<16x16xf32>
    %cst_237 = arith.constant 0.353553385 : f32
    %648 = vector.broadcast %cst_237 : f32 to vector<16x16xf32>
    %649 = arith.mulf %647, %648 : vector<16x16xf32>
    %650 = arith.addf %649, %423 : vector<16x16xf32>
    %cst_238 = arith.constant dense<0xFF800000> : vector<16xf32>
    %651 = vector.multi_reduction <maximumf>, %650, %cst_238 [1] : vector<16x16xf32> to vector<16xf32>
    %652 = vector.shape_cast %651 : vector<16xf32> to vector<16x1xf32>
    %653 = vector.broadcast %652 : vector<16x1xf32> to vector<16x16xf32>
    %654 = arith.subf %650, %653 : vector<16x16xf32>
    %655 = math.exp %654 : vector<16x16xf32>
    %cst_239 = arith.constant dense<0.000000e+00> : vector<16xf32>
    %656 = vector.multi_reduction <add>, %655, %cst_239 [1] : vector<16x16xf32> to vector<16xf32>
    %657 = vector.shape_cast %656 : vector<16xf32> to vector<16x1xf32>
    %658 = tpu.reciprocal %657 {approx = true} : vector<16x1xf32> -> vector<16x1xf32>
    %659 = vector.broadcast %658 : vector<16x1xf32> to vector<16x16xf32>
    %660 = arith.mulf %655, %659 : vector<16x16xf32>
    %cst_240 = arith.constant dense<0.000000e+00> : vector<16x8xf32>
    %661 = tpu.matmul %660, %646, %cst_240 {dimension_numbers = #tpu.dot_dimension_numbers<[1], [0], [0], [1], [0, 0, 1, 1], [], []>} : vector<16x16xf32>, vector<16x8xf32>, vector<16x8xf32> -> vector<16x8xf32>
    %662 = vector.extract_strided_slice %643 {offsets = [0, 8], sizes = [16, 8], strides = [1, 1]} : vector<16x96xf32> to vector<16x8xf32>
    %663 = vector.extract_strided_slice %643 {offsets = [0, 40], sizes = [16, 8], strides = [1, 1]} : vector<16x96xf32> to vector<16x8xf32>
    %664 = vector.extract_strided_slice %643 {offsets = [0, 72], sizes = [16, 8], strides = [1, 1]} : vector<16x96xf32> to vector<16x8xf32>
    %cst_241 = arith.constant dense<0.000000e+00> : vector<16x16xf32>
    %665 = tpu.matmul %662, %663, %cst_241 {dimension_numbers = #tpu.dot_dimension_numbers<[1], [1], [0], [0], [0, 0, 1, 0], [], []>} : vector<16x8xf32>, vector<16x8xf32>, vector<16x16xf32> -> vector<16x16xf32>
    %cst_242 = arith.constant 0.353553385 : f32
    %666 = vector.broadcast %cst_242 : f32 to vector<16x16xf32>
    %667 = arith.mulf %665, %666 : vector<16x16xf32>
    %668 = arith.addf %667, %423 : vector<16x16xf32>
    %cst_243 = arith.constant dense<0xFF800000> : vector<16xf32>
    %669 = vector.multi_reduction <maximumf>, %668, %cst_243 [1] : vector<16x16xf32> to vector<16xf32>
    %670 = vector.shape_cast %669 : vector<16xf32> to vector<16x1xf32>
    %671 = vector.broadcast %670 : vector<16x1xf32> to vector<16x16xf32>
    %672 = arith.subf %668, %671 : vector<16x16xf32>
    %673 = math.exp %672 : vector<16x16xf32>
    %cst_244 = arith.constant dense<0.000000e+00> : vector<16xf32>
    %674 = vector.multi_reduction <add>, %673, %cst_244 [1] : vector<16x16xf32> to vector<16xf32>
    %675 = vector.shape_cast %674 : vector<16xf32> to vector<16x1xf32>
    %676 = tpu.reciprocal %675 {approx = true} : vector<16x1xf32> -> vector<16x1xf32>
    %677 = vector.broadcast %676 : vector<16x1xf32> to vector<16x16xf32>
    %678 = arith.mulf %673, %677 : vector<16x16xf32>
    %cst_245 = arith.constant dense<0.000000e+00> : vector<16x8xf32>
    %679 = tpu.matmul %678, %664, %cst_245 {dimension_numbers = #tpu.dot_dimension_numbers<[1], [0], [0], [1], [0, 0, 1, 1], [], []>} : vector<16x16xf32>, vector<16x8xf32>, vector<16x8xf32> -> vector<16x8xf32>
    %680 = vector.extract_strided_slice %643 {offsets = [0, 16], sizes = [16, 8], strides = [1, 1]} : vector<16x96xf32> to vector<16x8xf32>
    %681 = vector.extract_strided_slice %643 {offsets = [0, 48], sizes = [16, 8], strides = [1, 1]} : vector<16x96xf32> to vector<16x8xf32>
    %682 = vector.extract_strided_slice %643 {offsets = [0, 80], sizes = [16, 8], strides = [1, 1]} : vector<16x96xf32> to vector<16x8xf32>
    %cst_246 = arith.constant dense<0.000000e+00> : vector<16x16xf32>
    %683 = tpu.matmul %680, %681, %cst_246 {dimension_numbers = #tpu.dot_dimension_numbers<[1], [1], [0], [0], [0, 0, 1, 0], [], []>} : vector<16x8xf32>, vector<16x8xf32>, vector<16x16xf32> -> vector<16x16xf32>
    %cst_247 = arith.constant 0.353553385 : f32
    %684 = vector.broadcast %cst_247 : f32 to vector<16x16xf32>
    %685 = arith.mulf %683, %684 : vector<16x16xf32>
    %686 = arith.addf %685, %423 : vector<16x16xf32>
    %cst_248 = arith.constant dense<0xFF800000> : vector<16xf32>
    %687 = vector.multi_reduction <maximumf>, %686, %cst_248 [1] : vector<16x16xf32> to vector<16xf32>
    %688 = vector.shape_cast %687 : vector<16xf32> to vector<16x1xf32>
    %689 = vector.broadcast %688 : vector<16x1xf32> to vector<16x16xf32>
    %690 = arith.subf %686, %689 : vector<16x16xf32>
    %691 = math.exp %690 : vector<16x16xf32>
    %cst_249 = arith.constant dense<0.000000e+00> : vector<16xf32>
    %692 = vector.multi_reduction <add>, %691, %cst_249 [1] : vector<16x16xf32> to vector<16xf32>
    %693 = vector.shape_cast %692 : vector<16xf32> to vector<16x1xf32>
    %694 = tpu.reciprocal %693 {approx = true} : vector<16x1xf32> -> vector<16x1xf32>
    %695 = vector.broadcast %694 : vector<16x1xf32> to vector<16x16xf32>
    %696 = arith.mulf %691, %695 : vector<16x16xf32>
    %cst_250 = arith.constant dense<0.000000e+00> : vector<16x8xf32>
    %697 = tpu.matmul %696, %682, %cst_250 {dimension_numbers = #tpu.dot_dimension_numbers<[1], [0], [0], [1], [0, 0, 1, 1], [], []>} : vector<16x16xf32>, vector<16x8xf32>, vector<16x8xf32> -> vector<16x8xf32>
    %698 = vector.extract_strided_slice %643 {offsets = [0, 24], sizes = [16, 8], strides = [1, 1]} : vector<16x96xf32> to vector<16x8xf32>
    %699 = vector.extract_strided_slice %643 {offsets = [0, 56], sizes = [16, 8], strides = [1, 1]} : vector<16x96xf32> to vector<16x8xf32>
    %700 = vector.extract_strided_slice %643 {offsets = [0, 88], sizes = [16, 8], strides = [1, 1]} : vector<16x96xf32> to vector<16x8xf32>
    %cst_251 = arith.constant dense<0.000000e+00> : vector<16x16xf32>
    %701 = tpu.matmul %698, %699, %cst_251 {dimension_numbers = #tpu.dot_dimension_numbers<[1], [1], [0], [0], [0, 0, 1, 0], [], []>} : vector<16x8xf32>, vector<16x8xf32>, vector<16x16xf32> -> vector<16x16xf32>
    %cst_252 = arith.constant 0.353553385 : f32
    %702 = vector.broadcast %cst_252 : f32 to vector<16x16xf32>
    %703 = arith.mulf %701, %702 : vector<16x16xf32>
    %704 = arith.addf %703, %423 : vector<16x16xf32>
    %cst_253 = arith.constant dense<0xFF800000> : vector<16xf32>
    %705 = vector.multi_reduction <maximumf>, %704, %cst_253 [1] : vector<16x16xf32> to vector<16xf32>
    %706 = vector.shape_cast %705 : vector<16xf32> to vector<16x1xf32>
    %707 = vector.broadcast %706 : vector<16x1xf32> to vector<16x16xf32>
    %708 = arith.subf %704, %707 : vector<16x16xf32>
    %709 = math.exp %708 : vector<16x16xf32>
    %cst_254 = arith.constant dense<0.000000e+00> : vector<16xf32>
    %710 = vector.multi_reduction <add>, %709, %cst_254 [1] : vector<16x16xf32> to vector<16xf32>
    %711 = vector.shape_cast %710 : vector<16xf32> to vector<16x1xf32>
    %712 = tpu.reciprocal %711 {approx = true} : vector<16x1xf32> -> vector<16x1xf32>
    %713 = vector.broadcast %712 : vector<16x1xf32> to vector<16x16xf32>
    %714 = arith.mulf %709, %713 : vector<16x16xf32>
    %cst_255 = arith.constant dense<0.000000e+00> : vector<16x8xf32>
    %715 = tpu.matmul %714, %700, %cst_255 {dimension_numbers = #tpu.dot_dimension_numbers<[1], [0], [0], [1], [0, 0, 1, 1], [], []>} : vector<16x16xf32>, vector<16x8xf32>, vector<16x8xf32> -> vector<16x8xf32>
    %716 = tpu.concatenate %661, %679, %697, %715 in 1 : vector<16x8xf32>, vector<16x8xf32>, vector<16x8xf32>, vector<16x8xf32> -> vector<16x32xf32>
    %cst_256 = arith.constant dense<0.000000e+00> : vector<16x32xf32>
    %717 = tpu.matmul %716, %638, %cst_256 {dimension_numbers = #tpu.dot_dimension_numbers<[1], [0], [0], [1], [0, 0, 1, 1], [], []>} : vector<16x32xf32>, vector<32x32xf32>, vector<16x32xf32> -> vector<16x32xf32>
    %718 = vector.broadcast %640 : vector<1x32xf32> to vector<16x32xf32>
    %719 = arith.addf %717, %718 : vector<16x32xf32>
    %720 = arith.addf %632, %719 : vector<16x32xf32>
    %721 = vector.extract_strided_slice %634 {offsets = [2, 0], sizes = [1, 32], strides = [1, 1]} : vector<8x128xf32> to vector<1x32xf32>
    %722 = vector.extract_strided_slice %634 {offsets = [3, 0], sizes = [1, 32], strides = [1, 1]} : vector<8x128xf32> to vector<1x32xf32>
    %cst_257 = arith.constant dense<0.000000e+00> : vector<16xf32>
    %723 = vector.multi_reduction <add>, %720, %cst_257 [1] : vector<16x32xf32> to vector<16xf32>
    %724 = vector.shape_cast %723 : vector<16xf32> to vector<16x1xf32>
    %cst_258 = arith.constant 3.200000e+01 : f32
    %725 = vector.broadcast %cst_258 : f32 to vector<16x1xf32>
    %726 = arith.divf %724, %725 : vector<16x1xf32>
    %727 = vector.broadcast %726 : vector<16x1xf32> to vector<16x32xf32>
    %728 = arith.subf %720, %727 : vector<16x32xf32>
    %729 = arith.mulf %728, %728 : vector<16x32xf32>
    %cst_259 = arith.constant dense<0.000000e+00> : vector<16xf32>
    %730 = vector.multi_reduction <add>, %729, %cst_259 [1] : vector<16x32xf32> to vector<16xf32>
    %731 = vector.shape_cast %730 : vector<16xf32> to vector<16x1xf32>
    %cst_260 = arith.constant 3.200000e+01 : f32
    %732 = vector.broadcast %cst_260 : f32 to vector<16x1xf32>
    %733 = arith.divf %731, %732 : vector<16x1xf32>
    %cst_261 = arith.constant 9.99999996E-13 : f32
    %734 = vector.broadcast %cst_261 : f32 to vector<16x1xf32>
    %735 = arith.addf %733, %734 : vector<16x1xf32>
    %736 = math.rsqrt %735 : vector<16x1xf32>
    %737 = vector.broadcast %736 : vector<16x1xf32> to vector<16x32xf32>
    %738 = arith.mulf %728, %737 : vector<16x32xf32>
    %739 = vector.broadcast %721 : vector<1x32xf32> to vector<16x32xf32>
    %740 = arith.mulf %738, %739 : vector<16x32xf32>
    %741 = vector.broadcast %722 : vector<1x32xf32> to vector<16x32xf32>
    %742 = arith.addf %740, %741 : vector<16x32xf32>
    %c1_262 = arith.constant 1 : index
    %c0_263 = arith.constant 0 : index
    %c0_264 = arith.constant 0 : index
    %743 = vector.load %arg14[%c1_262, %c0_263, %c0_264] : memref<2x32x64xf32, #tpu.memory_space<vmem>>, vector<1x32x64xf32>
    %744 = vector.shape_cast %743 : vector<1x32x64xf32> to vector<32x64xf32>
    %cst_265 = arith.constant dense<0.000000e+00> : vector<16x64xf32>
    %745 = tpu.matmul %742, %744, %cst_265 {dimension_numbers = #tpu.dot_dimension_numbers<[1], [0], [0], [1], [0, 0, 1, 1], [], []>} : vector<16x32xf32>, vector<32x64xf32>, vector<16x64xf32> -> vector<16x64xf32>
    %746 = vector.extract_strided_slice %634 {offsets = [4, 0], sizes = [1, 64], strides = [1, 1]} : vector<8x128xf32> to vector<1x64xf32>
    %747 = vector.broadcast %746 : vector<1x64xf32> to vector<16x64xf32>
    %748 = arith.addf %745, %747 : vector<16x64xf32>
    %cst_266 = arith.constant 5.000000e-01 : f32
    %749 = vector.broadcast %cst_266 : f32 to vector<16x64xf32>
    %750 = arith.mulf %749, %748 : vector<16x64xf32>
    %cst_267 = arith.constant 0.707106769 : f32
    %751 = vector.broadcast %cst_267 : f32 to vector<16x64xf32>
    %752 = arith.mulf %748, %751 : vector<16x64xf32>
    %cst_268 = arith.constant 0.000000e+00 : f32
    %753 = vector.broadcast %cst_268 : f32 to vector<16x64xf32>
    %754 = arith.cmpf olt, %752, %753 : vector<16x64xf32>
    %cst_269 = arith.constant -1.000000e+00 : f32
    %cst_270 = arith.constant 1.000000e+00 : f32
    %755 = vector.broadcast %cst_269 : f32 to vector<16x64xf32>
    %756 = vector.broadcast %cst_270 : f32 to vector<16x64xf32>
    %757 = arith.select %754, %755, %756 : vector<16x64xi1>, vector<16x64xf32>
    %758 = math.absf %752 : vector<16x64xf32>
    %cst_271 = arith.constant 0.327591091 : f32
    %759 = vector.broadcast %cst_271 : f32 to vector<16x64xf32>
    %760 = arith.mulf %759, %758 : vector<16x64xf32>
    %cst_272 = arith.constant 1.000000e+00 : f32
    %761 = vector.broadcast %cst_272 : f32 to vector<16x64xf32>
    %762 = arith.addf %761, %760 : vector<16x64xf32>
    %763 = tpu.reciprocal %762 {approx = true} : vector<16x64xf32> -> vector<16x64xf32>
    %cst_273 = arith.constant 1.06140542 : f32
    %764 = vector.broadcast %cst_273 : f32 to vector<16x64xf32>
    %765 = arith.mulf %763, %764 : vector<16x64xf32>
    %cst_274 = arith.constant -1.45315206 : f32
    %766 = vector.broadcast %cst_274 : f32 to vector<16x64xf32>
    %767 = arith.addf %766, %765 : vector<16x64xf32>
    %768 = arith.mulf %763, %767 : vector<16x64xf32>
    %cst_275 = arith.constant 1.42141378 : f32
    %769 = vector.broadcast %cst_275 : f32 to vector<16x64xf32>
    %770 = arith.addf %769, %768 : vector<16x64xf32>
    %771 = arith.mulf %763, %770 : vector<16x64xf32>
    %cst_276 = arith.constant -0.284496725 : f32
    %772 = vector.broadcast %cst_276 : f32 to vector<16x64xf32>
    %773 = arith.addf %772, %771 : vector<16x64xf32>
    %774 = arith.mulf %763, %773 : vector<16x64xf32>
    %cst_277 = arith.constant 0.254829586 : f32
    %775 = vector.broadcast %cst_277 : f32 to vector<16x64xf32>
    %776 = arith.addf %775, %774 : vector<16x64xf32>
    %777 = arith.mulf %763, %776 : vector<16x64xf32>
    %cst_278 = arith.constant 0.000000e+00 : f32
    %778 = vector.broadcast %cst_278 : f32 to vector<16x64xf32>
    %779 = arith.subf %778, %758 : vector<16x64xf32>
    %780 = arith.mulf %779, %758 : vector<16x64xf32>
    %781 = math.exp %780 : vector<16x64xf32>
    %782 = arith.mulf %777, %781 : vector<16x64xf32>
    %cst_279 = arith.constant 1.000000e+00 : f32
    %783 = vector.broadcast %cst_279 : f32 to vector<16x64xf32>
    %784 = arith.subf %783, %782 : vector<16x64xf32>
    %785 = arith.mulf %757, %784 : vector<16x64xf32>
    %cst_280 = arith.constant 1.000000e+00 : f32
    %786 = vector.broadcast %cst_280 : f32 to vector<16x64xf32>
    %787 = arith.addf %786, %785 : vector<16x64xf32>
    %788 = arith.mulf %750, %787 : vector<16x64xf32>
    %c1_281 = arith.constant 1 : index
    %c0_282 = arith.constant 0 : index
    %c0_283 = arith.constant 0 : index
    %789 = vector.load %arg15[%c1_281, %c0_282, %c0_283] : memref<2x64x32xf32, #tpu.memory_space<vmem>>, vector<1x64x32xf32>
    %790 = vector.shape_cast %789 : vector<1x64x32xf32> to vector<64x32xf32>
    %cst_284 = arith.constant dense<0.000000e+00> : vector<16x32xf32>
    %791 = tpu.matmul %788, %790, %cst_284 {dimension_numbers = #tpu.dot_dimension_numbers<[1], [0], [0], [1], [0, 0, 1, 1], [], []>} : vector<16x64xf32>, vector<64x32xf32>, vector<16x32xf32> -> vector<16x32xf32>
    %792 = vector.extract_strided_slice %634 {offsets = [5, 0], sizes = [1, 32], strides = [1, 1]} : vector<8x128xf32> to vector<1x32xf32>
    %793 = vector.broadcast %792 : vector<1x32xf32> to vector<16x32xf32>
    %794 = arith.addf %791, %793 : vector<16x32xf32>
    %795 = arith.addf %742, %794 : vector<16x32xf32>
    %796 = vector.extract_strided_slice %634 {offsets = [6, 0], sizes = [1, 32], strides = [1, 1]} : vector<8x128xf32> to vector<1x32xf32>
    %797 = vector.extract_strided_slice %634 {offsets = [7, 0], sizes = [1, 32], strides = [1, 1]} : vector<8x128xf32> to vector<1x32xf32>
    %cst_285 = arith.constant dense<0.000000e+00> : vector<16xf32>
    %798 = vector.multi_reduction <add>, %795, %cst_285 [1] : vector<16x32xf32> to vector<16xf32>
    %799 = vector.shape_cast %798 : vector<16xf32> to vector<16x1xf32>
    %cst_286 = arith.constant 3.200000e+01 : f32
    %800 = vector.broadcast %cst_286 : f32 to vector<16x1xf32>
    %801 = arith.divf %799, %800 : vector<16x1xf32>
    %802 = vector.broadcast %801 : vector<16x1xf32> to vector<16x32xf32>
    %803 = arith.subf %795, %802 : vector<16x32xf32>
    %804 = arith.mulf %803, %803 : vector<16x32xf32>
    %cst_287 = arith.constant dense<0.000000e+00> : vector<16xf32>
    %805 = vector.multi_reduction <add>, %804, %cst_287 [1] : vector<16x32xf32> to vector<16xf32>
    %806 = vector.shape_cast %805 : vector<16xf32> to vector<16x1xf32>
    %cst_288 = arith.constant 3.200000e+01 : f32
    %807 = vector.broadcast %cst_288 : f32 to vector<16x1xf32>
    %808 = arith.divf %806, %807 : vector<16x1xf32>
    %cst_289 = arith.constant 9.99999996E-13 : f32
    %809 = vector.broadcast %cst_289 : f32 to vector<16x1xf32>
    %810 = arith.addf %808, %809 : vector<16x1xf32>
    %811 = math.rsqrt %810 : vector<16x1xf32>
    %812 = vector.broadcast %811 : vector<16x1xf32> to vector<16x32xf32>
    %813 = arith.mulf %803, %812 : vector<16x32xf32>
    %814 = vector.broadcast %796 : vector<1x32xf32> to vector<16x32xf32>
    %815 = arith.mulf %813, %814 : vector<16x32xf32>
    %816 = vector.broadcast %797 : vector<1x32xf32> to vector<16x32xf32>
    %817 = arith.addf %815, %816 : vector<16x32xf32>
    %818 = vector.extract_strided_slice %817 {offsets = [0, 0], sizes = [1, 32], strides = [1, 1]} : vector<16x32xf32> to vector<1x32xf32>
    %819 = arith.mulf %818, %818 : vector<1x32xf32>
    %cst_290 = arith.constant dense<0.000000e+00> : vector<1xf32>
    %820 = vector.multi_reduction <add>, %819, %cst_290 [1] : vector<1x32xf32> to vector<1xf32>
    %821 = vector.shape_cast %820 : vector<1xf32> to vector<1x1xf32>
    %cst_291 = arith.constant 1.000000e-24 : f32
    %822 = vector.broadcast %cst_291 : f32 to vector<1x1xf32>
    %823 = arith.maximumf %821, %822 : vector<1x1xf32>
    %824 = math.rsqrt %823 : vector<1x1xf32>
    %825 = vector.broadcast %824 : vector<1x1xf32> to vector<1x32xf32>
    %826 = arith.mulf %818, %825 : vector<1x32xf32>
    %c0_292 = arith.constant 0 : index
    %c0_293 = arith.constant 0 : index
    %827 = vector.load %arg19[%c0_292, %c0_293] : memref<2x32xf32, #tpu.memory_space<vmem>>, vector<1x32xf32>
    tpu.vector_store %arg19[%c0_292, %c0_293], %826 {strides = array<i32>} : memref<2x32xf32, #tpu.memory_space<vmem>>, vector<1x32xf32>,
    %828 = vector.extract_strided_slice %817 {offsets = [8, 0], sizes = [1, 32], strides = [1, 1]} : vector<16x32xf32> to vector<1x32xf32>
    %829 = arith.mulf %828, %828 : vector<1x32xf32>
    %cst_294 = arith.constant dense<0.000000e+00> : vector<1xf32>
    %830 = vector.multi_reduction <add>, %829, %cst_294 [1] : vector<1x32xf32> to vector<1xf32>
    %831 = vector.shape_cast %830 : vector<1xf32> to vector<1x1xf32>
    %cst_295 = arith.constant 1.000000e-24 : f32
    %832 = vector.broadcast %cst_295 : f32 to vector<1x1xf32>
    %833 = arith.maximumf %831, %832 : vector<1x1xf32>
    %834 = math.rsqrt %833 : vector<1x1xf32>
    %835 = vector.broadcast %834 : vector<1x1xf32> to vector<1x32xf32>
    %836 = arith.mulf %828, %835 : vector<1x32xf32>
    %c1_296 = arith.constant 1 : index
    %c0_297 = arith.constant 0 : index
    %837 = vector.load %arg19[%c1_296, %c0_297] : memref<2x32xf32, #tpu.memory_space<vmem>>, vector<1x32xf32>
    tpu.vector_store %arg19[%c1_296, %c0_297], %836 {strides = array<i32>} : memref<2x32xf32, #tpu.memory_space<vmem>>, vector<1x32xf32>,
    return
  }
}

</mosaic_0001>

<llo_original>
// kernel: eq.17
$region0: #{eq.17}
  %s0 = inlined_call_operand.vmem [shape: s32[2,5], index: 0, kind: input, shape index: {}]
  %s1 = inlined_call_operand.vmem [shape: s32[10], index: 1, kind: output, shape index: {}]
  $region1: #{eq.17} parent=0
    #allocation0 [shape = 'u8[4096]{0}', space=vmem, size = 0x1000, scoped, tag = 'scoped mem for output reshape']
    #allocation1 [shape = 'u8[4096]{0}', space=vmem, size = 0x1000, scoped, tag = 'scoped mem for input reshape']
    %s3 = sshll.u32 1, 2
    %s4 = ssub.s32 %s3, 1
    %v5 = vld [vmem:[%s0] sm:%s4]
    %6 = vst [vmem:[#allocation1] sm:%s4] %v5
    %v7 = vld [vmem:[#allocation1] sm:$0x1]
    %vm8 = vcmask 39936
    %9 = vst.msk [vmem:[#allocation0] sm:$0x1] %vm8, %v7
    %s10 = scalar_lea.vmem [#allocation1], 1
    %v11 = vld [vmem:[%s10] sm:$0x1]
    %12 = vrot.lane.b32.xlu0 %v11, 5
    %v13 = vpop.permute.xlu0 %12
    %vm14 = vcmask 80936
    %15 = vst.msk [vmem:[#allocation0] sm:$0x1] %vm14, %v13
    %s17 = sshll.u32 1, 1
    %s18 = ssub.s32 %s17, 1
    %v20 = vld [vmem:[#allocation0] sm:%s18]
    %s21 = sshll.u32 1, 1
    %s22 = ssub.s32 %s21, 1
    %23 = vst [vmem:[%s1] sm:%s22] %v20

// kernel: clip_forward.1
$region0: #{clip_forward.1}
  #allocation0 [shape = 'u32[]', space=smem, size = 0x4, offset = 0x4, fixed_abs, tag = 'smem constant byte address 0x4 - core index']
  #allocation1 [shape = 'u32[144,128]{1,0:T(1,128)}', space=vmem, size = 0x12000, scoped, tag = 'internal scratch']
  %s0 = inlined_call_operand.vmem [shape: f32[10,199], index: 0, kind: input, shape index: {}]
  %s1 = inlined_call_operand.vmem [shape: f32[199,32], index: 1, kind: input, shape index: {}]
  %s2 = inlined_call_operand.vmem [shape: f32[10,10], index: 2, kind: input, shape index: {}]
  %s3 = inlined_call_operand.vmem [shape: f32[2,32,96], index: 3, kind: input, shape index: {}]
  %s4 = inlined_call_operand.vmem [shape: f32[2,32,32], index: 4, kind: input, shape index: {}]
  %s5 = inlined_call_operand.vmem [shape: f32[2,32,64], index: 5, kind: input, shape index: {}]
  %s6 = inlined_call_operand.vmem [shape: f32[2,64,32], index: 6, kind: input, shape index: {}]
  %s7 = inlined_call_operand.vmem [shape: f32[2,8,128], index: 7, kind: input, shape index: {}]
  %s8 = inlined_call_operand.vmem [shape: f32[3,128], index: 8, kind: input, shape index: {}]
  %s9 = inlined_call_operand.vmem [shape: f32[32,32], index: 9, kind: input, shape index: {}]
  %s10 = inlined_call_operand.vmem [shape: f32[16,32], index: 10, kind: input, shape index: {}]
  %s11 = inlined_call_operand.vmem [shape: f32[16,16], index: 11, kind: input, shape index: {}]
  %s12 = inlined_call_operand.vmem [shape: f32[2,32,96], index: 12, kind: input, shape index: {}]
  %s13 = inlined_call_operand.vmem [shape: f32[2,32,32], index: 13, kind: input, shape index: {}]
  %s14 = inlined_call_operand.vmem [shape: f32[2,32,64], index: 14, kind: input, shape index: {}]
  %s15 = inlined_call_operand.vmem [shape: f32[2,64,32], index: 15, kind: input, shape index: {}]
  %s16 = inlined_call_operand.vmem [shape: f32[2,8,128], index: 16, kind: input, shape index: {}]
  %s17 = inlined_call_operand.vmem [shape: f32[2,128], index: 17, kind: input, shape index: {}]
  %s18 = inlined_call_operand.hbm [shape: f32[2,32], index: 18, kind: output, shape index: {0}]
  %s19 = inlined_call_operand.hbm [shape: f32[2,32], index: 19, kind: output, shape index: {1}]
  %20 = xla_tuple %s18, %s19
  %s21 = sld [smem:[#allocation0]]
  $region90: #{clip_forward.1} parent=0
    _
  %s23 = ssub.s32 1, %s21
  %s24 = scalar_select 0, %s23, %s21
  $region1: #{clip_forward.1} parent=0
    #allocation2 [shape = 'u8[1024]{0}', space=vmem, size = 0x400, scoped, tag = 'output window, operand 0, single buffered']
    #allocation3 [shape = 's32[1]{0}', space=sflag, size = 0x4, scoped, tag = 'scoped memory for clip_forward.1']
    #allocation4 [shape = 'u8[1024]{0}', space=vmem, size = 0x400, scoped, tag = 'output window, operand 1, single buffered']
    #allocation5 [shape = 's32[1]{0}', space=sflag, size = 0x4, scoped, tag = 'scoped memory for clip_forward.1']
    %25 = vsyncpa [#allocation3], 0
    %26 = vsyncpa [#allocation5], 0
    // Predicated region
    $region2: #{clip_forward.1} parent=1 // pred_check
      _
    $region3: #{clip_forward.1} parent=1 // pred_check_branch
      %28 = sbr.rel (0) target = $region5
    $region4: #{clip_forward.1} parent=1 // pred_region
      _
    $region5: #{clip_forward.1} parent=1 // pred_fallthru
      _
    // Predicated region
    $region6: #{clip_forward.1} parent=1 // pred_check
      _
    $region7: #{clip_forward.1} parent=1 // pred_check_branch
      %30 = sbr.rel (0) target = $region9
    $region8: #{clip_forward.1} parent=1 // pred_region
      _
    $region9: #{clip_forward.1} parent=1 // pred_fallthru
      _
    // Predicated region
    $region10: #{clip_forward.1} parent=1 // pred_check
      _
    $region11: #{clip_forward.1} parent=1 // pred_check_branch
      %32 = sbr.rel (0) target = $region13
    $region12: #{clip_forward.1} parent=1 // pred_region
      _
    $region13: #{clip_forward.1} parent=1 // pred_fallthru
      _
    // Predicated region
    $region14: #{clip_forward.1} parent=1 // pred_check
      _
    $region15: #{clip_forward.1} parent=1 // pred_check_branch
      %34 = sbr.rel (0) target = $region17
    $region16: #{clip_forward.1} parent=1 // pred_region
      _
    $region17: #{clip_forward.1} parent=1 // pred_fallthru
      _
    // Predicated region
    $region18: #{clip_forward.1} parent=1 // pred_check
      _
    $region19: #{clip_forward.1} parent=1 // pred_check_branch
      %36 = sbr.rel (0) target = $region21
    $region20: #{clip_forward.1} parent=1 // pred_region
      _
    $region21: #{clip_forward.1} parent=1 // pred_fallthru
      _
    // Predicated region
    $region22: #{clip_forward.1} parent=1 // pred_check
      _
    $region23: #{clip_forward.1} parent=1 // pred_check_branch
      %38 = sbr.rel (0) target = $region25
    $region24: #{clip_forward.1} parent=1 // pred_region
      _
    $region25: #{clip_forward.1} parent=1 // pred_fallthru
      _
    // Predicated region
    $region26: #{clip_forward.1} parent=1 // pred_check
      _
    $region27: #{clip_forward.1} parent=1 // pred_check_branch
      %40 = sbr.rel (0) target = $region29
    $region28: #{clip_forward.1} parent=1 // pred_region
      _
    $region29: #{clip_forward.1} parent=1 // pred_fallthru
      _
    // Predicated region
    $region30: #{clip_forward.1} parent=1 // pred_check
      _
    $region31: #{clip_forward.1} parent=1 // pred_check_branch
      %42 = sbr.rel (0) target = $region33
    $region32: #{clip_forward.1} parent=1 // pred_region
      _
    $region33: #{clip_forward.1} parent=1 // pred_fallthru
      _
    // Predicated region
    $region34: #{clip_forward.1} parent=1 // pred_check
      _
    $region35: #{clip_forward.1} parent=1 // pred_check_branch
      %44 = sbr.rel (0) target = $region37
    $region36: #{clip_forward.1} parent=1 // pred_region
      _
    $region37: #{clip_forward.1} parent=1 // pred_fallthru
      _
    // Predicated region
    $region38: #{clip_forward.1} parent=1 // pred_check
      _
    $region39: #{clip_forward.1} parent=1 // pred_check_branch
      %46 = sbr.rel (0) target = $region41
    $region40: #{clip_forward.1} parent=1 // pred_region
      _
    $region41: #{clip_forward.1} parent=1 // pred_fallthru
      _
    // Predicated region
    $region42: #{clip_forward.1} parent=1 // pred_check
      _
    $region43: #{clip_forward.1} parent=1 // pred_check_branch
      %48 = sbr.rel (0) target = $region45
    $region44: #{clip_forward.1} parent=1 // pred_region
      _
    $region45: #{clip_forward.1} parent=1 // pred_fallthru
      _
    // Predicated region
    $region46: #{clip_forward.1} parent=1 // pred_check
      _
    $region47: #{clip_forward.1} parent=1 // pred_check_branch
      %50 = sbr.rel (0) target = $region49
    $region48: #{clip_forward.1} parent=1 // pred_region
      _
    $region49: #{clip_forward.1} parent=1 // pred_fallthru
      _
    // Predicated region
    $region50: #{clip_forward.1} parent=1 // pred_check
      _
    $region51: #{clip_forward.1} parent=1 // pred_check_branch
      %52 = sbr.rel (0) target = $region53
    $region52: #{clip_forward.1} parent=1 // pred_region
      _
    $region53: #{clip_forward.1} parent=1 // pred_fallthru
      _
    // Predicated region
    $region54: #{clip_forward.1} parent=1 // pred_check
      _
    $region55: #{clip_forward.1} parent=1 // pred_check_branch
      %54 = sbr.rel (0) target = $region57
    $region56: #{clip_forward.1} parent=1 // pred_region
      _
    $region57: #{clip_forward.1} parent=1 // pred_fallthru
      _
    // Predicated region
    $region58: #{clip_forward.1} parent=1 // pred_check
      _
    $region59: #{clip_forward.1} parent=1 // pred_check_branch
      %56 = sbr.rel (0) target = $region61
    $region60: #{clip_forward.1} parent=1 // pred_region
      _
    $region61: #{clip_forward.1} parent=1 // pred_fallthru
      _
    // Predicated region
    $region62: #{clip_forward.1} parent=1 // pred_check
      _
    $region63: #{clip_forward.1} parent=1 // pred_check_branch
      %58 = sbr.rel (0) target = $region65
    $region64: #{clip_forward.1} parent=1 // pred_region
      _
    $region65: #{clip_forward.1} parent=1 // pred_fallthru
      _
    // Predicated region
    $region66: #{clip_forward.1} parent=1 // pred_check
      _
    $region67: #{clip_forward.1} parent=1 // pred_check_branch
      %60 = sbr.rel (0) target = $region69
    $region68: #{clip_forward.1} parent=1 // pred_region
      _
    $region69: #{clip_forward.1} parent=1 // pred_fallthru
      _
    // Predicated region
    $region70: #{clip_forward.1} parent=1 // pred_check
      _
    $region71: #{clip_forward.1} parent=1 // pred_check_branch
      %62 = sbr.rel (0) target = $region73
    $region72: #{clip_forward.1} parent=1 // pred_region
      _
    $region73: #{clip_forward.1} parent=1 // pred_fallthru
      _
    %v63 = vld [vmem:[%s2] sm:$0xff]
    %v64 = vld [vmem:[%s2 + $0x8] sm:$0x3]
    %v65 = vld [vmem:[%s0] sm:$0xff]
    %v66 = vld [vmem:[%s0 + $0x8] sm:$0xff]
    %v67 = vld [vmem:[%s0 + $0x10] sm:$0x3]
    %v68 = vld [vmem:[%s0 + $0x18] sm:$0x3]
    %v69 = vld [vmem:[%s1] sm:$0xff]
    %v70 = vld [vmem:[%s1 + $0x8] sm:$0xff]
    %v71 = vld [vmem:[%s1 + $0x10] sm:$0xff]
    %v72 = vld [vmem:[%s1 + $0x18] sm:$0xff]
    %v73 = vld [vmem:[%s1 + $0x20] sm:$0xff]
    %v74 = vld [vmem:[%s1 + $0x28] sm:$0xff]
    %v75 = vld [vmem:[%s1 + $0x30] sm:$0xff]
    %v76 = vld [vmem:[%s1 + $0x38] sm:$0xff]
    %v77 = vld [vmem:[%s1 + $0x40] sm:$0xff]
    %v78 = vld [vmem:[%s1 + $0x48] sm:$0xff]
    %v79 = vld [vmem:[%s1 + $0x50] sm:$0xff]
    %v80 = vld [vmem:[%s1 + $0x58] sm:$0xff]
    %v81 = vld [vmem:[%s1 + $0x60] sm:$0xff]
    %v82 = vld [vmem:[%s1 + $0x68] sm:$0xff]
    %v83 = vld [vmem:[%s1 + $0x70] sm:$0xff]
    %v84 = vld [vmem:[%s1 + $0x78] sm:$0xff]
    %v85 = vld [vmem:[%s1 + $0x80] sm:$0xff]
    %v86 = vld [vmem:[%s1 + $0x88] sm:$0xff]
    %v87 = vld [vmem:[%s1 + $0x90] sm:$0xff]
    %v88 = vld [vmem:[%s1 + $0x98] sm:$0xff]
    %v89 = vld [vmem:[%s1 + $0xa0] sm:$0xff]
    %v90 = vld [vmem:[%s1 + $0xa8] sm:$0xff]
    %v91 = vld [vmem:[%s1 + $0xb0] sm:$0xff]
    %v92 = vld [vmem:[%s1 + $0xb8] sm:$0xff]
    %v93 = vld [vmem:[%s1 + $0xc0] sm:$0x7f]
    %vm94 = vcmask 580608
    %v96 = vsel %vm94, %v66, 0
    %v99 = vsel %vm94, %v68, 0
    %vm101 = vcmask 1046528
    %v103 = vsel %vm101, %v93, 0
    %105 = vmatprep.subr.mxu0 0.0
    %106 = vmatpush1.msra.mxu0 %v84
    %107 = vmatprep.subr.mxu0 0.0
    %108 = vmatpush1.msra.mxu0 %v83
    %109 = vmatprep.subr.mxu0 0.0
    %110 = vmatpush1.msra.mxu0 %v82
    %111 = vmatprep.subr.mxu0 0.0
    %112 = vmatpush1.msra.mxu0 %v81
    %113 = vmatprep.subr.mxu0 0.0
    %114 = vmatpush1.msra.mxu0 %v80
    %115 = vmatprep.subr.mxu0 0.0
    %116 = vmatpush1.msra.mxu0 %v79
    %117 = vmatprep.subr.mxu0 0.0
    %118 = vmatpush1.msra.mxu0 %v78
    %119 = vmatprep.subr.mxu0 0.0
    %120 = vmatpush1.msra.mxu0 %v77
    %121 = vmatprep.subr.mxu0 0.0
    %122 = vmatpush1.msra.mxu0 %v76
    %123 = vmatprep.subr.mxu0 0.0
    %124 = vmatpush1.msra.mxu0 %v75
    %125 = vmatprep.subr.mxu0 0.0
    %126 = vmatpush1.msra.mxu0 %v74
    %127 = vmatprep.subr.mxu0 0.0
    %128 = vmatpush1.msra.mxu0 %v73
    %129 = vmatprep.subr.mxu0 0.0
    %130 = vmatpush1.msra.mxu0 %v72
    %131 = vmatprep.subr.mxu0 0.0
    %132 = vmatpush1.msra.mxu0 %v71
    %133 = vmatprep.subr.mxu0 0.0
    %134 = vmatpush1.msra.mxu0 %v70
    %135 = vmatprep.subr.mxu0 0.0
    %136 = vmatpush1.msra.mxu0 %v69
    %137 = vmatprep.subr.mxu0 0.0
    %138 = vmatpush2.msra.mxu0 0.0
    %139 = vmatprep.subr.mxu0 0.0
    %140 = vmatpush2.msra.mxu0 0.0
    %141 = vmatprep.subr.mxu0 0.0
    %142 = vmatpush2.msra.mxu0 0.0
    %143 = vmatprep.subr.mxu0 0.0
    %144 = vmatpush2.msra.mxu0 0.0
    %145 = vmatprep.subr.mxu0 0.0
    %146 = vmatpush2.msra.mxu0 0.0
    %147 = vmatprep.subr.mxu0 0.0
    %148 = vmatpush2.msra.mxu0 0.0
    %149 = vmatprep.subr.mxu0 0.0
    %150 = vmatpush2.msra.mxu0 0.0
    %151 = vmatprep.subr.mxu0 0.0
    %152 = vmatpush2.msra.mxu0 %v103
    %153 = vmatprep.subr.mxu0 0.0
    %154 = vmatpush2.msra.mxu0 %v92
    %155 = vmatprep.subr.mxu0 0.0
    %156 = vmatpush2.msra.mxu0 %v91
    %157 = vmatprep.subr.mxu0 0.0
    %158 = vmatpush2.msra.mxu0 %v90
    %159 = vmatprep.subr.mxu0 0.0
    %160 = vmatpush2.msra.mxu0 %v89
    %161 = vmatprep.subr.mxu0 0.0
    %162 = vmatpush2.msra.mxu0 %v88
    %163 = vmatprep.subr.mxu0 0.0
    %164 = vmatpush2.msra.mxu0 %v87
    %165 = vmatprep.subr.mxu0 0.0
    %166 = vmatpush2.msra.mxu0 %v86
    %167 = vmatprep.subr.mxu0 0.0
    %168 = vmatpush2.msra.mxu0 %v85
    %169 = vmatprep.mubr.f32.mxu0 %v96
    %170 = vmatmul.mubr.f32.gmra.mxu0 %v65
    %v171 = vpop.f32.mrf.mxu0
    %v172 = vadd.f32 0.0, %v171
    %v173 = vpop.f32.mrf.mxu0
    %174 = vmatprep.mubr.f32.mxu0 %v99
    %175 = vmatmul.mubr.f32.gmra.mxu0 %v67
    %v176 = vpop.f32.mrf.mxu0
    %v177 = vadd.f32 0.0, %v176
    %v178 = vpop.f32.mrf.mxu0
    %179 = vdwg.mxu0
    %v180 = vld [vmem:[%s7] sm:$0xff]
    %vm181 = vcmask 261120
    %v182 = vsel %vm181, %v172, 0.0
    %183 = vadd.xlane.f32.xlu0 %v182
    %v184 = vpop.xlane.xlu0 %183
    %vm185 = vcmask 254976
    %v186 = vsel %vm185, %v177, 0.0
    %187 = vadd.xlane.f32.xlu0 %v186
    %v188 = vpop.xlane.xlu0 %187
    %v189 = vrcp.pop 32.0
    %v190 = vmul.f32 %v184, %v189
    %v191 = vmul.f32 %v188, %v189
    %v192 = vsub.f32 %v172, %v190
    %v193 = vsub.f32 %v177, %v191
    %v194 = vmul.f32 %v192, %v192
    %v195 = vmul.f32 %v193, %v193
    %v196 = vsel %vm181, %v194, 0.0
    %197 = vadd.xlane.f32.xlu0 %v196
    %v198 = vpop.xlane.xlu0 %197
    %v199 = vsel %vm185, %v195, 0.0
    %200 = vadd.xlane.f32.xlu0 %v199
    %v201 = vpop.xlane.xlu0 %200
    %v202 = vmul.f32 %v198, %v189
    %v203 = vmul.f32 %v201, %v189
    %v204 = vadd.f32 %v202, 1e-06
    %v205 = vadd.f32 %v203, 1e-06
    %v206 = vrsqrt.pop %v204
    %v207 = vrsqrt.pop %v205
    %v208 = vmul.f32 %v192, %v206
    %v209 = vmul.f32 %v193, %v207
    %v210 = vlaneseq
    %v211 = vshrl.u32 %v210, 7
    %v212 = vsub.s32 0, %v211
    %v213 = vrot.slane %v180, %v212
    %v214 = vmul.f32 %v208, %v213
    %v215 = vmul.f32 %v209, %v213
    %v216 = vlaneseq
    %v217 = vshrl.u32 %v216, 7
    %v218 = vsub.s32 1, %v217
    %v219 = vrot.slane %v180, %v218
    %v220 = vadd.f32 %v214, %v219
    %v221 = vadd.f32 %v215, %v219
    %v222 = vld [vmem:[%s3] sm:$0xff]
    %v223 = vld [vmem:[%s3 + $0x8] sm:$0xff]
    %v224 = vld [vmem:[%s3 + $0x10] sm:$0xff]
    %v225 = vld [vmem:[%s3 + $0x18] sm:$0xff]
    %v226 = vld [vmem:[%s4] sm:$0xff]
    %v227 = vld [vmem:[%s4 + $0x8] sm:$0xff]
    %v228 = vld [vmem:[%s4 + $0x10] sm:$0xff]
    %v229 = vld [vmem:[%s4 + $0x18] sm:$0xff]
    %v230 = vlaneseq
    %v231 = vshrl.u32 %v230, 7
    %v232 = vsub.s32 2, %v231
    %v233 = vrot.slane %v180, %v232
    %v235 = vsel %vm181, %v220, 0
    %v238 = vsel %vm181, %v221, 0
    %240 = vmatprep.subr.mxu0 0.0
    %241 = vmatpush1.msra.mxu0 0.0
    %242 = vmatprep.subr.mxu0 0.0
    %243 = vmatpush1.msra.mxu0 0.0
    %244 = vmatprep.subr.mxu0 0.0
    %245 = vmatpush1.msra.mxu0 0.0
    %246 = vmatprep.subr.mxu0 0.0
    %247 = vmatpush1.msra.mxu0 0.0
    %248 = vmatprep.subr.mxu0 0.0
    %249 = vmatpush1.msra.mxu0 0.0
    %250 = vmatprep.subr.mxu0 0.0
    %251 = vmatpush1.msra.mxu0 0.0
    %252 = vmatprep.subr.mxu0 0.0
    %253 = vmatpush1.msra.mxu0 0.0
    %254 = vmatprep.subr.mxu0 0.0
    %255 = vmatpush1.msra.mxu0 0.0
    %256 = vmatprep.subr.mxu0 0.0
    %257 = vmatpush1.msra.mxu0 0.0
    %258 = vmatprep.subr.mxu0 0.0
    %259 = vmatpush1.msra.mxu0 0.0
    %260 = vmatprep.subr.mxu0 0.0
    %261 = vmatpush1.msra.mxu0 0.0
    %262 = vmatprep.subr.mxu0 0.0
    %263 = vmatpush1.msra.mxu0 0.0
    %264 = vmatprep.subr.mxu0 0.0
    %265 = vmatpush1.msra.mxu0 %v225
    %266 = vmatprep.subr.mxu0 0.0
    %267 = vmatpush1.msra.mxu0 %v224
    %268 = vmatprep.subr.mxu0 0.0
    %269 = vmatpush1.msra.mxu0 %v223
    %270 = vmatprep.subr.mxu0 0.0
    %271 = vmatpush1.msra.mxu0 %v222
    %272 = vmatprep.subr.mxu0 0.0
    %273 = vmatpush2.msra.mxu0 0.0
    %274 = vmatprep.subr.mxu0 0.0
    %275 = vmatpush2.msra.mxu0 0.0
    %276 = vmatprep.subr.mxu0 0.0
    %277 = vmatpush2.msra.mxu0 0.0
    %278 = vmatprep.subr.mxu0 0.0
    %279 = vmatpush2.msra.mxu0 0.0
    %280 = vmatprep.subr.mxu0 0.0
    %281 = vmatpush2.msra.mxu0 0.0
    %282 = vmatprep.subr.mxu0 0.0
    %283 = vmatpush2.msra.mxu0 0.0
    %284 = vmatprep.subr.mxu0 0.0
    %285 = vmatpush2.msra.mxu0 0.0
    %286 = vmatprep.subr.mxu0 0.0
    %287 = vmatpush2.msra.mxu0 0.0
    %288 = vmatprep.subr.mxu0 0.0
    %289 = vmatpush2.msra.mxu0 0.0
    %290 = vmatprep.subr.mxu0 0.0
    %291 = vmatpush2.msra.mxu0 0.0
    %292 = vmatprep.subr.mxu0 0.0
    %293 = vmatpush2.msra.mxu0 0.0
    %294 = vmatprep.subr.mxu0 0.0
    %295 = vmatpush2.msra.mxu0 0.0
    %296 = vmatprep.subr.mxu0 0.0
    %297 = vmatpush2.msra.mxu0 0.0
    %298 = vmatprep.subr.mxu0 0.0
    %299 = vmatpush2.msra.mxu0 0.0
    %300 = vmatprep.subr.mxu0 0.0
    %301 = vmatpush2.msra.mxu0 0.0
    %302 = vmatprep.subr.mxu0 0.0
    %303 = vmatpush2.msra.mxu0 0.0
    %304 = vmatprep.mubr.f32.mxu0 0.0
    %305 = vmatmul.mubr.f32.gmra.mxu0 %v235
    %v306 = vpop.f32.mrf.mxu0
    %v307 = vadd.f32 %v233, %v306
    %v308 = vpop.f32.mrf.mxu0
    %309 = vmatprep.mubr.f32.mxu0 0.0
    %310 = vmatmul.mubr.f32.gmra.mxu0 %v238
    %v311 = vpop.f32.mrf.mxu0
    %v312 = vadd.f32 %v233, %v311
    %v313 = vpop.f32.mrf.mxu0
    %314 = vdwg.mxu0
    %317 = vrot.lane.b32.xlu0 %v307, 96
    %v318 = vpop.permute.xlu0 %317
    %319 = vrot.lane.b32.xlu0 %v312, 96
    %v320 = vpop.permute.xlu0 %319
    %vm321 = vcmask 64512
    %v322 = vsel %vm321, %v307, 0
    %v324 = vsel %vm321, %v312, 0
    %v326 = vsel %vm321, %v318, 0
    %v328 = vsel %vm321, %v320, 0
    %330 = vmatprep.subr.mxu0 0.0
    %331 = vmatpush1.xpose.msra.mxu0 0.0
    %332 = vmatprep.subr.mxu0 0.0
    %333 = vmatpush1.xpose.msra.mxu0 0.0
    %334 = vmatprep.subr.mxu0 0.0
    %335 = vmatpush1.xpose.msra.mxu0 0.0
    %336 = vmatprep.subr.mxu0 0.0
    %337 = vmatpush1.xpose.msra.mxu0 0.0
    %338 = vmatprep.subr.mxu0 0.0
    %339 = vmatpush1.xpose.msra.mxu0 0.0
    %340 = vmatprep.subr.mxu0 0.0
    %341 = vmatpush1.xpose.msra.mxu0 0.0
    %342 = vmatprep.subr.mxu0 0.0
    %343 = vmatpush1.xpose.msra.mxu0 0.0
    %344 = vmatprep.subr.mxu0 0.0
    %345 = vmatpush1.xpose.msra.mxu0 0.0
    %346 = vmatprep.subr.mxu0 0.0
    %347 = vmatpush1.xpose.msra.mxu0 0.0
    %348 = vmatprep.subr.mxu0 0.0
    %349 = vmatpush1.xpose.msra.mxu0 0.0
    %350 = vmatprep.subr.mxu0 0.0
    %351 = vmatpush1.xpose.msra.mxu0 0.0
    %352 = vmatprep.subr.mxu0 0.0
    %353 = vmatpush1.xpose.msra.mxu0 0.0
    %354 = vmatprep.subr.mxu0 0.0
    %355 = vmatpush1.xpose.msra.mxu0 0.0
    %356 = vmatprep.subr.mxu0 0.0
    %357 = vmatpush1.xpose.msra.mxu0 0.0
    %358 = vmatprep.subr.mxu0 0.0
    %359 = vmatpush1.xpose.msra.mxu0 %v328
    %360 = vmatprep.subr.mxu0 0.0
    %361 = vmatpush1.xpose.msra.mxu0 %v326
    %362 = vmatprep.subr.mxu0 0.0
    %363 = vmatpush2.xpose.msra.mxu0 0.0
    %364 = vmatprep.subr.mxu0 0.0
    %365 = vmatpush2.xpose.msra.mxu0 0.0
    %366 = vmatprep.subr.mxu0 0.0
    %367 = vmatpush2.xpose.msra.mxu0 0.0
    %368 = vmatprep.subr.mxu0 0.0
    %369 = vmatpush2.xpose.msra.mxu0 0.0
    %370 = vmatprep.subr.mxu0 0.0
    %371 = vmatpush2.xpose.msra.mxu0 0.0
    %372 = vmatprep.subr.mxu0 0.0
    %373 = vmatpush2.xpose.msra.mxu0 0.0
    %374 = vmatprep.subr.mxu0 0.0
    %375 = vmatpush2.xpose.msra.mxu0 0.0
    %376 = vmatprep.subr.mxu0 0.0
    %377 = vmatpush2.xpose.msra.mxu0 0.0
    %378 = vmatprep.subr.mxu0 0.0
    %379 = vmatpush2.xpose.msra.mxu0 0.0
    %380 = vmatprep.subr.mxu0 0.0
    %381 = vmatpush2.xpose.msra.mxu0 0.0
    %382 = vmatprep.subr.mxu0 0.0
    %383 = vmatpush2.xpose.msra.mxu0 0.0
    %384 = vmatprep.subr.mxu0 0.0
    %385 = vmatpush2.xpose.msra.mxu0 0.0
    %386 = vmatprep.subr.mxu0 0.0
    %387 = vmatpush2.xpose.msra.mxu0 0.0
    %388 = vmatprep.subr.mxu0 0.0
    %389 = vmatpush2.xpose.msra.mxu0 0.0
    %390 = vmatprep.subr.mxu0 0.0
    %391 = vmatpush2.xpose.msra.mxu0 0.0
    %392 = vmatprep.subr.mxu0 0.0
    %393 = vmatpush2.xpose.msra.mxu0 0.0
    %394 = vmatprep.mubr.f32.mxu0 0.0
    %395 = vmatmul.mubr.f32.gmra.mxu0 %v322
    %v396 = vpop.f32.mrf.mxu0
    %v397 = vadd.f32 0.0, %v396
    %v398 = vpop.f32.mrf.mxu0
    %399 = vmatprep.mubr.f32.mxu0 0.0
    %400 = vmatmul.mubr.f32.gmra.mxu0 %v324
    %v401 = vpop.f32.mrf.mxu0
    %v402 = vadd.f32 0.0, %v401
    %v403 = vpop.f32.mrf.mxu0
    %404 = vdwg.mxu0
    %v405 = vmul.f32 %v397, 0.35355338
    %v406 = vmul.f32 %v402, 0.35355338
    %v407 = vadd.f32 %v405, %v63
    %v408 = vadd.f32 %v406, %v64
    %vm409 = vcmask 80896
    %v410 = vsel %vm409, %v407, -inf
    %411 = vmax.xlane.f32.xlu0 %v410
    %v412 = vpop.xlane.xlu0 %411
    %vm413 = vcmask 74752
    %v414 = vsel %vm413, %v408, -inf
    %415 = vmax.xlane.f32.xlu0 %v414
    %v416 = vpop.xlane.xlu0 %415
    %v417 = vsub.f32 %v407, %v412
    %v418 = vsub.f32 %v408, %v416
    %v419 = vmul.f32 %v417, 1.442695
    %v420 = vpow.pop %v419
    %v421 = vmul.f32 %v418, 1.442695
    %v422 = vpow.pop %v421
    %v423 = vsel %vm409, %v420, 0.0
    %424 = vadd.xlane.f32.xlu0 %v423
    %v425 = vpop.xlane.xlu0 %424
    %v426 = vsel %vm413, %v422, 0.0
    %427 = vadd.xlane.f32.xlu0 %v426
    %v428 = vpop.xlane.xlu0 %427
    %v429 = vrcp.pop %v425
    %v430 = vrcp.pop %v428
    %v431 = vmul.f32 %v420, %v429
    %v432 = vmul.f32 %v422, %v430
    %433 = vrot.lane.b32.xlu0 %v307, 64
    %v434 = vpop.permute.xlu0 %433
    %435 = vrot.lane.b32.xlu0 %v312, 64
    %v436 = vpop.permute.xlu0 %435
    %v439 = vsel %vm409, %v431, 0
    %v442 = vsel %vm409, %v432, 0
    %vm444 = vcmask 1041408
    %v445 = vsel %vm444, %v436, 0
    %447 = vmatprep.subr.mxu0 0.0
    %448 = vmatpush1.msra.mxu0 0.0
    %449 = vmatprep.subr.mxu0 0.0
    %450 = vmatpush1.msra.mxu0 0.0
    %451 = vmatprep.subr.mxu0 0.0
    %452 = vmatpush1.msra.mxu0 0.0
    %453 = vmatprep.subr.mxu0 0.0
    %454 = vmatpush1.msra.mxu0 0.0
    %455 = vmatprep.subr.mxu0 0.0
    %456 = vmatpush1.msra.mxu0 0.0
    %457 = vmatprep.subr.mxu0 0.0
    %458 = vmatpush1.msra.mxu0 0.0
    %459 = vmatprep.subr.mxu0 0.0
    %460 = vmatpush1.msra.mxu0 0.0
    %461 = vmatprep.subr.mxu0 0.0
    %462 = vmatpush1.msra.mxu0 0.0
    %463 = vmatprep.subr.mxu0 0.0
    %464 = vmatpush1.msra.mxu0 0.0
    %465 = vmatprep.subr.mxu0 0.0
    %466 = vmatpush1.msra.mxu0 0.0
    %467 = vmatprep.subr.mxu0 0.0
    %468 = vmatpush1.msra.mxu0 0.0
    %469 = vmatprep.subr.mxu0 0.0
    %470 = vmatpush1.msra.mxu0 0.0
    %471 = vmatprep.subr.mxu0 0.0
    %472 = vmatpush1.msra.mxu0 0.0
    %473 = vmatprep.subr.mxu0 0.0
    %474 = vmatpush1.msra.mxu0 0.0
    %475 = vmatprep.subr.mxu0 0.0
    %476 = vmatpush1.msra.mxu0 %v445
    %477 = vmatprep.subr.mxu0 0.0
    %478 = vmatpush1.msra.mxu0 %v434
    %479 = vmatprep.subr.mxu0 0.0
    %480 = vmatpush2.msra.mxu0 0.0
    %481 = vmatprep.subr.mxu0 0.0
    %482 = vmatpush2.msra.mxu0 0.0
    %483 = vmatprep.subr.mxu0 0.0
    %484 = vmatpush2.msra.mxu0 0.0
    %485 = vmatprep.subr.mxu0 0.0
    %486 = vmatpush2.msra.mxu0 0.0
    %487 = vmatprep.subr.mxu0 0.0
    %488 = vmatpush2.msra.mxu0 0.0
    %489 = vmatprep.subr.mxu0 0.0
    %490 = vmatpush2.msra.mxu0 0.0
    %491 = vmatprep.subr.mxu0 0.0
    %492 = vmatpush2.msra.mxu0 0.0
    %493 = vmatprep.subr.mxu0 0.0
    %494 = vmatpush2.msra.mxu0 0.0
    %495 = vmatprep.subr.mxu0 0.0
    %496 = vmatpush2.msra.mxu0 0.0
    %497 = vmatprep.subr.mxu0 0.0
    %498 = vmatpush2.msra.mxu0 0.0
    %499 = vmatprep.subr.mxu0 0.0
    %500 = vmatpush2.msra.mxu0 0.0
    %501 = vmatprep.subr.mxu0 0.0
    %502 = vmatpush2.msra.mxu0 0.0
    %503 = vmatprep.subr.mxu0 0.0
    %504 = vmatpush2.msra.mxu0 0.0
    %505 = vmatprep.subr.mxu0 0.0
    %506 = vmatpush2.msra.mxu0 0.0
    %507 = vmatprep.subr.mxu0 0.0
    %508 = vmatpush2.msra.mxu0 0.0
    %509 = vmatprep.subr.mxu0 0.0
    %510 = vmatpush2.msra.mxu0 0.0
    %511 = vmatprep.mubr.f32.mxu0 0.0
    %512 = vmatmul.mubr.f32.gmra.mxu0 %v439
    %v513 = vpop.f32.mrf.mxu0
    %v514 = vadd.f32 0.0, %v513
    %v515 = vpop.f32.mrf.mxu0
    %516 = vmatprep.mubr.f32.mxu0 0.0
    %517 = vmatmul.mubr.f32.gmra.mxu0 %v442
    %v518 = vpop.f32.mrf.mxu0
    %v519 = vadd.f32 0.0, %v518
    %v520 = vpop.f32.mrf.mxu0
    %521 = vdwg.mxu0
    %522 = vrot.lane.b32.xlu0 %v307, 120
    %v523 = vpop.permute.xlu0 %522
    %524 = vrot.lane.b32.xlu0 %v312, 120
    %v525 = vpop.permute.xlu0 %524
    %526 = vrot.lane.b32.xlu0 %v307, 88
    %v527 = vpop.permute.xlu0 %526
    %528 = vrot.lane.b32.xlu0 %v312, 88
    %v529 = vpop.permute.xlu0 %528
    %v530 = vsel %vm321, %v523, 0
    %v532 = vsel %vm321, %v525, 0
    %v534 = vsel %vm321, %v527, 0
    %v536 = vsel %vm321, %v529, 0
    %538 = vmatprep.subr.mxu0 0.0
    %539 = vmatpush1.xpose.msra.mxu0 0.0
    %540 = vmatprep.subr.mxu0 0.0
    %541 = vmatpush1.xpose.msra.mxu0 0.0
    %542 = vmatprep.subr.mxu0 0.0
    %543 = vmatpush1.xpose.msra.mxu0 0.0
    %544 = vmatprep.subr.mxu0 0.0
    %545 = vmatpush1.xpose.msra.mxu0 0.0
    %546 = vmatprep.subr.mxu0 0.0
    %547 = vmatpush1.xpose.msra.mxu0 0.0
    %548 = vmatprep.subr.mxu0 0.0
    %549 = vmatpush1.xpose.msra.mxu0 0.0
    %550 = vmatprep.subr.mxu0 0.0
    %551 = vmatpush1.xpose.msra.mxu0 0.0
    %552 = vmatprep.subr.mxu0 0.0
    %553 = vmatpush1.xpose.msra.mxu0 0.0
    %554 = vmatprep.subr.mxu0 0.0
    %555 = vmatpush1.xpose.msra.mxu0 0.0
    %556 = vmatprep.subr.mxu0 0.0
    %557 = vmatpush1.xpose.msra.mxu0 0.0
    %558 = vmatprep.subr.mxu0 0.0
    %559 = vmatpush1.xpose.msra.mxu0 0.0
    %560 = vmatprep.subr.mxu0 0.0
    %561 = vmatpush1.xpose.msra.mxu0 0.0
    %562 = vmatprep.subr.mxu0 0.0
    %563 = vmatpush1.xpose.msra.mxu0 0.0
    %564 = vmatprep.subr.mxu0 0.0
    %565 = vmatpush1.xpose.msra.mxu0 0.0
    %566 = vmatprep.subr.mxu0 0.0
    %567 = vmatpush1.xpose.msra.mxu0 %v536
    %568 = vmatprep.subr.mxu0 0.0
    %569 = vmatpush1.xpose.msra.mxu0 %v534
    %570 = vmatprep.subr.mxu0 0.0
    %571 = vmatpush2.xpose.msra.mxu0 0.0
    %572 = vmatprep.subr.mxu0 0.0
    %573 = vmatpush2.xpose.msra.mxu0 0.0
    %574 = vmatprep.subr.mxu0 0.0
    %575 = vmatpush2.xpose.msra.mxu0 0.0
    %576 = vmatprep.subr.mxu0 0.0
    %577 = vmatpush2.xpose.msra.mxu0 0.0
    %578 = vmatprep.subr.mxu0 0.0
    %579 = vmatpush2.xpose.msra.mxu0 0.0
    %580 = vmatprep.subr.mxu0 0.0
    %581 = vmatpush2.xpose.msra.mxu0 0.0
    %582 = vmatprep.subr.mxu0 0.0
    %583 = vmatpush2.xpose.msra.mxu0 0.0
    %584 = vmatprep.subr.mxu0 0.0
    %585 = vmatpush2.xpose.msra.mxu0 0.0
    %586 = vmatprep.subr.mxu0 0.0
    %587 = vmatpush2.xpose.msra.mxu0 0.0
    %588 = vmatprep.subr.mxu0 0.0
    %589 = vmatpush2.xpose.msra.mxu0 0.0
    %590 = vmatprep.subr.mxu0 0.0
    %591 = vmatpush2.xpose.msra.mxu0 0.0
    %592 = vmatprep.subr.mxu0 0.0
    %593 = vmatpush2.xpose.msra.mxu0 0.0
    %594 = vmatprep.subr.mxu0 0.0
    %595 = vmatpush2.xpose.msra.mxu0 0.0
    %596 = vmatprep.subr.mxu0 0.0
    %597 = vmatpush2.xpose.msra.mxu0 0.0
    %598 = vmatprep.subr.mxu0 0.0
    %599 = vmatpush2.xpose.msra.mxu0 0.0
    %600 = vmatprep.subr.mxu0 0.0
    %601 = vmatpush2.xpose.msra.mxu0 0.0
    %602 = vmatprep.mubr.f32.mxu0 0.0
    %603 = vmatmul.mubr.f32.gmra.mxu0 %v530
    %v604 = vpop.f32.mrf.mxu0
    %v605 = vadd.f32 0.0, %v604
    %v606 = vpop.f32.mrf.mxu0
    %607 = vmatprep.mubr.f32.mxu0 0.0
    %608 = vmatmul.mubr.f32.gmra.mxu0 %v532
    %v609 = vpop.f32.mrf.mxu0
    %v610 = vadd.f32 0.0, %v609
    %v611 = vpop.f32.mrf.mxu0
    %612 = vdwg.mxu0
    %v613 = vmul.f32 %v605, 0.35355338
    %v614 = vmul.f32 %v610, 0.35355338
    %v615 = vadd.f32 %v613, %v63
    %v616 = vadd.f32 %v614, %v64
    %v617 = vsel %vm409, %v615, -inf
    %618 = vmax.xlane.f32.xlu0 %v617
    %v619 = vpop.xlane.xlu0 %618
    %v620 = vsel %vm413, %v616, -inf
    %621 = vmax.xlane.f32.xlu0 %v620
    %v622 = vpop.xlane.xlu0 %621
    %v623 = vsub.f32 %v615, %v619
    %v624 = vsub.f32 %v616, %v622
    %v625 = vmul.f32 %v623, 1.442695
    %v626 = vpow.pop %v625
    %v627 = vmul.f32 %v624, 1.442695
    %v628 = vpow.pop %v627
    %v629 = vsel %vm409, %v626, 0.0
    %630 = vadd.xlane.f32.xlu0 %v629
    %v631 = vpop.xlane.xlu0 %630
    %v632 = vsel %vm413, %v628, 0.0
    %633 = vadd.xlane.f32.xlu0 %v632
    %v634 = vpop.xlane.xlu0 %633
    %v635 = vrcp.pop %v631
    %v636 = vrcp.pop %v634
    %v637 = vmul.f32 %v626, %v635
    %v638 = vmul.f32 %v628, %v636
    %639 = vrot.lane.b32.xlu0 %v307, 56
    %v640 = vpop.permute.xlu0 %639
    %641 = vrot.lane.b32.xlu0 %v312, 56
    %v642 = vpop.permute.xlu0 %641
    %v645 = vsel %vm409, %v637, 0
    %v648 = vsel %vm409, %v638, 0
    %v650 = vsel %vm444, %v642, 0
    %652 = vmatprep.subr.mxu0 0.0
    %653 = vmatpush1.msra.mxu0 0.0
    %654 = vmatprep.subr.mxu0 0.0
    %655 = vmatpush1.msra.mxu0 0.0
    %656 = vmatprep.subr.mxu0 0.0
    %657 = vmatpush1.msra.mxu0 0.0
    %658 = vmatprep.subr.mxu0 0.0
    %659 = vmatpush1.msra.mxu0 0.0
    %660 = vmatprep.subr.mxu0 0.0
    %661 = vmatpush1.msra.mxu0 0.0
    %662 = vmatprep.subr.mxu0 0.0
    %663 = vmatpush1.msra.mxu0 0.0
    %664 = vmatprep.subr.mxu0 0.0
    %665 = vmatpush1.msra.mxu0 0.0
    %666 = vmatprep.subr.mxu0 0.0
    %667 = vmatpush1.msra.mxu0 0.0
    %668 = vmatprep.subr.mxu0 0.0
    %669 = vmatpush1.msra.mxu0 0.0
    %670 = vmatprep.subr.mxu0 0.0
    %671 = vmatpush1.msra.mxu0 0.0
    %672 = vmatprep.subr.mxu0 0.0
    %673 = vmatpush1.msra.mxu0 0.0
    %674 = vmatprep.subr.mxu0 0.0
    %675 = vmatpush1.msra.mxu0 0.0
    %676 = vmatprep.subr.mxu0 0.0
    %677 = vmatpush1.msra.mxu0 0.0
    %678 = vmatprep.subr.mxu0 0.0
    %679 = vmatpush1.msra.mxu0 0.0
    %680 = vmatprep.subr.mxu0 0.0
    %681 = vmatpush1.msra.mxu0 %v650
    %682 = vmatprep.subr.mxu0 0.0
    %683 = vmatpush1.msra.mxu0 %v640
    %684 = vmatprep.subr.mxu0 0.0
    %685 = vmatpush2.msra.mxu0 0.0
    %686 = vmatprep.subr.mxu0 0.0
    %687 = vmatpush2.msra.mxu0 0.0
    %688 = vmatprep.subr.mxu0 0.0
    %689 = vmatpush2.msra.mxu0 0.0
    %690 = vmatprep.subr.mxu0 0.0
    %691 = vmatpush2.msra.mxu0 0.0
    %692 = vmatprep.subr.mxu0 0.0
    %693 = vmatpush2.msra.mxu0 0.0
    %694 = vmatprep.subr.mxu0 0.0
    %695 = vmatpush2.msra.mxu0 0.0
    %696 = vmatprep.subr.mxu0 0.0
    %697 = vmatpush2.msra.mxu0 0.0
    %698 = vmatprep.subr.mxu0 0.0
    %699 = vmatpush2.msra.mxu0 0.0
    %700 = vmatprep.subr.mxu0 0.0
    %701 = vmatpush2.msra.mxu0 0.0
    %702 = vmatprep.subr.mxu0 0.0
    %703 = vmatpush2.msra.mxu0 0.0
    %704 = vmatprep.subr.mxu0 0.0
    %705 = vmatpush2.msra.mxu0 0.0
    %706 = vmatprep.subr.mxu0 0.0
    %707 = vmatpush2.msra.mxu0 0.0
    %708 = vmatprep.subr.mxu0 0.0
    %709 = vmatpush2.msra.mxu0 0.0
    %710 = vmatprep.subr.mxu0 0.0
    %711 = vmatpush2.msra.mxu0 0.0
    %712 = vmatprep.subr.mxu0 0.0
    %713 = vmatpush2.msra.mxu0 0.0
    %714 = vmatprep.subr.mxu0 0.0
    %715 = vmatpush2.msra.mxu0 0.0
    %716 = vmatprep.mubr.f32.mxu0 0.0
    %717 = vmatmul.mubr.f32.gmra.mxu0 %v645
    %v718 = vpop.f32.mrf.mxu0
    %v719 = vadd.f32 0.0, %v718
    %v720 = vpop.f32.mrf.mxu0
    %721 = vmatprep.mubr.f32.mxu0 0.0
    %722 = vmatmul.mubr.f32.gmra.mxu0 %v648
    %v723 = vpop.f32.mrf.mxu0
    %v724 = vadd.f32 0.0, %v723
    %v725 = vpop.f32.mrf.mxu0
    %726 = vdwg.mxu0
    %727 = vrot.lane.b32.xlu0 %v307, 112
    %v728 = vpop.permute.xlu0 %727
    %729 = vrot.lane.b32.xlu0 %v312, 112
    %v730 = vpop.permute.xlu0 %729
    %731 = vrot.lane.b32.xlu0 %v307, 80
    %v732 = vpop.permute.xlu0 %731
    %733 = vrot.lane.b32.xlu0 %v312, 80
    %v734 = vpop.permute.xlu0 %733
    %v735 = vsel %vm321, %v728, 0
    %v737 = vsel %vm321, %v730, 0
    %v739 = vsel %vm321, %v732, 0
    %v741 = vsel %vm321, %v734, 0
    %743 = vmatprep.subr.mxu0 0.0
    %744 = vmatpush1.xpose.msra.mxu0 0.0
    %745 = vmatprep.subr.mxu0 0.0
    %746 = vmatpush1.xpose.msra.mxu0 0.0
    %747 = vmatprep.subr.mxu0 0.0
    %748 = vmatpush1.xpose.msra.mxu0 0.0
    %749 = vmatprep.subr.mxu0 0.0
    %750 = vmatpush1.xpose.msra.mxu0 0.0
    %751 = vmatprep.subr.mxu0 0.0
    %752 = vmatpush1.xpose.msra.mxu0 0.0
    %753 = vmatprep.subr.mxu0 0.0
    %754 = vmatpush1.xpose.msra.mxu0 0.0
    %755 = vmatprep.subr.mxu0 0.0
    %756 = vmatpush1.xpose.msra.mxu0 0.0
    %757 = vmatprep.subr.mxu0 0.0
    %758 = vmatpush1.xpose.msra.mxu0 0.0
    %759 = vmatprep.subr.mxu0 0.0
    %760 = vmatpush1.xpose.msra.mxu0 0.0
    %761 = vmatprep.subr.mxu0 0.0
    %762 = vmatpush1.xpose.msra.mxu0 0.0
    %763 = vmatprep.subr.mxu0 0.0
    %764 = vmatpush1.xpose.msra.mxu0 0.0
    %765 = vmatprep.subr.mxu0 0.0
    %766 = vmatpush1.xpose.msra.mxu0 0.0
    %767 = vmatprep.subr.mxu0 0.0
    %768 = vmatpush1.xpose.msra.mxu0 0.0
    %769 = vmatprep.subr.mxu0 0.0
    %770 = vmatpush1.xpose.msra.mxu0 0.0
    %771 = vmatprep.subr.mxu0 0.0
    %772 = vmatpush1.xpose.msra.mxu0 %v741
    %773 = vmatprep.subr.mxu0 0.0
    %774 = vmatpush1.xpose.msra.mxu0 %v739
    %775 = vmatprep.subr.mxu0 0.0
    %776 = vmatpush2.xpose.msra.mxu0 0.0
    %777 = vmatprep.subr.mxu0 0.0
    %778 = vmatpush2.xpose.msra.mxu0 0.0
    %779 = vmatprep.subr.mxu0 0.0
    %780 = vmatpush2.xpose.msra.mxu0 0.0
    %781 = vmatprep.subr.mxu0 0.0
    %782 = vmatpush2.xpose.msra.mxu0 0.0
    %783 = vmatprep.subr.mxu0 0.0
    %784 = vmatpush2.xpose.msra.mxu0 0.0
    %785 = vmatprep.subr.mxu0 0.0
    %786 = vmatpush2.xpose.msra.mxu0 0.0
    %787 = vmatprep.subr.mxu0 0.0
    %788 = vmatpush2.xpose.msra.mxu0 0.0
    %789 = vmatprep.subr.mxu0 0.0
    %790 = vmatpush2.xpose.msra.mxu0 0.0
    %791 = vmatprep.subr.mxu0 0.0
    %792 = vmatpush2.xpose.msra.mxu0 0.0
    %793 = vmatprep.subr.mxu0 0.0
    %794 = vmatpush2.xpose.msra.mxu0 0.0
    %795 = vmatprep.subr.mxu0 0.0
    %796 = vmatpush2.xpose.msra.mxu0 0.0
    %797 = vmatprep.subr.mxu0 0.0
    %798 = vmatpush2.xpose.msra.mxu0 0.0
    %799 = vmatprep.subr.mxu0 0.0
    %800 = vmatpush2.xpose.msra.mxu0 0.0
    %801 = vmatprep.subr.mxu0 0.0
    %802 = vmatpush2.xpose.msra.mxu0 0.0
    %803 = vmatprep.subr.mxu0 0.0
    %804 = vmatpush2.xpose.msra.mxu0 0.0
    %805 = vmatprep.subr.mxu0 0.0
    %806 = vmatpush2.xpose.msra.mxu0 0.0
    %807 = vmatprep.mubr.f32.mxu0 0.0
    %808 = vmatmul.mubr.f32.gmra.mxu0 %v735
    %v809 = vpop.f32.mrf.mxu0
    %v810 = vadd.f32 0.0, %v809
    %v811 = vpop.f32.mrf.mxu0
    %812 = vmatprep.mubr.f32.mxu0 0.0
    %813 = vmatmul.mubr.f32.gmra.mxu0 %v737
    %v814 = vpop.f32.mrf.mxu0
    %v815 = vadd.f32 0.0, %v814
    %v816 = vpop.f32.mrf.mxu0
    %817 = vdwg.mxu0
    %v818 = vmul.f32 %v810, 0.35355338
    %v819 = vmul.f32 %v815, 0.35355338
    %v820 = vadd.f32 %v818, %v63
    %v821 = vadd.f32 %v819, %v64
    %v822 = vsel %vm409, %v820, -inf
    %823 = vmax.xlane.f32.xlu0 %v822
    %v824 = vpop.xlane.xlu0 %823
    %v825 = vsel %vm413, %v821, -inf
    %826 = vmax.xlane.f32.xlu0 %v825
    %v827 = vpop.xlane.xlu0 %826
    %v828 = vsub.f32 %v820, %v824
    %v829 = vsub.f32 %v821, %v827
    %v830 = vmul.f32 %v828, 1.442695
    %v831 = vpow.pop %v830
    %v832 = vmul.f32 %v829, 1.442695
    %v833 = vpow.pop %v832
    %v834 = vsel %vm409, %v831, 0.0
    %835 = vadd.xlane.f32.xlu0 %v834
    %v836 = vpop.xlane.xlu0 %835
    %v837 = vsel %vm413, %v833, 0.0
    %838 = vadd.xlane.f32.xlu0 %v837
    %v839 = vpop.xlane.xlu0 %838
    %v840 = vrcp.pop %v836
    %v841 = vrcp.pop %v839
    %v842 = vmul.f32 %v831, %v840
    %v843 = vmul.f32 %v833, %v841
    %844 = vrot.lane.b32.xlu0 %v307, 48
    %v845 = vpop.permute.xlu0 %844
    %846 = vrot.lane.b32.xlu0 %v312, 48
    %v847 = vpop.permute.xlu0 %846
    %v850 = vsel %vm409, %v842, 0
    %v853 = vsel %vm409, %v843, 0
    %v855 = vsel %vm444, %v847, 0
    %857 = vmatprep.subr.mxu0 0.0
    %858 = vmatpush1.msra.mxu0 0.0
    %859 = vmatprep.subr.mxu0 0.0
    %860 = vmatpush1.msra.mxu0 0.0
    %861 = vmatprep.subr.mxu0 0.0
    %862 = vmatpush1.msra.mxu0 0.0
    %863 = vmatprep.subr.mxu0 0.0
    %864 = vmatpush1.msra.mxu0 0.0
    %865 = vmatprep.subr.mxu0 0.0
    %866 = vmatpush1.msra.mxu0 0.0
    %867 = vmatprep.subr.mxu0 0.0
    %868 = vmatpush1.msra.mxu0 0.0
    %869 = vmatprep.subr.mxu0 0.0
    %870 = vmatpush1.msra.mxu0 0.0
    %871 = vmatprep.subr.mxu0 0.0
    %872 = vmatpush1.msra.mxu0 0.0
    %873 = vmatprep.subr.mxu0 0.0
    %874 = vmatpush1.msra.mxu0 0.0
    %875 = vmatprep.subr.mxu0 0.0
    %876 = vmatpush1.msra.mxu0 0.0
    %877 = vmatprep.subr.mxu0 0.0
    %878 = vmatpush1.msra.mxu0 0.0
    %879 = vmatprep.subr.mxu0 0.0
    %880 = vmatpush1.msra.mxu0 0.0
    %881 = vmatprep.subr.mxu0 0.0
    %882 = vmatpush1.msra.mxu0 0.0
    %883 = vmatprep.subr.mxu0 0.0
    %884 = vmatpush1.msra.mxu0 0.0
    %885 = vmatprep.subr.mxu0 0.0
    %886 = vmatpush1.msra.mxu0 %v855
    %887 = vmatprep.subr.mxu0 0.0
    %888 = vmatpush1.msra.mxu0 %v845
    %889 = vmatprep.subr.mxu0 0.0
    %890 = vmatpush2.msra.mxu0 0.0
    %891 = vmatprep.subr.mxu0 0.0
    %892 = vmatpush2.msra.mxu0 0.0
    %893 = vmatprep.subr.mxu0 0.0
    %894 = vmatpush2.msra.mxu0 0.0
    %895 = vmatprep.subr.mxu0 0.0
    %896 = vmatpush2.msra.mxu0 0.0
    %897 = vmatprep.subr.mxu0 0.0
    %898 = vmatpush2.msra.mxu0 0.0
    %899 = vmatprep.subr.mxu0 0.0
    %900 = vmatpush2.msra.mxu0 0.0
    %901 = vmatprep.subr.mxu0 0.0
    %902 = vmatpush2.msra.mxu0 0.0
    %903 = vmatprep.subr.mxu0 0.0
    %904 = vmatpush2.msra.mxu0 0.0
    %905 = vmatprep.subr.mxu0 0.0
    %906 = vmatpush2.msra.mxu0 0.0
    %907 = vmatprep.subr.mxu0 0.0
    %908 = vmatpush2.msra.mxu0 0.0
    %909 = vmatprep.subr.mxu0 0.0
    %910 = vmatpush2.msra.mxu0 0.0
    %911 = vmatprep.subr.mxu0 0.0
    %912 = vmatpush2.msra.mxu0 0.0
    %913 = vmatprep.subr.mxu0 0.0
    %914 = vmatpush2.msra.mxu0 0.0
    %915 = vmatprep.subr.mxu0 0.0
    %916 = vmatpush2.msra.mxu0 0.0
    %917 = vmatprep.subr.mxu0 0.0
    %918 = vmatpush2.msra.mxu0 0.0
    %919 = vmatprep.subr.mxu0 0.0
    %920 = vmatpush2.msra.mxu0 0.0
    %921 = vmatprep.mubr.f32.mxu0 0.0
    %922 = vmatmul.mubr.f32.gmra.mxu0 %v850
    %v923 = vpop.f32.mrf.mxu0
    %v924 = vadd.f32 0.0, %v923
    %v925 = vpop.f32.mrf.mxu0
    %926 = vmatprep.mubr.f32.mxu0 0.0
    %927 = vmatmul.mubr.f32.gmra.mxu0 %v853
    %v928 = vpop.f32.mrf.mxu0
    %v929 = vadd.f32 0.0, %v928
    %v930 = vpop.f32.mrf.mxu0
    %931 = vdwg.mxu0
    %932 = vrot.lane.b32.xlu0 %v307, 104
    %v933 = vpop.permute.xlu0 %932
    %934 = vrot.lane.b32.xlu0 %v312, 104
    %v935 = vpop.permute.xlu0 %934
    %936 = vrot.lane.b32.xlu0 %v307, 72
    %v937 = vpop.permute.xlu0 %936
    %938 = vrot.lane.b32.xlu0 %v312, 72
    %v939 = vpop.permute.xlu0 %938
    %v940 = vsel %vm321, %v933, 0
    %v942 = vsel %vm321, %v935, 0
    %v944 = vsel %vm321, %v937, 0
    %v946 = vsel %vm321, %v939, 0
    %948 = vmatprep.subr.mxu0 0.0
    %949 = vmatpush1.xpose.msra.mxu0 0.0
    %950 = vmatprep.subr.mxu0 0.0
    %951 = vmatpush1.xpose.msra.mxu0 0.0
    %952 = vmatprep.subr.mxu0 0.0
    %953 = vmatpush1.xpose.msra.mxu0 0.0
    %954 = vmatprep.subr.mxu0 0.0
    %955 = vmatpush1.xpose.msra.mxu0 0.0
    %956 = vmatprep.subr.mxu0 0.0
    %957 = vmatpush1.xpose.msra.mxu0 0.0
    %958 = vmatprep.subr.mxu0 0.0
    %959 = vmatpush1.xpose.msra.mxu0 0.0
    %960 = vmatprep.subr.mxu0 0.0
    %961 = vmatpush1.xpose.msra.mxu0 0.0
    %962 = vmatprep.subr.mxu0 0.0
    %963 = vmatpush1.xpose.msra.mxu0 0.0
    %964 = vmatprep.subr.mxu0 0.0
    %965 = vmatpush1.xpose.msra.mxu0 0.0
    %966 = vmatprep.subr.mxu0 0.0
    %967 = vmatpush1.xpose.msra.mxu0 0.0
    %968 = vmatprep.subr.mxu0 0.0
    %969 = vmatpush1.xpose.msra.mxu0 0.0
    %970 = vmatprep.subr.mxu0 0.0
    %971 = vmatpush1.xpose.msra.mxu0 0.0
    %972 = vmatprep.subr.mxu0 0.0
    %973 = vmatpush1.xpose.msra.mxu0 0.0
    %974 = vmatprep.subr.mxu0 0.0
    %975 = vmatpush1.xpose.msra.mxu0 0.0
    %976 = vmatprep.subr.mxu0 0.0
    %977 = vmatpush1.xpose.msra.mxu0 %v946
    %978 = vmatprep.subr.mxu0 0.0
    %979 = vmatpush1.xpose.msra.mxu0 %v944
    %980 = vmatprep.subr.mxu0 0.0
    %981 = vmatpush2.xpose.msra.mxu0 0.0
    %982 = vmatprep.subr.mxu0 0.0
    %983 = vmatpush2.xpose.msra.mxu0 0.0
    %984 = vmatprep.subr.mxu0 0.0
    %985 = vmatpush2.xpose.msra.mxu0 0.0
    %986 = vmatprep.subr.mxu0 0.0
    %987 = vmatpush2.xpose.msra.mxu0 0.0
    %988 = vmatprep.subr.mxu0 0.0
    %989 = vmatpush2.xpose.msra.mxu0 0.0
    %990 = vmatprep.subr.mxu0 0.0
    %991 = vmatpush2.xpose.msra.mxu0 0.0
    %992 = vmatprep.subr.mxu0 0.0
    %993 = vmatpush2.xpose.msra.mxu0 0.0
    %994 = vmatprep.subr.mxu0 0.0
    %995 = vmatpush2.xpose.msra.mxu0 0.0
    %996 = vmatprep.subr.mxu0 0.0
    %997 = vmatpush2.xpose.msra.mxu0 0.0
    %998 = vmatprep.subr.mxu0 0.0
    %999 = vmatpush2.xpose.msra.mxu0 0.0
    %1000 = vmatprep.subr.mxu0 0.0
    %1001 = vmatpush2.xpose.msra.mxu0 0.0
    %1002 = vmatprep.subr.mxu0 0.0
    %1003 = vmatpush2.xpose.msra.mxu0 0.0
    %1004 = vmatprep.subr.mxu0 0.0
    %1005 = vmatpush2.xpose.msra.mxu0 0.0
    %1006 = vmatprep.subr.mxu0 0.0
    %1007 = vmatpush2.xpose.msra.mxu0 0.0
    %1008 = vmatprep.subr.mxu0 0.0
    %1009 = vmatpush2.xpose.msra.mxu0 0.0
    %1010 = vmatprep.subr.mxu0 0.0
    %1011 = vmatpush2.xpose.msra.mxu0 0.0
    %1012 = vmatprep.mubr.f32.mxu0 0.0
    %1013 = vmatmul.mubr.f32.gmra.mxu0 %v940
    %v1014 = vpop.f32.mrf.mxu0
    %v1015 = vadd.f32 0.0, %v1014
    %v1016 = vpop.f32.mrf.mxu0
    %1017 = vmatprep.mubr.f32.mxu0 0.0
    %1018 = vmatmul.mubr.f32.gmra.mxu0 %v942
    %v1019 = vpop.f32.mrf.mxu0
    %v1020 = vadd.f32 0.0, %v1019
    %v1021 = vpop.f32.mrf.mxu0
    %1022 = vdwg.mxu0
    %v1023 = vmul.f32 %v1015, 0.35355338
    %v1024 = vmul.f32 %v1020, 0.35355338
    %v1025 = vadd.f32 %v1023, %v63
    %v1026 = vadd.f32 %v1024, %v64
    %v1027 = vsel %vm409, %v1025, -inf
    %1028 = vmax.xlane.f32.xlu0 %v1027
    %v1029 = vpop.xlane.xlu0 %1028
    %v1030 = vsel %vm413, %v1026, -inf
    %1031 = vmax.xlane.f32.xlu0 %v1030
    %v1032 = vpop.xlane.xlu0 %1031
    %v1033 = vsub.f32 %v1025, %v1029
    %v1034 = vsub.f32 %v1026, %v1032
    %v1035 = vmul.f32 %v1033, 1.442695
    %v1036 = vpow.pop %v1035
    %v1037 = vmul.f32 %v1034, 1.442695
    %v1038 = vpow.pop %v1037
    %v1039 = vsel %vm409, %v1036, 0.0
    %1040 = vadd.xlane.f32.xlu0 %v1039
    %v1041 = vpop.xlane.xlu0 %1040
    %v1042 = vsel %vm413, %v1038, 0.0
    %1043 = vadd.xlane.f32.xlu0 %v1042
    %v1044 = vpop.xlane.xlu0 %1043
    %v1045 = vrcp.pop %v1041
    %v1046 = vrcp.pop %v1044
    %v1047 = vmul.f32 %v1036, %v1045
    %v1048 = vmul.f32 %v1038, %v1046
    %1049 = vrot.lane.b32.xlu0 %v307, 40
    %v1050 = vpop.permute.xlu0 %1049
    %1051 = vrot.lane.b32.xlu0 %v312, 40
    %v1052 = vpop.permute.xlu0 %1051
    %v1055 = vsel %vm409, %v1047, 0
    %v1058 = vsel %vm409, %v1048, 0
    %v1060 = vsel %vm444, %v1052, 0
    %1062 = vmatprep.subr.mxu0 0.0
    %1063 = vmatpush1.msra.mxu0 0.0
    %1064 = vmatprep.subr.mxu0 0.0
    %1065 = vmatpush1.msra.mxu0 0.0
    %1066 = vmatprep.subr.mxu0 0.0
    %1067 = vmatpush1.msra.mxu0 0.0
    %1068 = vmatprep.subr.mxu0 0.0
    %1069 = vmatpush1.msra.mxu0 0.0
    %1070 = vmatprep.subr.mxu0 0.0
    %1071 = vmatpush1.msra.mxu0 0.0
    %1072 = vmatprep.subr.mxu0 0.0
    %1073 = vmatpush1.msra.mxu0 0.0
    %1074 = vmatprep.subr.mxu0 0.0
    %1075 = vmatpush1.msra.mxu0 0.0
    %1076 = vmatprep.subr.mxu0 0.0
    %1077 = vmatpush1.msra.mxu0 0.0
    %1078 = vmatprep.subr.mxu0 0.0
    %1079 = vmatpush1.msra.mxu0 0.0
    %1080 = vmatprep.subr.mxu0 0.0
    %1081 = vmatpush1.msra.mxu0 0.0
    %1082 = vmatprep.subr.mxu0 0.0
    %1083 = vmatpush1.msra.mxu0 0.0
    %1084 = vmatprep.subr.mxu0 0.0
    %1085 = vmatpush1.msra.mxu0 0.0
    %1086 = vmatprep.subr.mxu0 0.0
    %1087 = vmatpush1.msra.mxu0 0.0
    %1088 = vmatprep.subr.mxu0 0.0
    %1089 = vmatpush1.msra.mxu0 0.0
    %1090 = vmatprep.subr.mxu0 0.0
    %1091 = vmatpush1.msra.mxu0 %v1060
    %1092 = vmatprep.subr.mxu0 0.0
    %1093 = vmatpush1.msra.mxu0 %v1050
    %1094 = vmatprep.subr.mxu0 0.0
    %1095 = vmatpush2.msra.mxu0 0.0
    %1096 = vmatprep.subr.mxu0 0.0
    %1097 = vmatpush2.msra.mxu0 0.0
    %1098 = vmatprep.subr.mxu0 0.0
    %1099 = vmatpush2.msra.mxu0 0.0
    %1100 = vmatprep.subr.mxu0 0.0
    %1101 = vmatpush2.msra.mxu0 0.0
    %1102 = vmatprep.subr.mxu0 0.0
    %1103 = vmatpush2.msra.mxu0 0.0
    %1104 = vmatprep.subr.mxu0 0.0
    %1105 = vmatpush2.msra.mxu0 0.0
    %1106 = vmatprep.subr.mxu0 0.0
    %1107 = vmatpush2.msra.mxu0 0.0
    %1108 = vmatprep.subr.mxu0 0.0
    %1109 = vmatpush2.msra.mxu0 0.0
    %1110 = vmatprep.subr.mxu0 0.0
    %1111 = vmatpush2.msra.mxu0 0.0
    %1112 = vmatprep.subr.mxu0 0.0
    %1113 = vmatpush2.msra.mxu0 0.0
    %1114 = vmatprep.subr.mxu0 0.0
    %1115 = vmatpush2.msra.mxu0 0.0
    %1116 = vmatprep.subr.mxu0 0.0
    %1117 = vmatpush2.msra.mxu0 0.0
    %1118 = vmatprep.subr.mxu0 0.0
    %1119 = vmatpush2.msra.mxu0 0.0
    %1120 = vmatprep.subr.mxu0 0.0
    %1121 = vmatpush2.msra.mxu0 0.0
    %1122 = vmatprep.subr.mxu0 0.0
    %1123 = vmatpush2.msra.mxu0 0.0
    %1124 = vmatprep.subr.mxu0 0.0
    %1125 = vmatpush2.msra.mxu0 0.0
    %1126 = vmatprep.mubr.f32.mxu0 0.0
    %1127 = vmatmul.mubr.f32.gmra.mxu0 %v1055
    %v1128 = vpop.f32.mrf.mxu0
    %v1129 = vadd.f32 0.0, %v1128
    %v1130 = vpop.f32.mrf.mxu0
    %1131 = vmatprep.mubr.f32.mxu0 0.0
    %1132 = vmatmul.mubr.f32.gmra.mxu0 %v1058
    %v1133 = vpop.f32.mrf.mxu0
    %v1134 = vadd.f32 0.0, %v1133
    %v1135 = vpop.f32.mrf.mxu0
    %1136 = vdwg.mxu0
    %1139 = vrot.lane.b32.xlu0 %v719, 8
    %v1140 = vpop.permute.xlu0 %1139
    %1141 = vrot.lane.b32.xlu0 %v724, 8
    %v1142 = vpop.permute.xlu0 %1141
    %1147 = vrot.lane.b32.xlu0 %v924, 16
    %v1148 = vpop.permute.xlu0 %1147
    %1149 = vrot.lane.b32.xlu0 %v929, 16
    %v1150 = vpop.permute.xlu0 %1149
    %1155 = vrot.lane.b32.xlu0 %v1129, 24
    %v1156 = vpop.permute.xlu0 %1155
    %1157 = vrot.lane.b32.xlu0 %v1134, 24
    %v1158 = vpop.permute.xlu0 %1157
    %v1161 = vsel %vm321, %v514, %v1140
    %v1162 = vsel %vm321, %v519, %v1142
    %vm1163 = vcmask 130048
    %v1164 = vsel %vm1163, %v1161, %v1148
    %v1165 = vsel %vm1163, %v1162, %v1150
    %vm1166 = vcmask 195584
    %v1167 = vsel %vm1166, %v1164, %v1156
    %v1168 = vsel %vm1166, %v1165, %v1158
    %v1169 = vlaneseq
    %v1170 = vshrl.u32 %v1169, 7
    %v1171 = vsub.s32 3, %v1170
    %v1172 = vrot.slane %v180, %v1171
    %v1174 = vsel %vm181, %v1167, 0
    %v1177 = vsel %vm181, %v1168, 0
    %1179 = vmatprep.subr.mxu0 0.0
    %1180 = vmatpush1.msra.mxu0 0.0
    %1181 = vmatprep.subr.mxu0 0.0
    %1182 = vmatpush1.msra.mxu0 0.0
    %1183 = vmatprep.subr.mxu0 0.0
    %1184 = vmatpush1.msra.mxu0 0.0
    %1185 = vmatprep.subr.mxu0 0.0
    %1186 = vmatpush1.msra.mxu0 0.0
    %1187 = vmatprep.subr.mxu0 0.0
    %1188 = vmatpush1.msra.mxu0 0.0
    %1189 = vmatprep.subr.mxu0 0.0
    %1190 = vmatpush1.msra.mxu0 0.0
    %1191 = vmatprep.subr.mxu0 0.0
    %1192 = vmatpush1.msra.mxu0 0.0
    %1193 = vmatprep.subr.mxu0 0.0
    %1194 = vmatpush1.msra.mxu0 0.0
    %1195 = vmatprep.subr.mxu0 0.0
    %1196 = vmatpush1.msra.mxu0 0.0
    %1197 = vmatprep.subr.mxu0 0.0
    %1198 = vmatpush1.msra.mxu0 0.0
    %1199 = vmatprep.subr.mxu0 0.0
    %1200 = vmatpush1.msra.mxu0 0.0
    %1201 = vmatprep.subr.mxu0 0.0
    %1202 = vmatpush1.msra.mxu0 0.0
    %1203 = vmatprep.subr.mxu0 0.0
    %1204 = vmatpush1.msra.mxu0 %v229
    %1205 = vmatprep.subr.mxu0 0.0
    %1206 = vmatpush1.msra.mxu0 %v228
    %1207 = vmatprep.subr.mxu0 0.0
    %1208 = vmatpush1.msra.mxu0 %v227
    %1209 = vmatprep.subr.mxu0 0.0
    %1210 = vmatpush1.msra.mxu0 %v226
    %1211 = vmatprep.subr.mxu0 0.0
    %1212 = vmatpush2.msra.mxu0 0.0
    %1213 = vmatprep.subr.mxu0 0.0
    %1214 = vmatpush2.msra.mxu0 0.0
    %1215 = vmatprep.subr.mxu0 0.0
    %1216 = vmatpush2.msra.mxu0 0.0
    %1217 = vmatprep.subr.mxu0 0.0
    %1218 = vmatpush2.msra.mxu0 0.0
    %1219 = vmatprep.subr.mxu0 0.0
    %1220 = vmatpush2.msra.mxu0 0.0
    %1221 = vmatprep.subr.mxu0 0.0
    %1222 = vmatpush2.msra.mxu0 0.0
    %1223 = vmatprep.subr.mxu0 0.0
    %1224 = vmatpush2.msra.mxu0 0.0
    %1225 = vmatprep.subr.mxu0 0.0
    %1226 = vmatpush2.msra.mxu0 0.0
    %1227 = vmatprep.subr.mxu0 0.0
    %1228 = vmatpush2.msra.mxu0 0.0
    %1229 = vmatprep.subr.mxu0 0.0
    %1230 = vmatpush2.msra.mxu0 0.0
    %1231 = vmatprep.subr.mxu0 0.0
    %1232 = vmatpush2.msra.mxu0 0.0
    %1233 = vmatprep.subr.mxu0 0.0
    %1234 = vmatpush2.msra.mxu0 0.0
    %1235 = vmatprep.subr.mxu0 0.0
    %1236 = vmatpush2.msra.mxu0 0.0
    %1237 = vmatprep.subr.mxu0 0.0
    %1238 = vmatpush2.msra.mxu0 0.0
    %1239 = vmatprep.subr.mxu0 0.0
    %1240 = vmatpush2.msra.mxu0 0.0
    %1241 = vmatprep.subr.mxu0 0.0
    %1242 = vmatpush2.msra.mxu0 0.0
    %1243 = vmatprep.mubr.f32.mxu0 0.0
    %1244 = vmatmul.mubr.f32.gmra.mxu0 %v1174
    %v1245 = vpop.f32.mrf.mxu0
    %v1246 = vadd.f32 %v1172, %v1245
    %v1247 = vpop.f32.mrf.mxu0
    %1248 = vmatprep.mubr.f32.mxu0 0.0
    %1249 = vmatmul.mubr.f32.gmra.mxu0 %v1177
    %v1250 = vpop.f32.mrf.mxu0
    %v1251 = vadd.f32 %v1172, %v1250
    %v1252 = vpop.f32.mrf.mxu0
    %1253 = vdwg.mxu0
    %v1254 = vadd.f32 %v172, %v1246
    %v1255 = vadd.f32 %v177, %v1251
    %v1256 = vsel %vm181, %v1254, 0.0
    %1257 = vadd.xlane.f32.xlu0 %v1256
    %v1258 = vpop.xlane.xlu0 %1257
    %v1259 = vsel %vm185, %v1255, 0.0
    %1260 = vadd.xlane.f32.xlu0 %v1259
    %v1261 = vpop.xlane.xlu0 %1260
    %v1262 = vmul.f32 %v1258, %v189
    %v1263 = vmul.f32 %v1261, %v189
    %v1264 = vsub.f32 %v1254, %v1262
    %v1265 = vsub.f32 %v1255, %v1263
    %v1266 = vmul.f32 %v1264, %v1264
    %v1267 = vmul.f32 %v1265, %v1265
    %v1268 = vsel %vm181, %v1266, 0.0
    %1269 = vadd.xlane.f32.xlu0 %v1268
    %v1270 = vpop.xlane.xlu0 %1269
    %v1271 = vsel %vm185, %v1267, 0.0
    %1272 = vadd.xlane.f32.xlu0 %v1271
    %v1273 = vpop.xlane.xlu0 %1272
    %v1274 = vmul.f32 %v1270, %v189
    %v1275 = vmul.f32 %v1273, %v189
    %v1276 = vadd.f32 %v1274, 1e-06
    %v1277 = vadd.f32 %v1275, 1e-06
    %v1278 = vrsqrt.pop %v1276
    %v1279 = vrsqrt.pop %v1277
    %v1280 = vmul.f32 %v1264, %v1278
    %v1281 = vmul.f32 %v1265, %v1279
    %v1282 = vlaneseq
    %v1283 = vshrl.u32 %v1282, 7
    %v1284 = vsub.s32 4, %v1283
    %v1285 = vrot.slane %v180, %v1284
    %v1286 = vmul.f32 %v1280, %v1285
    %v1287 = vmul.f32 %v1281, %v1285
    %v1288 = vlaneseq
    %v1289 = vshrl.u32 %v1288, 7
    %v1290 = vsub.s32 5, %v1289
    %v1291 = vrot.slane %v180, %v1290
    %v1292 = vadd.f32 %v1286, %v1291
    %v1293 = vadd.f32 %v1287, %v1291
    %v1294 = vld [vmem:[%s5] sm:$0xff]
    %v1295 = vld [vmem:[%s5 + $0x8] sm:$0xff]
    %v1296 = vld [vmem:[%s5 + $0x10] sm:$0xff]
    %v1297 = vld [vmem:[%s5 + $0x18] sm:$0xff]
    %v1298 = vlaneseq
    %v1299 = vshrl.u32 %v1298, 7
    %v1300 = vsub.s32 6, %v1299
    %v1301 = vrot.slane %v180, %v1300
    %v1303 = vsel %vm181, %v1292, 0
    %v1306 = vsel %vm181, %v1293, 0
    %1308 = vmatprep.subr.mxu0 0.0
    %1309 = vmatpush1.msra.mxu0 0.0
    %1310 = vmatprep.subr.mxu0 0.0
    %1311 = vmatpush1.msra.mxu0 0.0
    %1312 = vmatprep.subr.mxu0 0.0
    %1313 = vmatpush1.msra.mxu0 0.0
    %1314 = vmatprep.subr.mxu0 0.0
    %1315 = vmatpush1.msra.mxu0 0.0
    %1316 = vmatprep.subr.mxu0 0.0
    %1317 = vmatpush1.msra.mxu0 0.0
    %1318 = vmatprep.subr.mxu0 0.0
    %1319 = vmatpush1.msra.mxu0 0.0
    %1320 = vmatprep.subr.mxu0 0.0
    %1321 = vmatpush1.msra.mxu0 0.0
    %1322 = vmatprep.subr.mxu0 0.0
    %1323 = vmatpush1.msra.mxu0 0.0
    %1324 = vmatprep.subr.mxu0 0.0
    %1325 = vmatpush1.msra.mxu0 0.0
    %1326 = vmatprep.subr.mxu0 0.0
    %1327 = vmatpush1.msra.mxu0 0.0
    %1328 = vmatprep.subr.mxu0 0.0
    %1329 = vmatpush1.msra.mxu0 0.0
    %1330 = vmatprep.subr.mxu0 0.0
    %1331 = vmatpush1.msra.mxu0 0.0
    %1332 = vmatprep.subr.mxu0 0.0
    %1333 = vmatpush1.msra.mxu0 %v1297
    %1334 = vmatprep.subr.mxu0 0.0
    %1335 = vmatpush1.msra.mxu0 %v1296
    %1336 = vmatprep.subr.mxu0 0.0
    %1337 = vmatpush1.msra.mxu0 %v1295
    %1338 = vmatprep.subr.mxu0 0.0
    %1339 = vmatpush1.msra.mxu0 %v1294
    %1340 = vmatprep.subr.mxu0 0.0
    %1341 = vmatpush2.msra.mxu0 0.0
    %1342 = vmatprep.subr.mxu0 0.0
    %1343 = vmatpush2.msra.mxu0 0.0
    %1344 = vmatprep.subr.mxu0 0.0
    %1345 = vmatpush2.msra.mxu0 0.0
    %1346 = vmatprep.subr.mxu0 0.0
    %1347 = vmatpush2.msra.mxu0 0.0
    %1348 = vmatprep.subr.mxu0 0.0
    %1349 = vmatpush2.msra.mxu0 0.0
    %1350 = vmatprep.subr.mxu0 0.0
    %1351 = vmatpush2.msra.mxu0 0.0
    %1352 = vmatprep.subr.mxu0 0.0
    %1353 = vmatpush2.msra.mxu0 0.0
    %1354 = vmatprep.subr.mxu0 0.0
    %1355 = vmatpush2.msra.mxu0 0.0
    %1356 = vmatprep.subr.mxu0 0.0
    %1357 = vmatpush2.msra.mxu0 0.0
    %1358 = vmatprep.subr.mxu0 0.0
    %1359 = vmatpush2.msra.mxu0 0.0
    %1360 = vmatprep.subr.mxu0 0.0
    %1361 = vmatpush2.msra.mxu0 0.0
    %1362 = vmatprep.subr.mxu0 0.0
    %1363 = vmatpush2.msra.mxu0 0.0
    %1364 = vmatprep.subr.mxu0 0.0
    %1365 = vmatpush2.msra.mxu0 0.0
    %1366 = vmatprep.subr.mxu0 0.0
    %1367 = vmatpush2.msra.mxu0 0.0
    %1368 = vmatprep.subr.mxu0 0.0
    %1369 = vmatpush2.msra.mxu0 0.0
    %1370 = vmatprep.subr.mxu0 0.0
    %1371 = vmatpush2.msra.mxu0 0.0
    %1372 = vmatprep.mubr.f32.mxu0 0.0
    %1373 = vmatmul.mubr.f32.gmra.mxu0 %v1303
    %v1374 = vpop.f32.mrf.mxu0
    %v1375 = vadd.f32 %v1301, %v1374
    %v1376 = vpop.f32.mrf.mxu0
    %1377 = vmatprep.mubr.f32.mxu0 0.0
    %1378 = vmatmul.mubr.f32.gmra.mxu0 %v1306
    %v1379 = vpop.f32.mrf.mxu0
    %v1380 = vadd.f32 %v1301, %v1379
    %v1381 = vpop.f32.mrf.mxu0
    %1382 = vdwg.mxu0
    %v1383 = vmul.f32 %v1375, 0.5
    %v1384 = vmul.f32 %v1380, 0.5
    %v1385 = vmul.f32 %v1375, 0.70710677
    %v1386 = vmul.f32 %v1380, 0.70710677
    %vm1387 = vcmp.lt.f32.partialorder %v1385, 0.0
    %vm1388 = vcmp.lt.f32.partialorder %v1386, 0.0
    %v1389 = vsel %vm1387, -1.0, 1.0
    %v1390 = vsel %vm1388, -1.0, 1.0
    %v1391 = vand.u32 2147483647, %v1385
    %v1392 = vand.u32 2147483647, %v1386
    %v1393 = vmul.f32 %v1391, 0.3275911
    %v1394 = vmul.f32 %v1392, 0.3275911
    %v1395 = vadd.f32 %v1393, 1.0
    %v1396 = vadd.f32 %v1394, 1.0
    %v1397 = vrcp.pop %v1395
    %v1398 = vrcp.pop %v1396
    %v1399 = vmul.f32 %v1397, 1.0614054
    %v1400 = vmul.f32 %v1398, 1.0614054
    %v1401 = vadd.f32 %v1399, -1.4531521
    %v1402 = vadd.f32 %v1400, -1.4531521
    %v1403 = vmul.f32 %v1397, %v1401
    %v1404 = vmul.f32 %v1398, %v1402
    %v1405 = vadd.f32 %v1403, 1.4214138
    %v1406 = vadd.f32 %v1404, 1.4214138
    %v1407 = vmul.f32 %v1397, %v1405
    %v1408 = vmul.f32 %v1398, %v1406
    %v1409 = vadd.f32 %v1407, -0.28449672
    %v1410 = vadd.f32 %v1408, -0.28449672
    %v1411 = vmul.f32 %v1397, %v1409
    %v1412 = vmul.f32 %v1398, %v1410
    %v1413 = vadd.f32 %v1411, 0.2548296
    %v1414 = vadd.f32 %v1412, 0.2548296
    %v1415 = vmul.f32 %v1397, %v1413
    %v1416 = vmul.f32 %v1398, %v1414
    %v1417 = vsub.f32 0.0, %v1391
    %v1418 = vsub.f32 0.0, %v1392
    %v1419 = vmul.f32 %v1417, %v1391
    %v1420 = vmul.f32 %v1418, %v1392
    %v1421 = vmul.f32 %v1419, 1.442695
    %v1422 = vpow.pop %v1421
    %v1423 = vmul.f32 %v1420, 1.442695
    %v1424 = vpow.pop %v1423
    %v1425 = vmul.f32 %v1415, %v1422
    %v1426 = vmul.f32 %v1416, %v1424
    %v1427 = vsub.f32 1.0, %v1425
    %v1428 = vsub.f32 1.0, %v1426
    %v1429 = vmul.f32 %v1389, %v1427
    %v1430 = vmul.f32 %v1390, %v1428
    %v1431 = vadd.f32 %v1429, 1.0
    %v1432 = vadd.f32 %v1430, 1.0
    %v1433 = vmul.f32 %v1383, %v1431
    %v1434 = vmul.f32 %v1384, %v1432
    %v1435 = vld [vmem:[%s6] sm:$0xff]
    %v1436 = vld [vmem:[%s6 + $0x8] sm:$0xff]
    %v1437 = vld [vmem:[%s6 + $0x10] sm:$0xff]
    %v1438 = vld [vmem:[%s6 + $0x18] sm:$0xff]
    %v1439 = vld [vmem:[%s6 + $0x20] sm:$0xff]
    %v1440 = vld [vmem:[%s6 + $0x28] sm:$0xff]
    %v1441 = vld [vmem:[%s6 + $0x30] sm:$0xff]
    %v1442 = vld [vmem:[%s6 + $0x38] sm:$0xff]
    %vm1443 = vcmask 523264
    %v1445 = vsel %vm1443, %v1433, 0
    %v1448 = vsel %vm1443, %v1434, 0
    %1450 = vmatprep.subr.mxu0 0.0
    %1451 = vmatpush1.msra.mxu0 0.0
    %1452 = vmatprep.subr.mxu0 0.0
    %1453 = vmatpush1.msra.mxu0 0.0
    %1454 = vmatprep.subr.mxu0 0.0
    %1455 = vmatpush1.msra.mxu0 0.0
    %1456 = vmatprep.subr.mxu0 0.0
    %1457 = vmatpush1.msra.mxu0 0.0
    %1458 = vmatprep.subr.mxu0 0.0
    %1459 = vmatpush1.msra.mxu0 0.0
    %1460 = vmatprep.subr.mxu0 0.0
    %1461 = vmatpush1.msra.mxu0 0.0
    %1462 = vmatprep.subr.mxu0 0.0
    %1463 = vmatpush1.msra.mxu0 0.0
    %1464 = vmatprep.subr.mxu0 0.0
    %1465 = vmatpush1.msra.mxu0 0.0
    %1466 = vmatprep.subr.mxu0 0.0
    %1467 = vmatpush1.msra.mxu0 %v1442
    %1468 = vmatprep.subr.mxu0 0.0
    %1469 = vmatpush1.msra.mxu0 %v1441
    %1470 = vmatprep.subr.mxu0 0.0
    %1471 = vmatpush1.msra.mxu0 %v1440
    %1472 = vmatprep.subr.mxu0 0.0
    %1473 = vmatpush1.msra.mxu0 %v1439
    %1474 = vmatprep.subr.mxu0 0.0
    %1475 = vmatpush1.msra.mxu0 %v1438
    %1476 = vmatprep.subr.mxu0 0.0
    %1477 = vmatpush1.msra.mxu0 %v1437
    %1478 = vmatprep.subr.mxu0 0.0
    %1479 = vmatpush1.msra.mxu0 %v1436
    %1480 = vmatprep.subr.mxu0 0.0
    %1481 = vmatpush1.msra.mxu0 %v1435
    %1482 = vmatprep.subr.mxu0 0.0
    %1483 = vmatpush2.msra.mxu0 0.0
    %1484 = vmatprep.subr.mxu0 0.0
    %1485 = vmatpush2.msra.mxu0 0.0
    %1486 = vmatprep.subr.mxu0 0.0
    %1487 = vmatpush2.msra.mxu0 0.0
    %1488 = vmatprep.subr.mxu0 0.0
    %1489 = vmatpush2.msra.mxu0 0.0
    %1490 = vmatprep.subr.mxu0 0.0
    %1491 = vmatpush2.msra.mxu0 0.0
    %1492 = vmatprep.subr.mxu0 0.0
    %1493 = vmatpush2.msra.mxu0 0.0
    %1494 = vmatprep.subr.mxu0 0.0
    %1495 = vmatpush2.msra.mxu0 0.0
    %1496 = vmatprep.subr.mxu0 0.0
    %1497 = vmatpush2.msra.mxu0 0.0
    %1498 = vmatprep.subr.mxu0 0.0
    %1499 = vmatpush2.msra.mxu0 0.0
    %1500 = vmatprep.subr.mxu0 0.0
    %1501 = vmatpush2.msra.mxu0 0.0
    %1502 = vmatprep.subr.mxu0 0.0
    %1503 = vmatpush2.msra.mxu0 0.0
    %1504 = vmatprep.subr.mxu0 0.0
    %1505 = vmatpush2.msra.mxu0 0.0
    %1506 = vmatprep.subr.mxu0 0.0
    %1507 = vmatpush2.msra.mxu0 0.0
    %1508 = vmatprep.subr.mxu0 0.0
    %1509 = vmatpush2.msra.mxu0 0.0
    %1510 = vmatprep.subr.mxu0 0.0
    %1511 = vmatpush2.msra.mxu0 0.0
    %1512 = vmatprep.subr.mxu0 0.0
    %1513 = vmatpush2.msra.mxu0 0.0
    %1514 = vmatprep.mubr.f32.mxu0 0.0
    %1515 = vmatmul.mubr.f32.gmra.mxu0 %v1445
    %v1516 = vpop.f32.mrf.mxu0
    %v1517 = vadd.f32 0.0, %v1516
    %v1518 = vpop.f32.mrf.mxu0
    %1519 = vmatprep.mubr.f32.mxu0 0.0
    %1520 = vmatmul.mubr.f32.gmra.mxu0 %v1448
    %v1521 = vpop.f32.mrf.mxu0
    %v1522 = vadd.f32 0.0, %v1521
    %v1523 = vpop.f32.mrf.mxu0
    %1524 = vdwg.mxu0
    %v1525 = vadd.f32 %v1254, %v1517
    %v1526 = vadd.f32 %v1255, %v1522
    %v1527 = vlaneseq
    %v1528 = vshrl.u32 %v1527, 7
    %v1529 = vsub.s32 7, %v1528
    %v1530 = vrot.slane %v180, %v1529
    %v1531 = vadd.f32 %v1525, %v1530
    %v1532 = vadd.f32 %v1526, %v1530
    %s1533 = scalar_lea.vmem %s7, 8
    %v1534 = vld [vmem:[%s1533] sm:$0xff]
    %v1535 = vsel %vm181, %v1531, 0.0
    %1536 = vadd.xlane.f32.xlu0 %v1535
    %v1537 = vpop.xlane.xlu0 %1536
    %v1538 = vsel %vm185, %v1532, 0.0
    %1539 = vadd.xlane.f32.xlu0 %v1538
    %v1540 = vpop.xlane.xlu0 %1539
    %v1541 = vmul.f32 %v1537, %v189
    %v1542 = vmul.f32 %v1540, %v189
    %v1543 = vsub.f32 %v1531, %v1541
    %v1544 = vsub.f32 %v1532, %v1542
    %v1545 = vmul.f32 %v1543, %v1543
    %v1546 = vmul.f32 %v1544, %v1544
    %v1547 = vsel %vm181, %v1545, 0.0
    %1548 = vadd.xlane.f32.xlu0 %v1547
    %v1549 = vpop.xlane.xlu0 %1548
    %v1550 = vsel %vm185, %v1546, 0.0
    %1551 = vadd.xlane.f32.xlu0 %v1550
    %v1552 = vpop.xlane.xlu0 %1551
    %v1553 = vmul.f32 %v1549, %v189
    %v1554 = vmul.f32 %v1552, %v189
    %v1555 = vadd.f32 %v1553, 1e-06
    %v1556 = vadd.f32 %v1554, 1e-06
    %v1557 = vrsqrt.pop %v1555
    %v1558 = vrsqrt.pop %v1556
    %v1559 = vmul.f32 %v1543, %v1557
    %v1560 = vmul.f32 %v1544, %v1558
    %v1561 = vlaneseq
    %v1562 = vshrl.u32 %v1561, 7
    %v1563 = vsub.s32 0, %v1562
    %v1564 = vrot.slane %v1534, %v1563
    %v1565 = vmul.f32 %v1559, %v1564
    %v1566 = vmul.f32 %v1560, %v1564
    %v1567 = vlaneseq
    %v1568 = vshrl.u32 %v1567, 7
    %v1569 = vsub.s32 1, %v1568
    %v1570 = vrot.slane %v1534, %v1569
    %v1571 = vadd.f32 %v1565, %v1570
    %v1572 = vadd.f32 %v1566, %v1570
    %s1573 = scalar_lea.vmem %s3, 32
    %v1574 = vld [vmem:[%s1573] sm:$0xff]
    %v1575 = vld [vmem:[%s1573 + $0x8] sm:$0xff]
    %v1576 = vld [vmem:[%s1573 + $0x10] sm:$0xff]
    %v1577 = vld [vmem:[%s1573 + $0x18] sm:$0xff]
    %s1578 = scalar_lea.vmem %s4, 32
    %v1579 = vld [vmem:[%s1578] sm:$0xff]
    %v1580 = vld [vmem:[%s1578 + $0x8] sm:$0xff]
    %v1581 = vld [vmem:[%s1578 + $0x10] sm:$0xff]
    %v1582 = vld [vmem:[%s1578 + $0x18] sm:$0xff]
    %v1583 = vlaneseq
    %v1584 = vshrl.u32 %v1583, 7
    %v1585 = vsub.s32 2, %v1584
    %v1586 = vrot.slane %v1534, %v1585
    %v1588 = vsel %vm181, %v1571, 0
    %v1591 = vsel %vm181, %v1572, 0
    %1593 = vmatprep.subr.mxu0 0.0
    %1594 = vmatpush1.msra.mxu0 0.0
    %1595 = vmatprep.subr.mxu0 0.0
    %1596 = vmatpush1.msra.mxu0 0.0
    %1597 = vmatprep.subr.mxu0 0.0
    %1598 = vmatpush1.msra.mxu0 0.0
    %1599 = vmatprep.subr.mxu0 0.0
    %1600 = vmatpush1.msra.mxu0 0.0
    %1601 = vmatprep.subr.mxu0 0.0
    %1602 = vmatpush1.msra.mxu0 0.0
    %1603 = vmatprep.subr.mxu0 0.0
    %1604 = vmatpush1.msra.mxu0 0.0
    %1605 = vmatprep.subr.mxu0 0.0
    %1606 = vmatpush1.msra.mxu0 0.0
    %1607 = vmatprep.subr.mxu0 0.0
    %1608 = vmatpush1.msra.mxu0 0.0
    %1609 = vmatprep.subr.mxu0 0.0
    %1610 = vmatpush1.msra.mxu0 0.0
    %1611 = vmatprep.subr.mxu0 0.0
    %1612 = vmatpush1.msra.mxu0 0.0
    %1613 = vmatprep.subr.mxu0 0.0
    %1614 = vmatpush1.msra.mxu0 0.0
    %1615 = vmatprep.subr.mxu0 0.0
    %1616 = vmatpush1.msra.mxu0 0.0
    %1617 = vmatprep.subr.mxu0 0.0
    %1618 = vmatpush1.msra.mxu0 %v1577
    %1619 = vmatprep.subr.mxu0 0.0
    %1620 = vmatpush1.msra.mxu0 %v1576
    %1621 = vmatprep.subr.mxu0 0.0
    %1622 = vmatpush1.msra.mxu0 %v1575
    %1623 = vmatprep.subr.mxu0 0.0
    %1624 = vmatpush1.msra.mxu0 %v1574
    %1625 = vmatprep.subr.mxu0 0.0
    %1626 = vmatpush2.msra.mxu0 0.0
    %1627 = vmatprep.subr.mxu0 0.0
    %1628 = vmatpush2.msra.mxu0 0.0
    %1629 = vmatprep.subr.mxu0 0.0
    %1630 = vmatpush2.msra.mxu0 0.0
    %1631 = vmatprep.subr.mxu0 0.0
    %1632 = vmatpush2.msra.mxu0 0.0
    %1633 = vmatprep.subr.mxu0 0.0
    %1634 = vmatpush2.msra.mxu0 0.0
    %1635 = vmatprep.subr.mxu0 0.0
    %1636 = vmatpush2.msra.mxu0 0.0
    %1637 = vmatprep.subr.mxu0 0.0
    %1638 = vmatpush2.msra.mxu0 0.0
    %1639 = vmatprep.subr.mxu0 0.0
    %1640 = vmatpush2.msra.mxu0 0.0
    %1641 = vmatprep.subr.mxu0 0.0
    %1642 = vmatpush2.msra.mxu0 0.0
    %1643 = vmatprep.subr.mxu0 0.0
    %1644 = vmatpush2.msra.mxu0 0.0
    %1645 = vmatprep.subr.mxu0 0.0
    %1646 = vmatpush2.msra.mxu0 0.0
    %1647 = vmatprep.subr.mxu0 0.0
    %1648 = vmatpush2.msra.mxu0 0.0
    %1649 = vmatprep.subr.mxu0 0.0
    %1650 = vmatpush2.msra.mxu0 0.0
    %1651 = vmatprep.subr.mxu0 0.0
    %1652 = vmatpush2.msra.mxu0 0.0
    %1653 = vmatprep.subr.mxu0 0.0
    %1654 = vmatpush2.msra.mxu0 0.0
    %1655 = vmatprep.subr.mxu0 0.0
    %1656 = vmatpush2.msra.mxu0 0.0
    %1657 = vmatprep.mubr.f32.mxu0 0.0
    %1658 = vmatmul.mubr.f32.gmra.mxu0 %v1588
    %v1659 = vpop.f32.mrf.mxu0
    %v1660 = vadd.f32 %v1586, %v1659
    %v1661 = vpop.f32.mrf.mxu0
    %1662 = vmatprep.mubr.f32.mxu0 0.0
    %1663 = vmatmul.mubr.f32.gmra.mxu0 %v1591
    %v1664 = vpop.f32.mrf.mxu0
    %v1665 = vadd.f32 %v1586, %v1664
    %v1666 = vpop.f32.mrf.mxu0
    %1667 = vdwg.mxu0
    %1670 = vrot.lane.b32.xlu0 %v1660, 96
    %v1671 = vpop.permute.xlu0 %1670
    %1672 = vrot.lane.b32.xlu0 %v1665, 96
    %v1673 = vpop.permute.xlu0 %1672
    %v1674 = vsel %vm321, %v1660, 0
    %v1676 = vsel %vm321, %v1665, 0
    %v1678 = vsel %vm321, %v1671, 0
    %v1680 = vsel %vm321, %v1673, 0
    %1682 = vmatprep.subr.mxu0 0.0
    %1683 = vmatpush1.xpose.msra.mxu0 0.0
    %1684 = vmatprep.subr.mxu0 0.0
    %1685 = vmatpush1.xpose.msra.mxu0 0.0
    %1686 = vmatprep.subr.mxu0 0.0
    %1687 = vmatpush1.xpose.msra.mxu0 0.0
    %1688 = vmatprep.subr.mxu0 0.0
    %1689 = vmatpush1.xpose.msra.mxu0 0.0
    %1690 = vmatprep.subr.mxu0 0.0
    %1691 = vmatpush1.xpose.msra.mxu0 0.0
    %1692 = vmatprep.subr.mxu0 0.0
    %1693 = vmatpush1.xpose.msra.mxu0 0.0
    %1694 = vmatprep.subr.mxu0 0.0
    %1695 = vmatpush1.xpose.msra.mxu0 0.0
    %1696 = vmatprep.subr.mxu0 0.0
    %1697 = vmatpush1.xpose.msra.mxu0 0.0
    %1698 = vmatprep.subr.mxu0 0.0
    %1699 = vmatpush1.xpose.msra.mxu0 0.0
    %1700 = vmatprep.subr.mxu0 0.0
    %1701 = vmatpush1.xpose.msra.mxu0 0.0
    %1702 = vmatprep.subr.mxu0 0.0
    %1703 = vmatpush1.xpose.msra.mxu0 0.0
    %1704 = vmatprep.subr.mxu0 0.0
    %1705 = vmatpush1.xpose.msra.mxu0 0.0
    %1706 = vmatprep.subr.mxu0 0.0
    %1707 = vmatpush1.xpose.msra.mxu0 0.0
    %1708 = vmatprep.subr.mxu0 0.0
    %1709 = vmatpush1.xpose.msra.mxu0 0.0
    %1710 = vmatprep.subr.mxu0 0.0
    %1711 = vmatpush1.xpose.msra.mxu0 %v1680
    %1712 = vmatprep.subr.mxu0 0.0
    %1713 = vmatpush1.xpose.msra.mxu0 %v1678
    %1714 = vmatprep.subr.mxu0 0.0
    %1715 = vmatpush2.xpose.msra.mxu0 0.0
    %1716 = vmatprep.subr.mxu0 0.0
    %1717 = vmatpush2.xpose.msra.mxu0 0.0
    %1718 = vmatprep.subr.mxu0 0.0
    %1719 = vmatpush2.xpose.msra.mxu0 0.0
    %1720 = vmatprep.subr.mxu0 0.0
    %1721 = vmatpush2.xpose.msra.mxu0 0.0
    %1722 = vmatprep.subr.mxu0 0.0
    %1723 = vmatpush2.xpose.msra.mxu0 0.0
    %1724 = vmatprep.subr.mxu0 0.0
    %1725 = vmatpush2.xpose.msra.mxu0 0.0
    %1726 = vmatprep.subr.mxu0 0.0
    %1727 = vmatpush2.xpose.msra.mxu0 0.0
    %1728 = vmatprep.subr.mxu0 0.0
    %1729 = vmatpush2.xpose.msra.mxu0 0.0
    %1730 = vmatprep.subr.mxu0 0.0
    %1731 = vmatpush2.xpose.msra.mxu0 0.0
    %1732 = vmatprep.subr.mxu0 0.0
    %1733 = vmatpush2.xpose.msra.mxu0 0.0
    %1734 = vmatprep.subr.mxu0 0.0
    %1735 = vmatpush2.xpose.msra.mxu0 0.0
    %1736 = vmatprep.subr.mxu0 0.0
    %1737 = vmatpush2.xpose.msra.mxu0 0.0
    %1738 = vmatprep.subr.mxu0 0.0
    %1739 = vmatpush2.xpose.msra.mxu0 0.0
    %1740 = vmatprep.subr.mxu0 0.0
    %1741 = vmatpush2.xpose.msra.mxu0 0.0
    %1742 = vmatprep.subr.mxu0 0.0
    %1743 = vmatpush2.xpose.msra.mxu0 0.0
    %1744 = vmatprep.subr.mxu0 0.0
    %1745 = vmatpush2.xpose.msra.mxu0 0.0
    %1746 = vmatprep.mubr.f32.mxu0 0.0
    %1747 = vmatmul.mubr.f32.gmra.mxu0 %v1674
    %v1748 = vpop.f32.mrf.mxu0
    %v1749 = vadd.f32 0.0, %v1748
    %v1750 = vpop.f32.mrf.mxu0
    %1751 = vmatprep.mubr.f32.mxu0 0.0
    %1752 = vmatmul.mubr.f32.gmra.mxu0 %v1676
    %v1753 = vpop.f32.mrf.mxu0
    %v1754 = vadd.f32 0.0, %v1753
    %v1755 = vpop.f32.mrf.mxu0
    %1756 = vdwg.mxu0
    %v1757 = vmul.f32 %v1749, 0.35355338
    %v1758 = vmul.f32 %v1754, 0.35355338
    %v1759 = vadd.f32 %v1757, %v63
    %v1760 = vadd.f32 %v1758, %v64
    %v1761 = vsel %vm409, %v1759, -inf
    %1762 = vmax.xlane.f32.xlu0 %v1761
    %v1763 = vpop.xlane.xlu0 %1762
    %v1764 = vsel %vm413, %v1760, -inf
    %1765 = vmax.xlane.f32.xlu0 %v1764
    %v1766 = vpop.xlane.xlu0 %1765
    %v1767 = vsub.f32 %v1759, %v1763
    %v1768 = vsub.f32 %v1760, %v1766
    %v1769 = vmul.f32 %v1767, 1.442695
    %v1770 = vpow.pop %v1769
    %v1771 = vmul.f32 %v1768, 1.442695
    %v1772 = vpow.pop %v1771
    %v1773 = vsel %vm409, %v1770, 0.0
    %1774 = vadd.xlane.f32.xlu0 %v1773
    %v1775 = vpop.xlane.xlu0 %1774
    %v1776 = vsel %vm413, %v1772, 0.0
    %1777 = vadd.xlane.f32.xlu0 %v1776
    %v1778 = vpop.xlane.xlu0 %1777
    %v1779 = vrcp.pop %v1775
    %v1780 = vrcp.pop %v1778
    %v1781 = vmul.f32 %v1770, %v1779
    %v1782 = vmul.f32 %v1772, %v1780
    %1783 = vrot.lane.b32.xlu0 %v1660, 64
    %v1784 = vpop.permute.xlu0 %1783
    %1785 = vrot.lane.b32.xlu0 %v1665, 64
    %v1786 = vpop.permute.xlu0 %1785
    %v1789 = vsel %vm409, %v1781, 0
    %v1792 = vsel %vm409, %v1782, 0
    %v1794 = vsel %vm444, %v1786, 0
    %1796 = vmatprep.subr.mxu0 0.0
    %1797 = vmatpush1.msra.mxu0 0.0
    %1798 = vmatprep.subr.mxu0 0.0
    %1799 = vmatpush1.msra.mxu0 0.0
    %1800 = vmatprep.subr.mxu0 0.0
    %1801 = vmatpush1.msra.mxu0 0.0
    %1802 = vmatprep.subr.mxu0 0.0
    %1803 = vmatpush1.msra.mxu0 0.0
    %1804 = vmatprep.subr.mxu0 0.0
    %1805 = vmatpush1.msra.mxu0 0.0
    %1806 = vmatprep.subr.mxu0 0.0
    %1807 = vmatpush1.msra.mxu0 0.0
    %1808 = vmatprep.subr.mxu0 0.0
    %1809 = vmatpush1.msra.mxu0 0.0
    %1810 = vmatprep.subr.mxu0 0.0
    %1811 = vmatpush1.msra.mxu0 0.0
    %1812 = vmatprep.subr.mxu0 0.0
    %1813 = vmatpush1.msra.mxu0 0.0
    %1814 = vmatprep.subr.mxu0 0.0
    %1815 = vmatpush1.msra.mxu0 0.0
    %1816 = vmatprep.subr.mxu0 0.0
    %1817 = vmatpush1.msra.mxu0 0.0
    %1818 = vmatprep.subr.mxu0 0.0
    %1819 = vmatpush1.msra.mxu0 0.0
    %1820 = vmatprep.subr.mxu0 0.0
    %1821 = vmatpush1.msra.mxu0 0.0
    %1822 = vmatprep.subr.mxu0 0.0
    %1823 = vmatpush1.msra.mxu0 0.0
    %1824 = vmatprep.subr.mxu0 0.0
    %1825 = vmatpush1.msra.mxu0 %v1794
    %1826 = vmatprep.subr.mxu0 0.0
    %1827 = vmatpush1.msra.mxu0 %v1784
    %1828 = vmatprep.subr.mxu0 0.0
    %1829 = vmatpush2.msra.mxu0 0.0
    %1830 = vmatprep.subr.mxu0 0.0
    %1831 = vmatpush2.msra.mxu0 0.0
    %1832 = vmatprep.subr.mxu0 0.0
    %1833 = vmatpush2.msra.mxu0 0.0
    %1834 = vmatprep.subr.mxu0 0.0
    %1835 = vmatpush2.msra.mxu0 0.0
    %1836 = vmatprep.subr.mxu0 0.0
    %1837 = vmatpush2.msra.mxu0 0.0
    %1838 = vmatprep.subr.mxu0 0.0
    %1839 = vmatpush2.msra.mxu0 0.0
    %1840 = vmatprep.subr.mxu0 0.0
    %1841 = vmatpush2.msra.mxu0 0.0
    %1842 = vmatprep.subr.mxu0 0.0
    %1843 = vmatpush2.msra.mxu0 0.0
    %1844 = vmatprep.subr.mxu0 0.0
    %1845 = vmatpush2.msra.mxu0 0.0
    %1846 = vmatprep.subr.mxu0 0.0
    %1847 = vmatpush2.msra.mxu0 0.0
    %1848 = vmatprep.subr.mxu0 0.0
    %1849 = vmatpush2.msra.mxu0 0.0
    %1850 = vmatprep.subr.mxu0 0.0
    %1851 = vmatpush2.msra.mxu0 0.0
    %1852 = vmatprep.subr.mxu0 0.0
    %1853 = vmatpush2.msra.mxu0 0.0
    %1854 = vmatprep.subr.mxu0 0.0
    %1855 = vmatpush2.msra.mxu0 0.0
    %1856 = vmatprep.subr.mxu0 0.0
    %1857 = vmatpush2.msra.mxu0 0.0
    %1858 = vmatprep.subr.mxu0 0.0
    %1859 = vmatpush2.msra.mxu0 0.0
    %1860 = vmatprep.mubr.f32.mxu0 0.0
    %1861 = vmatmul.mubr.f32.gmra.mxu0 %v1789
    %v1862 = vpop.f32.mrf.mxu0
    %v1863 = vadd.f32 0.0, %v1862
    %v1864 = vpop.f32.mrf.mxu0
    %1865 = vmatprep.mubr.f32.mxu0 0.0
    %1866 = vmatmul.mubr.f32.gmra.mxu0 %v1792
    %v1867 = vpop.f32.mrf.mxu0
    %v1868 = vadd.f32 0.0, %v1867
    %v1869 = vpop.f32.mrf.mxu0
    %1870 = vdwg.mxu0
    %1871 = vrot.lane.b32.xlu0 %v1660, 120
    %v1872 = vpop.permute.xlu0 %1871
    %1873 = vrot.lane.b32.xlu0 %v1665, 120
    %v1874 = vpop.permute.xlu0 %1873
    %1875 = vrot.lane.b32.xlu0 %v1660, 88
    %v1876 = vpop.permute.xlu0 %1875
    %1877 = vrot.lane.b32.xlu0 %v1665, 88
    %v1878 = vpop.permute.xlu0 %1877
    %v1879 = vsel %vm321, %v1872, 0
    %v1881 = vsel %vm321, %v1874, 0
    %v1883 = vsel %vm321, %v1876, 0
    %v1885 = vsel %vm321, %v1878, 0
    %1887 = vmatprep.subr.mxu0 0.0
    %1888 = vmatpush1.xpose.msra.mxu0 0.0
    %1889 = vmatprep.subr.mxu0 0.0
    %1890 = vmatpush1.xpose.msra.mxu0 0.0
    %1891 = vmatprep.subr.mxu0 0.0
    %1892 = vmatpush1.xpose.msra.mxu0 0.0
    %1893 = vmatprep.subr.mxu0 0.0
    %1894 = vmatpush1.xpose.msra.mxu0 0.0
    %1895 = vmatprep.subr.mxu0 0.0
    %1896 = vmatpush1.xpose.msra.mxu0 0.0
    %1897 = vmatprep.subr.mxu0 0.0
    %1898 = vmatpush1.xpose.msra.mxu0 0.0
    %1899 = vmatprep.subr.mxu0 0.0
    %1900 = vmatpush1.xpose.msra.mxu0 0.0
    %1901 = vmatprep.subr.mxu0 0.0
    %1902 = vmatpush1.xpose.msra.mxu0 0.0
    %1903 = vmatprep.subr.mxu0 0.0
    %1904 = vmatpush1.xpose.msra.mxu0 0.0
    %1905 = vmatprep.subr.mxu0 0.0
    %1906 = vmatpush1.xpose.msra.mxu0 0.0
    %1907 = vmatprep.subr.mxu0 0.0
    %1908 = vmatpush1.xpose.msra.mxu0 0.0
    %1909 = vmatprep.subr.mxu0 0.0
    %1910 = vmatpush1.xpose.msra.mxu0 0.0
    %1911 = vmatprep.subr.mxu0 0.0
    %1912 = vmatpush1.xpose.msra.mxu0 0.0
    %1913 = vmatprep.subr.mxu0 0.0
    %1914 = vmatpush1.xpose.msra.mxu0 0.0
    %1915 = vmatprep.subr.mxu0 0.0
    %1916 = vmatpush1.xpose.msra.mxu0 %v1885
    %1917 = vmatprep.subr.mxu0 0.0
    %1918 = vmatpush1.xpose.msra.mxu0 %v1883
    %1919 = vmatprep.subr.mxu0 0.0
    %1920 = vmatpush2.xpose.msra.mxu0 0.0
    %1921 = vmatprep.subr.mxu0 0.0
    %1922 = vmatpush2.xpose.msra.mxu0 0.0
    %1923 = vmatprep.subr.mxu0 0.0
    %1924 = vmatpush2.xpose.msra.mxu0 0.0
    %1925 = vmatprep.subr.mxu0 0.0
    %1926 = vmatpush2.xpose.msra.mxu0 0.0
    %1927 = vmatprep.subr.mxu0 0.0
    %1928 = vmatpush2.xpose.msra.mxu0 0.0
    %1929 = vmatprep.subr.mxu0 0.0
    %1930 = vmatpush2.xpose.msra.mxu0 0.0
    %1931 = vmatprep.subr.mxu0 0.0
    %1932 = vmatpush2.xpose.msra.mxu0 0.0
    %1933 = vmatprep.subr.mxu0 0.0
    %1934 = vmatpush2.xpose.msra.mxu0 0.0
    %1935 = vmatprep.subr.mxu0 0.0
    %1936 = vmatpush2.xpose.msra.mxu0 0.0
    %1937 = vmatprep.subr.mxu0 0.0
    %1938 = vmatpush2.xpose.msra.mxu0 0.0
    %1939 = vmatprep.subr.mxu0 0.0
    %1940 = vmatpush2.xpose.msra.mxu0 0.0
    %1941 = vmatprep.subr.mxu0 0.0
    %1942 = vmatpush2.xpose.msra.mxu0 0.0
    %1943 = vmatprep.subr.mxu0 0.0
    %1944 = vmatpush2.xpose.msra.mxu0 0.0
    %1945 = vmatprep.subr.mxu0 0.0
    %1946 = vmatpush2.xpose.msra.mxu0 0.0
    %1947 = vmatprep.subr.mxu0 0.0
    %1948 = vmatpush2.xpose.msra.mxu0 0.0
    %1949 = vmatprep.subr.mxu0 0.0
    %1950 = vmatpush2.xpose.msra.mxu0 0.0
    %1951 = vmatprep.mubr.f32.mxu0 0.0
    %1952 = vmatmul.mubr.f32.gmra.mxu0 %v1879
    %v1953 = vpop.f32.mrf.mxu0
    %v1954 = vadd.f32 0.0, %v1953
    %v1955 = vpop.f32.mrf.mxu0
    %1956 = vmatprep.mubr.f32.mxu0 0.0
    %1957 = vmatmul.mubr.f32.gmra.mxu0 %v1881
    %v1958 = vpop.f32.mrf.mxu0
    %v1959 = vadd.f32 0.0, %v1958
    %v1960 = vpop.f32.mrf.mxu0
    %1961 = vdwg.mxu0
    %v1962 = vmul.f32 %v1954, 0.35355338
    %v1963 = vmul.f32 %v1959, 0.35355338
    %v1964 = vadd.f32 %v1962, %v63
    %v1965 = vadd.f32 %v1963, %v64
    %v1966 = vsel %vm409, %v1964, -inf
    %1967 = vmax.xlane.f32.xlu0 %v1966
    %v1968 = vpop.xlane.xlu0 %1967
    %v1969 = vsel %vm413, %v1965, -inf
    %1970 = vmax.xlane.f32.xlu0 %v1969
    %v1971 = vpop.xlane.xlu0 %1970
    %v1972 = vsub.f32 %v1964, %v1968
    %v1973 = vsub.f32 %v1965, %v1971
    %v1974 = vmul.f32 %v1972, 1.442695
    %v1975 = vpow.pop %v1974
    %v1976 = vmul.f32 %v1973, 1.442695
    %v1977 = vpow.pop %v1976
    %v1978 = vsel %vm409, %v1975, 0.0
    %1979 = vadd.xlane.f32.xlu0 %v1978
    %v1980 = vpop.xlane.xlu0 %1979
    %v1981 = vsel %vm413, %v1977, 0.0
    %1982 = vadd.xlane.f32.xlu0 %v1981
    %v1983 = vpop.xlane.xlu0 %1982
    %v1984 = vrcp.pop %v1980
    %v1985 = vrcp.pop %v1983
    %v1986 = vmul.f32 %v1975, %v1984
    %v1987 = vmul.f32 %v1977, %v1985
    %1988 = vrot.lane.b32.xlu0 %v1660, 56
    %v1989 = vpop.permute.xlu0 %1988
    %1990 = vrot.lane.b32.xlu0 %v1665, 56
    %v1991 = vpop.permute.xlu0 %1990
    %v1994 = vsel %vm409, %v1986, 0
    %v1997 = vsel %vm409, %v1987, 0
    %v1999 = vsel %vm444, %v1991, 0
    %2001 = vmatprep.subr.mxu0 0.0
    %2002 = vmatpush1.msra.mxu0 0.0
    %2003 = vmatprep.subr.mxu0 0.0
    %2004 = vmatpush1.msra.mxu0 0.0
    %2005 = vmatprep.subr.mxu0 0.0
    %2006 = vmatpush1.msra.mxu0 0.0
    %2007 = vmatprep.subr.mxu0 0.0
    %2008 = vmatpush1.msra.mxu0 0.0
    %2009 = vmatprep.subr.mxu0 0.0
    %2010 = vmatpush1.msra.mxu0 0.0
    %2011 = vmatprep.subr.mxu0 0.0
    %2012 = vmatpush1.msra.mxu0 0.0
    %2013 = vmatprep.subr.mxu0 0.0
    %2014 = vmatpush1.msra.mxu0 0.0
    %2015 = vmatprep.subr.mxu0 0.0
    %2016 = vmatpush1.msra.mxu0 0.0
    %2017 = vmatprep.subr.mxu0 0.0
    %2018 = vmatpush1.msra.mxu0 0.0
    %2019 = vmatprep.subr.mxu0 0.0
    %2020 = vmatpush1.msra.mxu0 0.0
    %2021 = vmatprep.subr.mxu0 0.0
    %2022 = vmatpush1.msra.mxu0 0.0
    %2023 = vmatprep.subr.mxu0 0.0
    %2024 = vmatpush1.msra.mxu0 0.0
    %2025 = vmatprep.subr.mxu0 0.0
    %2026 = vmatpush1.msra.mxu0 0.0
    %2027 = vmatprep.subr.mxu0 0.0
    %2028 = vmatpush1.msra.mxu0 0.0
    %2029 = vmatprep.subr.mxu0 0.0
    %2030 = vmatpush1.msra.mxu0 %v1999
    %2031 = vmatprep.subr.mxu0 0.0
    %2032 = vmatpush1.msra.mxu0 %v1989
    %2033 = vmatprep.subr.mxu0 0.0
    %2034 = vmatpush2.msra.mxu0 0.0
    %2035 = vmatprep.subr.mxu0 0.0
    %2036 = vmatpush2.msra.mxu0 0.0
    %2037 = vmatprep.subr.mxu0 0.0
    %2038 = vmatpush2.msra.mxu0 0.0
    %2039 = vmatprep.subr.mxu0 0.0
    %2040 = vmatpush2.msra.mxu0 0.0
    %2041 = vmatprep.subr.mxu0 0.0
    %2042 = vmatpush2.msra.mxu0 0.0
    %2043 = vmatprep.subr.mxu0 0.0
    %2044 = vmatpush2.msra.mxu0 0.0
    %2045 = vmatprep.subr.mxu0 0.0
    %2046 = vmatpush2.msra.mxu0 0.0
    %2047 = vmatprep.subr.mxu0 0.0
    %2048 = vmatpush2.msra.mxu0 0.0
    %2049 = vmatprep.subr.mxu0 0.0
    %2050 = vmatpush2.msra.mxu0 0.0
    %2051 = vmatprep.subr.mxu0 0.0
    %2052 = vmatpush2.msra.mxu0 0.0
    %2053 = vmatprep.subr.mxu0 0.0
    %2054 = vmatpush2.msra.mxu0 0.0
    %2055 = vmatprep.subr.mxu0 0.0
    %2056 = vmatpush2.msra.mxu0 0.0
    %2057 = vmatprep.subr.mxu0 0.0
    %2058 = vmatpush2.msra.mxu0 0.0
    %2059 = vmatprep.subr.mxu0 0.0
    %2060 = vmatpush2.msra.mxu0 0.0
    %2061 = vmatprep.subr.mxu0 0.0
    %2062 = vmatpush2.msra.mxu0 0.0
    %2063 = vmatprep.subr.mxu0 0.0
    %2064 = vmatpush2.msra.mxu0 0.0
    %2065 = vmatprep.mubr.f32.mxu0 0.0
    %2066 = vmatmul.mubr.f32.gmra.mxu0 %v1994
    %v2067 = vpop.f32.mrf.mxu0
    %v2068 = vadd.f32 0.0, %v2067
    %v2069 = vpop.f32.mrf.mxu0
    %2070 = vmatprep.mubr.f32.mxu0 0.0
    %2071 = vmatmul.mubr.f32.gmra.mxu0 %v1997
    %v2072 = vpop.f32.mrf.mxu0
    %v2073 = vadd.f32 0.0, %v2072
    %v2074 = vpop.f32.mrf.mxu0
    %2075 = vdwg.mxu0
    %2076 = vrot.lane.b32.xlu0 %v1660, 112
    %v2077 = vpop.permute.xlu0 %2076
    %2078 = vrot.lane.b32.xlu0 %v1665, 112
    %v2079 = vpop.permute.xlu0 %2078
    %2080 = vrot.lane.b32.xlu0 %v1660, 80
    %v2081 = vpop.permute.xlu0 %2080
    %2082 = vrot.lane.b32.xlu0 %v1665, 80
    %v2083 = vpop.permute.xlu0 %2082
    %v2084 = vsel %vm321, %v2077, 0
    %v2086 = vsel %vm321, %v2079, 0
    %v2088 = vsel %vm321, %v2081, 0
    %v2090 = vsel %vm321, %v2083, 0
    %2092 = vmatprep.subr.mxu0 0.0
    %2093 = vmatpush1.xpose.msra.mxu0 0.0
    %2094 = vmatprep.subr.mxu0 0.0
    %2095 = vmatpush1.xpose.msra.mxu0 0.0
    %2096 = vmatprep.subr.mxu0 0.0
    %2097 = vmatpush1.xpose.msra.mxu0 0.0
    %2098 = vmatprep.subr.mxu0 0.0
    %2099 = vmatpush1.xpose.msra.mxu0 0.0
    %2100 = vmatprep.subr.mxu0 0.0
    %2101 = vmatpush1.xpose.msra.mxu0 0.0
    %2102 = vmatprep.subr.mxu0 0.0
    %2103 = vmatpush1.xpose.msra.mxu0 0.0
    %2104 = vmatprep.subr.mxu0 0.0
    %2105 = vmatpush1.xpose.msra.mxu0 0.0
    %2106 = vmatprep.subr.mxu0 0.0
    %2107 = vmatpush1.xpose.msra.mxu0 0.0
    %2108 = vmatprep.subr.mxu0 0.0
    %2109 = vmatpush1.xpose.msra.mxu0 0.0
    %2110 = vmatprep.subr.mxu0 0.0
    %2111 = vmatpush1.xpose.msra.mxu0 0.0
    %2112 = vmatprep.subr.mxu0 0.0
    %2113 = vmatpush1.xpose.msra.mxu0 0.0
    %2114 = vmatprep.subr.mxu0 0.0
    %2115 = vmatpush1.xpose.msra.mxu0 0.0
    %2116 = vmatprep.subr.mxu0 0.0
    %2117 = vmatpush1.xpose.msra.mxu0 0.0
    %2118 = vmatprep.subr.mxu0 0.0
    %2119 = vmatpush1.xpose.msra.mxu0 0.0
    %2120 = vmatprep.subr.mxu0 0.0
    %2121 = vmatpush1.xpose.msra.mxu0 %v2090
    %2122 = vmatprep.subr.mxu0 0.0
    %2123 = vmatpush1.xpose.msra.mxu0 %v2088
    %2124 = vmatprep.subr.mxu0 0.0
    %2125 = vmatpush2.xpose.msra.mxu0 0.0
    %2126 = vmatprep.subr.mxu0 0.0
    %2127 = vmatpush2.xpose.msra.mxu0 0.0
    %2128 = vmatprep.subr.mxu0 0.0
    %2129 = vmatpush2.xpose.msra.mxu0 0.0
    %2130 = vmatprep.subr.mxu0 0.0
    %2131 = vmatpush2.xpose.msra.mxu0 0.0
    %2132 = vmatprep.subr.mxu0 0.0
    %2133 = vmatpush2.xpose.msra.mxu0 0.0
    %2134 = vmatprep.subr.mxu0 0.0
    %2135 = vmatpush2.xpose.msra.mxu0 0.0
    %2136 = vmatprep.subr.mxu0 0.0
    %2137 = vmatpush2.xpose.msra.mxu0 0.0
    %2138 = vmatprep.subr.mxu0 0.0
    %2139 = vmatpush2.xpose.msra.mxu0 0.0
    %2140 = vmatprep.subr.mxu0 0.0
    %2141 = vmatpush2.xpose.msra.mxu0 0.0
    %2142 = vmatprep.subr.mxu0 0.0
    %2143 = vmatpush2.xpose.msra.mxu0 0.0
    %2144 = vmatprep.subr.mxu0 0.0
    %2145 = vmatpush2.xpose.msra.mxu0 0.0
    %2146 = vmatprep.subr.mxu0 0.0
    %2147 = vmatpush2.xpose.msra.mxu0 0.0
    %2148 = vmatprep.subr.mxu0 0.0
    %2149 = vmatpush2.xpose.msra.mxu0 0.0
    %2150 = vmatprep.subr.mxu0 0.0
    %2151 = vmatpush2.xpose.msra.mxu0 0.0
    %2152 = vmatprep.subr.mxu0 0.0
    %2153 = vmatpush2.xpose.msra.mxu0 0.0
    %2154 = vmatprep.subr.mxu0 0.0
    %2155 = vmatpush2.xpose.msra.mxu0 0.0
    %2156 = vmatprep.mubr.f32.mxu0 0.0
    %2157 = vmatmul.mubr.f32.gmra.mxu0 %v2084
    %v2158 = vpop.f32.mrf.mxu0
    %v2159 = vadd.f32 0.0, %v2158
    %v2160 = vpop.f32.mrf.mxu0
    %2161 = vmatprep.mubr.f32.mxu0 0.0
    %2162 = vmatmul.mubr.f32.gmra.mxu0 %v2086
    %v2163 = vpop.f32.mrf.mxu0
    %v2164 = vadd.f32 0.0, %v2163
    %v2165 = vpop.f32.mrf.mxu0
    %2166 = vdwg.mxu0
    %v2167 = vmul.f32 %v2159, 0.35355338
    %v2168 = vmul.f32 %v2164, 0.35355338
    %v2169 = vadd.f32 %v2167, %v63
    %v2170 = vadd.f32 %v2168, %v64
    %v2171 = vsel %vm409, %v2169, -inf
    %2172 = vmax.xlane.f32.xlu0 %v2171
    %v2173 = vpop.xlane.xlu0 %2172
    %v2174 = vsel %vm413, %v2170, -inf
    %2175 = vmax.xlane.f32.xlu0 %v2174
    %v2176 = vpop.xlane.xlu0 %2175
    %v2177 = vsub.f32 %v2169, %v2173
    %v2178 = vsub.f32 %v2170, %v2176
    %v2179 = vmul.f32 %v2177, 1.442695
    %v2180 = vpow.pop %v2179
    %v2181 = vmul.f32 %v2178, 1.442695
    %v2182 = vpow.pop %v2181
    %v2183 = vsel %vm409, %v2180, 0.0
    %2184 = vadd.xlane.f32.xlu0 %v2183
    %v2185 = vpop.xlane.xlu0 %2184
    %v2186 = vsel %vm413, %v2182, 0.0
    %2187 = vadd.xlane.f32.xlu0 %v2186
    %v2188 = vpop.xlane.xlu0 %2187
    %v2189 = vrcp.pop %v2185
    %v2190 = vrcp.pop %v2188
    %v2191 = vmul.f32 %v2180, %v2189
    %v2192 = vmul.f32 %v2182, %v2190
    %2193 = vrot.lane.b32.xlu0 %v1660, 48
    %v2194 = vpop.permute.xlu0 %2193
    %2195 = vrot.lane.b32.xlu0 %v1665, 48
    %v2196 = vpop.permute.xlu0 %2195
    %v2199 = vsel %vm409, %v2191, 0
    %v2202 = vsel %vm409, %v2192, 0
    %v2204 = vsel %vm444, %v2196, 0
    %2206 = vmatprep.subr.mxu0 0.0
    %2207 = vmatpush1.msra.mxu0 0.0
    %2208 = vmatprep.subr.mxu0 0.0
    %2209 = vmatpush1.msra.mxu0 0.0
    %2210 = vmatprep.subr.mxu0 0.0
    %2211 = vmatpush1.msra.mxu0 0.0
    %2212 = vmatprep.subr.mxu0 0.0
    %2213 = vmatpush1.msra.mxu0 0.0
    %2214 = vmatprep.subr.mxu0 0.0
    %2215 = vmatpush1.msra.mxu0 0.0
    %2216 = vmatprep.subr.mxu0 0.0
    %2217 = vmatpush1.msra.mxu0 0.0
    %2218 = vmatprep.subr.mxu0 0.0
    %2219 = vmatpush1.msra.mxu0 0.0
    %2220 = vmatprep.subr.mxu0 0.0
    %2221 = vmatpush1.msra.mxu0 0.0
    %2222 = vmatprep.subr.mxu0 0.0
    %2223 = vmatpush1.msra.mxu0 0.0
    %2224 = vmatprep.subr.mxu0 0.0
    %2225 = vmatpush1.msra.mxu0 0.0
    %2226 = vmatprep.subr.mxu0 0.0
    %2227 = vmatpush1.msra.mxu0 0.0
    %2228 = vmatprep.subr.mxu0 0.0
    %2229 = vmatpush1.msra.mxu0 0.0
    %2230 = vmatprep.subr.mxu0 0.0
    %2231 = vmatpush1.msra.mxu0 0.0
    %2232 = vmatprep.subr.mxu0 0.0
    %2233 = vmatpush1.msra.mxu0 0.0
    %2234 = vmatprep.subr.mxu0 0.0
    %2235 = vmatpush1.msra.mxu0 %v2204
    %2236 = vmatprep.subr.mxu0 0.0
    %2237 = vmatpush1.msra.mxu0 %v2194
    %2238 = vmatprep.subr.mxu0 0.0
    %2239 = vmatpush2.msra.mxu0 0.0
    %2240 = vmatprep.subr.mxu0 0.0
    %2241 = vmatpush2.msra.mxu0 0.0
    %2242 = vmatprep.subr.mxu0 0.0
    %2243 = vmatpush2.msra.mxu0 0.0
    %2244 = vmatprep.subr.mxu0 0.0
    %2245 = vmatpush2.msra.mxu0 0.0
    %2246 = vmatprep.subr.mxu0 0.0
    %2247 = vmatpush2.msra.mxu0 0.0
    %2248 = vmatprep.subr.mxu0 0.0
    %2249 = vmatpush2.msra.mxu0 0.0
    %2250 = vmatprep.subr.mxu0 0.0
    %2251 = vmatpush2.msra.mxu0 0.0
    %2252 = vmatprep.subr.mxu0 0.0
    %2253 = vmatpush2.msra.mxu0 0.0
    %2254 = vmatprep.subr.mxu0 0.0
    %2255 = vmatpush2.msra.mxu0 0.0
    %2256 = vmatprep.subr.mxu0 0.0
    %2257 = vmatpush2.msra.mxu0 0.0
    %2258 = vmatprep.subr.mxu0 0.0
    %2259 = vmatpush2.msra.mxu0 0.0
    %2260 = vmatprep.subr.mxu0 0.0
    %2261 = vmatpush2.msra.mxu0 0.0
    %2262 = vmatprep.subr.mxu0 0.0
    %2263 = vmatpush2.msra.mxu0 0.0
    %2264 = vmatprep.subr.mxu0 0.0
    %2265 = vmatpush2.msra.mxu0 0.0
    %2266 = vmatprep.subr.mxu0 0.0
    %2267 = vmatpush2.msra.mxu0 0.0
    %2268 = vmatprep.subr.mxu0 0.0
    %2269 = vmatpush2.msra.mxu0 0.0
    %2270 = vmatprep.mubr.f32.mxu0 0.0
    %2271 = vmatmul.mubr.f32.gmra.mxu0 %v2199
    %v2272 = vpop.f32.mrf.mxu0
    %v2273 = vadd.f32 0.0, %v2272
    %v2274 = vpop.f32.mrf.mxu0
    %2275 = vmatprep.mubr.f32.mxu0 0.0
    %2276 = vmatmul.mubr.f32.gmra.mxu0 %v2202
    %v2277 = vpop.f32.mrf.mxu0
    %v2278 = vadd.f32 0.0, %v2277
    %v2279 = vpop.f32.mrf.mxu0
    %2280 = vdwg.mxu0
    %2281 = vrot.lane.b32.xlu0 %v1660, 104
    %v2282 = vpop.permute.xlu0 %2281
    %2283 = vrot.lane.b32.xlu0 %v1665, 104
    %v2284 = vpop.permute.xlu0 %2283
    %2285 = vrot.lane.b32.xlu0 %v1660, 72
    %v2286 = vpop.permute.xlu0 %2285
    %2287 = vrot.lane.b32.xlu0 %v1665, 72
    %v2288 = vpop.permute.xlu0 %2287
    %v2289 = vsel %vm321, %v2282, 0
    %v2291 = vsel %vm321, %v2284, 0
    %v2293 = vsel %vm321, %v2286, 0
    %v2295 = vsel %vm321, %v2288, 0
    %2297 = vmatprep.subr.mxu0 0.0
    %2298 = vmatpush1.xpose.msra.mxu0 0.0
    %2299 = vmatprep.subr.mxu0 0.0
    %2300 = vmatpush1.xpose.msra.mxu0 0.0
    %2301 = vmatprep.subr.mxu0 0.0
    %2302 = vmatpush1.xpose.msra.mxu0 0.0
    %2303 = vmatprep.subr.mxu0 0.0
    %2304 = vmatpush1.xpose.msra.mxu0 0.0
    %2305 = vmatprep.subr.mxu0 0.0
    %2306 = vmatpush1.xpose.msra.mxu0 0.0
    %2307 = vmatprep.subr.mxu0 0.0
    %2308 = vmatpush1.xpose.msra.mxu0 0.0
    %2309 = vmatprep.subr.mxu0 0.0
    %2310 = vmatpush1.xpose.msra.mxu0 0.0
    %2311 = vmatprep.subr.mxu0 0.0
    %2312 = vmatpush1.xpose.msra.mxu0 0.0
    %2313 = vmatprep.subr.mxu0 0.0
    %2314 = vmatpush1.xpose.msra.mxu0 0.0
    %2315 = vmatprep.subr.mxu0 0.0
    %2316 = vmatpush1.xpose.msra.mxu0 0.0
    %2317 = vmatprep.subr.mxu0 0.0
    %2318 = vmatpush1.xpose.msra.mxu0 0.0
    %2319 = vmatprep.subr.mxu0 0.0
    %2320 = vmatpush1.xpose.msra.mxu0 0.0
    %2321 = vmatprep.subr.mxu0 0.0
    %2322 = vmatpush1.xpose.msra.mxu0 0.0
    %2323 = vmatprep.subr.mxu0 0.0
    %2324 = vmatpush1.xpose.msra.mxu0 0.0
    %2325 = vmatprep.subr.mxu0 0.0
    %2326 = vmatpush1.xpose.msra.mxu0 %v2295
    %2327 = vmatprep.subr.mxu0 0.0
    %2328 = vmatpush1.xpose.msra.mxu0 %v2293
    %2329 = vmatprep.subr.mxu0 0.0
    %2330 = vmatpush2.xpose.msra.mxu0 0.0
    %2331 = vmatprep.subr.mxu0 0.0
    %2332 = vmatpush2.xpose.msra.mxu0 0.0
    %2333 = vmatprep.subr.mxu0 0.0
    %2334 = vmatpush2.xpose.msra.mxu0 0.0
    %2335 = vmatprep.subr.mxu0 0.0
    %2336 = vmatpush2.xpose.msra.mxu0 0.0
    %2337 = vmatprep.subr.mxu0 0.0
    %2338 = vmatpush2.xpose.msra.mxu0 0.0
    %2339 = vmatprep.subr.mxu0 0.0
    %2340 = vmatpush2.xpose.msra.mxu0 0.0
    %2341 = vmatprep.subr.mxu0 0.0
    %2342 = vmatpush2.xpose.msra.mxu0 0.0
    %2343 = vmatprep.subr.mxu0 0.0
    %2344 = vmatpush2.xpose.msra.mxu0 0.0
    %2345 = vmatprep.subr.mxu0 0.0
    %2346 = vmatpush2.xpose.msra.mxu0 0.0
    %2347 = vmatprep.subr.mxu0 0.0
    %2348 = vmatpush2.xpose.msra.mxu0 0.0
    %2349 = vmatprep.subr.mxu0 0.0
    %2350 = vmatpush2.xpose.msra.mxu0 0.0
    %2351 = vmatprep.subr.mxu0 0.0
    %2352 = vmatpush2.xpose.msra.mxu0 0.0
    %2353 = vmatprep.subr.mxu0 0.0
    %2354 = vmatpush2.xpose.msra.mxu0 0.0
    %2355 = vmatprep.subr.mxu0 0.0
    %2356 = vmatpush2.xpose.msra.mxu0 0.0
    %2357 = vmatprep.subr.mxu0 0.0
    %2358 = vmatpush2.xpose.msra.mxu0 0.0
    %2359 = vmatprep.subr.mxu0 0.0
    %2360 = vmatpush2.xpose.msra.mxu0 0.0
    %2361 = vmatprep.mubr.f32.mxu0 0.0
    %2362 = vmatmul.mubr.f32.gmra.mxu0 %v2289
    %v2363 = vpop.f32.mrf.mxu0
    %v2364 = vadd.f32 0.0, %v2363
    %v2365 = vpop.f32.mrf.mxu0
    %2366 = vmatprep.mubr.f32.mxu0 0.0
    %2367 = vmatmul.mubr.f32.gmra.mxu0 %v2291
    %v2368 = vpop.f32.mrf.mxu0
    %v2369 = vadd.f32 0.0, %v2368
    %v2370 = vpop.f32.mrf.mxu0
    %2371 = vdwg.mxu0
    %v2372 = vmul.f32 %v2364, 0.35355338
    %v2373 = vmul.f32 %v2369, 0.35355338
    %v2374 = vadd.f32 %v2372, %v63
    %v2375 = vadd.f32 %v2373, %v64
    %v2376 = vsel %vm409, %v2374, -inf
    %2377 = vmax.xlane.f32.xlu0 %v2376
    %v2378 = vpop.xlane.xlu0 %2377
    %v2379 = vsel %vm413, %v2375, -inf
    %2380 = vmax.xlane.f32.xlu0 %v2379
    %v2381 = vpop.xlane.xlu0 %2380
    %v2382 = vsub.f32 %v2374, %v2378
    %v2383 = vsub.f32 %v2375, %v2381
    %v2384 = vmul.f32 %v2382, 1.442695
    %v2385 = vpow.pop %v2384
    %v2386 = vmul.f32 %v2383, 1.442695
    %v2387 = vpow.pop %v2386
    %v2388 = vsel %vm409, %v2385, 0.0
    %2389 = vadd.xlane.f32.xlu0 %v2388
    %v2390 = vpop.xlane.xlu0 %2389
    %v2391 = vsel %vm413, %v2387, 0.0
    %2392 = vadd.xlane.f32.xlu0 %v2391
    %v2393 = vpop.xlane.xlu0 %2392
    %v2394 = vrcp.pop %v2390
    %v2395 = vrcp.pop %v2393
    %v2396 = vmul.f32 %v2385, %v2394
    %v2397 = vmul.f32 %v2387, %v2395
    %2398 = vrot.lane.b32.xlu0 %v1660, 40
    %v2399 = vpop.permute.xlu0 %2398
    %2400 = vrot.lane.b32.xlu0 %v1665, 40
    %v2401 = vpop.permute.xlu0 %2400
    %v2404 = vsel %vm409, %v2396, 0
    %v2407 = vsel %vm409, %v2397, 0
    %v2409 = vsel %vm444, %v2401, 0
    %2411 = vmatprep.subr.mxu0 0.0
    %2412 = vmatpush1.msra.mxu0 0.0
    %2413 = vmatprep.subr.mxu0 0.0
    %2414 = vmatpush1.msra.mxu0 0.0
    %2415 = vmatprep.subr.mxu0 0.0
    %2416 = vmatpush1.msra.mxu0 0.0
    %2417 = vmatprep.subr.mxu0 0.0
    %2418 = vmatpush1.msra.mxu0 0.0
    %2419 = vmatprep.subr.mxu0 0.0
    %2420 = vmatpush1.msra.mxu0 0.0
    %2421 = vmatprep.subr.mxu0 0.0
    %2422 = vmatpush1.msra.mxu0 0.0
    %2423 = vmatprep.subr.mxu0 0.0
    %2424 = vmatpush1.msra.mxu0 0.0
    %2425 = vmatprep.subr.mxu0 0.0
    %2426 = vmatpush1.msra.mxu0 0.0
    %2427 = vmatprep.subr.mxu0 0.0
    %2428 = vmatpush1.msra.mxu0 0.0
    %2429 = vmatprep.subr.mxu0 0.0
    %2430 = vmatpush1.msra.mxu0 0.0
    %2431 = vmatprep.subr.mxu0 0.0
    %2432 = vmatpush1.msra.mxu0 0.0
    %2433 = vmatprep.subr.mxu0 0.0
    %2434 = vmatpush1.msra.mxu0 0.0
    %2435 = vmatprep.subr.mxu0 0.0
    %2436 = vmatpush1.msra.mxu0 0.0
    %2437 = vmatprep.subr.mxu0 0.0
    %2438 = vmatpush1.msra.mxu0 0.0
    %2439 = vmatprep.subr.mxu0 0.0
    %2440 = vmatpush1.msra.mxu0 %v2409
    %2441 = vmatprep.subr.mxu0 0.0
    %2442 = vmatpush1.msra.mxu0 %v2399
    %2443 = vmatprep.subr.mxu0 0.0
    %2444 = vmatpush2.msra.mxu0 0.0
    %2445 = vmatprep.subr.mxu0 0.0
    %2446 = vmatpush2.msra.mxu0 0.0
    %2447 = vmatprep.subr.mxu0 0.0
    %2448 = vmatpush2.msra.mxu0 0.0
    %2449 = vmatprep.subr.mxu0 0.0
    %2450 = vmatpush2.msra.mxu0 0.0
    %2451 = vmatprep.subr.mxu0 0.0
    %2452 = vmatpush2.msra.mxu0 0.0
    %2453 = vmatprep.subr.mxu0 0.0
    %2454 = vmatpush2.msra.mxu0 0.0
    %2455 = vmatprep.subr.mxu0 0.0
    %2456 = vmatpush2.msra.mxu0 0.0
    %2457 = vmatprep.subr.mxu0 0.0
    %2458 = vmatpush2.msra.mxu0 0.0
    %2459 = vmatprep.subr.mxu0 0.0
    %2460 = vmatpush2.msra.mxu0 0.0
    %2461 = vmatprep.subr.mxu0 0.0
    %2462 = vmatpush2.msra.mxu0 0.0
    %2463 = vmatprep.subr.mxu0 0.0
    %2464 = vmatpush2.msra.mxu0 0.0
    %2465 = vmatprep.subr.mxu0 0.0
    %2466 = vmatpush2.msra.mxu0 0.0
    %2467 = vmatprep.subr.mxu0 0.0
    %2468 = vmatpush2.msra.mxu0 0.0
    %2469 = vmatprep.subr.mxu0 0.0
    %2470 = vmatpush2.msra.mxu0 0.0
    %2471 = vmatprep.subr.mxu0 0.0
    %2472 = vmatpush2.msra.mxu0 0.0
    %2473 = vmatprep.subr.mxu0 0.0
    %2474 = vmatpush2.msra.mxu0 0.0
    %2475 = vmatprep.mubr.f32.mxu0 0.0
    %2476 = vmatmul.mubr.f32.gmra.mxu0 %v2404
    %v2477 = vpop.f32.mrf.mxu0
    %v2478 = vadd.f32 0.0, %v2477
    %v2479 = vpop.f32.mrf.mxu0
    %2480 = vmatprep.mubr.f32.mxu0 0.0
    %2481 = vmatmul.mubr.f32.gmra.mxu0 %v2407
    %v2482 = vpop.f32.mrf.mxu0
    %v2483 = vadd.f32 0.0, %v2482
    %v2484 = vpop.f32.mrf.mxu0
    %2485 = vdwg.mxu0
    %2488 = vrot.lane.b32.xlu0 %v2068, 8
    %v2489 = vpop.permute.xlu0 %2488
    %2490 = vrot.lane.b32.xlu0 %v2073, 8
    %v2491 = vpop.permute.xlu0 %2490
    %2496 = vrot.lane.b32.xlu0 %v2273, 16
    %v2497 = vpop.permute.xlu0 %2496
    %2498 = vrot.lane.b32.xlu0 %v2278, 16
    %v2499 = vpop.permute.xlu0 %2498
    %2504 = vrot.lane.b32.xlu0 %v2478, 24
    %v2505 = vpop.permute.xlu0 %2504
    %2506 = vrot.lane.b32.xlu0 %v2483, 24
    %v2507 = vpop.permute.xlu0 %2506
    %v2510 = vsel %vm321, %v1863, %v2489
    %v2511 = vsel %vm321, %v1868, %v2491
    %v2512 = vsel %vm1163, %v2510, %v2497
    %v2513 = vsel %vm1163, %v2511, %v2499
    %v2514 = vsel %vm1166, %v2512, %v2505
    %v2515 = vsel %vm1166, %v2513, %v2507
    %v2516 = vlaneseq
    %v2517 = vshrl.u32 %v2516, 7
    %v2518 = vsub.s32 3, %v2517
    %v2519 = vrot.slane %v1534, %v2518
    %v2521 = vsel %vm181, %v2514, 0
    %v2524 = vsel %vm181, %v2515, 0
    %2526 = vmatprep.subr.mxu0 0.0
    %2527 = vmatpush1.msra.mxu0 0.0
    %2528 = vmatprep.subr.mxu0 0.0
    %2529 = vmatpush1.msra.mxu0 0.0
    %2530 = vmatprep.subr.mxu0 0.0
    %2531 = vmatpush1.msra.mxu0 0.0
    %2532 = vmatprep.subr.mxu0 0.0
    %2533 = vmatpush1.msra.mxu0 0.0
    %2534 = vmatprep.subr.mxu0 0.0
    %2535 = vmatpush1.msra.mxu0 0.0
    %2536 = vmatprep.subr.mxu0 0.0
    %2537 = vmatpush1.msra.mxu0 0.0
    %2538 = vmatprep.subr.mxu0 0.0
    %2539 = vmatpush1.msra.mxu0 0.0
    %2540 = vmatprep.subr.mxu0 0.0
    %2541 = vmatpush1.msra.mxu0 0.0
    %2542 = vmatprep.subr.mxu0 0.0
    %2543 = vmatpush1.msra.mxu0 0.0
    %2544 = vmatprep.subr.mxu0 0.0
    %2545 = vmatpush1.msra.mxu0 0.0
    %2546 = vmatprep.subr.mxu0 0.0
    %2547 = vmatpush1.msra.mxu0 0.0
    %2548 = vmatprep.subr.mxu0 0.0
    %2549 = vmatpush1.msra.mxu0 0.0
    %2550 = vmatprep.subr.mxu0 0.0
    %2551 = vmatpush1.msra.mxu0 %v1582
    %2552 = vmatprep.subr.mxu0 0.0
    %2553 = vmatpush1.msra.mxu0 %v1581
    %2554 = vmatprep.subr.mxu0 0.0
    %2555 = vmatpush1.msra.mxu0 %v1580
    %2556 = vmatprep.subr.mxu0 0.0
    %2557 = vmatpush1.msra.mxu0 %v1579
    %2558 = vmatprep.subr.mxu0 0.0
    %2559 = vmatpush2.msra.mxu0 0.0
    %2560 = vmatprep.subr.mxu0 0.0
    %2561 = vmatpush2.msra.mxu0 0.0
    %2562 = vmatprep.subr.mxu0 0.0
    %2563 = vmatpush2.msra.mxu0 0.0
    %2564 = vmatprep.subr.mxu0 0.0
    %2565 = vmatpush2.msra.mxu0 0.0
    %2566 = vmatprep.subr.mxu0 0.0
    %2567 = vmatpush2.msra.mxu0 0.0
    %2568 = vmatprep.subr.mxu0 0.0
    %2569 = vmatpush2.msra.mxu0 0.0
    %2570 = vmatprep.subr.mxu0 0.0
    %2571 = vmatpush2.msra.mxu0 0.0
    %2572 = vmatprep.subr.mxu0 0.0
    %2573 = vmatpush2.msra.mxu0 0.0
    %2574 = vmatprep.subr.mxu0 0.0
    %2575 = vmatpush2.msra.mxu0 0.0
    %2576 = vmatprep.subr.mxu0 0.0
    %2577 = vmatpush2.msra.mxu0 0.0
    %2578 = vmatprep.subr.mxu0 0.0
    %2579 = vmatpush2.msra.mxu0 0.0
    %2580 = vmatprep.subr.mxu0 0.0
    %2581 = vmatpush2.msra.mxu0 0.0
    %2582 = vmatprep.subr.mxu0 0.0
    %2583 = vmatpush2.msra.mxu0 0.0
    %2584 = vmatprep.subr.mxu0 0.0
    %2585 = vmatpush2.msra.mxu0 0.0
    %2586 = vmatprep.subr.mxu0 0.0
    %2587 = vmatpush2.msra.mxu0 0.0
    %2588 = vmatprep.subr.mxu0 0.0
    %2589 = vmatpush2.msra.mxu0 0.0
    %2590 = vmatprep.mubr.f32.mxu0 0.0
    %2591 = vmatmul.mubr.f32.gmra.mxu0 %v2521
    %v2592 = vpop.f32.mrf.mxu0
    %v2593 = vadd.f32 %v2519, %v2592
    %v2594 = vpop.f32.mrf.mxu0
    %2595 = vmatprep.mubr.f32.mxu0 0.0
    %2596 = vmatmul.mubr.f32.gmra.mxu0 %v2524
    %v2597 = vpop.f32.mrf.mxu0
    %v2598 = vadd.f32 %v2519, %v2597
    %v2599 = vpop.f32.mrf.mxu0
    %2600 = vdwg.mxu0
    %v2601 = vadd.f32 %v1531, %v2593
    %v2602 = vadd.f32 %v1532, %v2598
    %v2603 = vsel %vm181, %v2601, 0.0
    %2604 = vadd.xlane.f32.xlu0 %v2603
    %v2605 = vpop.xlane.xlu0 %2604
    %v2606 = vsel %vm185, %v2602, 0.0
    %2607 = vadd.xlane.f32.xlu0 %v2606
    %v2608 = vpop.xlane.xlu0 %2607
    %v2609 = vmul.f32 %v2605, %v189
    %v2610 = vmul.f32 %v2608, %v189
    %v2611 = vsub.f32 %v2601, %v2609
    %v2612 = vsub.f32 %v2602, %v2610
    %v2613 = vmul.f32 %v2611, %v2611
    %v2614 = vmul.f32 %v2612, %v2612
    %v2615 = vsel %vm181, %v2613, 0.0
    %2616 = vadd.xlane.f32.xlu0 %v2615
    %v2617 = vpop.xlane.xlu0 %2616
    %v2618 = vsel %vm185, %v2614, 0.0
    %2619 = vadd.xlane.f32.xlu0 %v2618
    %v2620 = vpop.xlane.xlu0 %2619
    %v2621 = vmul.f32 %v2617, %v189
    %v2622 = vmul.f32 %v2620, %v189
    %v2623 = vadd.f32 %v2621, 1e-06
    %v2624 = vadd.f32 %v2622, 1e-06
    %v2625 = vrsqrt.pop %v2623
    %v2626 = vrsqrt.pop %v2624
    %v2627 = vmul.f32 %v2611, %v2625
    %v2628 = vmul.f32 %v2612, %v2626
    %v2629 = vlaneseq
    %v2630 = vshrl.u32 %v2629, 7
    %v2631 = vsub.s32 4, %v2630
    %v2632 = vrot.slane %v1534, %v2631
    %v2633 = vmul.f32 %v2627, %v2632
    %v2634 = vmul.f32 %v2628, %v2632
    %v2635 = vlaneseq
    %v2636 = vshrl.u32 %v2635, 7
    %v2637 = vsub.s32 5, %v2636
    %v2638 = vrot.slane %v1534, %v2637
    %v2639 = vadd.f32 %v2633, %v2638
    %v2640 = vadd.f32 %v2634, %v2638
    %s2641 = scalar_lea.vmem %s5, 32
    %v2642 = vld [vmem:[%s2641] sm:$0xff]
    %v2643 = vld [vmem:[%s2641 + $0x8] sm:$0xff]
    %v2644 = vld [vmem:[%s2641 + $0x10] sm:$0xff]
    %v2645 = vld [vmem:[%s2641 + $0x18] sm:$0xff]
    %v2646 = vlaneseq
    %v2647 = vshrl.u32 %v2646, 7
    %v2648 = vsub.s32 6, %v2647
    %v2649 = vrot.slane %v1534, %v2648
    %v2651 = vsel %vm181, %v2639, 0
    %v2654 = vsel %vm181, %v2640, 0
    %2656 = vmatprep.subr.mxu0 0.0
    %2657 = vmatpush1.msra.mxu0 0.0
    %2658 = vmatprep.subr.mxu0 0.0
    %2659 = vmatpush1.msra.mxu0 0.0
    %2660 = vmatprep.subr.mxu0 0.0
    %2661 = vmatpush1.msra.mxu0 0.0
    %2662 = vmatprep.subr.mxu0 0.0
    %2663 = vmatpush1.msra.mxu0 0.0
    %2664 = vmatprep.subr.mxu0 0.0
    %2665 = vmatpush1.msra.mxu0 0.0
    %2666 = vmatprep.subr.mxu0 0.0
    %2667 = vmatpush1.msra.mxu0 0.0
    %2668 = vmatprep.subr.mxu0 0.0
    %2669 = vmatpush1.msra.mxu0 0.0
    %2670 = vmatprep.subr.mxu0 0.0
    %2671 = vmatpush1.msra.mxu0 0.0
    %2672 = vmatprep.subr.mxu0 0.0
    %2673 = vmatpush1.msra.mxu0 0.0
    %2674 = vmatprep.subr.mxu0 0.0
    %2675 = vmatpush1.msra.mxu0 0.0
    %2676 = vmatprep.subr.mxu0 0.0
    %2677 = vmatpush1.msra.mxu0 0.0
    %2678 = vmatprep.subr.mxu0 0.0
    %2679 = vmatpush1.msra.mxu0 0.0
    %2680 = vmatprep.subr.mxu0 0.0
    %2681 = vmatpush1.msra.mxu0 %v2645
    %2682 = vmatprep.subr.mxu0 0.0
    %2683 = vmatpush1.msra.mxu0 %v2644
    %2684 = vmatprep.subr.mxu0 0.0
    %2685 = vmatpush1.msra.mxu0 %v2643
    %2686 = vmatprep.subr.mxu0 0.0
    %2687 = vmatpush1.msra.mxu0 %v2642
    %2688 = vmatprep.subr.mxu0 0.0
    %2689 = vmatpush2.msra.mxu0 0.0
    %2690 = vmatprep.subr.mxu0 0.0
    %2691 = vmatpush2.msra.mxu0 0.0
    %2692 = vmatprep.subr.mxu0 0.0
    %2693 = vmatpush2.msra.mxu0 0.0
    %2694 = vmatprep.subr.mxu0 0.0
    %2695 = vmatpush2.msra.mxu0 0.0
    %2696 = vmatprep.subr.mxu0 0.0
    %2697 = vmatpush2.msra.mxu0 0.0
    %2698 = vmatprep.subr.mxu0 0.0
    %2699 = vmatpush2.msra.mxu0 0.0
    %2700 = vmatprep.subr.mxu0 0.0
    %2701 = vmatpush2.msra.mxu0 0.0
    %2702 = vmatprep.subr.mxu0 0.0
    %2703 = vmatpush2.msra.mxu0 0.0
    %2704 = vmatprep.subr.mxu0 0.0
    %2705 = vmatpush2.msra.mxu0 0.0
    %2706 = vmatprep.subr.mxu0 0.0
    %2707 = vmatpush2.msra.mxu0 0.0
    %2708 = vmatprep.subr.mxu0 0.0
    %2709 = vmatpush2.msra.mxu0 0.0
    %2710 = vmatprep.subr.mxu0 0.0
    %2711 = vmatpush2.msra.mxu0 0.0
    %2712 = vmatprep.subr.mxu0 0.0
    %2713 = vmatpush2.msra.mxu0 0.0
    %2714 = vmatprep.subr.mxu0 0.0
    %2715 = vmatpush2.msra.mxu0 0.0
    %2716 = vmatprep.subr.mxu0 0.0
    %2717 = vmatpush2.msra.mxu0 0.0
    %2718 = vmatprep.subr.mxu0 0.0
    %2719 = vmatpush2.msra.mxu0 0.0
    %2720 = vmatprep.mubr.f32.mxu0 0.0
    %2721 = vmatmul.mubr.f32.gmra.mxu0 %v2651
    %v2722 = vpop.f32.mrf.mxu0
    %v2723 = vadd.f32 %v2649, %v2722
    %v2724 = vpop.f32.mrf.mxu0
    %2725 = vmatprep.mubr.f32.mxu0 0.0
    %2726 = vmatmul.mubr.f32.gmra.mxu0 %v2654
    %v2727 = vpop.f32.mrf.mxu0
    %v2728 = vadd.f32 %v2649, %v2727
    %v2729 = vpop.f32.mrf.mxu0
    %2730 = vdwg.mxu0
    %v2731 = vmul.f32 %v2723, 0.5
    %v2732 = vmul.f32 %v2728, 0.5
    %v2733 = vmul.f32 %v2723, 0.70710677
    %v2734 = vmul.f32 %v2728, 0.70710677
    %vm2735 = vcmp.lt.f32.partialorder %v2733, 0.0
    %vm2736 = vcmp.lt.f32.partialorder %v2734, 0.0
    %v2737 = vsel %vm2735, -1.0, 1.0
    %v2738 = vsel %vm2736, -1.0, 1.0
    %v2739 = vand.u32 2147483647, %v2733
    %v2740 = vand.u32 2147483647, %v2734
    %v2741 = vmul.f32 %v2739, 0.3275911
    %v2742 = vmul.f32 %v2740, 0.3275911
    %v2743 = vadd.f32 %v2741, 1.0
    %v2744 = vadd.f32 %v2742, 1.0
    %v2745 = vrcp.pop %v2743
    %v2746 = vrcp.pop %v2744
    %v2747 = vmul.f32 %v2745, 1.0614054
    %v2748 = vmul.f32 %v2746, 1.0614054
    %v2749 = vadd.f32 %v2747, -1.4531521
    %v2750 = vadd.f32 %v2748, -1.4531521
    %v2751 = vmul.f32 %v2745, %v2749
    %v2752 = vmul.f32 %v2746, %v2750
    %v2753 = vadd.f32 %v2751, 1.4214138
    %v2754 = vadd.f32 %v2752, 1.4214138
    %v2755 = vmul.f32 %v2745, %v2753
    %v2756 = vmul.f32 %v2746, %v2754
    %v2757 = vadd.f32 %v2755, -0.28449672
    %v2758 = vadd.f32 %v2756, -0.28449672
    %v2759 = vmul.f32 %v2745, %v2757
    %v2760 = vmul.f32 %v2746, %v2758
    %v2761 = vadd.f32 %v2759, 0.2548296
    %v2762 = vadd.f32 %v2760, 0.2548296
    %v2763 = vmul.f32 %v2745, %v2761
    %v2764 = vmul.f32 %v2746, %v2762
    %v2765 = vsub.f32 0.0, %v2739
    %v2766 = vsub.f32 0.0, %v2740
    %v2767 = vmul.f32 %v2765, %v2739
    %v2768 = vmul.f32 %v2766, %v2740
    %v2769 = vmul.f32 %v2767, 1.442695
    %v2770 = vpow.pop %v2769
    %v2771 = vmul.f32 %v2768, 1.442695
    %v2772 = vpow.pop %v2771
    %v2773 = vmul.f32 %v2763, %v2770
    %v2774 = vmul.f32 %v2764, %v2772
    %v2775 = vsub.f32 1.0, %v2773
    %v2776 = vsub.f32 1.0, %v2774
    %v2777 = vmul.f32 %v2737, %v2775
    %v2778 = vmul.f32 %v2738, %v2776
    %v2779 = vadd.f32 %v2777, 1.0
    %v2780 = vadd.f32 %v2778, 1.0
    %v2781 = vmul.f32 %v2731, %v2779
    %v2782 = vmul.f32 %v2732, %v2780
    %s2783 = scalar_lea.vmem %s6, 64
    %v2784 = vld [vmem:[%s2783] sm:$0xff]
    %v2785 = vld [vmem:[%s2783 + $0x8] sm:$0xff]
    %v2786 = vld [vmem:[%s2783 + $0x10] sm:$0xff]
    %v2787 = vld [vmem:[%s2783 + $0x18] sm:$0xff]
    %v2788 = vld [vmem:[%s2783 + $0x20] sm:$0xff]
    %v2789 = vld [vmem:[%s2783 + $0x28] sm:$0xff]
    %v2790 = vld [vmem:[%s2783 + $0x30] sm:$0xff]
    %v2791 = vld [vmem:[%s2783 + $0x38] sm:$0xff]
    %v2793 = vsel %vm1443, %v2781, 0
    %v2796 = vsel %vm1443, %v2782, 0
    %2798 = vmatprep.subr.mxu0 0.0
    %2799 = vmatpush1.msra.mxu0 0.0
    %2800 = vmatprep.subr.mxu0 0.0
    %2801 = vmatpush1.msra.mxu0 0.0
    %2802 = vmatprep.subr.mxu0 0.0
    %2803 = vmatpush1.msra.mxu0 0.0
    %2804 = vmatprep.subr.mxu0 0.0
    %2805 = vmatpush1.msra.mxu0 0.0
    %2806 = vmatprep.subr.mxu0 0.0
    %2807 = vmatpush1.msra.mxu0 0.0
    %2808 = vmatprep.subr.mxu0 0.0
    %2809 = vmatpush1.msra.mxu0 0.0
    %2810 = vmatprep.subr.mxu0 0.0
    %2811 = vmatpush1.msra.mxu0 0.0
    %2812 = vmatprep.subr.mxu0 0.0
    %2813 = vmatpush1.msra.mxu0 0.0
    %2814 = vmatprep.subr.mxu0 0.0
    %2815 = vmatpush1.msra.mxu0 %v2791
    %2816 = vmatprep.subr.mxu0 0.0
    %2817 = vmatpush1.msra.mxu0 %v2790
    %2818 = vmatprep.subr.mxu0 0.0
    %2819 = vmatpush1.msra.mxu0 %v2789
    %2820 = vmatprep.subr.mxu0 0.0
    %2821 = vmatpush1.msra.mxu0 %v2788
    %2822 = vmatprep.subr.mxu0 0.0
    %2823 = vmatpush1.msra.mxu0 %v2787
    %2824 = vmatprep.subr.mxu0 0.0
    %2825 = vmatpush1.msra.mxu0 %v2786
    %2826 = vmatprep.subr.mxu0 0.0
    %2827 = vmatpush1.msra.mxu0 %v2785
    %2828 = vmatprep.subr.mxu0 0.0
    %2829 = vmatpush1.msra.mxu0 %v2784
    %2830 = vmatprep.subr.mxu0 0.0
    %2831 = vmatpush2.msra.mxu0 0.0
    %2832 = vmatprep.subr.mxu0 0.0
    %2833 = vmatpush2.msra.mxu0 0.0
    %2834 = vmatprep.subr.mxu0 0.0
    %2835 = vmatpush2.msra.mxu0 0.0
    %2836 = vmatprep.subr.mxu0 0.0
    %2837 = vmatpush2.msra.mxu0 0.0
    %2838 = vmatprep.subr.mxu0 0.0
    %2839 = vmatpush2.msra.mxu0 0.0
    %2840 = vmatprep.subr.mxu0 0.0
    %2841 = vmatpush2.msra.mxu0 0.0
    %2842 = vmatprep.subr.mxu0 0.0
    %2843 = vmatpush2.msra.mxu0 0.0
    %2844 = vmatprep.subr.mxu0 0.0
    %2845 = vmatpush2.msra.mxu0 0.0
    %2846 = vmatprep.subr.mxu0 0.0
    %2847 = vmatpush2.msra.mxu0 0.0
    %2848 = vmatprep.subr.mxu0 0.0
    %2849 = vmatpush2.msra.mxu0 0.0
    %2850 = vmatprep.subr.mxu0 0.0
    %2851 = vmatpush2.msra.mxu0 0.0
    %2852 = vmatprep.subr.mxu0 0.0
    %2853 = vmatpush2.msra.mxu0 0.0
    %2854 = vmatprep.subr.mxu0 0.0
    %2855 = vmatpush2.msra.mxu0 0.0
    %2856 = vmatprep.subr.mxu0 0.0
    %2857 = vmatpush2.msra.mxu0 0.0
    %2858 = vmatprep.subr.mxu0 0.0
    %2859 = vmatpush2.msra.mxu0 0.0
    %2860 = vmatprep.subr.mxu0 0.0
    %2861 = vmatpush2.msra.mxu0 0.0
    %2862 = vmatprep.mubr.f32.mxu0 0.0
    %2863 = vmatmul.mubr.f32.gmra.mxu0 %v2793
    %v2864 = vpop.f32.mrf.mxu0
    %v2865 = vadd.f32 0.0, %v2864
    %v2866 = vpop.f32.mrf.mxu0
    %2867 = vmatprep.mubr.f32.mxu0 0.0
    %2868 = vmatmul.mubr.f32.gmra.mxu0 %v2796
    %v2869 = vpop.f32.mrf.mxu0
    %v2870 = vpop.f32.mrf.mxu0
    %2871 = vdwg.mxu0
    %v2872 = vadd.f32 %v2601, %v2865
    %v2873 = vlaneseq
    %v2874 = vshrl.u32 %v2873, 7
    %v2875 = vsub.s32 7, %v2874
    %v2876 = vrot.slane %v1534, %v2875
    %v2877 = vadd.f32 %v2872, %v2876
    %v2878 = vld [vmem:[%s8] sm:$0x7]
    %v2879 = vsel %vm181, %v2877, 0.0
    %2880 = vadd.xlane.f32.xlu0 %v2879
    %v2881 = vpop.xlane.xlu0 %2880
    %v2882 = vmul.f32 %v2881, %v189
    %v2883 = vsub.f32 %v2877, %v2882
    %v2884 = vmul.f32 %v2883, %v2883
    %v2885 = vsel %vm181, %v2884, 0.0
    %2886 = vadd.xlane.f32.xlu0 %v2885
    %v2887 = vpop.xlane.xlu0 %2886
    %v2888 = vmul.f32 %v2887, %v189
    %v2889 = vadd.f32 %v2888, 1e-06
    %v2890 = vrsqrt.pop %v2889
    %v2891 = vmul.f32 %v2883, %v2890
    %v2892 = vlaneseq
    %v2893 = vshrl.u32 %v2892, 7
    %v2894 = vsub.s32 0, %v2893
    %v2895 = vrot.slane %v2878, %v2894
    %v2896 = vmul.f32 %v2891, %v2895
    %v2897 = vlaneseq
    %v2898 = vshrl.u32 %v2897, 7
    %v2899 = vsub.s32 1, %v2898
    %v2900 = vrot.slane %v2878, %v2899
    %v2901 = vadd.f32 %v2896, %v2900
    %v2902 = vld [vmem:[%s9] sm:$0xff]
    %v2903 = vld [vmem:[%s9 + $0x8] sm:$0xff]
    %v2904 = vld [vmem:[%s9 + $0x10] sm:$0xff]
    %v2905 = vld [vmem:[%s9 + $0x18] sm:$0xff]
    %v2907 = vrot.slane %v2878, 2
    %v2910 = vsel %vm181, %v2901, 0
    %2912 = vmatprep.subr.mxu0 0.0
    %2913 = vmatpush1.msra.mxu0 0.0
    %2914 = vmatprep.subr.mxu0 0.0
    %2915 = vmatpush1.msra.mxu0 0.0
    %2916 = vmatprep.subr.mxu0 0.0
    %2917 = vmatpush1.msra.mxu0 0.0
    %2918 = vmatprep.subr.mxu0 0.0
    %2919 = vmatpush1.msra.mxu0 0.0
    %2920 = vmatprep.subr.mxu0 0.0
    %2921 = vmatpush1.msra.mxu0 0.0
    %2922 = vmatprep.subr.mxu0 0.0
    %2923 = vmatpush1.msra.mxu0 0.0
    %2924 = vmatprep.subr.mxu0 0.0
    %2925 = vmatpush1.msra.mxu0 0.0
    %2926 = vmatprep.subr.mxu0 0.0
    %2927 = vmatpush1.msra.mxu0 0.0
    %2928 = vmatprep.subr.mxu0 0.0
    %2929 = vmatpush1.msra.mxu0 0.0
    %2930 = vmatprep.subr.mxu0 0.0
    %2931 = vmatpush1.msra.mxu0 0.0
    %2932 = vmatprep.subr.mxu0 0.0
    %2933 = vmatpush1.msra.mxu0 0.0
    %2934 = vmatprep.subr.mxu0 0.0
    %2935 = vmatpush1.msra.mxu0 0.0
    %2936 = vmatprep.subr.mxu0 0.0
    %2937 = vmatpush1.msra.mxu0 %v2905
    %2938 = vmatprep.subr.mxu0 0.0
    %2939 = vmatpush1.msra.mxu0 %v2904
    %2940 = vmatprep.subr.mxu0 0.0
    %2941 = vmatpush1.msra.mxu0 %v2903
    %2942 = vmatprep.subr.mxu0 0.0
    %2943 = vmatpush1.msra.mxu0 %v2902
    %2944 = vmatprep.subr.mxu0 0.0
    %2945 = vmatpush2.msra.mxu0 0.0
    %2946 = vmatprep.subr.mxu0 0.0
    %2947 = vmatpush2.msra.mxu0 0.0
    %2948 = vmatprep.subr.mxu0 0.0
    %2949 = vmatpush2.msra.mxu0 0.0
    %2950 = vmatprep.subr.mxu0 0.0
    %2951 = vmatpush2.msra.mxu0 0.0
    %2952 = vmatprep.subr.mxu0 0.0
    %2953 = vmatpush2.msra.mxu0 0.0
    %2954 = vmatprep.subr.mxu0 0.0
    %2955 = vmatpush2.msra.mxu0 0.0
    %2956 = vmatprep.subr.mxu0 0.0
    %2957 = vmatpush2.msra.mxu0 0.0
    %2958 = vmatprep.subr.mxu0 0.0
    %2959 = vmatpush2.msra.mxu0 0.0
    %2960 = vmatprep.subr.mxu0 0.0
    %2961 = vmatpush2.msra.mxu0 0.0
    %2962 = vmatprep.subr.mxu0 0.0
    %2963 = vmatpush2.msra.mxu0 0.0
    %2964 = vmatprep.subr.mxu0 0.0
    %2965 = vmatpush2.msra.mxu0 0.0
    %2966 = vmatprep.subr.mxu0 0.0
    %2967 = vmatpush2.msra.mxu0 0.0
    %2968 = vmatprep.subr.mxu0 0.0
    %2969 = vmatpush2.msra.mxu0 0.0
    %2970 = vmatprep.subr.mxu0 0.0
    %2971 = vmatpush2.msra.mxu0 0.0
    %2972 = vmatprep.subr.mxu0 0.0
    %2973 = vmatpush2.msra.mxu0 0.0
    %2974 = vmatprep.subr.mxu0 0.0
    %2975 = vmatpush2.msra.mxu0 0.0
    %2976 = vmatprep.mubr.f32.mxu0 0.0
    %2977 = vmatmul.mubr.f32.gmra.mxu0 %v2910
    %v2978 = vpop.f32.mrf.mxu0
    %v2979 = vadd.f32 %v2907, %v2978
    %v2980 = vpop.f32.mrf.mxu0
    %2981 = vdwg.mxu0
    %v2982 = vmul.f32 %v2979, %v2979
    %vm2983 = vcmask 253952
    %v2984 = vsel %vm2983, %v2982, 0.0
    %2985 = vadd.xlane.f32.xlu0 %v2984
    %v2986 = vpop.xlane.xlu0 %2985
    %v2987 = vmax.f32 %v2986, 1e-24
    %v2988 = vrsqrt.pop %v2987
    %v2989 = vmul.f32 %v2979, %v2988
    %2990 = vst.msk [vmem:[#allocation2] sm:$0x1] %vm2983, %v2989
    %v2991 = vrot.slane %v2901, 5
    %v2992 = vsel %vm181, %v2991, 0
    %2994 = vmatprep.subr.mxu0 0.0
    %2995 = vmatpush1.msra.mxu0 0.0
    %2996 = vmatprep.subr.mxu0 0.0
    %2997 = vmatpush1.msra.mxu0 0.0
    %2998 = vmatprep.subr.mxu0 0.0
    %2999 = vmatpush1.msra.mxu0 0.0
    %3000 = vmatprep.subr.mxu0 0.0
    %3001 = vmatpush1.msra.mxu0 0.0
    %3002 = vmatprep.subr.mxu0 0.0
    %3003 = vmatpush1.msra.mxu0 0.0
    %3004 = vmatprep.subr.mxu0 0.0
    %3005 = vmatpush1.msra.mxu0 0.0
    %3006 = vmatprep.subr.mxu0 0.0
    %3007 = vmatpush1.msra.mxu0 0.0
    %3008 = vmatprep.subr.mxu0 0.0
    %3009 = vmatpush1.msra.mxu0 0.0
    %3010 = vmatprep.subr.mxu0 0.0
    %3011 = vmatpush1.msra.mxu0 0.0
    %3012 = vmatprep.subr.mxu0 0.0
    %3013 = vmatpush1.msra.mxu0 0.0
    %3014 = vmatprep.subr.mxu0 0.0
    %3015 = vmatpush1.msra.mxu0 0.0
    %3016 = vmatprep.subr.mxu0 0.0
    %3017 = vmatpush1.msra.mxu0 0.0
    %3018 = vmatprep.subr.mxu0 0.0
    %3019 = vmatpush1.msra.mxu0 %v2905
    %3020 = vmatprep.subr.mxu0 0.0
    %3021 = vmatpush1.msra.mxu0 %v2904
    %3022 = vmatprep.subr.mxu0 0.0
    %3023 = vmatpush1.msra.mxu0 %v2903
    %3024 = vmatprep.subr.mxu0 0.0
    %3025 = vmatpush1.msra.mxu0 %v2902
    %3026 = vmatprep.subr.mxu0 0.0
    %3027 = vmatpush2.msra.mxu0 0.0
    %3028 = vmatprep.subr.mxu0 0.0
    %3029 = vmatpush2.msra.mxu0 0.0
    %3030 = vmatprep.subr.mxu0 0.0
    %3031 = vmatpush2.msra.mxu0 0.0
    %3032 = vmatprep.subr.mxu0 0.0
    %3033 = vmatpush2.msra.mxu0 0.0
    %3034 = vmatprep.subr.mxu0 0.0
    %3035 = vmatpush2.msra.mxu0 0.0
    %3036 = vmatprep.subr.mxu0 0.0
    %3037 = vmatpush2.msra.mxu0 0.0
    %3038 = vmatprep.subr.mxu0 0.0
    %3039 = vmatpush2.msra.mxu0 0.0
    %3040 = vmatprep.subr.mxu0 0.0
    %3041 = vmatpush2.msra.mxu0 0.0
    %3042 = vmatprep.subr.mxu0 0.0
    %3043 = vmatpush2.msra.mxu0 0.0
    %3044 = vmatprep.subr.mxu0 0.0
    %3045 = vmatpush2.msra.mxu0 0.0
    %3046 = vmatprep.subr.mxu0 0.0
    %3047 = vmatpush2.msra.mxu0 0.0
    %3048 = vmatprep.subr.mxu0 0.0
    %3049 = vmatpush2.msra.mxu0 0.0
    %3050 = vmatprep.subr.mxu0 0.0
    %3051 = vmatpush2.msra.mxu0 0.0
    %3052 = vmatprep.subr.mxu0 0.0
    %3053 = vmatpush2.msra.mxu0 0.0
    %3054 = vmatprep.subr.mxu0 0.0
    %3055 = vmatpush2.msra.mxu0 0.0
    %3056 = vmatprep.subr.mxu0 0.0
    %3057 = vmatpush2.msra.mxu0 0.0
    %3058 = vmatprep.mubr.f32.mxu0 0.0
    %3059 = vmatmul.mubr.f32.gmra.mxu0 %v2992
    %v3060 = vpop.f32.mrf.mxu0
    %v3061 = vadd.f32 %v2907, %v3060
    %v3062 = vpop.f32.mrf.mxu0
    %3063 = vdwg.mxu0
    %v3064 = vmul.f32 %v3061, %v3061
    %v3065 = vsel %vm2983, %v3064, 0.0
    %3066 = vadd.xlane.f32.xlu0 %v3065
    %v3067 = vpop.xlane.xlu0 %3066
    %v3068 = vmax.f32 %v3067, 1e-24
    %v3069 = vrsqrt.pop %v3068
    %v3070 = vmul.f32 %v3061, %v3069
    %3071 = vst.msk [vmem:[#allocation2 + $0x1] sm:$0x1] %vm2983, %v3070
    %v3072 = vld [vmem:[%s11] sm:$0xff]
    %v3073 = vld [vmem:[%s11 + $0x8] sm:$0xff]
    %v3074 = vld [vmem:[%s17] sm:$0x3]
    %v3075 = vld [vmem:[%s10] sm:$0xff]
    %v3076 = vld [vmem:[%s10 + $0x8] sm:$0xff]
    %v3077 = vsel %vm181, %v3075, 0.0
    %3078 = vadd.xlane.f32.xlu0 %v3077
    %v3079 = vpop.xlane.xlu0 %3078
    %v3080 = vsel %vm181, %v3076, 0.0
    %3081 = vadd.xlane.f32.xlu0 %v3080
    %v3082 = vpop.xlane.xlu0 %3081
    %v3083 = vmul.f32 %v3079, %v189
    %v3084 = vmul.f32 %v3082, %v189
    %v3085 = vsub.f32 %v3075, %v3083
    %v3086 = vsub.f32 %v3076, %v3084
    %v3087 = vmul.f32 %v3085, %v3085
    %v3088 = vmul.f32 %v3086, %v3086
    %v3089 = vsel %vm181, %v3087, 0.0
    %3090 = vadd.xlane.f32.xlu0 %v3089
    %v3091 = vpop.xlane.xlu0 %3090
    %v3092 = vsel %vm181, %v3088, 0.0
    %3093 = vadd.xlane.f32.xlu0 %v3092
    %v3094 = vpop.xlane.xlu0 %3093
    %v3095 = vmul.f32 %v3091, %v189
    %v3096 = vmul.f32 %v3094, %v189
    %v3097 = vadd.f32 %v3095, 1e-12
    %v3098 = vadd.f32 %v3096, 1e-12
    %v3099 = vrsqrt.pop %v3097
    %v3100 = vrsqrt.pop %v3098
    %v3101 = vmul.f32 %v3085, %v3099
    %v3102 = vmul.f32 %v3086, %v3100
    %v3103 = vlaneseq
    %v3104 = vshrl.u32 %v3103, 7
    %v3105 = vsub.s32 0, %v3104
    %v3106 = vrot.slane %v3074, %v3105
    %v3107 = vmul.f32 %v3101, %v3106
    %v3108 = vmul.f32 %v3102, %v3106
    %v3109 = vlaneseq
    %v3110 = vshrl.u32 %v3109, 7
    %v3111 = vsub.s32 1, %v3110
    %v3112 = vrot.slane %v3074, %v3111
    %v3113 = vadd.f32 %v3107, %v3112
    %v3114 = vadd.f32 %v3108, %v3112
    %v3115 = vld [vmem:[%s16] sm:$0xff]
    %v3116 = vld [vmem:[%s12] sm:$0xff]
    %v3117 = vld [vmem:[%s12 + $0x8] sm:$0xff]
    %v3118 = vld [vmem:[%s12 + $0x10] sm:$0xff]
    %v3119 = vld [vmem:[%s12 + $0x18] sm:$0xff]
    %v3120 = vld [vmem:[%s13] sm:$0xff]
    %v3121 = vld [vmem:[%s13 + $0x8] sm:$0xff]
    %v3122 = vld [vmem:[%s13 + $0x10] sm:$0xff]
    %v3123 = vld [vmem:[%s13 + $0x18] sm:$0xff]
    %v3124 = vlaneseq
    %v3125 = vshrl.u32 %v3124, 7
    %v3126 = vsub.s32 0, %v3125
    %v3127 = vrot.slane %v3115, %v3126
    %v3129 = vsel %vm181, %v3113, 0
    %v3132 = vsel %vm181, %v3114, 0
    %3134 = vmatprep.subr.mxu0 0.0
    %3135 = vmatpush1.msra.mxu0 0.0
    %3136 = vmatprep.subr.mxu0 0.0
    %3137 = vmatpush1.msra.mxu0 0.0
    %3138 = vmatprep.subr.mxu0 0.0
    %3139 = vmatpush1.msra.mxu0 0.0
    %3140 = vmatprep.subr.mxu0 0.0
    %3141 = vmatpush1.msra.mxu0 0.0
    %3142 = vmatprep.subr.mxu0 0.0
    %3143 = vmatpush1.msra.mxu0 0.0
    %3144 = vmatprep.subr.mxu0 0.0
    %3145 = vmatpush1.msra.mxu0 0.0
    %3146 = vmatprep.subr.mxu0 0.0
    %3147 = vmatpush1.msra.mxu0 0.0
    %3148 = vmatprep.subr.mxu0 0.0
    %3149 = vmatpush1.msra.mxu0 0.0
    %3150 = vmatprep.subr.mxu0 0.0
    %3151 = vmatpush1.msra.mxu0 0.0
    %3152 = vmatprep.subr.mxu0 0.0
    %3153 = vmatpush1.msra.mxu0 0.0
    %3154 = vmatprep.subr.mxu0 0.0
    %3155 = vmatpush1.msra.mxu0 0.0
    %3156 = vmatprep.subr.mxu0 0.0
    %3157 = vmatpush1.msra.mxu0 0.0
    %3158 = vmatprep.subr.mxu0 0.0
    %3159 = vmatpush1.msra.mxu0 %v3119
    %3160 = vmatprep.subr.mxu0 0.0
    %3161 = vmatpush1.msra.mxu0 %v3118
    %3162 = vmatprep.subr.mxu0 0.0
    %3163 = vmatpush1.msra.mxu0 %v3117
    %3164 = vmatprep.subr.mxu0 0.0
    %3165 = vmatpush1.msra.mxu0 %v3116
    %3166 = vmatprep.subr.mxu0 0.0
    %3167 = vmatpush2.msra.mxu0 0.0
    %3168 = vmatprep.subr.mxu0 0.0
    %3169 = vmatpush2.msra.mxu0 0.0
    %3170 = vmatprep.subr.mxu0 0.0
    %3171 = vmatpush2.msra.mxu0 0.0
    %3172 = vmatprep.subr.mxu0 0.0
    %3173 = vmatpush2.msra.mxu0 0.0
    %3174 = vmatprep.subr.mxu0 0.0
    %3175 = vmatpush2.msra.mxu0 0.0
    %3176 = vmatprep.subr.mxu0 0.0
    %3177 = vmatpush2.msra.mxu0 0.0
    %3178 = vmatprep.subr.mxu0 0.0
    %3179 = vmatpush2.msra.mxu0 0.0
    %3180 = vmatprep.subr.mxu0 0.0
    %3181 = vmatpush2.msra.mxu0 0.0
    %3182 = vmatprep.subr.mxu0 0.0
    %3183 = vmatpush2.msra.mxu0 0.0
    %3184 = vmatprep.subr.mxu0 0.0
    %3185 = vmatpush2.msra.mxu0 0.0
    %3186 = vmatprep.subr.mxu0 0.0
    %3187 = vmatpush2.msra.mxu0 0.0
    %3188 = vmatprep.subr.mxu0 0.0
    %3189 = vmatpush2.msra.mxu0 0.0
    %3190 = vmatprep.subr.mxu0 0.0
    %3191 = vmatpush2.msra.mxu0 0.0
    %3192 = vmatprep.subr.mxu0 0.0
    %3193 = vmatpush2.msra.mxu0 0.0
    %3194 = vmatprep.subr.mxu0 0.0
    %3195 = vmatpush2.msra.mxu0 0.0
    %3196 = vmatprep.subr.mxu0 0.0
    %3197 = vmatpush2.msra.mxu0 0.0
    %3198 = vmatprep.mubr.f32.mxu0 0.0
    %3199 = vmatmul.mubr.f32.gmra.mxu0 %v3129
    %v3200 = vpop.f32.mrf.mxu0
    %v3201 = vadd.f32 %v3127, %v3200
    %v3202 = vpop.f32.mrf.mxu0
    %3203 = vmatprep.mubr.f32.mxu0 0.0
    %3204 = vmatmul.mubr.f32.gmra.mxu0 %v3132
    %v3205 = vpop.f32.mrf.mxu0
    %v3206 = vadd.f32 %v3127, %v3205
    %v3207 = vpop.f32.mrf.mxu0
    %3208 = vdwg.mxu0
    %3211 = vrot.lane.b32.xlu0 %v3201, 96
    %v3212 = vpop.permute.xlu0 %3211
    %3213 = vrot.lane.b32.xlu0 %v3206, 96
    %v3214 = vpop.permute.xlu0 %3213
    %v3215 = vsel %vm321, %v3201, 0
    %v3217 = vsel %vm321, %v3206, 0
    %v3219 = vsel %vm321, %v3212, 0
    %v3221 = vsel %vm321, %v3214, 0
    %3223 = vmatprep.subr.mxu0 0.0
    %3224 = vmatpush1.xpose.msra.mxu0 0.0
    %3225 = vmatprep.subr.mxu0 0.0
    %3226 = vmatpush1.xpose.msra.mxu0 0.0
    %3227 = vmatprep.subr.mxu0 0.0
    %3228 = vmatpush1.xpose.msra.mxu0 0.0
    %3229 = vmatprep.subr.mxu0 0.0
    %3230 = vmatpush1.xpose.msra.mxu0 0.0
    %3231 = vmatprep.subr.mxu0 0.0
    %3232 = vmatpush1.xpose.msra.mxu0 0.0
    %3233 = vmatprep.subr.mxu0 0.0
    %3234 = vmatpush1.xpose.msra.mxu0 0.0
    %3235 = vmatprep.subr.mxu0 0.0
    %3236 = vmatpush1.xpose.msra.mxu0 0.0
    %3237 = vmatprep.subr.mxu0 0.0
    %3238 = vmatpush1.xpose.msra.mxu0 0.0
    %3239 = vmatprep.subr.mxu0 0.0
    %3240 = vmatpush1.xpose.msra.mxu0 0.0
    %3241 = vmatprep.subr.mxu0 0.0
    %3242 = vmatpush1.xpose.msra.mxu0 0.0
    %3243 = vmatprep.subr.mxu0 0.0
    %3244 = vmatpush1.xpose.msra.mxu0 0.0
    %3245 = vmatprep.subr.mxu0 0.0
    %3246 = vmatpush1.xpose.msra.mxu0 0.0
    %3247 = vmatprep.subr.mxu0 0.0
    %3248 = vmatpush1.xpose.msra.mxu0 0.0
    %3249 = vmatprep.subr.mxu0 0.0
    %3250 = vmatpush1.xpose.msra.mxu0 0.0
    %3251 = vmatprep.subr.mxu0 0.0
    %3252 = vmatpush1.xpose.msra.mxu0 %v3221
    %3253 = vmatprep.subr.mxu0 0.0
    %3254 = vmatpush1.xpose.msra.mxu0 %v3219
    %3255 = vmatprep.subr.mxu0 0.0
    %3256 = vmatpush2.xpose.msra.mxu0 0.0
    %3257 = vmatprep.subr.mxu0 0.0
    %3258 = vmatpush2.xpose.msra.mxu0 0.0
    %3259 = vmatprep.subr.mxu0 0.0
    %3260 = vmatpush2.xpose.msra.mxu0 0.0
    %3261 = vmatprep.subr.mxu0 0.0
    %3262 = vmatpush2.xpose.msra.mxu0 0.0
    %3263 = vmatprep.subr.mxu0 0.0
    %3264 = vmatpush2.xpose.msra.mxu0 0.0
    %3265 = vmatprep.subr.mxu0 0.0
    %3266 = vmatpush2.xpose.msra.mxu0 0.0
    %3267 = vmatprep.subr.mxu0 0.0
    %3268 = vmatpush2.xpose.msra.mxu0 0.0
    %3269 = vmatprep.subr.mxu0 0.0
    %3270 = vmatpush2.xpose.msra.mxu0 0.0
    %3271 = vmatprep.subr.mxu0 0.0
    %3272 = vmatpush2.xpose.msra.mxu0 0.0
    %3273 = vmatprep.subr.mxu0 0.0
    %3274 = vmatpush2.xpose.msra.mxu0 0.0
    %3275 = vmatprep.subr.mxu0 0.0
    %3276 = vmatpush2.xpose.msra.mxu0 0.0
    %3277 = vmatprep.subr.mxu0 0.0
    %3278 = vmatpush2.xpose.msra.mxu0 0.0
    %3279 = vmatprep.subr.mxu0 0.0
    %3280 = vmatpush2.xpose.msra.mxu0 0.0
    %3281 = vmatprep.subr.mxu0 0.0
    %3282 = vmatpush2.xpose.msra.mxu0 0.0
    %3283 = vmatprep.subr.mxu0 0.0
    %3284 = vmatpush2.xpose.msra.mxu0 0.0
    %3285 = vmatprep.subr.mxu0 0.0
    %3286 = vmatpush2.xpose.msra.mxu0 0.0
    %3287 = vmatprep.mubr.f32.mxu0 0.0
    %3288 = vmatmul.mubr.f32.gmra.mxu0 %v3215
    %v3289 = vpop.f32.mrf.mxu0
    %v3290 = vadd.f32 0.0, %v3289
    %v3291 = vpop.f32.mrf.mxu0
    %3292 = vmatprep.mubr.f32.mxu0 0.0
    %3293 = vmatmul.mubr.f32.gmra.mxu0 %v3217
    %v3294 = vpop.f32.mrf.mxu0
    %v3295 = vadd.f32 0.0, %v3294
    %v3296 = vpop.f32.mrf.mxu0
    %3297 = vdwg.mxu0
    %v3298 = vmul.f32 %v3290, 0.35355338
    %v3299 = vmul.f32 %v3295, 0.35355338
    %v3300 = vadd.f32 %v3298, %v3072
    %v3301 = vadd.f32 %v3299, %v3073
    %v3302 = vsel %vm1163, %v3300, -inf
    %3303 = vmax.xlane.f32.xlu0 %v3302
    %v3304 = vpop.xlane.xlu0 %3303
    %v3305 = vsel %vm1163, %v3301, -inf
    %3306 = vmax.xlane.f32.xlu0 %v3305
    %v3307 = vpop.xlane.xlu0 %3306
    %v3308 = vsub.f32 %v3300, %v3304
    %v3309 = vsub.f32 %v3301, %v3307
    %v3310 = vmul.f32 %v3308, 1.442695
    %v3311 = vpow.pop %v3310
    %v3312 = vmul.f32 %v3309, 1.442695
    %v3313 = vpow.pop %v3312
    %v3314 = vsel %vm1163, %v3311, 0.0
    %3315 = vadd.xlane.f32.xlu0 %v3314
    %v3316 = vpop.xlane.xlu0 %3315
    %v3317 = vsel %vm1163, %v3313, 0.0
    %3318 = vadd.xlane.f32.xlu0 %v3317
    %v3319 = vpop.xlane.xlu0 %3318
    %v3320 = vrcp.pop %v3316
    %v3321 = vrcp.pop %v3319
    %v3322 = vmul.f32 %v3311, %v3320
    %v3323 = vmul.f32 %v3313, %v3321
    %3324 = vrot.lane.b32.xlu0 %v3201, 64
    %v3325 = vpop.permute.xlu0 %3324
    %3326 = vrot.lane.b32.xlu0 %v3206, 64
    %v3327 = vpop.permute.xlu0 %3326
    %v3331 = vsel %vm1163, %v3322, 0
    %v3334 = vsel %vm1163, %v3323, 0
    %3336 = vmatprep.subr.mxu0 0.0
    %3337 = vmatpush1.msra.mxu0 0.0
    %3338 = vmatprep.subr.mxu0 0.0
    %3339 = vmatpush1.msra.mxu0 0.0
    %3340 = vmatprep.subr.mxu0 0.0
    %3341 = vmatpush1.msra.mxu0 0.0
    %3342 = vmatprep.subr.mxu0 0.0
    %3343 = vmatpush1.msra.mxu0 0.0
    %3344 = vmatprep.subr.mxu0 0.0
    %3345 = vmatpush1.msra.mxu0 0.0
    %3346 = vmatprep.subr.mxu0 0.0
    %3347 = vmatpush1.msra.mxu0 0.0
    %3348 = vmatprep.subr.mxu0 0.0
    %3349 = vmatpush1.msra.mxu0 0.0
    %3350 = vmatprep.subr.mxu0 0.0
    %3351 = vmatpush1.msra.mxu0 0.0
    %3352 = vmatprep.subr.mxu0 0.0
    %3353 = vmatpush1.msra.mxu0 0.0
    %3354 = vmatprep.subr.mxu0 0.0
    %3355 = vmatpush1.msra.mxu0 0.0
    %3356 = vmatprep.subr.mxu0 0.0
    %3357 = vmatpush1.msra.mxu0 0.0
    %3358 = vmatprep.subr.mxu0 0.0
    %3359 = vmatpush1.msra.mxu0 0.0
    %3360 = vmatprep.subr.mxu0 0.0
    %3361 = vmatpush1.msra.mxu0 0.0
    %3362 = vmatprep.subr.mxu0 0.0
    %3363 = vmatpush1.msra.mxu0 0.0
    %3364 = vmatprep.subr.mxu0 0.0
    %3365 = vmatpush1.msra.mxu0 %v3327
    %3366 = vmatprep.subr.mxu0 0.0
    %3367 = vmatpush1.msra.mxu0 %v3325
    %3368 = vmatprep.subr.mxu0 0.0
    %3369 = vmatpush2.msra.mxu0 0.0
    %3370 = vmatprep.subr.mxu0 0.0
    %3371 = vmatpush2.msra.mxu0 0.0
    %3372 = vmatprep.subr.mxu0 0.0
    %3373 = vmatpush2.msra.mxu0 0.0
    %3374 = vmatprep.subr.mxu0 0.0
    %3375 = vmatpush2.msra.mxu0 0.0
    %3376 = vmatprep.subr.mxu0 0.0
    %3377 = vmatpush2.msra.mxu0 0.0
    %3378 = vmatprep.subr.mxu0 0.0
    %3379 = vmatpush2.msra.mxu0 0.0
    %3380 = vmatprep.subr.mxu0 0.0
    %3381 = vmatpush2.msra.mxu0 0.0
    %3382 = vmatprep.subr.mxu0 0.0
    %3383 = vmatpush2.msra.mxu0 0.0
    %3384 = vmatprep.subr.mxu0 0.0
    %3385 = vmatpush2.msra.mxu0 0.0
    %3386 = vmatprep.subr.mxu0 0.0
    %3387 = vmatpush2.msra.mxu0 0.0
    %3388 = vmatprep.subr.mxu0 0.0
    %3389 = vmatpush2.msra.mxu0 0.0
    %3390 = vmatprep.subr.mxu0 0.0
    %3391 = vmatpush2.msra.mxu0 0.0
    %3392 = vmatprep.subr.mxu0 0.0
    %3393 = vmatpush2.msra.mxu0 0.0
    %3394 = vmatprep.subr.mxu0 0.0
    %3395 = vmatpush2.msra.mxu0 0.0
    %3396 = vmatprep.subr.mxu0 0.0
    %3397 = vmatpush2.msra.mxu0 0.0
    %3398 = vmatprep.subr.mxu0 0.0
    %3399 = vmatpush2.msra.mxu0 0.0
    %3400 = vmatprep.mubr.f32.mxu0 0.0
    %3401 = vmatmul.mubr.f32.gmra.mxu0 %v3331
    %v3402 = vpop.f32.mrf.mxu0
    %v3403 = vadd.f32 0.0, %v3402
    %v3404 = vpop.f32.mrf.mxu0
    %3405 = vmatprep.mubr.f32.mxu0 0.0
    %3406 = vmatmul.mubr.f32.gmra.mxu0 %v3334
    %v3407 = vpop.f32.mrf.mxu0
    %v3408 = vadd.f32 0.0, %v3407
    %v3409 = vpop.f32.mrf.mxu0
    %3410 = vdwg.mxu0
    %3411 = vrot.lane.b32.xlu0 %v3201, 120
    %v3412 = vpop.permute.xlu0 %3411
    %3413 = vrot.lane.b32.xlu0 %v3206, 120
    %v3414 = vpop.permute.xlu0 %3413
    %3415 = vrot.lane.b32.xlu0 %v3201, 88
    %v3416 = vpop.permute.xlu0 %3415
    %3417 = vrot.lane.b32.xlu0 %v3206, 88
    %v3418 = vpop.permute.xlu0 %3417
    %v3419 = vsel %vm321, %v3412, 0
    %v3421 = vsel %vm321, %v3414, 0
    %v3423 = vsel %vm321, %v3416, 0
    %v3425 = vsel %vm321, %v3418, 0
    %3427 = vmatprep.subr.mxu0 0.0
    %3428 = vmatpush1.xpose.msra.mxu0 0.0
    %3429 = vmatprep.subr.mxu0 0.0
    %3430 = vmatpush1.xpose.msra.mxu0 0.0
    %3431 = vmatprep.subr.mxu0 0.0
    %3432 = vmatpush1.xpose.msra.mxu0 0.0
    %3433 = vmatprep.subr.mxu0 0.0
    %3434 = vmatpush1.xpose.msra.mxu0 0.0
    %3435 = vmatprep.subr.mxu0 0.0
    %3436 = vmatpush1.xpose.msra.mxu0 0.0
    %3437 = vmatprep.subr.mxu0 0.0
    %3438 = vmatpush1.xpose.msra.mxu0 0.0
    %3439 = vmatprep.subr.mxu0 0.0
    %3440 = vmatpush1.xpose.msra.mxu0 0.0
    %3441 = vmatprep.subr.mxu0 0.0
    %3442 = vmatpush1.xpose.msra.mxu0 0.0
    %3443 = vmatprep.subr.mxu0 0.0
    %3444 = vmatpush1.xpose.msra.mxu0 0.0
    %3445 = vmatprep.subr.mxu0 0.0
    %3446 = vmatpush1.xpose.msra.mxu0 0.0
    %3447 = vmatprep.subr.mxu0 0.0
    %3448 = vmatpush1.xpose.msra.mxu0 0.0
    %3449 = vmatprep.subr.mxu0 0.0
    %3450 = vmatpush1.xpose.msra.mxu0 0.0
    %3451 = vmatprep.subr.mxu0 0.0
    %3452 = vmatpush1.xpose.msra.mxu0 0.0
    %3453 = vmatprep.subr.mxu0 0.0
    %3454 = vmatpush1.xpose.msra.mxu0 0.0
    %3455 = vmatprep.subr.mxu0 0.0
    %3456 = vmatpush1.xpose.msra.mxu0 %v3425
    %3457 = vmatprep.subr.mxu0 0.0
    %3458 = vmatpush1.xpose.msra.mxu0 %v3423
    %3459 = vmatprep.subr.mxu0 0.0
    %3460 = vmatpush2.xpose.msra.mxu0 0.0
    %3461 = vmatprep.subr.mxu0 0.0
    %3462 = vmatpush2.xpose.msra.mxu0 0.0
    %3463 = vmatprep.subr.mxu0 0.0
    %3464 = vmatpush2.xpose.msra.mxu0 0.0
    %3465 = vmatprep.subr.mxu0 0.0
    %3466 = vmatpush2.xpose.msra.mxu0 0.0
    %3467 = vmatprep.subr.mxu0 0.0
    %3468 = vmatpush2.xpose.msra.mxu0 0.0
    %3469 = vmatprep.subr.mxu0 0.0
    %3470 = vmatpush2.xpose.msra.mxu0 0.0
    %3471 = vmatprep.subr.mxu0 0.0
    %3472 = vmatpush2.xpose.msra.mxu0 0.0
    %3473 = vmatprep.subr.mxu0 0.0
    %3474 = vmatpush2.xpose.msra.mxu0 0.0
    %3475 = vmatprep.subr.mxu0 0.0
    %3476 = vmatpush2.xpose.msra.mxu0 0.0
    %3477 = vmatprep.subr.mxu0 0.0
    %3478 = vmatpush2.xpose.msra.mxu0 0.0
    %3479 = vmatprep.subr.mxu0 0.0
    %3480 = vmatpush2.xpose.msra.mxu0 0.0
    %3481 = vmatprep.subr.mxu0 0.0
    %3482 = vmatpush2.xpose.msra.mxu0 0.0
    %3483 = vmatprep.subr.mxu0 0.0
    %3484 = vmatpush2.xpose.msra.mxu0 0.0
    %3485 = vmatprep.subr.mxu0 0.0
    %3486 = vmatpush2.xpose.msra.mxu0 0.0
    %3487 = vmatprep.subr.mxu0 0.0
    %3488 = vmatpush2.xpose.msra.mxu0 0.0
    %3489 = vmatprep.subr.mxu0 0.0
    %3490 = vmatpush2.xpose.msra.mxu0 0.0
    %3491 = vmatprep.mubr.f32.mxu0 0.0
    %3492 = vmatmul.mubr.f32.gmra.mxu0 %v3419
    %v3493 = vpop.f32.mrf.mxu0
    %v3494 = vadd.f32 0.0, %v3493
    %v3495 = vpop.f32.mrf.mxu0
    %3496 = vmatprep.mubr.f32.mxu0 0.0
    %3497 = vmatmul.mubr.f32.gmra.mxu0 %v3421
    %v3498 = vpop.f32.mrf.mxu0
    %v3499 = vadd.f32 0.0, %v3498
    %v3500 = vpop.f32.mrf.mxu0
    %3501 = vdwg.mxu0
    %v3502 = vmul.f32 %v3494, 0.35355338
    %v3503 = vmul.f32 %v3499, 0.35355338
    %v3504 = vadd.f32 %v3502, %v3072
    %v3505 = vadd.f32 %v3503, %v3073
    %v3506 = vsel %vm1163, %v3504, -inf
    %3507 = vmax.xlane.f32.xlu0 %v3506
    %v3508 = vpop.xlane.xlu0 %3507
    %v3509 = vsel %vm1163, %v3505, -inf
    %3510 = vmax.xlane.f32.xlu0 %v3509
    %v3511 = vpop.xlane.xlu0 %3510
    %v3512 = vsub.f32 %v3504, %v3508
    %v3513 = vsub.f32 %v3505, %v3511
    %v3514 = vmul.f32 %v3512, 1.442695
    %v3515 = vpow.pop %v3514
    %v3516 = vmul.f32 %v3513, 1.442695
    %v3517 = vpow.pop %v3516
    %v3518 = vsel %vm1163, %v3515, 0.0
    %3519 = vadd.xlane.f32.xlu0 %v3518
    %v3520 = vpop.xlane.xlu0 %3519
    %v3521 = vsel %vm1163, %v3517, 0.0
    %3522 = vadd.xlane.f32.xlu0 %v3521
    %v3523 = vpop.xlane.xlu0 %3522
    %v3524 = vrcp.pop %v3520
    %v3525 = vrcp.pop %v3523
    %v3526 = vmul.f32 %v3515, %v3524
    %v3527 = vmul.f32 %v3517, %v3525
    %3528 = vrot.lane.b32.xlu0 %v3201, 56
    %v3529 = vpop.permute.xlu0 %3528
    %3530 = vrot.lane.b32.xlu0 %v3206, 56
    %v3531 = vpop.permute.xlu0 %3530
    %v3535 = vsel %vm1163, %v3526, 0
    %v3538 = vsel %vm1163, %v3527, 0
    %3540 = vmatprep.subr.mxu0 0.0
    %3541 = vmatpush1.msra.mxu0 0.0
    %3542 = vmatprep.subr.mxu0 0.0
    %3543 = vmatpush1.msra.mxu0 0.0
    %3544 = vmatprep.subr.mxu0 0.0
    %3545 = vmatpush1.msra.mxu0 0.0
    %3546 = vmatprep.subr.mxu0 0.0
    %3547 = vmatpush1.msra.mxu0 0.0
    %3548 = vmatprep.subr.mxu0 0.0
    %3549 = vmatpush1.msra.mxu0 0.0
    %3550 = vmatprep.subr.mxu0 0.0
    %3551 = vmatpush1.msra.mxu0 0.0
    %3552 = vmatprep.subr.mxu0 0.0
    %3553 = vmatpush1.msra.mxu0 0.0
    %3554 = vmatprep.subr.mxu0 0.0
    %3555 = vmatpush1.msra.mxu0 0.0
    %3556 = vmatprep.subr.mxu0 0.0
    %3557 = vmatpush1.msra.mxu0 0.0
    %3558 = vmatprep.subr.mxu0 0.0
    %3559 = vmatpush1.msra.mxu0 0.0
    %3560 = vmatprep.subr.mxu0 0.0
    %3561 = vmatpush1.msra.mxu0 0.0
    %3562 = vmatprep.subr.mxu0 0.0
    %3563 = vmatpush1.msra.mxu0 0.0
    %3564 = vmatprep.subr.mxu0 0.0
    %3565 = vmatpush1.msra.mxu0 0.0
    %3566 = vmatprep.subr.mxu0 0.0
    %3567 = vmatpush1.msra.mxu0 0.0
    %3568 = vmatprep.subr.mxu0 0.0
    %3569 = vmatpush1.msra.mxu0 %v3531
    %3570 = vmatprep.subr.mxu0 0.0
    %3571 = vmatpush1.msra.mxu0 %v3529
    %3572 = vmatprep.subr.mxu0 0.0
    %3573 = vmatpush2.msra.mxu0 0.0
    %3574 = vmatprep.subr.mxu0 0.0
    %3575 = vmatpush2.msra.mxu0 0.0
    %3576 = vmatprep.subr.mxu0 0.0
    %3577 = vmatpush2.msra.mxu0 0.0
    %3578 = vmatprep.subr.mxu0 0.0
    %3579 = vmatpush2.msra.mxu0 0.0
    %3580 = vmatprep.subr.mxu0 0.0
    %3581 = vmatpush2.msra.mxu0 0.0
    %3582 = vmatprep.subr.mxu0 0.0
    %3583 = vmatpush2.msra.mxu0 0.0
    %3584 = vmatprep.subr.mxu0 0.0
    %3585 = vmatpush2.msra.mxu0 0.0
    %3586 = vmatprep.subr.mxu0 0.0
    %3587 = vmatpush2.msra.mxu0 0.0
    %3588 = vmatprep.subr.mxu0 0.0
    %3589 = vmatpush2.msra.mxu0 0.0
    %3590 = vmatprep.subr.mxu0 0.0
    %3591 = vmatpush2.msra.mxu0 0.0
    %3592 = vmatprep.subr.mxu0 0.0
    %3593 = vmatpush2.msra.mxu0 0.0
    %3594 = vmatprep.subr.mxu0 0.0
    %3595 = vmatpush2.msra.mxu0 0.0
    %3596 = vmatprep.subr.mxu0 0.0
    %3597 = vmatpush2.msra.mxu0 0.0
    %3598 = vmatprep.subr.mxu0 0.0
    %3599 = vmatpush2.msra.mxu0 0.0
    %3600 = vmatprep.subr.mxu0 0.0
    %3601 = vmatpush2.msra.mxu0 0.0
    %3602 = vmatprep.subr.mxu0 0.0
    %3603 = vmatpush2.msra.mxu0 0.0
    %3604 = vmatprep.mubr.f32.mxu0 0.0
    %3605 = vmatmul.mubr.f32.gmra.mxu0 %v3535
    %v3606 = vpop.f32.mrf.mxu0
    %v3607 = vadd.f32 0.0, %v3606
    %v3608 = vpop.f32.mrf.mxu0
    %3609 = vmatprep.mubr.f32.mxu0 0.0
    %3610 = vmatmul.mubr.f32.gmra.mxu0 %v3538
    %v3611 = vpop.f32.mrf.mxu0
    %v3612 = vadd.f32 0.0, %v3611
    %v3613 = vpop.f32.mrf.mxu0
    %3614 = vdwg.mxu0
    %3615 = vrot.lane.b32.xlu0 %v3201, 112
    %v3616 = vpop.permute.xlu0 %3615
    %3617 = vrot.lane.b32.xlu0 %v3206, 112
    %v3618 = vpop.permute.xlu0 %3617
    %3619 = vrot.lane.b32.xlu0 %v3201, 80
    %v3620 = vpop.permute.xlu0 %3619
    %3621 = vrot.lane.b32.xlu0 %v3206, 80
    %v3622 = vpop.permute.xlu0 %3621
    %v3623 = vsel %vm321, %v3616, 0
    %v3625 = vsel %vm321, %v3618, 0
    %v3627 = vsel %vm321, %v3620, 0
    %v3629 = vsel %vm321, %v3622, 0
    %3631 = vmatprep.subr.mxu0 0.0
    %3632 = vmatpush1.xpose.msra.mxu0 0.0
    %3633 = vmatprep.subr.mxu0 0.0
    %3634 = vmatpush1.xpose.msra.mxu0 0.0
    %3635 = vmatprep.subr.mxu0 0.0
    %3636 = vmatpush1.xpose.msra.mxu0 0.0
    %3637 = vmatprep.subr.mxu0 0.0
    %3638 = vmatpush1.xpose.msra.mxu0 0.0
    %3639 = vmatprep.subr.mxu0 0.0
    %3640 = vmatpush1.xpose.msra.mxu0 0.0
    %3641 = vmatprep.subr.mxu0 0.0
    %3642 = vmatpush1.xpose.msra.mxu0 0.0
    %3643 = vmatprep.subr.mxu0 0.0
    %3644 = vmatpush1.xpose.msra.mxu0 0.0
    %3645 = vmatprep.subr.mxu0 0.0
    %3646 = vmatpush1.xpose.msra.mxu0 0.0
    %3647 = vmatprep.subr.mxu0 0.0
    %3648 = vmatpush1.xpose.msra.mxu0 0.0
    %3649 = vmatprep.subr.mxu0 0.0
    %3650 = vmatpush1.xpose.msra.mxu0 0.0
    %3651 = vmatprep.subr.mxu0 0.0
    %3652 = vmatpush1.xpose.msra.mxu0 0.0
    %3653 = vmatprep.subr.mxu0 0.0
    %3654 = vmatpush1.xpose.msra.mxu0 0.0
    %3655 = vmatprep.subr.mxu0 0.0
    %3656 = vmatpush1.xpose.msra.mxu0 0.0
    %3657 = vmatprep.subr.mxu0 0.0
    %3658 = vmatpush1.xpose.msra.mxu0 0.0
    %3659 = vmatprep.subr.mxu0 0.0
    %3660 = vmatpush1.xpose.msra.mxu0 %v3629
    %3661 = vmatprep.subr.mxu0 0.0
    %3662 = vmatpush1.xpose.msra.mxu0 %v3627
    %3663 = vmatprep.subr.mxu0 0.0
    %3664 = vmatpush2.xpose.msra.mxu0 0.0
    %3665 = vmatprep.subr.mxu0 0.0
    %3666 = vmatpush2.xpose.msra.mxu0 0.0
    %3667 = vmatprep.subr.mxu0 0.0
    %3668 = vmatpush2.xpose.msra.mxu0 0.0
    %3669 = vmatprep.subr.mxu0 0.0
    %3670 = vmatpush2.xpose.msra.mxu0 0.0
    %3671 = vmatprep.subr.mxu0 0.0
    %3672 = vmatpush2.xpose.msra.mxu0 0.0
    %3673 = vmatprep.subr.mxu0 0.0
    %3674 = vmatpush2.xpose.msra.mxu0 0.0
    %3675 = vmatprep.subr.mxu0 0.0
    %3676 = vmatpush2.xpose.msra.mxu0 0.0
    %3677 = vmatprep.subr.mxu0 0.0
    %3678 = vmatpush2.xpose.msra.mxu0 0.0
    %3679 = vmatprep.subr.mxu0 0.0
    %3680 = vmatpush2.xpose.msra.mxu0 0.0
    %3681 = vmatprep.subr.mxu0 0.0
    %3682 = vmatpush2.xpose.msra.mxu0 0.0
    %3683 = vmatprep.subr.mxu0 0.0
    %3684 = vmatpush2.xpose.msra.mxu0 0.0
    %3685 = vmatprep.subr.mxu0 0.0
    %3686 = vmatpush2.xpose.msra.mxu0 0.0
    %3687 = vmatprep.subr.mxu0 0.0
    %3688 = vmatpush2.xpose.msra.mxu0 0.0
    %3689 = vmatprep.subr.mxu0 0.0
    %3690 = vmatpush2.xpose.msra.mxu0 0.0
    %3691 = vmatprep.subr.mxu0 0.0
    %3692 = vmatpush2.xpose.msra.mxu0 0.0
    %3693 = vmatprep.subr.mxu0 0.0
    %3694 = vmatpush2.xpose.msra.mxu0 0.0
    %3695 = vmatprep.mubr.f32.mxu0 0.0
    %3696 = vmatmul.mubr.f32.gmra.mxu0 %v3623
    %v3697 = vpop.f32.mrf.mxu0
    %v3698 = vadd.f32 0.0, %v3697
    %v3699 = vpop.f32.mrf.mxu0
    %3700 = vmatprep.mubr.f32.mxu0 0.0
    %3701 = vmatmul.mubr.f32.gmra.mxu0 %v3625
    %v3702 = vpop.f32.mrf.mxu0
    %v3703 = vadd.f32 0.0, %v3702
    %v3704 = vpop.f32.mrf.mxu0
    %3705 = vdwg.mxu0
    %v3706 = vmul.f32 %v3698, 0.35355338
    %v3707 = vmul.f32 %v3703, 0.35355338
    %v3708 = vadd.f32 %v3706, %v3072
    %v3709 = vadd.f32 %v3707, %v3073
    %v3710 = vsel %vm1163, %v3708, -inf
    %3711 = vmax.xlane.f32.xlu0 %v3710
    %v3712 = vpop.xlane.xlu0 %3711
    %v3713 = vsel %vm1163, %v3709, -inf
    %3714 = vmax.xlane.f32.xlu0 %v3713
    %v3715 = vpop.xlane.xlu0 %3714
    %v3716 = vsub.f32 %v3708, %v3712
    %v3717 = vsub.f32 %v3709, %v3715
    %v3718 = vmul.f32 %v3716, 1.442695
    %v3719 = vpow.pop %v3718
    %v3720 = vmul.f32 %v3717, 1.442695
    %v3721 = vpow.pop %v3720
    %v3722 = vsel %vm1163, %v3719, 0.0
    %3723 = vadd.xlane.f32.xlu0 %v3722
    %v3724 = vpop.xlane.xlu0 %3723
    %v3725 = vsel %vm1163, %v3721, 0.0
    %3726 = vadd.xlane.f32.xlu0 %v3725
    %v3727 = vpop.xlane.xlu0 %3726
    %v3728 = vrcp.pop %v3724
    %v3729 = vrcp.pop %v3727
    %v3730 = vmul.f32 %v3719, %v3728
    %v3731 = vmul.f32 %v3721, %v3729
    %3732 = vrot.lane.b32.xlu0 %v3201, 48
    %v3733 = vpop.permute.xlu0 %3732
    %3734 = vrot.lane.b32.xlu0 %v3206, 48
    %v3735 = vpop.permute.xlu0 %3734
    %v3739 = vsel %vm1163, %v3730, 0
    %v3742 = vsel %vm1163, %v3731, 0
    %3744 = vmatprep.subr.mxu0 0.0
    %3745 = vmatpush1.msra.mxu0 0.0
    %3746 = vmatprep.subr.mxu0 0.0
    %3747 = vmatpush1.msra.mxu0 0.0
    %3748 = vmatprep.subr.mxu0 0.0
    %3749 = vmatpush1.msra.mxu0 0.0
    %3750 = vmatprep.subr.mxu0 0.0
    %3751 = vmatpush1.msra.mxu0 0.0
    %3752 = vmatprep.subr.mxu0 0.0
    %3753 = vmatpush1.msra.mxu0 0.0
    %3754 = vmatprep.subr.mxu0 0.0
    %3755 = vmatpush1.msra.mxu0 0.0
    %3756 = vmatprep.subr.mxu0 0.0
    %3757 = vmatpush1.msra.mxu0 0.0
    %3758 = vmatprep.subr.mxu0 0.0
    %3759 = vmatpush1.msra.mxu0 0.0
    %3760 = vmatprep.subr.mxu0 0.0
    %3761 = vmatpush1.msra.mxu0 0.0
    %3762 = vmatprep.subr.mxu0 0.0
    %3763 = vmatpush1.msra.mxu0 0.0
    %3764 = vmatprep.subr.mxu0 0.0
    %3765 = vmatpush1.msra.mxu0 0.0
    %3766 = vmatprep.subr.mxu0 0.0
    %3767 = vmatpush1.msra.mxu0 0.0
    %3768 = vmatprep.subr.mxu0 0.0
    %3769 = vmatpush1.msra.mxu0 0.0
    %3770 = vmatprep.subr.mxu0 0.0
    %3771 = vmatpush1.msra.mxu0 0.0
    %3772 = vmatprep.subr.mxu0 0.0
    %3773 = vmatpush1.msra.mxu0 %v3735
    %3774 = vmatprep.subr.mxu0 0.0
    %3775 = vmatpush1.msra.mxu0 %v3733
    %3776 = vmatprep.subr.mxu0 0.0
    %3777 = vmatpush2.msra.mxu0 0.0
    %3778 = vmatprep.subr.mxu0 0.0
    %3779 = vmatpush2.msra.mxu0 0.0
    %3780 = vmatprep.subr.mxu0 0.0
    %3781 = vmatpush2.msra.mxu0 0.0
    %3782 = vmatprep.subr.mxu0 0.0
    %3783 = vmatpush2.msra.mxu0 0.0
    %3784 = vmatprep.subr.mxu0 0.0
    %3785 = vmatpush2.msra.mxu0 0.0
    %3786 = vmatprep.subr.mxu0 0.0
    %3787 = vmatpush2.msra.mxu0 0.0
    %3788 = vmatprep.subr.mxu0 0.0
    %3789 = vmatpush2.msra.mxu0 0.0
    %3790 = vmatprep.subr.mxu0 0.0
    %3791 = vmatpush2.msra.mxu0 0.0
    %3792 = vmatprep.subr.mxu0 0.0
    %3793 = vmatpush2.msra.mxu0 0.0
    %3794 = vmatprep.subr.mxu0 0.0
    %3795 = vmatpush2.msra.mxu0 0.0
    %3796 = vmatprep.subr.mxu0 0.0
    %3797 = vmatpush2.msra.mxu0 0.0
    %3798 = vmatprep.subr.mxu0 0.0
    %3799 = vmatpush2.msra.mxu0 0.0
    %3800 = vmatprep.subr.mxu0 0.0
    %3801 = vmatpush2.msra.mxu0 0.0
    %3802 = vmatprep.subr.mxu0 0.0
    %3803 = vmatpush2.msra.mxu0 0.0
    %3804 = vmatprep.subr.mxu0 0.0
    %3805 = vmatpush2.msra.mxu0 0.0
    %3806 = vmatprep.subr.mxu0 0.0
    %3807 = vmatpush2.msra.mxu0 0.0
    %3808 = vmatprep.mubr.f32.mxu0 0.0
    %3809 = vmatmul.mubr.f32.gmra.mxu0 %v3739
    %v3810 = vpop.f32.mrf.mxu0
    %v3811 = vadd.f32 0.0, %v3810
    %v3812 = vpop.f32.mrf.mxu0
    %3813 = vmatprep.mubr.f32.mxu0 0.0
    %3814 = vmatmul.mubr.f32.gmra.mxu0 %v3742
    %v3815 = vpop.f32.mrf.mxu0
    %v3816 = vadd.f32 0.0, %v3815
    %v3817 = vpop.f32.mrf.mxu0
    %3818 = vdwg.mxu0
    %3819 = vrot.lane.b32.xlu0 %v3201, 104
    %v3820 = vpop.permute.xlu0 %3819
    %3821 = vrot.lane.b32.xlu0 %v3206, 104
    %v3822 = vpop.permute.xlu0 %3821
    %3823 = vrot.lane.b32.xlu0 %v3201, 72
    %v3824 = vpop.permute.xlu0 %3823
    %3825 = vrot.lane.b32.xlu0 %v3206, 72
    %v3826 = vpop.permute.xlu0 %3825
    %v3827 = vsel %vm321, %v3820, 0
    %v3829 = vsel %vm321, %v3822, 0
    %v3831 = vsel %vm321, %v3824, 0
    %v3833 = vsel %vm321, %v3826, 0
    %3835 = vmatprep.subr.mxu0 0.0
    %3836 = vmatpush1.xpose.msra.mxu0 0.0
    %3837 = vmatprep.subr.mxu0 0.0
    %3838 = vmatpush1.xpose.msra.mxu0 0.0
    %3839 = vmatprep.subr.mxu0 0.0
    %3840 = vmatpush1.xpose.msra.mxu0 0.0
    %3841 = vmatprep.subr.mxu0 0.0
    %3842 = vmatpush1.xpose.msra.mxu0 0.0
    %3843 = vmatprep.subr.mxu0 0.0
    %3844 = vmatpush1.xpose.msra.mxu0 0.0
    %3845 = vmatprep.subr.mxu0 0.0
    %3846 = vmatpush1.xpose.msra.mxu0 0.0
    %3847 = vmatprep.subr.mxu0 0.0
    %3848 = vmatpush1.xpose.msra.mxu0 0.0
    %3849 = vmatprep.subr.mxu0 0.0
    %3850 = vmatpush1.xpose.msra.mxu0 0.0
    %3851 = vmatprep.subr.mxu0 0.0
    %3852 = vmatpush1.xpose.msra.mxu0 0.0
    %3853 = vmatprep.subr.mxu0 0.0
    %3854 = vmatpush1.xpose.msra.mxu0 0.0
    %3855 = vmatprep.subr.mxu0 0.0
    %3856 = vmatpush1.xpose.msra.mxu0 0.0
    %3857 = vmatprep.subr.mxu0 0.0
    %3858 = vmatpush1.xpose.msra.mxu0 0.0
    %3859 = vmatprep.subr.mxu0 0.0
    %3860 = vmatpush1.xpose.msra.mxu0 0.0
    %3861 = vmatprep.subr.mxu0 0.0
    %3862 = vmatpush1.xpose.msra.mxu0 0.0
    %3863 = vmatprep.subr.mxu0 0.0
    %3864 = vmatpush1.xpose.msra.mxu0 %v3833
    %3865 = vmatprep.subr.mxu0 0.0
    %3866 = vmatpush1.xpose.msra.mxu0 %v3831
    %3867 = vmatprep.subr.mxu0 0.0
    %3868 = vmatpush2.xpose.msra.mxu0 0.0
    %3869 = vmatprep.subr.mxu0 0.0
    %3870 = vmatpush2.xpose.msra.mxu0 0.0
    %3871 = vmatprep.subr.mxu0 0.0
    %3872 = vmatpush2.xpose.msra.mxu0 0.0
    %3873 = vmatprep.subr.mxu0 0.0
    %3874 = vmatpush2.xpose.msra.mxu0 0.0
    %3875 = vmatprep.subr.mxu0 0.0
    %3876 = vmatpush2.xpose.msra.mxu0 0.0
    %3877 = vmatprep.subr.mxu0 0.0
    %3878 = vmatpush2.xpose.msra.mxu0 0.0
    %3879 = vmatprep.subr.mxu0 0.0
    %3880 = vmatpush2.xpose.msra.mxu0 0.0
    %3881 = vmatprep.subr.mxu0 0.0
    %3882 = vmatpush2.xpose.msra.mxu0 0.0
    %3883 = vmatprep.subr.mxu0 0.0
    %3884 = vmatpush2.xpose.msra.mxu0 0.0
    %3885 = vmatprep.subr.mxu0 0.0
    %3886 = vmatpush2.xpose.msra.mxu0 0.0
    %3887 = vmatprep.subr.mxu0 0.0
    %3888 = vmatpush2.xpose.msra.mxu0 0.0
    %3889 = vmatprep.subr.mxu0 0.0
    %3890 = vmatpush2.xpose.msra.mxu0 0.0
    %3891 = vmatprep.subr.mxu0 0.0
    %3892 = vmatpush2.xpose.msra.mxu0 0.0
    %3893 = vmatprep.subr.mxu0 0.0
    %3894 = vmatpush2.xpose.msra.mxu0 0.0
    %3895 = vmatprep.subr.mxu0 0.0
    %3896 = vmatpush2.xpose.msra.mxu0 0.0
    %3897 = vmatprep.subr.mxu0 0.0
    %3898 = vmatpush2.xpose.msra.mxu0 0.0
    %3899 = vmatprep.mubr.f32.mxu0 0.0
    %3900 = vmatmul.mubr.f32.gmra.mxu0 %v3827
    %v3901 = vpop.f32.mrf.mxu0
    %v3902 = vadd.f32 0.0, %v3901
    %v3903 = vpop.f32.mrf.mxu0
    %3904 = vmatprep.mubr.f32.mxu0 0.0
    %3905 = vmatmul.mubr.f32.gmra.mxu0 %v3829
    %v3906 = vpop.f32.mrf.mxu0
    %v3907 = vadd.f32 0.0, %v3906
    %v3908 = vpop.f32.mrf.mxu0
    %3909 = vdwg.mxu0
    %v3910 = vmul.f32 %v3902, 0.35355338
    %v3911 = vmul.f32 %v3907, 0.35355338
    %v3912 = vadd.f32 %v3910, %v3072
    %v3913 = vadd.f32 %v3911, %v3073
    %v3914 = vsel %vm1163, %v3912, -inf
    %3915 = vmax.xlane.f32.xlu0 %v3914
    %v3916 = vpop.xlane.xlu0 %3915
    %v3917 = vsel %vm1163, %v3913, -inf
    %3918 = vmax.xlane.f32.xlu0 %v3917
    %v3919 = vpop.xlane.xlu0 %3918
    %v3920 = vsub.f32 %v3912, %v3916
    %v3921 = vsub.f32 %v3913, %v3919
    %v3922 = vmul.f32 %v3920, 1.442695
    %v3923 = vpow.pop %v3922
    %v3924 = vmul.f32 %v3921, 1.442695
    %v3925 = vpow.pop %v3924
    %v3926 = vsel %vm1163, %v3923, 0.0
    %3927 = vadd.xlane.f32.xlu0 %v3926
    %v3928 = vpop.xlane.xlu0 %3927
    %v3929 = vsel %vm1163, %v3925, 0.0
    %3930 = vadd.xlane.f32.xlu0 %v3929
    %v3931 = vpop.xlane.xlu0 %3930
    %v3932 = vrcp.pop %v3928
    %v3933 = vrcp.pop %v3931
    %v3934 = vmul.f32 %v3923, %v3932
    %v3935 = vmul.f32 %v3925, %v3933
    %3936 = vrot.lane.b32.xlu0 %v3201, 40
    %v3937 = vpop.permute.xlu0 %3936
    %3938 = vrot.lane.b32.xlu0 %v3206, 40
    %v3939 = vpop.permute.xlu0 %3938
    %v3943 = vsel %vm1163, %v3934, 0
    %v3946 = vsel %vm1163, %v3935, 0
    %3948 = vmatprep.subr.mxu0 0.0
    %3949 = vmatpush1.msra.mxu0 0.0
    %3950 = vmatprep.subr.mxu0 0.0
    %3951 = vmatpush1.msra.mxu0 0.0
    %3952 = vmatprep.subr.mxu0 0.0
    %3953 = vmatpush1.msra.mxu0 0.0
    %3954 = vmatprep.subr.mxu0 0.0
    %3955 = vmatpush1.msra.mxu0 0.0
    %3956 = vmatprep.subr.mxu0 0.0
    %3957 = vmatpush1.msra.mxu0 0.0
    %3958 = vmatprep.subr.mxu0 0.0
    %3959 = vmatpush1.msra.mxu0 0.0
    %3960 = vmatprep.subr.mxu0 0.0
    %3961 = vmatpush1.msra.mxu0 0.0
    %3962 = vmatprep.subr.mxu0 0.0
    %3963 = vmatpush1.msra.mxu0 0.0
    %3964 = vmatprep.subr.mxu0 0.0
    %3965 = vmatpush1.msra.mxu0 0.0
    %3966 = vmatprep.subr.mxu0 0.0
    %3967 = vmatpush1.msra.mxu0 0.0
    %3968 = vmatprep.subr.mxu0 0.0
    %3969 = vmatpush1.msra.mxu0 0.0
    %3970 = vmatprep.subr.mxu0 0.0
    %3971 = vmatpush1.msra.mxu0 0.0
    %3972 = vmatprep.subr.mxu0 0.0
    %3973 = vmatpush1.msra.mxu0 0.0
    %3974 = vmatprep.subr.mxu0 0.0
    %3975 = vmatpush1.msra.mxu0 0.0
    %3976 = vmatprep.subr.mxu0 0.0
    %3977 = vmatpush1.msra.mxu0 %v3939
    %3978 = vmatprep.subr.mxu0 0.0
    %3979 = vmatpush1.msra.mxu0 %v3937
    %3980 = vmatprep.subr.mxu0 0.0
    %3981 = vmatpush2.msra.mxu0 0.0
    %3982 = vmatprep.subr.mxu0 0.0
    %3983 = vmatpush2.msra.mxu0 0.0
    %3984 = vmatprep.subr.mxu0 0.0
    %3985 = vmatpush2.msra.mxu0 0.0
    %3986 = vmatprep.subr.mxu0 0.0
    %3987 = vmatpush2.msra.mxu0 0.0
    %3988 = vmatprep.subr.mxu0 0.0
    %3989 = vmatpush2.msra.mxu0 0.0
    %3990 = vmatprep.subr.mxu0 0.0
    %3991 = vmatpush2.msra.mxu0 0.0
    %3992 = vmatprep.subr.mxu0 0.0
    %3993 = vmatpush2.msra.mxu0 0.0
    %3994 = vmatprep.subr.mxu0 0.0
    %3995 = vmatpush2.msra.mxu0 0.0
    %3996 = vmatprep.subr.mxu0 0.0
    %3997 = vmatpush2.msra.mxu0 0.0
    %3998 = vmatprep.subr.mxu0 0.0
    %3999 = vmatpush2.msra.mxu0 0.0
    %4000 = vmatprep.subr.mxu0 0.0
    %4001 = vmatpush2.msra.mxu0 0.0
    %4002 = vmatprep.subr.mxu0 0.0
    %4003 = vmatpush2.msra.mxu0 0.0
    %4004 = vmatprep.subr.mxu0 0.0
    %4005 = vmatpush2.msra.mxu0 0.0
    %4006 = vmatprep.subr.mxu0 0.0
    %4007 = vmatpush2.msra.mxu0 0.0
    %4008 = vmatprep.subr.mxu0 0.0
    %4009 = vmatpush2.msra.mxu0 0.0
    %4010 = vmatprep.subr.mxu0 0.0
    %4011 = vmatpush2.msra.mxu0 0.0
    %4012 = vmatprep.mubr.f32.mxu0 0.0
    %4013 = vmatmul.mubr.f32.gmra.mxu0 %v3943
    %v4014 = vpop.f32.mrf.mxu0
    %v4015 = vadd.f32 0.0, %v4014
    %v4016 = vpop.f32.mrf.mxu0
    %4017 = vmatprep.mubr.f32.mxu0 0.0
    %4018 = vmatmul.mubr.f32.gmra.mxu0 %v3946
    %v4019 = vpop.f32.mrf.mxu0
    %v4020 = vadd.f32 0.0, %v4019
    %v4021 = vpop.f32.mrf.mxu0
    %4022 = vdwg.mxu0
    %4025 = vrot.lane.b32.xlu0 %v3607, 8
    %v4026 = vpop.permute.xlu0 %4025
    %4027 = vrot.lane.b32.xlu0 %v3612, 8
    %v4028 = vpop.permute.xlu0 %4027
    %4033 = vrot.lane.b32.xlu0 %v3811, 16
    %v4034 = vpop.permute.xlu0 %4033
    %4035 = vrot.lane.b32.xlu0 %v3816, 16
    %v4036 = vpop.permute.xlu0 %4035
    %4041 = vrot.lane.b32.xlu0 %v4015, 24
    %v4042 = vpop.permute.xlu0 %4041
    %4043 = vrot.lane.b32.xlu0 %v4020, 24
    %v4044 = vpop.permute.xlu0 %4043
    %v4047 = vsel %vm321, %v3403, %v4026
    %v4048 = vsel %vm321, %v3408, %v4028
    %v4049 = vsel %vm1163, %v4047, %v4034
    %v4050 = vsel %vm1163, %v4048, %v4036
    %v4051 = vsel %vm1166, %v4049, %v4042
    %v4052 = vsel %vm1166, %v4050, %v4044
    %v4053 = vlaneseq
    %v4054 = vshrl.u32 %v4053, 7
    %v4055 = vsub.s32 1, %v4054
    %v4056 = vrot.slane %v3115, %v4055
    %v4058 = vsel %vm181, %v4051, 0
    %v4061 = vsel %vm181, %v4052, 0
    %4063 = vmatprep.subr.mxu0 0.0
    %4064 = vmatpush1.msra.mxu0 0.0
    %4065 = vmatprep.subr.mxu0 0.0
    %4066 = vmatpush1.msra.mxu0 0.0
    %4067 = vmatprep.subr.mxu0 0.0
    %4068 = vmatpush1.msra.mxu0 0.0
    %4069 = vmatprep.subr.mxu0 0.0
    %4070 = vmatpush1.msra.mxu0 0.0
    %4071 = vmatprep.subr.mxu0 0.0
    %4072 = vmatpush1.msra.mxu0 0.0
    %4073 = vmatprep.subr.mxu0 0.0
    %4074 = vmatpush1.msra.mxu0 0.0
    %4075 = vmatprep.subr.mxu0 0.0
    %4076 = vmatpush1.msra.mxu0 0.0
    %4077 = vmatprep.subr.mxu0 0.0
    %4078 = vmatpush1.msra.mxu0 0.0
    %4079 = vmatprep.subr.mxu0 0.0
    %4080 = vmatpush1.msra.mxu0 0.0
    %4081 = vmatprep.subr.mxu0 0.0
    %4082 = vmatpush1.msra.mxu0 0.0
    %4083 = vmatprep.subr.mxu0 0.0
    %4084 = vmatpush1.msra.mxu0 0.0
    %4085 = vmatprep.subr.mxu0 0.0
    %4086 = vmatpush1.msra.mxu0 0.0
    %4087 = vmatprep.subr.mxu0 0.0
    %4088 = vmatpush1.msra.mxu0 %v3123
    %4089 = vmatprep.subr.mxu0 0.0
    %4090 = vmatpush1.msra.mxu0 %v3122
    %4091 = vmatprep.subr.mxu0 0.0
    %4092 = vmatpush1.msra.mxu0 %v3121
    %4093 = vmatprep.subr.mxu0 0.0
    %4094 = vmatpush1.msra.mxu0 %v3120
    %4095 = vmatprep.subr.mxu0 0.0
    %4096 = vmatpush2.msra.mxu0 0.0
    %4097 = vmatprep.subr.mxu0 0.0
    %4098 = vmatpush2.msra.mxu0 0.0
    %4099 = vmatprep.subr.mxu0 0.0
    %4100 = vmatpush2.msra.mxu0 0.0
    %4101 = vmatprep.subr.mxu0 0.0
    %4102 = vmatpush2.msra.mxu0 0.0
    %4103 = vmatprep.subr.mxu0 0.0
    %4104 = vmatpush2.msra.mxu0 0.0
    %4105 = vmatprep.subr.mxu0 0.0
    %4106 = vmatpush2.msra.mxu0 0.0
    %4107 = vmatprep.subr.mxu0 0.0
    %4108 = vmatpush2.msra.mxu0 0.0
    %4109 = vmatprep.subr.mxu0 0.0
    %4110 = vmatpush2.msra.mxu0 0.0
    %4111 = vmatprep.subr.mxu0 0.0
    %4112 = vmatpush2.msra.mxu0 0.0
    %4113 = vmatprep.subr.mxu0 0.0
    %4114 = vmatpush2.msra.mxu0 0.0
    %4115 = vmatprep.subr.mxu0 0.0
    %4116 = vmatpush2.msra.mxu0 0.0
    %4117 = vmatprep.subr.mxu0 0.0
    %4118 = vmatpush2.msra.mxu0 0.0
    %4119 = vmatprep.subr.mxu0 0.0
    %4120 = vmatpush2.msra.mxu0 0.0
    %4121 = vmatprep.subr.mxu0 0.0
    %4122 = vmatpush2.msra.mxu0 0.0
    %4123 = vmatprep.subr.mxu0 0.0
    %4124 = vmatpush2.msra.mxu0 0.0
    %4125 = vmatprep.subr.mxu0 0.0
    %4126 = vmatpush2.msra.mxu0 0.0
    %4127 = vmatprep.mubr.f32.mxu0 0.0
    %4128 = vmatmul.mubr.f32.gmra.mxu0 %v4058
    %v4129 = vpop.f32.mrf.mxu0
    %v4130 = vadd.f32 %v4056, %v4129
    %v4131 = vpop.f32.mrf.mxu0
    %4132 = vmatprep.mubr.f32.mxu0 0.0
    %4133 = vmatmul.mubr.f32.gmra.mxu0 %v4061
    %v4134 = vpop.f32.mrf.mxu0
    %v4135 = vadd.f32 %v4056, %v4134
    %v4136 = vpop.f32.mrf.mxu0
    %4137 = vdwg.mxu0
    %v4138 = vadd.f32 %v3113, %v4130
    %v4139 = vadd.f32 %v3114, %v4135
    %v4140 = vsel %vm181, %v4138, 0.0
    %4141 = vadd.xlane.f32.xlu0 %v4140
    %v4142 = vpop.xlane.xlu0 %4141
    %v4143 = vsel %vm181, %v4139, 0.0
    %4144 = vadd.xlane.f32.xlu0 %v4143
    %v4145 = vpop.xlane.xlu0 %4144
    %v4146 = vmul.f32 %v4142, %v189
    %v4147 = vmul.f32 %v4145, %v189
    %v4148 = vsub.f32 %v4138, %v4146
    %v4149 = vsub.f32 %v4139, %v4147
    %v4150 = vmul.f32 %v4148, %v4148
    %v4151 = vmul.f32 %v4149, %v4149
    %v4152 = vsel %vm181, %v4150, 0.0
    %4153 = vadd.xlane.f32.xlu0 %v4152
    %v4154 = vpop.xlane.xlu0 %4153
    %v4155 = vsel %vm181, %v4151, 0.0
    %4156 = vadd.xlane.f32.xlu0 %v4155
    %v4157 = vpop.xlane.xlu0 %4156
    %v4158 = vmul.f32 %v4154, %v189
    %v4159 = vmul.f32 %v4157, %v189
    %v4160 = vadd.f32 %v4158, 1e-12
    %v4161 = vadd.f32 %v4159, 1e-12
    %v4162 = vrsqrt.pop %v4160
    %v4163 = vrsqrt.pop %v4161
    %v4164 = vmul.f32 %v4148, %v4162
    %v4165 = vmul.f32 %v4149, %v4163
    %v4166 = vlaneseq
    %v4167 = vshrl.u32 %v4166, 7
    %v4168 = vsub.s32 2, %v4167
    %v4169 = vrot.slane %v3115, %v4168
    %v4170 = vmul.f32 %v4164, %v4169
    %v4171 = vmul.f32 %v4165, %v4169
    %v4172 = vlaneseq
    %v4173 = vshrl.u32 %v4172, 7
    %v4174 = vsub.s32 3, %v4173
    %v4175 = vrot.slane %v3115, %v4174
    %v4176 = vadd.f32 %v4170, %v4175
    %v4177 = vadd.f32 %v4171, %v4175
    %v4178 = vld [vmem:[%s14] sm:$0xff]
    %v4179 = vld [vmem:[%s14 + $0x8] sm:$0xff]
    %v4180 = vld [vmem:[%s14 + $0x10] sm:$0xff]
    %v4181 = vld [vmem:[%s14 + $0x18] sm:$0xff]
    %v4182 = vlaneseq
    %v4183 = vshrl.u32 %v4182, 7
    %v4184 = vsub.s32 4, %v4183
    %v4185 = vrot.slane %v3115, %v4184
    %v4187 = vsel %vm181, %v4176, 0
    %v4190 = vsel %vm181, %v4177, 0
    %4192 = vmatprep.subr.mxu0 0.0
    %4193 = vmatpush1.msra.mxu0 0.0
    %4194 = vmatprep.subr.mxu0 0.0
    %4195 = vmatpush1.msra.mxu0 0.0
    %4196 = vmatprep.subr.mxu0 0.0
    %4197 = vmatpush1.msra.mxu0 0.0
    %4198 = vmatprep.subr.mxu0 0.0
    %4199 = vmatpush1.msra.mxu0 0.0
    %4200 = vmatprep.subr.mxu0 0.0
    %4201 = vmatpush1.msra.mxu0 0.0
    %4202 = vmatprep.subr.mxu0 0.0
    %4203 = vmatpush1.msra.mxu0 0.0
    %4204 = vmatprep.subr.mxu0 0.0
    %4205 = vmatpush1.msra.mxu0 0.0
    %4206 = vmatprep.subr.mxu0 0.0
    %4207 = vmatpush1.msra.mxu0 0.0
    %4208 = vmatprep.subr.mxu0 0.0
    %4209 = vmatpush1.msra.mxu0 0.0
    %4210 = vmatprep.subr.mxu0 0.0
    %4211 = vmatpush1.msra.mxu0 0.0
    %4212 = vmatprep.subr.mxu0 0.0
    %4213 = vmatpush1.msra.mxu0 0.0
    %4214 = vmatprep.subr.mxu0 0.0
    %4215 = vmatpush1.msra.mxu0 0.0
    %4216 = vmatprep.subr.mxu0 0.0
    %4217 = vmatpush1.msra.mxu0 %v4181
    %4218 = vmatprep.subr.mxu0 0.0
    %4219 = vmatpush1.msra.mxu0 %v4180
    %4220 = vmatprep.subr.mxu0 0.0
    %4221 = vmatpush1.msra.mxu0 %v4179
    %4222 = vmatprep.subr.mxu0 0.0
    %4223 = vmatpush1.msra.mxu0 %v4178
    %4224 = vmatprep.subr.mxu0 0.0
    %4225 = vmatpush2.msra.mxu0 0.0
    %4226 = vmatprep.subr.mxu0 0.0
    %4227 = vmatpush2.msra.mxu0 0.0
    %4228 = vmatprep.subr.mxu0 0.0
    %4229 = vmatpush2.msra.mxu0 0.0
    %4230 = vmatprep.subr.mxu0 0.0
    %4231 = vmatpush2.msra.mxu0 0.0
    %4232 = vmatprep.subr.mxu0 0.0
    %4233 = vmatpush2.msra.mxu0 0.0
    %4234 = vmatprep.subr.mxu0 0.0
    %4235 = vmatpush2.msra.mxu0 0.0
    %4236 = vmatprep.subr.mxu0 0.0
    %4237 = vmatpush2.msra.mxu0 0.0
    %4238 = vmatprep.subr.mxu0 0.0
    %4239 = vmatpush2.msra.mxu0 0.0
    %4240 = vmatprep.subr.mxu0 0.0
    %4241 = vmatpush2.msra.mxu0 0.0
    %4242 = vmatprep.subr.mxu0 0.0
    %4243 = vmatpush2.msra.mxu0 0.0
    %4244 = vmatprep.subr.mxu0 0.0
    %4245 = vmatpush2.msra.mxu0 0.0
    %4246 = vmatprep.subr.mxu0 0.0
    %4247 = vmatpush2.msra.mxu0 0.0
    %4248 = vmatprep.subr.mxu0 0.0
    %4249 = vmatpush2.msra.mxu0 0.0
    %4250 = vmatprep.subr.mxu0 0.0
    %4251 = vmatpush2.msra.mxu0 0.0
    %4252 = vmatprep.subr.mxu0 0.0
    %4253 = vmatpush2.msra.mxu0 0.0
    %4254 = vmatprep.subr.mxu0 0.0
    %4255 = vmatpush2.msra.mxu0 0.0
    %4256 = vmatprep.mubr.f32.mxu0 0.0
    %4257 = vmatmul.mubr.f32.gmra.mxu0 %v4187
    %v4258 = vpop.f32.mrf.mxu0
    %v4259 = vadd.f32 %v4185, %v4258
    %v4260 = vpop.f32.mrf.mxu0
    %4261 = vmatprep.mubr.f32.mxu0 0.0
    %4262 = vmatmul.mubr.f32.gmra.mxu0 %v4190
    %v4263 = vpop.f32.mrf.mxu0
    %v4264 = vadd.f32 %v4185, %v4263
    %v4265 = vpop.f32.mrf.mxu0
    %4266 = vdwg.mxu0
    %v4267 = vmul.f32 %v4259, 0.5
    %v4268 = vmul.f32 %v4264, 0.5
    %v4269 = vmul.f32 %v4259, 0.70710677
    %v4270 = vmul.f32 %v4264, 0.70710677
    %vm4271 = vcmp.lt.f32.partialorder %v4269, 0.0
    %vm4272 = vcmp.lt.f32.partialorder %v4270, 0.0
    %v4273 = vsel %vm4271, -1.0, 1.0
    %v4274 = vsel %vm4272, -1.0, 1.0
    %v4275 = vand.u32 2147483647, %v4269
    %v4276 = vand.u32 2147483647, %v4270
    %v4277 = vmul.f32 %v4275, 0.3275911
    %v4278 = vmul.f32 %v4276, 0.3275911
    %v4279 = vadd.f32 %v4277, 1.0
    %v4280 = vadd.f32 %v4278, 1.0
    %v4281 = vrcp.pop %v4279
    %v4282 = vrcp.pop %v4280
    %v4283 = vmul.f32 %v4281, 1.0614054
    %v4284 = vmul.f32 %v4282, 1.0614054
    %v4285 = vadd.f32 %v4283, -1.4531521
    %v4286 = vadd.f32 %v4284, -1.4531521
    %v4287 = vmul.f32 %v4281, %v4285
    %v4288 = vmul.f32 %v4282, %v4286
    %v4289 = vadd.f32 %v4287, 1.4214138
    %v4290 = vadd.f32 %v4288, 1.4214138
    %v4291 = vmul.f32 %v4281, %v4289
    %v4292 = vmul.f32 %v4282, %v4290
    %v4293 = vadd.f32 %v4291, -0.28449672
    %v4294 = vadd.f32 %v4292, -0.28449672
    %v4295 = vmul.f32 %v4281, %v4293
    %v4296 = vmul.f32 %v4282, %v4294
    %v4297 = vadd.f32 %v4295, 0.2548296
    %v4298 = vadd.f32 %v4296, 0.2548296
    %v4299 = vmul.f32 %v4281, %v4297
    %v4300 = vmul.f32 %v4282, %v4298
    %v4301 = vsub.f32 0.0, %v4275
    %v4302 = vsub.f32 0.0, %v4276
    %v4303 = vmul.f32 %v4301, %v4275
    %v4304 = vmul.f32 %v4302, %v4276
    %v4305 = vmul.f32 %v4303, 1.442695
    %v4306 = vpow.pop %v4305
    %v4307 = vmul.f32 %v4304, 1.442695
    %v4308 = vpow.pop %v4307
    %v4309 = vmul.f32 %v4299, %v4306
    %v4310 = vmul.f32 %v4300, %v4308
    %v4311 = vsub.f32 1.0, %v4309
    %v4312 = vsub.f32 1.0, %v4310
    %v4313 = vmul.f32 %v4273, %v4311
    %v4314 = vmul.f32 %v4274, %v4312
    %v4315 = vadd.f32 %v4313, 1.0
    %v4316 = vadd.f32 %v4314, 1.0
    %v4317 = vmul.f32 %v4267, %v4315
    %v4318 = vmul.f32 %v4268, %v4316
    %v4319 = vld [vmem:[%s15] sm:$0xff]
    %v4320 = vld [vmem:[%s15 + $0x8] sm:$0xff]
    %v4321 = vld [vmem:[%s15 + $0x10] sm:$0xff]
    %v4322 = vld [vmem:[%s15 + $0x18] sm:$0xff]
    %v4323 = vld [vmem:[%s15 + $0x20] sm:$0xff]
    %v4324 = vld [vmem:[%s15 + $0x28] sm:$0xff]
    %v4325 = vld [vmem:[%s15 + $0x30] sm:$0xff]
    %v4326 = vld [vmem:[%s15 + $0x38] sm:$0xff]
    %v4327 = vlaneseq
    %v4328 = vshrl.u32 %v4327, 7
    %v4329 = vsub.s32 5, %v4328
    %v4330 = vrot.slane %v3115, %v4329
    %v4332 = vsel %vm1443, %v4317, 0
    %v4335 = vsel %vm1443, %v4318, 0
    %4337 = vmatprep.subr.mxu0 0.0
    %4338 = vmatpush1.msra.mxu0 0.0
    %4339 = vmatprep.subr.mxu0 0.0
    %4340 = vmatpush1.msra.mxu0 0.0
    %4341 = vmatprep.subr.mxu0 0.0
    %4342 = vmatpush1.msra.mxu0 0.0
    %4343 = vmatprep.subr.mxu0 0.0
    %4344 = vmatpush1.msra.mxu0 0.0
    %4345 = vmatprep.subr.mxu0 0.0
    %4346 = vmatpush1.msra.mxu0 0.0
    %4347 = vmatprep.subr.mxu0 0.0
    %4348 = vmatpush1.msra.mxu0 0.0
    %4349 = vmatprep.subr.mxu0 0.0
    %4350 = vmatpush1.msra.mxu0 0.0
    %4351 = vmatprep.subr.mxu0 0.0
    %4352 = vmatpush1.msra.mxu0 0.0
    %4353 = vmatprep.subr.mxu0 0.0
    %4354 = vmatpush1.msra.mxu0 %v4326
    %4355 = vmatprep.subr.mxu0 0.0
    %4356 = vmatpush1.msra.mxu0 %v4325
    %4357 = vmatprep.subr.mxu0 0.0
    %4358 = vmatpush1.msra.mxu0 %v4324
    %4359 = vmatprep.subr.mxu0 0.0
    %4360 = vmatpush1.msra.mxu0 %v4323
    %4361 = vmatprep.subr.mxu0 0.0
    %4362 = vmatpush1.msra.mxu0 %v4322
    %4363 = vmatprep.subr.mxu0 0.0
    %4364 = vmatpush1.msra.mxu0 %v4321
    %4365 = vmatprep.subr.mxu0 0.0
    %4366 = vmatpush1.msra.mxu0 %v4320
    %4367 = vmatprep.subr.mxu0 0.0
    %4368 = vmatpush1.msra.mxu0 %v4319
    %4369 = vmatprep.subr.mxu0 0.0
    %4370 = vmatpush2.msra.mxu0 0.0
    %4371 = vmatprep.subr.mxu0 0.0
    %4372 = vmatpush2.msra.mxu0 0.0
    %4373 = vmatprep.subr.mxu0 0.0
    %4374 = vmatpush2.msra.mxu0 0.0
    %4375 = vmatprep.subr.mxu0 0.0
    %4376 = vmatpush2.msra.mxu0 0.0
    %4377 = vmatprep.subr.mxu0 0.0
    %4378 = vmatpush2.msra.mxu0 0.0
    %4379 = vmatprep.subr.mxu0 0.0
    %4380 = vmatpush2.msra.mxu0 0.0
    %4381 = vmatprep.subr.mxu0 0.0
    %4382 = vmatpush2.msra.mxu0 0.0
    %4383 = vmatprep.subr.mxu0 0.0
    %4384 = vmatpush2.msra.mxu0 0.0
    %4385 = vmatprep.subr.mxu0 0.0
    %4386 = vmatpush2.msra.mxu0 0.0
    %4387 = vmatprep.subr.mxu0 0.0
    %4388 = vmatpush2.msra.mxu0 0.0
    %4389 = vmatprep.subr.mxu0 0.0
    %4390 = vmatpush2.msra.mxu0 0.0
    %4391 = vmatprep.subr.mxu0 0.0
    %4392 = vmatpush2.msra.mxu0 0.0
    %4393 = vmatprep.subr.mxu0 0.0
    %4394 = vmatpush2.msra.mxu0 0.0
    %4395 = vmatprep.subr.mxu0 0.0
    %4396 = vmatpush2.msra.mxu0 0.0
    %4397 = vmatprep.subr.mxu0 0.0
    %4398 = vmatpush2.msra.mxu0 0.0
    %4399 = vmatprep.subr.mxu0 0.0
    %4400 = vmatpush2.msra.mxu0 0.0
    %4401 = vmatprep.mubr.f32.mxu0 0.0
    %4402 = vmatmul.mubr.f32.gmra.mxu0 %v4332
    %v4403 = vpop.f32.mrf.mxu0
    %v4404 = vadd.f32 %v4330, %v4403
    %v4405 = vpop.f32.mrf.mxu0
    %4406 = vmatprep.mubr.f32.mxu0 0.0
    %4407 = vmatmul.mubr.f32.gmra.mxu0 %v4335
    %v4408 = vpop.f32.mrf.mxu0
    %v4409 = vadd.f32 %v4330, %v4408
    %v4410 = vpop.f32.mrf.mxu0
    %4411 = vdwg.mxu0
    %v4412 = vadd.f32 %v4176, %v4404
    %v4413 = vadd.f32 %v4177, %v4409
    %v4414 = vsel %vm181, %v4412, 0.0
    %4415 = vadd.xlane.f32.xlu0 %v4414
    %v4416 = vpop.xlane.xlu0 %4415
    %v4417 = vsel %vm181, %v4413, 0.0
    %4418 = vadd.xlane.f32.xlu0 %v4417
    %v4419 = vpop.xlane.xlu0 %4418
    %v4420 = vmul.f32 %v4416, %v189
    %v4421 = vmul.f32 %v4419, %v189
    %v4422 = vsub.f32 %v4412, %v4420
    %v4423 = vsub.f32 %v4413, %v4421
    %v4424 = vmul.f32 %v4422, %v4422
    %v4425 = vmul.f32 %v4423, %v4423
    %v4426 = vsel %vm181, %v4424, 0.0
    %4427 = vadd.xlane.f32.xlu0 %v4426
    %v4428 = vpop.xlane.xlu0 %4427
    %v4429 = vsel %vm181, %v4425, 0.0
    %4430 = vadd.xlane.f32.xlu0 %v4429
    %v4431 = vpop.xlane.xlu0 %4430
    %v4432 = vmul.f32 %v4428, %v189
    %v4433 = vmul.f32 %v4431, %v189
    %v4434 = vadd.f32 %v4432, 1e-12
    %v4435 = vadd.f32 %v4433, 1e-12
    %v4436 = vrsqrt.pop %v4434
    %v4437 = vrsqrt.pop %v4435
    %v4438 = vmul.f32 %v4422, %v4436
    %v4439 = vmul.f32 %v4423, %v4437
    %v4440 = vlaneseq
    %v4441 = vshrl.u32 %v4440, 7
    %v4442 = vsub.s32 6, %v4441
    %v4443 = vrot.slane %v3115, %v4442
    %v4444 = vmul.f32 %v4438, %v4443
    %v4445 = vmul.f32 %v4439, %v4443
    %v4446 = vlaneseq
    %v4447 = vshrl.u32 %v4446, 7
    %v4448 = vsub.s32 7, %v4447
    %v4449 = vrot.slane %v3115, %v4448
    %v4450 = vadd.f32 %v4444, %v4449
    %v4451 = vadd.f32 %v4445, %v4449
    %s4452 = scalar_lea.vmem %s16, 8
    %v4453 = vld [vmem:[%s4452] sm:$0xff]
    %s4454 = scalar_lea.vmem %s12, 32
    %v4455 = vld [vmem:[%s4454] sm:$0xff]
    %v4456 = vld [vmem:[%s4454 + $0x8] sm:$0xff]
    %v4457 = vld [vmem:[%s4454 + $0x10] sm:$0xff]
    %v4458 = vld [vmem:[%s4454 + $0x18] sm:$0xff]
    %s4459 = scalar_lea.vmem %s13, 32
    %v4460 = vld [vmem:[%s4459] sm:$0xff]
    %v4461 = vld [vmem:[%s4459 + $0x8] sm:$0xff]
    %v4462 = vld [vmem:[%s4459 + $0x10] sm:$0xff]
    %v4463 = vld [vmem:[%s4459 + $0x18] sm:$0xff]
    %v4464 = vlaneseq
    %v4465 = vshrl.u32 %v4464, 7
    %v4466 = vsub.s32 0, %v4465
    %v4467 = vrot.slane %v4453, %v4466
    %v4469 = vsel %vm181, %v4450, 0
    %v4472 = vsel %vm181, %v4451, 0
    %4474 = vmatprep.subr.mxu0 0.0
    %4475 = vmatpush1.msra.mxu0 0.0
    %4476 = vmatprep.subr.mxu0 0.0
    %4477 = vmatpush1.msra.mxu0 0.0
    %4478 = vmatprep.subr.mxu0 0.0
    %4479 = vmatpush1.msra.mxu0 0.0
    %4480 = vmatprep.subr.mxu0 0.0
    %4481 = vmatpush1.msra.mxu0 0.0
    %4482 = vmatprep.subr.mxu0 0.0
    %4483 = vmatpush1.msra.mxu0 0.0
    %4484 = vmatprep.subr.mxu0 0.0
    %4485 = vmatpush1.msra.mxu0 0.0
    %4486 = vmatprep.subr.mxu0 0.0
    %4487 = vmatpush1.msra.mxu0 0.0
    %4488 = vmatprep.subr.mxu0 0.0
    %4489 = vmatpush1.msra.mxu0 0.0
    %4490 = vmatprep.subr.mxu0 0.0
    %4491 = vmatpush1.msra.mxu0 0.0
    %4492 = vmatprep.subr.mxu0 0.0
    %4493 = vmatpush1.msra.mxu0 0.0
    %4494 = vmatprep.subr.mxu0 0.0
    %4495 = vmatpush1.msra.mxu0 0.0
    %4496 = vmatprep.subr.mxu0 0.0
    %4497 = vmatpush1.msra.mxu0 0.0
    %4498 = vmatprep.subr.mxu0 0.0
    %4499 = vmatpush1.msra.mxu0 %v4458
    %4500 = vmatprep.subr.mxu0 0.0
    %4501 = vmatpush1.msra.mxu0 %v4457
    %4502 = vmatprep.subr.mxu0 0.0
    %4503 = vmatpush1.msra.mxu0 %v4456
    %4504 = vmatprep.subr.mxu0 0.0
    %4505 = vmatpush1.msra.mxu0 %v4455
    %4506 = vmatprep.subr.mxu0 0.0
    %4507 = vmatpush2.msra.mxu0 0.0
    %4508 = vmatprep.subr.mxu0 0.0
    %4509 = vmatpush2.msra.mxu0 0.0
    %4510 = vmatprep.subr.mxu0 0.0
    %4511 = vmatpush2.msra.mxu0 0.0
    %4512 = vmatprep.subr.mxu0 0.0
    %4513 = vmatpush2.msra.mxu0 0.0
    %4514 = vmatprep.subr.mxu0 0.0
    %4515 = vmatpush2.msra.mxu0 0.0
    %4516 = vmatprep.subr.mxu0 0.0
    %4517 = vmatpush2.msra.mxu0 0.0
    %4518 = vmatprep.subr.mxu0 0.0
    %4519 = vmatpush2.msra.mxu0 0.0
    %4520 = vmatprep.subr.mxu0 0.0
    %4521 = vmatpush2.msra.mxu0 0.0
    %4522 = vmatprep.subr.mxu0 0.0
    %4523 = vmatpush2.msra.mxu0 0.0
    %4524 = vmatprep.subr.mxu0 0.0
    %4525 = vmatpush2.msra.mxu0 0.0
    %4526 = vmatprep.subr.mxu0 0.0
    %4527 = vmatpush2.msra.mxu0 0.0
    %4528 = vmatprep.subr.mxu0 0.0
    %4529 = vmatpush2.msra.mxu0 0.0
    %4530 = vmatprep.subr.mxu0 0.0
    %4531 = vmatpush2.msra.mxu0 0.0
    %4532 = vmatprep.subr.mxu0 0.0
    %4533 = vmatpush2.msra.mxu0 0.0
    %4534 = vmatprep.subr.mxu0 0.0
    %4535 = vmatpush2.msra.mxu0 0.0
    %4536 = vmatprep.subr.mxu0 0.0
    %4537 = vmatpush2.msra.mxu0 0.0
    %4538 = vmatprep.mubr.f32.mxu0 0.0
    %4539 = vmatmul.mubr.f32.gmra.mxu0 %v4469
    %v4540 = vpop.f32.mrf.mxu0
    %v4541 = vadd.f32 %v4467, %v4540
    %v4542 = vpop.f32.mrf.mxu0
    %4543 = vmatprep.mubr.f32.mxu0 0.0
    %4544 = vmatmul.mubr.f32.gmra.mxu0 %v4472
    %v4545 = vpop.f32.mrf.mxu0
    %v4546 = vadd.f32 %v4467, %v4545
    %v4547 = vpop.f32.mrf.mxu0
    %4548 = vdwg.mxu0
    %4551 = vrot.lane.b32.xlu0 %v4541, 96
    %v4552 = vpop.permute.xlu0 %4551
    %4553 = vrot.lane.b32.xlu0 %v4546, 96
    %v4554 = vpop.permute.xlu0 %4553
    %v4555 = vsel %vm321, %v4541, 0
    %v4557 = vsel %vm321, %v4546, 0
    %v4559 = vsel %vm321, %v4552, 0
    %v4561 = vsel %vm321, %v4554, 0
    %4563 = vmatprep.subr.mxu0 0.0
    %4564 = vmatpush1.xpose.msra.mxu0 0.0
    %4565 = vmatprep.subr.mxu0 0.0
    %4566 = vmatpush1.xpose.msra.mxu0 0.0
    %4567 = vmatprep.subr.mxu0 0.0
    %4568 = vmatpush1.xpose.msra.mxu0 0.0
    %4569 = vmatprep.subr.mxu0 0.0
    %4570 = vmatpush1.xpose.msra.mxu0 0.0
    %4571 = vmatprep.subr.mxu0 0.0
    %4572 = vmatpush1.xpose.msra.mxu0 0.0
    %4573 = vmatprep.subr.mxu0 0.0
    %4574 = vmatpush1.xpose.msra.mxu0 0.0
    %4575 = vmatprep.subr.mxu0 0.0
    %4576 = vmatpush1.xpose.msra.mxu0 0.0
    %4577 = vmatprep.subr.mxu0 0.0
    %4578 = vmatpush1.xpose.msra.mxu0 0.0
    %4579 = vmatprep.subr.mxu0 0.0
    %4580 = vmatpush1.xpose.msra.mxu0 0.0
    %4581 = vmatprep.subr.mxu0 0.0
    %4582 = vmatpush1.xpose.msra.mxu0 0.0
    %4583 = vmatprep.subr.mxu0 0.0
    %4584 = vmatpush1.xpose.msra.mxu0 0.0
    %4585 = vmatprep.subr.mxu0 0.0
    %4586 = vmatpush1.xpose.msra.mxu0 0.0
    %4587 = vmatprep.subr.mxu0 0.0
    %4588 = vmatpush1.xpose.msra.mxu0 0.0
    %4589 = vmatprep.subr.mxu0 0.0
    %4590 = vmatpush1.xpose.msra.mxu0 0.0
    %4591 = vmatprep.subr.mxu0 0.0
    %4592 = vmatpush1.xpose.msra.mxu0 %v4561
    %4593 = vmatprep.subr.mxu0 0.0
    %4594 = vmatpush1.xpose.msra.mxu0 %v4559
    %4595 = vmatprep.subr.mxu0 0.0
    %4596 = vmatpush2.xpose.msra.mxu0 0.0
    %4597 = vmatprep.subr.mxu0 0.0
    %4598 = vmatpush2.xpose.msra.mxu0 0.0
    %4599 = vmatprep.subr.mxu0 0.0
    %4600 = vmatpush2.xpose.msra.mxu0 0.0
    %4601 = vmatprep.subr.mxu0 0.0
    %4602 = vmatpush2.xpose.msra.mxu0 0.0
    %4603 = vmatprep.subr.mxu0 0.0
    %4604 = vmatpush2.xpose.msra.mxu0 0.0
    %4605 = vmatprep.subr.mxu0 0.0
    %4606 = vmatpush2.xpose.msra.mxu0 0.0
    %4607 = vmatprep.subr.mxu0 0.0
    %4608 = vmatpush2.xpose.msra.mxu0 0.0
    %4609 = vmatprep.subr.mxu0 0.0
    %4610 = vmatpush2.xpose.msra.mxu0 0.0
    %4611 = vmatprep.subr.mxu0 0.0
    %4612 = vmatpush2.xpose.msra.mxu0 0.0
    %4613 = vmatprep.subr.mxu0 0.0
    %4614 = vmatpush2.xpose.msra.mxu0 0.0
    %4615 = vmatprep.subr.mxu0 0.0
    %4616 = vmatpush2.xpose.msra.mxu0 0.0
    %4617 = vmatprep.subr.mxu0 0.0
    %4618 = vmatpush2.xpose.msra.mxu0 0.0
    %4619 = vmatprep.subr.mxu0 0.0
    %4620 = vmatpush2.xpose.msra.mxu0 0.0
    %4621 = vmatprep.subr.mxu0 0.0
    %4622 = vmatpush2.xpose.msra.mxu0 0.0
    %4623 = vmatprep.subr.mxu0 0.0
    %4624 = vmatpush2.xpose.msra.mxu0 0.0
    %4625 = vmatprep.subr.mxu0 0.0
    %4626 = vmatpush2.xpose.msra.mxu0 0.0
    %4627 = vmatprep.mubr.f32.mxu0 0.0
    %4628 = vmatmul.mubr.f32.gmra.mxu0 %v4555
    %v4629 = vpop.f32.mrf.mxu0
    %v4630 = vadd.f32 0.0, %v4629
    %v4631 = vpop.f32.mrf.mxu0
    %4632 = vmatprep.mubr.f32.mxu0 0.0
    %4633 = vmatmul.mubr.f32.gmra.mxu0 %v4557
    %v4634 = vpop.f32.mrf.mxu0
    %v4635 = vadd.f32 0.0, %v4634
    %v4636 = vpop.f32.mrf.mxu0
    %4637 = vdwg.mxu0
    %v4638 = vmul.f32 %v4630, 0.35355338
    %v4639 = vmul.f32 %v4635, 0.35355338
    %v4640 = vadd.f32 %v4638, %v3072
    %v4641 = vadd.f32 %v4639, %v3073
    %v4642 = vsel %vm1163, %v4640, -inf
    %4643 = vmax.xlane.f32.xlu0 %v4642
    %v4644 = vpop.xlane.xlu0 %4643
    %v4645 = vsel %vm1163, %v4641, -inf
    %4646 = vmax.xlane.f32.xlu0 %v4645
    %v4647 = vpop.xlane.xlu0 %4646
    %v4648 = vsub.f32 %v4640, %v4644
    %v4649 = vsub.f32 %v4641, %v4647
    %v4650 = vmul.f32 %v4648, 1.442695
    %v4651 = vpow.pop %v4650
    %v4652 = vmul.f32 %v4649, 1.442695
    %v4653 = vpow.pop %v4652
    %v4654 = vsel %vm1163, %v4651, 0.0
    %4655 = vadd.xlane.f32.xlu0 %v4654
    %v4656 = vpop.xlane.xlu0 %4655
    %v4657 = vsel %vm1163, %v4653, 0.0
    %4658 = vadd.xlane.f32.xlu0 %v4657
    %v4659 = vpop.xlane.xlu0 %4658
    %v4660 = vrcp.pop %v4656
    %v4661 = vrcp.pop %v4659
    %v4662 = vmul.f32 %v4651, %v4660
    %v4663 = vmul.f32 %v4653, %v4661
    %4664 = vrot.lane.b32.xlu0 %v4541, 64
    %v4665 = vpop.permute.xlu0 %4664
    %4666 = vrot.lane.b32.xlu0 %v4546, 64
    %v4667 = vpop.permute.xlu0 %4666
    %v4671 = vsel %vm1163, %v4662, 0
    %v4674 = vsel %vm1163, %v4663, 0
    %4676 = vmatprep.subr.mxu0 0.0
    %4677 = vmatpush1.msra.mxu0 0.0
    %4678 = vmatprep.subr.mxu0 0.0
    %4679 = vmatpush1.msra.mxu0 0.0
    %4680 = vmatprep.subr.mxu0 0.0
    %4681 = vmatpush1.msra.mxu0 0.0
    %4682 = vmatprep.subr.mxu0 0.0
    %4683 = vmatpush1.msra.mxu0 0.0
    %4684 = vmatprep.subr.mxu0 0.0
    %4685 = vmatpush1.msra.mxu0 0.0
    %4686 = vmatprep.subr.mxu0 0.0
    %4687 = vmatpush1.msra.mxu0 0.0
    %4688 = vmatprep.subr.mxu0 0.0
    %4689 = vmatpush1.msra.mxu0 0.0
    %4690 = vmatprep.subr.mxu0 0.0
    %4691 = vmatpush1.msra.mxu0 0.0
    %4692 = vmatprep.subr.mxu0 0.0
    %4693 = vmatpush1.msra.mxu0 0.0
    %4694 = vmatprep.subr.mxu0 0.0
    %4695 = vmatpush1.msra.mxu0 0.0
    %4696 = vmatprep.subr.mxu0 0.0
    %4697 = vmatpush1.msra.mxu0 0.0
    %4698 = vmatprep.subr.mxu0 0.0
    %4699 = vmatpush1.msra.mxu0 0.0
    %4700 = vmatprep.subr.mxu0 0.0
    %4701 = vmatpush1.msra.mxu0 0.0
    %4702 = vmatprep.subr.mxu0 0.0
    %4703 = vmatpush1.msra.mxu0 0.0
    %4704 = vmatprep.subr.mxu0 0.0
    %4705 = vmatpush1.msra.mxu0 %v4667
    %4706 = vmatprep.subr.mxu0 0.0
    %4707 = vmatpush1.msra.mxu0 %v4665
    %4708 = vmatprep.subr.mxu0 0.0
    %4709 = vmatpush2.msra.mxu0 0.0
    %4710 = vmatprep.subr.mxu0 0.0
    %4711 = vmatpush2.msra.mxu0 0.0
    %4712 = vmatprep.subr.mxu0 0.0
    %4713 = vmatpush2.msra.mxu0 0.0
    %4714 = vmatprep.subr.mxu0 0.0
    %4715 = vmatpush2.msra.mxu0 0.0
    %4716 = vmatprep.subr.mxu0 0.0
    %4717 = vmatpush2.msra.mxu0 0.0
    %4718 = vmatprep.subr.mxu0 0.0
    %4719 = vmatpush2.msra.mxu0 0.0
    %4720 = vmatprep.subr.mxu0 0.0
    %4721 = vmatpush2.msra.mxu0 0.0
    %4722 = vmatprep.subr.mxu0 0.0
    %4723 = vmatpush2.msra.mxu0 0.0
    %4724 = vmatprep.subr.mxu0 0.0
    %4725 = vmatpush2.msra.mxu0 0.0
    %4726 = vmatprep.subr.mxu0 0.0
    %4727 = vmatpush2.msra.mxu0 0.0
    %4728 = vmatprep.subr.mxu0 0.0
    %4729 = vmatpush2.msra.mxu0 0.0
    %4730 = vmatprep.subr.mxu0 0.0
    %4731 = vmatpush2.msra.mxu0 0.0
    %4732 = vmatprep.subr.mxu0 0.0
    %4733 = vmatpush2.msra.mxu0 0.0
    %4734 = vmatprep.subr.mxu0 0.0
    %4735 = vmatpush2.msra.mxu0 0.0
    %4736 = vmatprep.subr.mxu0 0.0
    %4737 = vmatpush2.msra.mxu0 0.0
    %4738 = vmatprep.subr.mxu0 0.0
    %4739 = vmatpush2.msra.mxu0 0.0
    %4740 = vmatprep.mubr.f32.mxu0 0.0
    %4741 = vmatmul.mubr.f32.gmra.mxu0 %v4671
    %v4742 = vpop.f32.mrf.mxu0
    %v4743 = vadd.f32 0.0, %v4742
    %v4744 = vpop.f32.mrf.mxu0
    %4745 = vmatprep.mubr.f32.mxu0 0.0
    %4746 = vmatmul.mubr.f32.gmra.mxu0 %v4674
    %v4747 = vpop.f32.mrf.mxu0
    %v4748 = vadd.f32 0.0, %v4747
    %v4749 = vpop.f32.mrf.mxu0
    %4750 = vdwg.mxu0
    %4751 = vrot.lane.b32.xlu0 %v4541, 120
    %v4752 = vpop.permute.xlu0 %4751
    %4753 = vrot.lane.b32.xlu0 %v4546, 120
    %v4754 = vpop.permute.xlu0 %4753
    %4755 = vrot.lane.b32.xlu0 %v4541, 88
    %v4756 = vpop.permute.xlu0 %4755
    %4757 = vrot.lane.b32.xlu0 %v4546, 88
    %v4758 = vpop.permute.xlu0 %4757
    %v4759 = vsel %vm321, %v4752, 0
    %v4761 = vsel %vm321, %v4754, 0
    %v4763 = vsel %vm321, %v4756, 0
    %v4765 = vsel %vm321, %v4758, 0
    %4767 = vmatprep.subr.mxu0 0.0
    %4768 = vmatpush1.xpose.msra.mxu0 0.0
    %4769 = vmatprep.subr.mxu0 0.0
    %4770 = vmatpush1.xpose.msra.mxu0 0.0
    %4771 = vmatprep.subr.mxu0 0.0
    %4772 = vmatpush1.xpose.msra.mxu0 0.0
    %4773 = vmatprep.subr.mxu0 0.0
    %4774 = vmatpush1.xpose.msra.mxu0 0.0
    %4775 = vmatprep.subr.mxu0 0.0
    %4776 = vmatpush1.xpose.msra.mxu0 0.0
    %4777 = vmatprep.subr.mxu0 0.0
    %4778 = vmatpush1.xpose.msra.mxu0 0.0
    %4779 = vmatprep.subr.mxu0 0.0
    %4780 = vmatpush1.xpose.msra.mxu0 0.0
    %4781 = vmatprep.subr.mxu0 0.0
    %4782 = vmatpush1.xpose.msra.mxu0 0.0
    %4783 = vmatprep.subr.mxu0 0.0
    %4784 = vmatpush1.xpose.msra.mxu0 0.0
    %4785 = vmatprep.subr.mxu0 0.0
    %4786 = vmatpush1.xpose.msra.mxu0 0.0
    %4787 = vmatprep.subr.mxu0 0.0
    %4788 = vmatpush1.xpose.msra.mxu0 0.0
    %4789 = vmatprep.subr.mxu0 0.0
    %4790 = vmatpush1.xpose.msra.mxu0 0.0
    %4791 = vmatprep.subr.mxu0 0.0
    %4792 = vmatpush1.xpose.msra.mxu0 0.0
    %4793 = vmatprep.subr.mxu0 0.0
    %4794 = vmatpush1.xpose.msra.mxu0 0.0
    %4795 = vmatprep.subr.mxu0 0.0
    %4796 = vmatpush1.xpose.msra.mxu0 %v4765
    %4797 = vmatprep.subr.mxu0 0.0
    %4798 = vmatpush1.xpose.msra.mxu0 %v4763
    %4799 = vmatprep.subr.mxu0 0.0
    %4800 = vmatpush2.xpose.msra.mxu0 0.0
    %4801 = vmatprep.subr.mxu0 0.0
    %4802 = vmatpush2.xpose.msra.mxu0 0.0
    %4803 = vmatprep.subr.mxu0 0.0
    %4804 = vmatpush2.xpose.msra.mxu0 0.0
    %4805 = vmatprep.subr.mxu0 0.0
    %4806 = vmatpush2.xpose.msra.mxu0 0.0
    %4807 = vmatprep.subr.mxu0 0.0
    %4808 = vmatpush2.xpose.msra.mxu0 0.0
    %4809 = vmatprep.subr.mxu0 0.0
    %4810 = vmatpush2.xpose.msra.mxu0 0.0
    %4811 = vmatprep.subr.mxu0 0.0
    %4812 = vmatpush2.xpose.msra.mxu0 0.0
    %4813 = vmatprep.subr.mxu0 0.0
    %4814 = vmatpush2.xpose.msra.mxu0 0.0
    %4815 = vmatprep.subr.mxu0 0.0
    %4816 = vmatpush2.xpose.msra.mxu0 0.0
    %4817 = vmatprep.subr.mxu0 0.0
    %4818 = vmatpush2.xpose.msra.mxu0 0.0
    %4819 = vmatprep.subr.mxu0 0.0
    %4820 = vmatpush2.xpose.msra.mxu0 0.0
    %4821 = vmatprep.subr.mxu0 0.0
    %4822 = vmatpush2.xpose.msra.mxu0 0.0
    %4823 = vmatprep.subr.mxu0 0.0
    %4824 = vmatpush2.xpose.msra.mxu0 0.0
    %4825 = vmatprep.subr.mxu0 0.0
    %4826 = vmatpush2.xpose.msra.mxu0 0.0
    %4827 = vmatprep.subr.mxu0 0.0
    %4828 = vmatpush2.xpose.msra.mxu0 0.0
    %4829 = vmatprep.subr.mxu0 0.0
    %4830 = vmatpush2.xpose.msra.mxu0 0.0
    %4831 = vmatprep.mubr.f32.mxu0 0.0
    %4832 = vmatmul.mubr.f32.gmra.mxu0 %v4759
    %v4833 = vpop.f32.mrf.mxu0
    %v4834 = vadd.f32 0.0, %v4833
    %v4835 = vpop.f32.mrf.mxu0
    %4836 = vmatprep.mubr.f32.mxu0 0.0
    %4837 = vmatmul.mubr.f32.gmra.mxu0 %v4761
    %v4838 = vpop.f32.mrf.mxu0
    %v4839 = vadd.f32 0.0, %v4838
    %v4840 = vpop.f32.mrf.mxu0
    %4841 = vdwg.mxu0
    %v4842 = vmul.f32 %v4834, 0.35355338
    %v4843 = vmul.f32 %v4839, 0.35355338
    %v4844 = vadd.f32 %v4842, %v3072
    %v4845 = vadd.f32 %v4843, %v3073
    %v4846 = vsel %vm1163, %v4844, -inf
    %4847 = vmax.xlane.f32.xlu0 %v4846
    %v4848 = vpop.xlane.xlu0 %4847
    %v4849 = vsel %vm1163, %v4845, -inf
    %4850 = vmax.xlane.f32.xlu0 %v4849
    %v4851 = vpop.xlane.xlu0 %4850
    %v4852 = vsub.f32 %v4844, %v4848
    %v4853 = vsub.f32 %v4845, %v4851
    %v4854 = vmul.f32 %v4852, 1.442695
    %v4855 = vpow.pop %v4854
    %v4856 = vmul.f32 %v4853, 1.442695
    %v4857 = vpow.pop %v4856
    %v4858 = vsel %vm1163, %v4855, 0.0
    %4859 = vadd.xlane.f32.xlu0 %v4858
    %v4860 = vpop.xlane.xlu0 %4859
    %v4861 = vsel %vm1163, %v4857, 0.0
    %4862 = vadd.xlane.f32.xlu0 %v4861
    %v4863 = vpop.xlane.xlu0 %4862
    %v4864 = vrcp.pop %v4860
    %v4865 = vrcp.pop %v4863
    %v4866 = vmul.f32 %v4855, %v4864
    %v4867 = vmul.f32 %v4857, %v4865
    %4868 = vrot.lane.b32.xlu0 %v4541, 56
    %v4869 = vpop.permute.xlu0 %4868
    %4870 = vrot.lane.b32.xlu0 %v4546, 56
    %v4871 = vpop.permute.xlu0 %4870
    %v4875 = vsel %vm1163, %v4866, 0
    %v4878 = vsel %vm1163, %v4867, 0
    %4880 = vmatprep.subr.mxu0 0.0
    %4881 = vmatpush1.msra.mxu0 0.0
    %4882 = vmatprep.subr.mxu0 0.0
    %4883 = vmatpush1.msra.mxu0 0.0
    %4884 = vmatprep.subr.mxu0 0.0
    %4885 = vmatpush1.msra.mxu0 0.0
    %4886 = vmatprep.subr.mxu0 0.0
    %4887 = vmatpush1.msra.mxu0 0.0
    %4888 = vmatprep.subr.mxu0 0.0
    %4889 = vmatpush1.msra.mxu0 0.0
    %4890 = vmatprep.subr.mxu0 0.0
    %4891 = vmatpush1.msra.mxu0 0.0
    %4892 = vmatprep.subr.mxu0 0.0
    %4893 = vmatpush1.msra.mxu0 0.0
    %4894 = vmatprep.subr.mxu0 0.0
    %4895 = vmatpush1.msra.mxu0 0.0
    %4896 = vmatprep.subr.mxu0 0.0
    %4897 = vmatpush1.msra.mxu0 0.0
    %4898 = vmatprep.subr.mxu0 0.0
    %4899 = vmatpush1.msra.mxu0 0.0
    %4900 = vmatprep.subr.mxu0 0.0
    %4901 = vmatpush1.msra.mxu0 0.0
    %4902 = vmatprep.subr.mxu0 0.0
    %4903 = vmatpush1.msra.mxu0 0.0
    %4904 = vmatprep.subr.mxu0 0.0
    %4905 = vmatpush1.msra.mxu0 0.0
    %4906 = vmatprep.subr.mxu0 0.0
    %4907 = vmatpush1.msra.mxu0 0.0
    %4908 = vmatprep.subr.mxu0 0.0
    %4909 = vmatpush1.msra.mxu0 %v4871
    %4910 = vmatprep.subr.mxu0 0.0
    %4911 = vmatpush1.msra.mxu0 %v4869
    %4912 = vmatprep.subr.mxu0 0.0
    %4913 = vmatpush2.msra.mxu0 0.0
    %4914 = vmatprep.subr.mxu0 0.0
    %4915 = vmatpush2.msra.mxu0 0.0
    %4916 = vmatprep.subr.mxu0 0.0
    %4917 = vmatpush2.msra.mxu0 0.0
    %4918 = vmatprep.subr.mxu0 0.0
    %4919 = vmatpush2.msra.mxu0 0.0
    %4920 = vmatprep.subr.mxu0 0.0
    %4921 = vmatpush2.msra.mxu0 0.0
    %4922 = vmatprep.subr.mxu0 0.0
    %4923 = vmatpush2.msra.mxu0 0.0
    %4924 = vmatprep.subr.mxu0 0.0
    %4925 = vmatpush2.msra.mxu0 0.0
    %4926 = vmatprep.subr.mxu0 0.0
    %4927 = vmatpush2.msra.mxu0 0.0
    %4928 = vmatprep.subr.mxu0 0.0
    %4929 = vmatpush2.msra.mxu0 0.0
    %4930 = vmatprep.subr.mxu0 0.0
    %4931 = vmatpush2.msra.mxu0 0.0
    %4932 = vmatprep.subr.mxu0 0.0
    %4933 = vmatpush2.msra.mxu0 0.0
    %4934 = vmatprep.subr.mxu0 0.0
    %4935 = vmatpush2.msra.mxu0 0.0
    %4936 = vmatprep.subr.mxu0 0.0
    %4937 = vmatpush2.msra.mxu0 0.0
    %4938 = vmatprep.subr.mxu0 0.0
    %4939 = vmatpush2.msra.mxu0 0.0
    %4940 = vmatprep.subr.mxu0 0.0
    %4941 = vmatpush2.msra.mxu0 0.0
    %4942 = vmatprep.subr.mxu0 0.0
    %4943 = vmatpush2.msra.mxu0 0.0
    %4944 = vmatprep.mubr.f32.mxu0 0.0
    %4945 = vmatmul.mubr.f32.gmra.mxu0 %v4875
    %v4946 = vpop.f32.mrf.mxu0
    %v4947 = vadd.f32 0.0, %v4946
    %v4948 = vpop.f32.mrf.mxu0
    %4949 = vmatprep.mubr.f32.mxu0 0.0
    %4950 = vmatmul.mubr.f32.gmra.mxu0 %v4878
    %v4951 = vpop.f32.mrf.mxu0
    %v4952 = vadd.f32 0.0, %v4951
    %v4953 = vpop.f32.mrf.mxu0
    %4954 = vdwg.mxu0
    %4955 = vrot.lane.b32.xlu0 %v4541, 112
    %v4956 = vpop.permute.xlu0 %4955
    %4957 = vrot.lane.b32.xlu0 %v4546, 112
    %v4958 = vpop.permute.xlu0 %4957
    %4959 = vrot.lane.b32.xlu0 %v4541, 80
    %v4960 = vpop.permute.xlu0 %4959
    %4961 = vrot.lane.b32.xlu0 %v4546, 80
    %v4962 = vpop.permute.xlu0 %4961
    %v4963 = vsel %vm321, %v4956, 0
    %v4965 = vsel %vm321, %v4958, 0
    %v4967 = vsel %vm321, %v4960, 0
    %v4969 = vsel %vm321, %v4962, 0
    %4971 = vmatprep.subr.mxu0 0.0
    %4972 = vmatpush1.xpose.msra.mxu0 0.0
    %4973 = vmatprep.subr.mxu0 0.0
    %4974 = vmatpush1.xpose.msra.mxu0 0.0
    %4975 = vmatprep.subr.mxu0 0.0
    %4976 = vmatpush1.xpose.msra.mxu0 0.0
    %4977 = vmatprep.subr.mxu0 0.0
    %4978 = vmatpush1.xpose.msra.mxu0 0.0
    %4979 = vmatprep.subr.mxu0 0.0
    %4980 = vmatpush1.xpose.msra.mxu0 0.0
    %4981 = vmatprep.subr.mxu0 0.0
    %4982 = vmatpush1.xpose.msra.mxu0 0.0
    %4983 = vmatprep.subr.mxu0 0.0
    %4984 = vmatpush1.xpose.msra.mxu0 0.0
    %4985 = vmatprep.subr.mxu0 0.0
    %4986 = vmatpush1.xpose.msra.mxu0 0.0
    %4987 = vmatprep.subr.mxu0 0.0
    %4988 = vmatpush1.xpose.msra.mxu0 0.0
    %4989 = vmatprep.subr.mxu0 0.0
    %4990 = vmatpush1.xpose.msra.mxu0 0.0
    %4991 = vmatprep.subr.mxu0 0.0
    %4992 = vmatpush1.xpose.msra.mxu0 0.0
    %4993 = vmatprep.subr.mxu0 0.0
    %4994 = vmatpush1.xpose.msra.mxu0 0.0
    %4995 = vmatprep.subr.mxu0 0.0
    %4996 = vmatpush1.xpose.msra.mxu0 0.0
    %4997 = vmatprep.subr.mxu0 0.0
    %4998 = vmatpush1.xpose.msra.mxu0 0.0
    %4999 = vmatprep.subr.mxu0 0.0
    %5000 = vmatpush1.xpose.msra.mxu0 %v4969
    %5001 = vmatprep.subr.mxu0 0.0
    %5002 = vmatpush1.xpose.msra.mxu0 %v4967
    %5003 = vmatprep.subr.mxu0 0.0
    %5004 = vmatpush2.xpose.msra.mxu0 0.0
    %5005 = vmatprep.subr.mxu0 0.0
    %5006 = vmatpush2.xpose.msra.mxu0 0.0
    %5007 = vmatprep.subr.mxu0 0.0
    %5008 = vmatpush2.xpose.msra.mxu0 0.0
    %5009 = vmatprep.subr.mxu0 0.0
    %5010 = vmatpush2.xpose.msra.mxu0 0.0
    %5011 = vmatprep.subr.mxu0 0.0
    %5012 = vmatpush2.xpose.msra.mxu0 0.0
    %5013 = vmatprep.subr.mxu0 0.0
    %5014 = vmatpush2.xpose.msra.mxu0 0.0
    %5015 = vmatprep.subr.mxu0 0.0
    %5016 = vmatpush2.xpose.msra.mxu0 0.0
    %5017 = vmatprep.subr.mxu0 0.0
    %5018 = vmatpush2.xpose.msra.mxu0 0.0
    %5019 = vmatprep.subr.mxu0 0.0
    %5020 = vmatpush2.xpose.msra.mxu0 0.0
    %5021 = vmatprep.subr.mxu0 0.0
    %5022 = vmatpush2.xpose.msra.mxu0 0.0
    %5023 = vmatprep.subr.mxu0 0.0
    %5024 = vmatpush2.xpose.msra.mxu0 0.0
    %5025 = vmatprep.subr.mxu0 0.0
    %5026 = vmatpush2.xpose.msra.mxu0 0.0
    %5027 = vmatprep.subr.mxu0 0.0
    %5028 = vmatpush2.xpose.msra.mxu0 0.0
    %5029 = vmatprep.subr.mxu0 0.0
    %5030 = vmatpush2.xpose.msra.mxu0 0.0
    %5031 = vmatprep.subr.mxu0 0.0
    %5032 = vmatpush2.xpose.msra.mxu0 0.0
    %5033 = vmatprep.subr.mxu0 0.0
    %5034 = vmatpush2.xpose.msra.mxu0 0.0
    %5035 = vmatprep.mubr.f32.mxu0 0.0
    %5036 = vmatmul.mubr.f32.gmra.mxu0 %v4963
    %v5037 = vpop.f32.mrf.mxu0
    %v5038 = vadd.f32 0.0, %v5037
    %v5039 = vpop.f32.mrf.mxu0
    %5040 = vmatprep.mubr.f32.mxu0 0.0
    %5041 = vmatmul.mubr.f32.gmra.mxu0 %v4965
    %v5042 = vpop.f32.mrf.mxu0
    %v5043 = vadd.f32 0.0, %v5042
    %v5044 = vpop.f32.mrf.mxu0
    %5045 = vdwg.mxu0
    %v5046 = vmul.f32 %v5038, 0.35355338
    %v5047 = vmul.f32 %v5043, 0.35355338
    %v5048 = vadd.f32 %v5046, %v3072
    %v5049 = vadd.f32 %v5047, %v3073
    %v5050 = vsel %vm1163, %v5048, -inf
    %5051 = vmax.xlane.f32.xlu0 %v5050
    %v5052 = vpop.xlane.xlu0 %5051
    %v5053 = vsel %vm1163, %v5049, -inf
    %5054 = vmax.xlane.f32.xlu0 %v5053
    %v5055 = vpop.xlane.xlu0 %5054
    %v5056 = vsub.f32 %v5048, %v5052
    %v5057 = vsub.f32 %v5049, %v5055
    %v5058 = vmul.f32 %v5056, 1.442695
    %v5059 = vpow.pop %v5058
    %v5060 = vmul.f32 %v5057, 1.442695
    %v5061 = vpow.pop %v5060
    %v5062 = vsel %vm1163, %v5059, 0.0
    %5063 = vadd.xlane.f32.xlu0 %v5062
    %v5064 = vpop.xlane.xlu0 %5063
    %v5065 = vsel %vm1163, %v5061, 0.0
    %5066 = vadd.xlane.f32.xlu0 %v5065
    %v5067 = vpop.xlane.xlu0 %5066
    %v5068 = vrcp.pop %v5064
    %v5069 = vrcp.pop %v5067
    %v5070 = vmul.f32 %v5059, %v5068
    %v5071 = vmul.f32 %v5061, %v5069
    %5072 = vrot.lane.b32.xlu0 %v4541, 48
    %v5073 = vpop.permute.xlu0 %5072
    %5074 = vrot.lane.b32.xlu0 %v4546, 48
    %v5075 = vpop.permute.xlu0 %5074
    %v5079 = vsel %vm1163, %v5070, 0
    %v5082 = vsel %vm1163, %v5071, 0
    %5084 = vmatprep.subr.mxu0 0.0
    %5085 = vmatpush1.msra.mxu0 0.0
    %5086 = vmatprep.subr.mxu0 0.0
    %5087 = vmatpush1.msra.mxu0 0.0
    %5088 = vmatprep.subr.mxu0 0.0
    %5089 = vmatpush1.msra.mxu0 0.0
    %5090 = vmatprep.subr.mxu0 0.0
    %5091 = vmatpush1.msra.mxu0 0.0
    %5092 = vmatprep.subr.mxu0 0.0
    %5093 = vmatpush1.msra.mxu0 0.0
    %5094 = vmatprep.subr.mxu0 0.0
    %5095 = vmatpush1.msra.mxu0 0.0
    %5096 = vmatprep.subr.mxu0 0.0
    %5097 = vmatpush1.msra.mxu0 0.0
    %5098 = vmatprep.subr.mxu0 0.0
    %5099 = vmatpush1.msra.mxu0 0.0
    %5100 = vmatprep.subr.mxu0 0.0
    %5101 = vmatpush1.msra.mxu0 0.0
    %5102 = vmatprep.subr.mxu0 0.0
    %5103 = vmatpush1.msra.mxu0 0.0
    %5104 = vmatprep.subr.mxu0 0.0
    %5105 = vmatpush1.msra.mxu0 0.0
    %5106 = vmatprep.subr.mxu0 0.0
    %5107 = vmatpush1.msra.mxu0 0.0
    %5108 = vmatprep.subr.mxu0 0.0
    %5109 = vmatpush1.msra.mxu0 0.0
    %5110 = vmatprep.subr.mxu0 0.0
    %5111 = vmatpush1.msra.mxu0 0.0
    %5112 = vmatprep.subr.mxu0 0.0
    %5113 = vmatpush1.msra.mxu0 %v5075
    %5114 = vmatprep.subr.mxu0 0.0
    %5115 = vmatpush1.msra.mxu0 %v5073
    %5116 = vmatprep.subr.mxu0 0.0
    %5117 = vmatpush2.msra.mxu0 0.0
    %5118 = vmatprep.subr.mxu0 0.0
    %5119 = vmatpush2.msra.mxu0 0.0
    %5120 = vmatprep.subr.mxu0 0.0
    %5121 = vmatpush2.msra.mxu0 0.0
    %5122 = vmatprep.subr.mxu0 0.0
    %5123 = vmatpush2.msra.mxu0 0.0
    %5124 = vmatprep.subr.mxu0 0.0
    %5125 = vmatpush2.msra.mxu0 0.0
    %5126 = vmatprep.subr.mxu0 0.0
    %5127 = vmatpush2.msra.mxu0 0.0
    %5128 = vmatprep.subr.mxu0 0.0
    %5129 = vmatpush2.msra.mxu0 0.0
    %5130 = vmatprep.subr.mxu0 0.0
    %5131 = vmatpush2.msra.mxu0 0.0
    %5132 = vmatprep.subr.mxu0 0.0
    %5133 = vmatpush2.msra.mxu0 0.0
    %5134 = vmatprep.subr.mxu0 0.0
    %5135 = vmatpush2.msra.mxu0 0.0
    %5136 = vmatprep.subr.mxu0 0.0
    %5137 = vmatpush2.msra.mxu0 0.0
    %5138 = vmatprep.subr.mxu0 0.0
    %5139 = vmatpush2.msra.mxu0 0.0
    %5140 = vmatprep.subr.mxu0 0.0
    %5141 = vmatpush2.msra.mxu0 0.0
    %5142 = vmatprep.subr.mxu0 0.0
    %5143 = vmatpush2.msra.mxu0 0.0
    %5144 = vmatprep.subr.mxu0 0.0
    %5145 = vmatpush2.msra.mxu0 0.0
    %5146 = vmatprep.subr.mxu0 0.0
    %5147 = vmatpush2.msra.mxu0 0.0
    %5148 = vmatprep.mubr.f32.mxu0 0.0
    %5149 = vmatmul.mubr.f32.gmra.mxu0 %v5079
    %v5150 = vpop.f32.mrf.mxu0
    %v5151 = vadd.f32 0.0, %v5150
    %v5152 = vpop.f32.mrf.mxu0
    %5153 = vmatprep.mubr.f32.mxu0 0.0
    %5154 = vmatmul.mubr.f32.gmra.mxu0 %v5082
    %v5155 = vpop.f32.mrf.mxu0
    %v5156 = vadd.f32 0.0, %v5155
    %v5157 = vpop.f32.mrf.mxu0
    %5158 = vdwg.mxu0
    %5159 = vrot.lane.b32.xlu0 %v4541, 104
    %v5160 = vpop.permute.xlu0 %5159
    %5161 = vrot.lane.b32.xlu0 %v4546, 104
    %v5162 = vpop.permute.xlu0 %5161
    %5163 = vrot.lane.b32.xlu0 %v4541, 72
    %v5164 = vpop.permute.xlu0 %5163
    %5165 = vrot.lane.b32.xlu0 %v4546, 72
    %v5166 = vpop.permute.xlu0 %5165
    %v5167 = vsel %vm321, %v5160, 0
    %v5169 = vsel %vm321, %v5162, 0
    %v5171 = vsel %vm321, %v5164, 0
    %v5173 = vsel %vm321, %v5166, 0
    %5175 = vmatprep.subr.mxu0 0.0
    %5176 = vmatpush1.xpose.msra.mxu0 0.0
    %5177 = vmatprep.subr.mxu0 0.0
    %5178 = vmatpush1.xpose.msra.mxu0 0.0
    %5179 = vmatprep.subr.mxu0 0.0
    %5180 = vmatpush1.xpose.msra.mxu0 0.0
    %5181 = vmatprep.subr.mxu0 0.0
    %5182 = vmatpush1.xpose.msra.mxu0 0.0
    %5183 = vmatprep.subr.mxu0 0.0
    %5184 = vmatpush1.xpose.msra.mxu0 0.0
    %5185 = vmatprep.subr.mxu0 0.0
    %5186 = vmatpush1.xpose.msra.mxu0 0.0
    %5187 = vmatprep.subr.mxu0 0.0
    %5188 = vmatpush1.xpose.msra.mxu0 0.0
    %5189 = vmatprep.subr.mxu0 0.0
    %5190 = vmatpush1.xpose.msra.mxu0 0.0
    %5191 = vmatprep.subr.mxu0 0.0
    %5192 = vmatpush1.xpose.msra.mxu0 0.0
    %5193 = vmatprep.subr.mxu0 0.0
    %5194 = vmatpush1.xpose.msra.mxu0 0.0
    %5195 = vmatprep.subr.mxu0 0.0
    %5196 = vmatpush1.xpose.msra.mxu0 0.0
    %5197 = vmatprep.subr.mxu0 0.0
    %5198 = vmatpush1.xpose.msra.mxu0 0.0
    %5199 = vmatprep.subr.mxu0 0.0
    %5200 = vmatpush1.xpose.msra.mxu0 0.0
    %5201 = vmatprep.subr.mxu0 0.0
    %5202 = vmatpush1.xpose.msra.mxu0 0.0
    %5203 = vmatprep.subr.mxu0 0.0
    %5204 = vmatpush1.xpose.msra.mxu0 %v5173
    %5205 = vmatprep.subr.mxu0 0.0
    %5206 = vmatpush1.xpose.msra.mxu0 %v5171
    %5207 = vmatprep.subr.mxu0 0.0
    %5208 = vmatpush2.xpose.msra.mxu0 0.0
    %5209 = vmatprep.subr.mxu0 0.0
    %5210 = vmatpush2.xpose.msra.mxu0 0.0
    %5211 = vmatprep.subr.mxu0 0.0
    %5212 = vmatpush2.xpose.msra.mxu0 0.0
    %5213 = vmatprep.subr.mxu0 0.0
    %5214 = vmatpush2.xpose.msra.mxu0 0.0
    %5215 = vmatprep.subr.mxu0 0.0
    %5216 = vmatpush2.xpose.msra.mxu0 0.0
    %5217 = vmatprep.subr.mxu0 0.0
    %5218 = vmatpush2.xpose.msra.mxu0 0.0
    %5219 = vmatprep.subr.mxu0 0.0
    %5220 = vmatpush2.xpose.msra.mxu0 0.0
    %5221 = vmatprep.subr.mxu0 0.0
    %5222 = vmatpush2.xpose.msra.mxu0 0.0
    %5223 = vmatprep.subr.mxu0 0.0
    %5224 = vmatpush2.xpose.msra.mxu0 0.0
    %5225 = vmatprep.subr.mxu0 0.0
    %5226 = vmatpush2.xpose.msra.mxu0 0.0
    %5227 = vmatprep.subr.mxu0 0.0
    %5228 = vmatpush2.xpose.msra.mxu0 0.0
    %5229 = vmatprep.subr.mxu0 0.0
    %5230 = vmatpush2.xpose.msra.mxu0 0.0
    %5231 = vmatprep.subr.mxu0 0.0
    %5232 = vmatpush2.xpose.msra.mxu0 0.0
    %5233 = vmatprep.subr.mxu0 0.0
    %5234 = vmatpush2.xpose.msra.mxu0 0.0
    %5235 = vmatprep.subr.mxu0 0.0
    %5236 = vmatpush2.xpose.msra.mxu0 0.0
    %5237 = vmatprep.subr.mxu0 0.0
    %5238 = vmatpush2.xpose.msra.mxu0 0.0
    %5239 = vmatprep.mubr.f32.mxu0 0.0
    %5240 = vmatmul.mubr.f32.gmra.mxu0 %v5167
    %v5241 = vpop.f32.mrf.mxu0
    %v5242 = vadd.f32 0.0, %v5241
    %v5243 = vpop.f32.mrf.mxu0
    %5244 = vmatprep.mubr.f32.mxu0 0.0
    %5245 = vmatmul.mubr.f32.gmra.mxu0 %v5169
    %v5246 = vpop.f32.mrf.mxu0
    %v5247 = vadd.f32 0.0, %v5246
    %v5248 = vpop.f32.mrf.mxu0
    %5249 = vdwg.mxu0
    %v5250 = vmul.f32 %v5242, 0.35355338
    %v5251 = vmul.f32 %v5247, 0.35355338
    %v5252 = vadd.f32 %v5250, %v3072
    %v5253 = vadd.f32 %v5251, %v3073
    %v5254 = vsel %vm1163, %v5252, -inf
    %5255 = vmax.xlane.f32.xlu0 %v5254
    %v5256 = vpop.xlane.xlu0 %5255
    %v5257 = vsel %vm1163, %v5253, -inf
    %5258 = vmax.xlane.f32.xlu0 %v5257
    %v5259 = vpop.xlane.xlu0 %5258
    %v5260 = vsub.f32 %v5252, %v5256
    %v5261 = vsub.f32 %v5253, %v5259
    %v5262 = vmul.f32 %v5260, 1.442695
    %v5263 = vpow.pop %v5262
    %v5264 = vmul.f32 %v5261, 1.442695
    %v5265 = vpow.pop %v5264
    %v5266 = vsel %vm1163, %v5263, 0.0
    %5267 = vadd.xlane.f32.xlu0 %v5266
    %v5268 = vpop.xlane.xlu0 %5267
    %v5269 = vsel %vm1163, %v5265, 0.0
    %5270 = vadd.xlane.f32.xlu0 %v5269
    %v5271 = vpop.xlane.xlu0 %5270
    %v5272 = vrcp.pop %v5268
    %v5273 = vrcp.pop %v5271
    %v5274 = vmul.f32 %v5263, %v5272
    %v5275 = vmul.f32 %v5265, %v5273
    %5276 = vrot.lane.b32.xlu0 %v4541, 40
    %v5277 = vpop.permute.xlu0 %5276
    %5278 = vrot.lane.b32.xlu0 %v4546, 40
    %v5279 = vpop.permute.xlu0 %5278
    %v5283 = vsel %vm1163, %v5274, 0
    %v5286 = vsel %vm1163, %v5275, 0
    %5288 = vmatprep.subr.mxu0 0.0
    %5289 = vmatpush1.msra.mxu0 0.0
    %5290 = vmatprep.subr.mxu0 0.0
    %5291 = vmatpush1.msra.mxu0 0.0
    %5292 = vmatprep.subr.mxu0 0.0
    %5293 = vmatpush1.msra.mxu0 0.0
    %5294 = vmatprep.subr.mxu0 0.0
    %5295 = vmatpush1.msra.mxu0 0.0
    %5296 = vmatprep.subr.mxu0 0.0
    %5297 = vmatpush1.msra.mxu0 0.0
    %5298 = vmatprep.subr.mxu0 0.0
    %5299 = vmatpush1.msra.mxu0 0.0
    %5300 = vmatprep.subr.mxu0 0.0
    %5301 = vmatpush1.msra.mxu0 0.0
    %5302 = vmatprep.subr.mxu0 0.0
    %5303 = vmatpush1.msra.mxu0 0.0
    %5304 = vmatprep.subr.mxu0 0.0
    %5305 = vmatpush1.msra.mxu0 0.0
    %5306 = vmatprep.subr.mxu0 0.0
    %5307 = vmatpush1.msra.mxu0 0.0
    %5308 = vmatprep.subr.mxu0 0.0
    %5309 = vmatpush1.msra.mxu0 0.0
    %5310 = vmatprep.subr.mxu0 0.0
    %5311 = vmatpush1.msra.mxu0 0.0
    %5312 = vmatprep.subr.mxu0 0.0
    %5313 = vmatpush1.msra.mxu0 0.0
    %5314 = vmatprep.subr.mxu0 0.0
    %5315 = vmatpush1.msra.mxu0 0.0
    %5316 = vmatprep.subr.mxu0 0.0
    %5317 = vmatpush1.msra.mxu0 %v5279
    %5318 = vmatprep.subr.mxu0 0.0
    %5319 = vmatpush1.msra.mxu0 %v5277
    %5320 = vmatprep.subr.mxu0 0.0
    %5321 = vmatpush2.msra.mxu0 0.0
    %5322 = vmatprep.subr.mxu0 0.0
    %5323 = vmatpush2.msra.mxu0 0.0
    %5324 = vmatprep.subr.mxu0 0.0
    %5325 = vmatpush2.msra.mxu0 0.0
    %5326 = vmatprep.subr.mxu0 0.0
    %5327 = vmatpush2.msra.mxu0 0.0
    %5328 = vmatprep.subr.mxu0 0.0
    %5329 = vmatpush2.msra.mxu0 0.0
    %5330 = vmatprep.subr.mxu0 0.0
    %5331 = vmatpush2.msra.mxu0 0.0
    %5332 = vmatprep.subr.mxu0 0.0
    %5333 = vmatpush2.msra.mxu0 0.0
    %5334 = vmatprep.subr.mxu0 0.0
    %5335 = vmatpush2.msra.mxu0 0.0
    %5336 = vmatprep.subr.mxu0 0.0
    %5337 = vmatpush2.msra.mxu0 0.0
    %5338 = vmatprep.subr.mxu0 0.0
    %5339 = vmatpush2.msra.mxu0 0.0
    %5340 = vmatprep.subr.mxu0 0.0
    %5341 = vmatpush2.msra.mxu0 0.0
    %5342 = vmatprep.subr.mxu0 0.0
    %5343 = vmatpush2.msra.mxu0 0.0
    %5344 = vmatprep.subr.mxu0 0.0
    %5345 = vmatpush2.msra.mxu0 0.0
    %5346 = vmatprep.subr.mxu0 0.0
    %5347 = vmatpush2.msra.mxu0 0.0
    %5348 = vmatprep.subr.mxu0 0.0
    %5349 = vmatpush2.msra.mxu0 0.0
    %5350 = vmatprep.subr.mxu0 0.0
    %5351 = vmatpush2.msra.mxu0 0.0
    %5352 = vmatprep.mubr.f32.mxu0 0.0
    %5353 = vmatmul.mubr.f32.gmra.mxu0 %v5283
    %v5354 = vpop.f32.mrf.mxu0
    %v5355 = vadd.f32 0.0, %v5354
    %v5356 = vpop.f32.mrf.mxu0
    %5357 = vmatprep.mubr.f32.mxu0 0.0
    %5358 = vmatmul.mubr.f32.gmra.mxu0 %v5286
    %v5359 = vpop.f32.mrf.mxu0
    %v5360 = vadd.f32 0.0, %v5359
    %v5361 = vpop.f32.mrf.mxu0
    %5362 = vdwg.mxu0
    %5365 = vrot.lane.b32.xlu0 %v4947, 8
    %v5366 = vpop.permute.xlu0 %5365
    %5367 = vrot.lane.b32.xlu0 %v4952, 8
    %v5368 = vpop.permute.xlu0 %5367
    %5373 = vrot.lane.b32.xlu0 %v5151, 16
    %v5374 = vpop.permute.xlu0 %5373
    %5375 = vrot.lane.b32.xlu0 %v5156, 16
    %v5376 = vpop.permute.xlu0 %5375
    %5381 = vrot.lane.b32.xlu0 %v5355, 24
    %v5382 = vpop.permute.xlu0 %5381
    %5383 = vrot.lane.b32.xlu0 %v5360, 24
    %v5384 = vpop.permute.xlu0 %5383
    %v5387 = vsel %vm321, %v4743, %v5366
    %v5388 = vsel %vm321, %v4748, %v5368
    %v5389 = vsel %vm1163, %v5387, %v5374
    %v5390 = vsel %vm1163, %v5388, %v5376
    %v5391 = vsel %vm1166, %v5389, %v5382
    %v5392 = vsel %vm1166, %v5390, %v5384
    %v5393 = vlaneseq
    %v5394 = vshrl.u32 %v5393, 7
    %v5395 = vsub.s32 1, %v5394
    %v5396 = vrot.slane %v4453, %v5395
    %v5398 = vsel %vm181, %v5391, 0
    %v5401 = vsel %vm181, %v5392, 0
    %5403 = vmatprep.subr.mxu0 0.0
    %5404 = vmatpush1.msra.mxu0 0.0
    %5405 = vmatprep.subr.mxu0 0.0
    %5406 = vmatpush1.msra.mxu0 0.0
    %5407 = vmatprep.subr.mxu0 0.0
    %5408 = vmatpush1.msra.mxu0 0.0
    %5409 = vmatprep.subr.mxu0 0.0
    %5410 = vmatpush1.msra.mxu0 0.0
    %5411 = vmatprep.subr.mxu0 0.0
    %5412 = vmatpush1.msra.mxu0 0.0
    %5413 = vmatprep.subr.mxu0 0.0
    %5414 = vmatpush1.msra.mxu0 0.0
    %5415 = vmatprep.subr.mxu0 0.0
    %5416 = vmatpush1.msra.mxu0 0.0
    %5417 = vmatprep.subr.mxu0 0.0
    %5418 = vmatpush1.msra.mxu0 0.0
    %5419 = vmatprep.subr.mxu0 0.0
    %5420 = vmatpush1.msra.mxu0 0.0
    %5421 = vmatprep.subr.mxu0 0.0
    %5422 = vmatpush1.msra.mxu0 0.0
    %5423 = vmatprep.subr.mxu0 0.0
    %5424 = vmatpush1.msra.mxu0 0.0
    %5425 = vmatprep.subr.mxu0 0.0
    %5426 = vmatpush1.msra.mxu0 0.0
    %5427 = vmatprep.subr.mxu0 0.0
    %5428 = vmatpush1.msra.mxu0 %v4463
    %5429 = vmatprep.subr.mxu0 0.0
    %5430 = vmatpush1.msra.mxu0 %v4462
    %5431 = vmatprep.subr.mxu0 0.0
    %5432 = vmatpush1.msra.mxu0 %v4461
    %5433 = vmatprep.subr.mxu0 0.0
    %5434 = vmatpush1.msra.mxu0 %v4460
    %5435 = vmatprep.subr.mxu0 0.0
    %5436 = vmatpush2.msra.mxu0 0.0
    %5437 = vmatprep.subr.mxu0 0.0
    %5438 = vmatpush2.msra.mxu0 0.0
    %5439 = vmatprep.subr.mxu0 0.0
    %5440 = vmatpush2.msra.mxu0 0.0
    %5441 = vmatprep.subr.mxu0 0.0
    %5442 = vmatpush2.msra.mxu0 0.0
    %5443 = vmatprep.subr.mxu0 0.0
    %5444 = vmatpush2.msra.mxu0 0.0
    %5445 = vmatprep.subr.mxu0 0.0
    %5446 = vmatpush2.msra.mxu0 0.0
    %5447 = vmatprep.subr.mxu0 0.0
    %5448 = vmatpush2.msra.mxu0 0.0
    %5449 = vmatprep.subr.mxu0 0.0
    %5450 = vmatpush2.msra.mxu0 0.0
    %5451 = vmatprep.subr.mxu0 0.0
    %5452 = vmatpush2.msra.mxu0 0.0
    %5453 = vmatprep.subr.mxu0 0.0
    %5454 = vmatpush2.msra.mxu0 0.0
    %5455 = vmatprep.subr.mxu0 0.0
    %5456 = vmatpush2.msra.mxu0 0.0
    %5457 = vmatprep.subr.mxu0 0.0
    %5458 = vmatpush2.msra.mxu0 0.0
    %5459 = vmatprep.subr.mxu0 0.0
    %5460 = vmatpush2.msra.mxu0 0.0
    %5461 = vmatprep.subr.mxu0 0.0
    %5462 = vmatpush2.msra.mxu0 0.0
    %5463 = vmatprep.subr.mxu0 0.0
    %5464 = vmatpush2.msra.mxu0 0.0
    %5465 = vmatprep.subr.mxu0 0.0
    %5466 = vmatpush2.msra.mxu0 0.0
    %5467 = vmatprep.mubr.f32.mxu0 0.0
    %5468 = vmatmul.mubr.f32.gmra.mxu0 %v5398
    %v5469 = vpop.f32.mrf.mxu0
    %v5470 = vadd.f32 %v5396, %v5469
    %v5471 = vpop.f32.mrf.mxu0
    %5472 = vmatprep.mubr.f32.mxu0 0.0
    %5473 = vmatmul.mubr.f32.gmra.mxu0 %v5401
    %v5474 = vpop.f32.mrf.mxu0
    %v5475 = vadd.f32 %v5396, %v5474
    %v5476 = vpop.f32.mrf.mxu0
    %5477 = vdwg.mxu0
    %v5478 = vadd.f32 %v4450, %v5470
    %v5479 = vadd.f32 %v4451, %v5475
    %v5480 = vsel %vm181, %v5478, 0.0
    %5481 = vadd.xlane.f32.xlu0 %v5480
    %v5482 = vpop.xlane.xlu0 %5481
    %v5483 = vsel %vm181, %v5479, 0.0
    %5484 = vadd.xlane.f32.xlu0 %v5483
    %v5485 = vpop.xlane.xlu0 %5484
    %v5486 = vmul.f32 %v5482, %v189
    %v5487 = vmul.f32 %v5485, %v189
    %v5488 = vsub.f32 %v5478, %v5486
    %v5489 = vsub.f32 %v5479, %v5487
    %v5490 = vmul.f32 %v5488, %v5488
    %v5491 = vmul.f32 %v5489, %v5489
    %v5492 = vsel %vm181, %v5490, 0.0
    %5493 = vadd.xlane.f32.xlu0 %v5492
    %v5494 = vpop.xlane.xlu0 %5493
    %v5495 = vsel %vm181, %v5491, 0.0
    %5496 = vadd.xlane.f32.xlu0 %v5495
    %v5497 = vpop.xlane.xlu0 %5496
    %v5498 = vmul.f32 %v5494, %v189
    %v5499 = vmul.f32 %v5497, %v189
    %v5500 = vadd.f32 %v5498, 1e-12
    %v5501 = vadd.f32 %v5499, 1e-12
    %v5502 = vrsqrt.pop %v5500
    %v5503 = vrsqrt.pop %v5501
    %v5504 = vmul.f32 %v5488, %v5502
    %v5505 = vmul.f32 %v5489, %v5503
    %v5506 = vlaneseq
    %v5507 = vshrl.u32 %v5506, 7
    %v5508 = vsub.s32 2, %v5507
    %v5509 = vrot.slane %v4453, %v5508
    %v5510 = vmul.f32 %v5504, %v5509
    %v5511 = vmul.f32 %v5505, %v5509
    %v5512 = vlaneseq
    %v5513 = vshrl.u32 %v5512, 7
    %v5514 = vsub.s32 3, %v5513
    %v5515 = vrot.slane %v4453, %v5514
    %v5516 = vadd.f32 %v5510, %v5515
    %v5517 = vadd.f32 %v5511, %v5515
    %s5518 = scalar_lea.vmem %s14, 32
    %v5519 = vld [vmem:[%s5518] sm:$0xff]
    %v5520 = vld [vmem:[%s5518 + $0x8] sm:$0xff]
    %v5521 = vld [vmem:[%s5518 + $0x10] sm:$0xff]
    %v5522 = vld [vmem:[%s5518 + $0x18] sm:$0xff]
    %v5523 = vlaneseq
    %v5524 = vshrl.u32 %v5523, 7
    %v5525 = vsub.s32 4, %v5524
    %v5526 = vrot.slane %v4453, %v5525
    %v5528 = vsel %vm181, %v5516, 0
    %v5531 = vsel %vm181, %v5517, 0
    %5533 = vmatprep.subr.mxu0 0.0
    %5534 = vmatpush1.msra.mxu0 0.0
    %5535 = vmatprep.subr.mxu0 0.0
    %5536 = vmatpush1.msra.mxu0 0.0
    %5537 = vmatprep.subr.mxu0 0.0
    %5538 = vmatpush1.msra.mxu0 0.0
    %5539 = vmatprep.subr.mxu0 0.0
    %5540 = vmatpush1.msra.mxu0 0.0
    %5541 = vmatprep.subr.mxu0 0.0
    %5542 = vmatpush1.msra.mxu0 0.0
    %5543 = vmatprep.subr.mxu0 0.0
    %5544 = vmatpush1.msra.mxu0 0.0
    %5545 = vmatprep.subr.mxu0 0.0
    %5546 = vmatpush1.msra.mxu0 0.0
    %5547 = vmatprep.subr.mxu0 0.0
    %5548 = vmatpush1.msra.mxu0 0.0
    %5549 = vmatprep.subr.mxu0 0.0
    %5550 = vmatpush1.msra.mxu0 0.0
    %5551 = vmatprep.subr.mxu0 0.0
    %5552 = vmatpush1.msra.mxu0 0.0
    %5553 = vmatprep.subr.mxu0 0.0
    %5554 = vmatpush1.msra.mxu0 0.0
    %5555 = vmatprep.subr.mxu0 0.0
    %5556 = vmatpush1.msra.mxu0 0.0
    %5557 = vmatprep.subr.mxu0 0.0
    %5558 = vmatpush1.msra.mxu0 %v5522
    %5559 = vmatprep.subr.mxu0 0.0
    %5560 = vmatpush1.msra.mxu0 %v5521
    %5561 = vmatprep.subr.mxu0 0.0
    %5562 = vmatpush1.msra.mxu0 %v5520
    %5563 = vmatprep.subr.mxu0 0.0
    %5564 = vmatpush1.msra.mxu0 %v5519
    %5565 = vmatprep.subr.mxu0 0.0
    %5566 = vmatpush2.msra.mxu0 0.0
    %5567 = vmatprep.subr.mxu0 0.0
    %5568 = vmatpush2.msra.mxu0 0.0
    %5569 = vmatprep.subr.mxu0 0.0
    %5570 = vmatpush2.msra.mxu0 0.0
    %5571 = vmatprep.subr.mxu0 0.0
    %5572 = vmatpush2.msra.mxu0 0.0
    %5573 = vmatprep.subr.mxu0 0.0
    %5574 = vmatpush2.msra.mxu0 0.0
    %5575 = vmatprep.subr.mxu0 0.0
    %5576 = vmatpush2.msra.mxu0 0.0
    %5577 = vmatprep.subr.mxu0 0.0
    %5578 = vmatpush2.msra.mxu0 0.0
    %5579 = vmatprep.subr.mxu0 0.0
    %5580 = vmatpush2.msra.mxu0 0.0
    %5581 = vmatprep.subr.mxu0 0.0
    %5582 = vmatpush2.msra.mxu0 0.0
    %5583 = vmatprep.subr.mxu0 0.0
    %5584 = vmatpush2.msra.mxu0 0.0
    %5585 = vmatprep.subr.mxu0 0.0
    %5586 = vmatpush2.msra.mxu0 0.0
    %5587 = vmatprep.subr.mxu0 0.0
    %5588 = vmatpush2.msra.mxu0 0.0
    %5589 = vmatprep.subr.mxu0 0.0
    %5590 = vmatpush2.msra.mxu0 0.0
    %5591 = vmatprep.subr.mxu0 0.0
    %5592 = vmatpush2.msra.mxu0 0.0
    %5593 = vmatprep.subr.mxu0 0.0
    %5594 = vmatpush2.msra.mxu0 0.0
    %5595 = vmatprep.subr.mxu0 0.0
    %5596 = vmatpush2.msra.mxu0 0.0
    %5597 = vmatprep.mubr.f32.mxu0 0.0
    %5598 = vmatmul.mubr.f32.gmra.mxu0 %v5528
    %v5599 = vpop.f32.mrf.mxu0
    %v5600 = vadd.f32 %v5526, %v5599
    %v5601 = vpop.f32.mrf.mxu0
    %5602 = vmatprep.mubr.f32.mxu0 0.0
    %5603 = vmatmul.mubr.f32.gmra.mxu0 %v5531
    %v5604 = vpop.f32.mrf.mxu0
    %v5605 = vadd.f32 %v5526, %v5604
    %v5606 = vpop.f32.mrf.mxu0
    %5607 = vdwg.mxu0
    %v5608 = vmul.f32 %v5600, 0.5
    %v5609 = vmul.f32 %v5605, 0.5
    %v5610 = vmul.f32 %v5600, 0.70710677
    %v5611 = vmul.f32 %v5605, 0.70710677
    %vm5612 = vcmp.lt.f32.partialorder %v5610, 0.0
    %vm5613 = vcmp.lt.f32.partialorder %v5611, 0.0
    %v5614 = vsel %vm5612, -1.0, 1.0
    %v5615 = vsel %vm5613, -1.0, 1.0
    %v5616 = vand.u32 2147483647, %v5610
    %v5617 = vand.u32 2147483647, %v5611
    %v5618 = vmul.f32 %v5616, 0.3275911
    %v5619 = vmul.f32 %v5617, 0.3275911
    %v5620 = vadd.f32 %v5618, 1.0
    %v5621 = vadd.f32 %v5619, 1.0
    %v5622 = vrcp.pop %v5620
    %v5623 = vrcp.pop %v5621
    %v5624 = vmul.f32 %v5622, 1.0614054
    %v5625 = vmul.f32 %v5623, 1.0614054
    %v5626 = vadd.f32 %v5624, -1.4531521
    %v5627 = vadd.f32 %v5625, -1.4531521
    %v5628 = vmul.f32 %v5622, %v5626
    %v5629 = vmul.f32 %v5623, %v5627
    %v5630 = vadd.f32 %v5628, 1.4214138
    %v5631 = vadd.f32 %v5629, 1.4214138
    %v5632 = vmul.f32 %v5622, %v5630
    %v5633 = vmul.f32 %v5623, %v5631
    %v5634 = vadd.f32 %v5632, -0.28449672
    %v5635 = vadd.f32 %v5633, -0.28449672
    %v5636 = vmul.f32 %v5622, %v5634
    %v5637 = vmul.f32 %v5623, %v5635
    %v5638 = vadd.f32 %v5636, 0.2548296
    %v5639 = vadd.f32 %v5637, 0.2548296
    %v5640 = vmul.f32 %v5622, %v5638
    %v5641 = vmul.f32 %v5623, %v5639
    %v5642 = vsub.f32 0.0, %v5616
    %v5643 = vsub.f32 0.0, %v5617
    %v5644 = vmul.f32 %v5642, %v5616
    %v5645 = vmul.f32 %v5643, %v5617
    %v5646 = vmul.f32 %v5644, 1.442695
    %v5647 = vpow.pop %v5646
    %v5648 = vmul.f32 %v5645, 1.442695
    %v5649 = vpow.pop %v5648
    %v5650 = vmul.f32 %v5640, %v5647
    %v5651 = vmul.f32 %v5641, %v5649
    %v5652 = vsub.f32 1.0, %v5650
    %v5653 = vsub.f32 1.0, %v5651
    %v5654 = vmul.f32 %v5614, %v5652
    %v5655 = vmul.f32 %v5615, %v5653
    %v5656 = vadd.f32 %v5654, 1.0
    %v5657 = vadd.f32 %v5655, 1.0
    %v5658 = vmul.f32 %v5608, %v5656
    %v5659 = vmul.f32 %v5609, %v5657
    %s5660 = scalar_lea.vmem %s15, 64
    %v5661 = vld [vmem:[%s5660] sm:$0xff]
    %v5662 = vld [vmem:[%s5660 + $0x8] sm:$0xff]
    %v5663 = vld [vmem:[%s5660 + $0x10] sm:$0xff]
    %v5664 = vld [vmem:[%s5660 + $0x18] sm:$0xff]
    %v5665 = vld [vmem:[%s5660 + $0x20] sm:$0xff]
    %v5666 = vld [vmem:[%s5660 + $0x28] sm:$0xff]
    %v5667 = vld [vmem:[%s5660 + $0x30] sm:$0xff]
    %v5668 = vld [vmem:[%s5660 + $0x38] sm:$0xff]
    %v5669 = vlaneseq
    %v5670 = vshrl.u32 %v5669, 7
    %v5671 = vsub.s32 5, %v5670
    %v5672 = vrot.slane %v4453, %v5671
    %v5674 = vsel %vm1443, %v5658, 0
    %v5677 = vsel %vm1443, %v5659, 0
    %5679 = vmatprep.subr.mxu0 0.0
    %5680 = vmatpush1.msra.mxu0 0.0
    %5681 = vmatprep.subr.mxu0 0.0
    %5682 = vmatpush1.msra.mxu0 0.0
    %5683 = vmatprep.subr.mxu0 0.0
    %5684 = vmatpush1.msra.mxu0 0.0
    %5685 = vmatprep.subr.mxu0 0.0
    %5686 = vmatpush1.msra.mxu0 0.0
    %5687 = vmatprep.subr.mxu0 0.0
    %5688 = vmatpush1.msra.mxu0 0.0
    %5689 = vmatprep.subr.mxu0 0.0
    %5690 = vmatpush1.msra.mxu0 0.0
    %5691 = vmatprep.subr.mxu0 0.0
    %5692 = vmatpush1.msra.mxu0 0.0
    %5693 = vmatprep.subr.mxu0 0.0
    %5694 = vmatpush1.msra.mxu0 0.0
    %5695 = vmatprep.subr.mxu0 0.0
    %5696 = vmatpush1.msra.mxu0 %v5668
    %5697 = vmatprep.subr.mxu0 0.0
    %5698 = vmatpush1.msra.mxu0 %v5667
    %5699 = vmatprep.subr.mxu0 0.0
    %5700 = vmatpush1.msra.mxu0 %v5666
    %5701 = vmatprep.subr.mxu0 0.0
    %5702 = vmatpush1.msra.mxu0 %v5665
    %5703 = vmatprep.subr.mxu0 0.0
    %5704 = vmatpush1.msra.mxu0 %v5664
    %5705 = vmatprep.subr.mxu0 0.0
    %5706 = vmatpush1.msra.mxu0 %v5663
    %5707 = vmatprep.subr.mxu0 0.0
    %5708 = vmatpush1.msra.mxu0 %v5662
    %5709 = vmatprep.subr.mxu0 0.0
    %5710 = vmatpush1.msra.mxu0 %v5661
    %5711 = vmatprep.subr.mxu0 0.0
    %5712 = vmatpush2.msra.mxu0 0.0
    %5713 = vmatprep.subr.mxu0 0.0
    %5714 = vmatpush2.msra.mxu0 0.0
    %5715 = vmatprep.subr.mxu0 0.0
    %5716 = vmatpush2.msra.mxu0 0.0
    %5717 = vmatprep.subr.mxu0 0.0
    %5718 = vmatpush2.msra.mxu0 0.0
    %5719 = vmatprep.subr.mxu0 0.0
    %5720 = vmatpush2.msra.mxu0 0.0
    %5721 = vmatprep.subr.mxu0 0.0
    %5722 = vmatpush2.msra.mxu0 0.0
    %5723 = vmatprep.subr.mxu0 0.0
    %5724 = vmatpush2.msra.mxu0 0.0
    %5725 = vmatprep.subr.mxu0 0.0
    %5726 = vmatpush2.msra.mxu0 0.0
    %5727 = vmatprep.subr.mxu0 0.0
    %5728 = vmatpush2.msra.mxu0 0.0
    %5729 = vmatprep.subr.mxu0 0.0
    %5730 = vmatpush2.msra.mxu0 0.0
    %5731 = vmatprep.subr.mxu0 0.0
    %5732 = vmatpush2.msra.mxu0 0.0
    %5733 = vmatprep.subr.mxu0 0.0
    %5734 = vmatpush2.msra.mxu0 0.0
    %5735 = vmatprep.subr.mxu0 0.0
    %5736 = vmatpush2.msra.mxu0 0.0
    %5737 = vmatprep.subr.mxu0 0.0
    %5738 = vmatpush2.msra.mxu0 0.0
    %5739 = vmatprep.subr.mxu0 0.0
    %5740 = vmatpush2.msra.mxu0 0.0
    %5741 = vmatprep.subr.mxu0 0.0
    %5742 = vmatpush2.msra.mxu0 0.0
    %5743 = vmatprep.mubr.f32.mxu0 0.0
    %5744 = vmatmul.mubr.f32.gmra.mxu0 %v5674
    %v5745 = vpop.f32.mrf.mxu0
    %v5746 = vadd.f32 %v5672, %v5745
    %v5747 = vpop.f32.mrf.mxu0
    %5748 = vmatprep.mubr.f32.mxu0 0.0
    %5749 = vmatmul.mubr.f32.gmra.mxu0 %v5677
    %v5750 = vpop.f32.mrf.mxu0
    %v5751 = vadd.f32 %v5672, %v5750
    %v5752 = vpop.f32.mrf.mxu0
    %5753 = vdwg.mxu0
    %v5754 = vadd.f32 %v5516, %v5746
    %v5755 = vadd.f32 %v5517, %v5751
    %v5756 = vsel %vm181, %v5754, 0.0
    %5757 = vadd.xlane.f32.xlu0 %v5756
    %v5758 = vpop.xlane.xlu0 %5757
    %v5759 = vsel %vm181, %v5755, 0.0
    %5760 = vadd.xlane.f32.xlu0 %v5759
    %v5761 = vpop.xlane.xlu0 %5760
    %v5762 = vmul.f32 %v5758, %v189
    %v5763 = vmul.f32 %v5761, %v189
    %v5764 = vsub.f32 %v5754, %v5762
    %v5765 = vsub.f32 %v5755, %v5763
    %v5766 = vmul.f32 %v5764, %v5764
    %v5767 = vmul.f32 %v5765, %v5765
    %v5768 = vsel %vm181, %v5766, 0.0
    %5769 = vadd.xlane.f32.xlu0 %v5768
    %v5770 = vpop.xlane.xlu0 %5769
    %v5771 = vsel %vm181, %v5767, 0.0
    %5772 = vadd.xlane.f32.xlu0 %v5771
    %v5773 = vpop.xlane.xlu0 %5772
    %v5774 = vmul.f32 %v5770, %v189
    %v5775 = vmul.f32 %v5773, %v189
    %v5776 = vadd.f32 %v5774, 1e-12
    %v5777 = vadd.f32 %v5775, 1e-12
    %v5778 = vrsqrt.pop %v5776
    %v5779 = vrsqrt.pop %v5777
    %v5780 = vmul.f32 %v5764, %v5778
    %v5781 = vmul.f32 %v5765, %v5779
    %v5782 = vlaneseq
    %v5783 = vshrl.u32 %v5782, 7
    %v5784 = vsub.s32 6, %v5783
    %v5785 = vrot.slane %v4453, %v5784
    %v5786 = vmul.f32 %v5780, %v5785
    %v5787 = vmul.f32 %v5781, %v5785
    %v5788 = vlaneseq
    %v5789 = vshrl.u32 %v5788, 7
    %v5790 = vsub.s32 7, %v5789
    %v5791 = vrot.slane %v4453, %v5790
    %v5792 = vadd.f32 %v5786, %v5791
    %v5793 = vadd.f32 %v5787, %v5791
    %v5794 = vmul.f32 %v5792, %v5792
    %v5795 = vsel %vm2983, %v5794, 0.0
    %5796 = vadd.xlane.f32.xlu0 %v5795
    %v5797 = vpop.xlane.xlu0 %5796
    %v5798 = vmax.f32 %v5797, 1e-24
    %v5799 = vrsqrt.pop %v5798
    %v5800 = vmul.f32 %v5792, %v5799
    %5801 = vst.msk [vmem:[#allocation4] sm:$0x1] %vm2983, %v5800
    %v5802 = vmul.f32 %v5793, %v5793
    %v5803 = vsel %vm2983, %v5802, 0.0
    %5804 = vadd.xlane.f32.xlu0 %v5803
    %v5805 = vpop.xlane.xlu0 %5804
    %v5806 = vmax.f32 %v5805, 1e-24
    %v5807 = vrsqrt.pop %v5806
    %v5808 = vmul.f32 %v5793, %v5807
    %5809 = vst.msk [vmem:[#allocation4 + $0x1] sm:$0x1] %vm2983, %v5808
    // Predicated region
    $region74: #{clip_forward.1} parent=1 // pred_check
      _
    $region75: #{clip_forward.1} parent=1 // pred_check_branch
      %5811 = sbr.rel (0) target = $region77
    $region76: #{clip_forward.1} parent=1 // pred_region
      %s5813 = ssub.s32 32, 32
      %5814 = vsyncadd [#allocation3], %s5813
      %s5816 = sshll.u32 [#allocation2], 4
      %s5817 = int_to_ptr.vmem [resolvable:$true] %s5816
      %5819 = dma.vmem_to_hbm [thread:$0]  %s5817, 32, %s18, [#allocation3]
    $region77: #{clip_forward.1} parent=1 // pred_fallthru
      _
    // Predicated region
    $region78: #{clip_forward.1} parent=1 // pred_check
      _
    $region79: #{clip_forward.1} parent=1 // pred_check_branch
      %5821 = sbr.rel (0) target = $region81
    $region80: #{clip_forward.1} parent=1 // pred_region
      %s5823 = ssub.s32 32, 32
      %5824 = vsyncadd [#allocation5], %s5823
      %s5826 = sshll.u32 [#allocation4], 4
      %s5827 = int_to_ptr.vmem [resolvable:$true] %s5826
      %5829 = dma.vmem_to_hbm [thread:$0]  %s5827, 32, %s19, [#allocation5]
    $region81: #{clip_forward.1} parent=1 // pred_fallthru
      _
    // Predicated region
    $region82: #{clip_forward.1} parent=1 // pred_check
      _
    $region83: #{clip_forward.1} parent=1 // pred_check_branch
      %5831 = sbr.rel (0) target = $region85
    $region84: #{clip_forward.1} parent=1 // pred_region
      %5832 = dma.done [#allocation3], 32
    $region85: #{clip_forward.1} parent=1 // pred_fallthru
      _
    // Predicated region
    $region86: #{clip_forward.1} parent=1 // pred_check
      _
    $region87: #{clip_forward.1} parent=1 // pred_check_branch
      %5834 = sbr.rel (0) target = $region89
    $region88: #{clip_forward.1} parent=1 // pred_region
      %5835 = dma.done [#allocation5], 32
    $region89: #{clip_forward.1} parent=1 // pred_fallthru
      _
    %5836 = vsyncpa [#allocation3], 1
    %5837 = vsyncpa [#allocation5], 1

</llo_original>
